<compile_context>
chip_gen: v7x
topology: tpu7x:2x2x1
jax: 0.10.0
libtpu: 0.0.40
codegen_flags: <defaults>
</compile_context>

<pallas_src>
import jax
import jax.numpy as jnp
from jax import lax
from jax.experimental import pallas as pl
from jax.experimental.pallas import tpu as pltpu


_VMEM_LIMIT = 32 * 1024 * 1024   # explicit, with headroom under v7x's 64 MiB
_PIXEL_TILE_CAP = 4096           # elements along the tiled (lane) axis


# ------------------------------ small helpers -------------------------------

def _round_up(x, m):
    return ((x + m - 1) // m) * m


def _choose_pixel_tile(P, cap=_PIXEL_TILE_CAP):
    """Largest tile <= cap, multiple of 128, that minimizes padding waste."""
    p128 = _round_up(P, 128)
    n_tiles = -(-p128 // cap)
    return _round_up(-(-p128 // n_tiles), 128)


def _pad_pixels(a, p_pad):
    P = a.shape[-1]
    if p_pad == P:
        return a
    return jnp.pad(a, ((0, 0), (0, 0), (0, p_pad - P)))


def _leaky_relu(x, slope=0.1):
    return jnp.where(x >= 0, x, slope * x)


def _block_diag2(a, b):
    """[[a, 0], [0, b]] — used to merge the amp/pha 1x1-conv chains."""
    z_ab = jnp.zeros((a.shape[0], b.shape[1]), a.dtype)
    z_ba = jnp.zeros((b.shape[0], a.shape[1]), b.dtype)
    return jnp.concatenate(
        [jnp.concatenate([a, z_ab], axis=1),
         jnp.concatenate([z_ba, b], axis=1)], axis=0)


# ------------------------------ Pallas kernels ------------------------------

def conv1x1_res_kernel(x_ref, res_ref, w_ref, b_ref, o_ref):
    """Channel-major 1x1 conv + residual: out = W @ x + b + res."""
    o_ref[...] = (jnp.dot(w_ref[...], x_ref[...],
                          preferred_element_type=jnp.float32)
                  + b_ref[...] + res_ref[...])


def freq_fuse_kernel(mp_ref, w1_ref, b1_ref, w2_ref, b2_ref,
                     real_ref, imag_ref):
    """Merged amp_fuse / pha_fuse (1x1 -> LeakyReLU(0.1) -> 1x1) + cos/sin mix.

    mp_ref holds [mag; pha] stacked along channels (2C, T); the weights are
    block-diagonal so a single matmul per stage services both paths.
    """
    y = jnp.dot(w1_ref[...], mp_ref[...],
                preferred_element_type=jnp.float32) + b1_ref[...]
    y = _leaky_relu(y)
    y = jnp.dot(w2_ref[...], y,
                preferred_element_type=jnp.float32) + b2_ref[...]
    C = real_ref.shape[0]
    m = y[:C]          # amp_fuse output
    p = y[C:]          # pha_fuse output
    # torch.tile(., (2, 2)) commutes with these pointwise ops, so real/imag are
    # produced at (H, W) and periodically tiled to (2H, 2W) in the glue.
    real_ref[...] = m * jnp.cos(p)
    imag_ref[...] = m * jnp.sin(p)


def post_fuse_kernel(a_ref, x2_ref, wf2_ref, wcomb_ref, bcomb_ref, o_ref):
    """fuse(cat([x2, post(a)])) with post folded into fuse:
       out = Wf2 @ x2 + (Wf3 @ Wpost) @ a + (Wf3 @ bpost + bfuse)."""
    o_ref[...] = (jnp.dot(wf2_ref[...], x2_ref[...],
                          preferred_element_type=jnp.float32)
                  + jnp.dot(wcomb_ref[...], a_ref[...],
                            preferred_element_type=jnp.float32)
                  + bcomb_ref[...])


# ------------------------------ Pallas wrappers -----------------------------

def _pixel_grid_call(kernel, pixel_inputs, weight_inputs, out_channels,
                     n_outputs=1):
    """Common channel-major pallas_call: grid = (N, pixel tiles)."""
    N = pixel_inputs[0].shape[0]
    P = pixel_inputs[0].shape[-1]
    tile = _choose_pixel_tile(P)
    p_pad = _round_up(P, tile)

    padded = [_pad_pixels(a, p_pad) for a in pixel_inputs]

    in_specs = [pl.BlockSpec((None, a.shape[1], tile), lambda n, i: (n, 0, i))
                for a in padded]
    in_specs += [pl.BlockSpec(w.shape, lambda n, i: (0, 0))
                 for w in weight_inputs]

    out_spec = pl.BlockSpec((None, out_channels, tile), lambda n, i: (n, 0, i))
    out_sd = jax.ShapeDtypeStruct((N, out_channels, p_pad), jnp.float32)

    if n_outputs == 1:
        out_specs, out_shape = out_spec, out_sd
    else:
        out_specs = (out_spec,) * n_outputs
        out_shape = (out_sd,) * n_outputs

    out = pl.pallas_call(
        kernel,
        grid=(N, p_pad // tile),
        in_specs=in_specs,
        out_specs=out_specs,
        out_shape=out_shape,
        compiler_params=pltpu.CompilerParams(
            dimension_semantics=("parallel", "parallel"),
            vmem_limit_bytes=_VMEM_LIMIT),
    )(*padded, *weight_inputs)

    if n_outputs == 1:
        return out[:, :, :P]
    return tuple(o[:, :, :P] for o in out)


def conv1x1_residual(x, res, w, b):
    """x:(N,Cin,H,W), res:(N,Cout,H,W) -> conv1x1(x) + res   (RDB LFF path)."""
    N, Cin, H, W = x.shape
    Cout = w.shape[0]
    out = _pixel_grid_call(conv1x1_res_kernel,
                           [x.reshape(N, Cin, H * W),
                            res.reshape(N, Cout, H * W)],
                           [w, b], Cout)
    return out.reshape(N, Cout, H, W)


def freq_fuse(mag, pha, p):
    """mag/pha: (N, C, H, W) -> real, imag at (N, C, H, W)."""
    N, C, H, W = mag.shape
    mp = jnp.concatenate([mag.reshape(N, C, H * W),
                          pha.reshape(N, C, H * W)], axis=1)   # (N, 2C, HW)
    w1 = _block_diag2(p["wa1"], p["wp1"])
    b1 = jnp.concatenate([p["ba1"], p["bp1"]], axis=0)
    w2 = _block_diag2(p["wa2"], p["wp2"])
    b2 = jnp.concatenate([p["ba2"], p["bp2"]], axis=0)
    real, imag = _pixel_grid_call(freq_fuse_kernel, [mp],
                                  [w1, b1, w2, b2], C, n_outputs=2)
    return real.reshape(N, C, H, W), imag.reshape(N, C, H, W)


def post_fuse(absout, x2, p):
    """frescat tail: x3 = post(absout); out = fuse(cat([x2, x3]))  (folded)."""
    N, Cin, H, W = absout.shape
    Cout = x2.shape[1]
    wf = p["fuse_w"]                               # (Cout, 2*Cout)
    wf2 = wf[:, :Cout]                             # acts on x2
    wf3 = wf[:, Cout:]                             # acts on x3 = post(absout)
    wcomb = jnp.dot(wf3, p["post_w"])              # (Cout, Cin)
    bcomb = jnp.dot(wf3, p["post_b"]) + p["fuse_b"]
    out = _pixel_grid_call(post_fuse_kernel,
                           [absout.reshape(N, Cin, H * W),
                            x2.reshape(N, Cout, H * W)],
                           [wf2, wcomb, bcomb], Cout)
    return out.reshape(N, Cout, H, W)


# --------------------------------- JAX glue ---------------------------------
# TODO(synk): dense 3x3 convs / 4x4 transposed convs / fft2 / ifft2 / bilinear
# upsample are left to XLA; no Pallas im2col or FFT kernel is provided.

def conv2d(x, w, b, stride=1, padding=1):
    y = lax.conv_general_dilated(
        x, w, window_strides=(stride, stride),
        padding=[(padding, padding), (padding, padding)],
        dimension_numbers=('NCHW', 'OIHW', 'NCHW'))
    return y + b[None, :, None, None]


def conv_transpose2d(x, w, b, stride=2, padding=1):
    """PyTorch ConvTranspose2d; w in (Cin, Cout, kh, kw) layout."""
    k = w.shape[2]
    w_conv = jnp.transpose(jnp.flip(w, (2, 3)), (1, 0, 2, 3))   # (Cout, Cin, k, k)
    pad = k - 1 - padding
    y = lax.conv_general_dilated(
        x, w_conv, window_strides=(1, 1),
        padding=[(pad, pad), (pad, pad)],
        lhs_dilation=(stride, stride),
        dimension_numbers=('NCHW', 'OIHW', 'NCHW'))
    return y + b[None, :, None, None]


def bilinear_upsample_x2(x):
    """nn.Upsample(scale_factor=2, mode='bilinear') (align_corners=False)."""
    N, C, H, W = x.shape

    def idx_weights(S):
        i = jnp.arange(2 * S, dtype=jnp.float32)
        src = jnp.maximum((i + 0.5) * 0.5 - 0.5, 0.0)
        i0 = jnp.floor(src).astype(jnp.int32)
        i1 = jnp.minimum(i0 + 1, S - 1)
        lam = src - i0.astype(jnp.float32)
        return i0, i1, lam

    h0, h1, lh = idx_weights(H)
    w0, w1, lw = idx_weights(W)
    rows = (x[:, :, h0, :] * (1.0 - lh)[None, None, :, None]
            + x[:, :, h1, :] * lh[None, None, :, None])
    return (rows[:, :, :, w0] * (1.0 - lw)[None, None, None, :]
            + rows[:, :, :, w1] * lw[None, None, None, :])


def rdb_forward(x, p):
    """RDB: dense 3x3 conv-ReLU-concat chain, then 1x1 LFF + residual (Pallas)."""
    feat = x
    for (w, b) in p["convs"]:
        out = jax.nn.relu(conv2d(feat, w, b))
        feat = jnp.concatenate([feat, out], axis=1)
    return conv1x1_residual(feat, x, p["lff_w"], p["lff_b"])


def frescat_forward(x, p):
    """frescat_padding(Cin, Cout): x (N,Cin,H,W) -> (N,Cout,2H,2W)."""
    # x2 = ConvTranspose2d(Cin, Cout, 4, stride=2, padding=1)
    x2 = conv_transpose2d(x, p["up_w"], p["up_b"], stride=2, padding=1)

    # --- freup_Periodicpadding ---
    fx = jnp.fft.fft2(x)
    mag = jnp.abs(fx).astype(jnp.float32)
    pha = jnp.angle(fx).astype(jnp.float32)

    real, imag = freq_fuse(mag, pha, p)                      # (N, Cin, H, W)
    real_t = jnp.tile(real, (1, 1, 2, 2))                    # torch.tile(., (2,2))
    imag_t = jnp.tile(imag, (1, 1, 2, 2))
    absout = jnp.abs(jnp.fft.ifft2(real_t + 1j * imag_t)).astype(jnp.float32)

    # post(absout) + fuse(cat([x2, x3])) folded into a single Pallas kernel.
    return post_fuse(absout, x2, p)


def drbn_bu_forward(params, input_x, prev_feats=None, flag=0):
    """DRBN_BU.part_forward.  input_x: (N, 2*n_color, H, W)."""
    f_first = jax.nn.relu(conv2d(input_x, *params["sfe1"]))
    f_s1 = jax.nn.relu(conv2d(f_first, *params["sfe2"]))
    f_s2 = conv2d(rdb_forward(f_s1, params["rdbs"][0]), *params["down1"], stride=2)
    f_s4 = conv2d(rdb_forward(f_s2, params["rdbs"][1]), *params["down2"], stride=2)

    if flag == 0:
        f_s4 = f_s4 + rdb_forward(rdb_forward(f_s4, params["rdbs"][2]),
                                  params["rdbs"][3])
        f_s2 = f_s2 + rdb_forward(frescat_forward(f_s4, params["up2"]),
                                  params["rdbs"][4])
        f_s1 = (f_s1
                + rdb_forward(conv_transpose2d(f_s2, *params["up1"],
                                               stride=2, padding=1),
                              params["rdbs"][5])
                + f_first)
    else:
        pf1, pf2, pf4 = prev_feats
        f_s4 = f_s4 + rdb_forward(rdb_forward(f_s4, params["rdbs"][2]),
                                  params["rdbs"][3]) + pf4
        f_s2 = f_s2 + rdb_forward(frescat_forward(f_s4, params["up2"]),
                                  params["rdbs"][4]) + pf2
        f_s1 = (f_s1
                + rdb_forward(conv_transpose2d(f_s2, *params["up1"],
                                               stride=2, padding=1),
                              params["rdbs"][5])
                + f_first + pf1)

    res4 = conv2d(conv2d(f_s4, *params["upnet4"][0]), *params["upnet4"][1])
    res2 = (conv2d(conv2d(f_s2, *params["upnet2"][0]), *params["upnet2"][1])
            + bilinear_upsample_x2(res4))
    res1 = (conv2d(conv2d(f_s1, *params["upnet"][0]), *params["upnet"][1])
            + bilinear_upsample_x2(res2))
    return res1, res2, res4, f_s1, f_s2, f_s4


# ----------------------------- parameter setup ------------------------------

class _KeyGen:
    def __init__(self, key):
        self._key = key

    def __call__(self):
        self._key, sub = jax.random.split(self._key)
        return sub


def _conv_init(kg, cout, cin, k):
    bound = 1.0 / float((cin * k * k) ** 0.5)
    w = jax.random.uniform(kg(), (cout, cin, k, k), jnp.float32, -bound, bound)
    b = jax.random.uniform(kg(), (cout,), jnp.float32, -bound, bound)
    return w, b


def _convT_init(kg, cin, cout, k):
    bound = 1.0 / float((cin * k * k) ** 0.5)
    w = jax.random.uniform(kg(), (cin, cout, k, k), jnp.float32, -bound, bound)
    b = jax.random.uniform(kg(), (cout,), jnp.float32, -bound, bound)
    return w, b


def _conv1x1_init(kg, cout, cin):
    """Stored channel-major for the Pallas kernels: W (Cout, Cin), b (Cout, 1)."""
    bound = 1.0 / float(cin ** 0.5)
    w = jax.random.uniform(kg(), (cout, cin), jnp.float32, -bound, bound)
    b = jax.random.uniform(kg(), (cout, 1), jnp.float32, -bound, bound)
    return w, b


def _rdb_init(kg, g0, g, c):
    convs, cin = [], g0
    for _ in range(c):
        convs.append(_conv_init(kg, g, cin, 3))
        cin += g
    lff_w, lff_b = _conv1x1_init(kg, g0, cin)
    return {"convs": convs, "lff_w": lff_w, "lff_b": lff_b}


def _frescat_init(kg, cin, cout):
    p = {}
    p["up_w"], p["up_b"] = _convT_init(kg, cin, cout, 4)
    for n in ("a1", "a2", "p1", "p2"):
        w, b = _conv1x1_init(kg, cin, cin)
        p["w" + n], p["b" + n] = w, b
    p["post_w"], p["post_b"] = _conv1x1_init(kg, cout, cin)
    p["fuse_w"], p["fuse_b"] = _conv1x1_init(kg, cout, 2 * cout)
    return p


def init_params(key, n_color=3):
    G0, G, C_layers = 16, 8, 4
    kg = _KeyGen(key)
    params = {
        "sfe1": _conv_init(kg, G0, n_color * 2, 3),
        "sfe2": _conv_init(kg, G0, G0, 3),
        "rdbs": [
            _rdb_init(kg, G0, G, C_layers),
            _rdb_init(kg, G0, G, C_layers),
            _rdb_init(kg, 2 * G0, 2 * G, C_layers),
            _rdb_init(kg, 2 * G0, 2 * G, C_layers),
            _rdb_init(kg, G0, G, C_layers),
            _rdb_init(kg, G0, G, C_layers),
        ],
        "upnet": [_conv_init(kg, G0, G0, 3), _conv_init(kg, 3, G0, 3)],
        "upnet2": [_conv_init(kg, G0, G0, 3), _conv_init(kg, 3, G0, 3)],
        "upnet4": [_conv_init(kg, G0, 2 * G0, 3), _conv_init(kg, 3, G0, 3)],
        "down1": _conv_init(kg, G0, G0, 3),
        "down2": _conv_init(kg, 2 * G0, G0, 3),
        "up1": _convT_init(kg, G0, G0, 4),
        "up2": _frescat_init(kg, 2 * G0, G0),
    }
    return params


# ----------------------------------- main ------------------------------------

if __name__ == "__main__":
    key = jax.random.PRNGKey(0)
    k_p, k_x = jax.random.split(key)

    N, n_color, H, W = 2, 3, 64, 64        # input to DRBN_BU has 2*n_color channels
    params = init_params(k_p, n_color)
    x = jax.random.uniform(k_x, (N, 2 * n_color, H, W), dtype=jnp.float32)

    fwd = jax.jit(lambda p, xx: drbn_bu_forward(p, xx, flag=0))
    outs = jax.block_until_ready(fwd(params, x))
    res1, res2, res4, f_s1, f_s2, f_s4 = outs

    assert res1.shape == (N, 3, H, W), res1.shape
    assert res2.shape == (N, 3, H // 2, W // 2), res2.shape
    assert res4.shape == (N, 3, H // 4, W // 4), res4.shape
    assert f_s1.shape == (N, 16, H, W), f_s1.shape
    assert f_s2.shape == (N, 16, H // 2, W // 2), f_s2.shape
    assert f_s4.shape == (N, 32, H // 4, W // 4), f_s4.shape
    assert all(o.dtype == jnp.float32 for o in outs)
    assert all(bool(jnp.all(jnp.isfinite(o))) for o in outs)
    print("KERNEL_OK")
</pallas_src>

<mosaic_0001>
module attributes {stable_mosaic.version = 11 : i64} {
  func.func @conv1x1_res_kernel(%arg0: i32, %arg1: i32, %arg2: memref<1x48x4096xf32, #tpu.memory_space<vmem>>, %arg3: memref<1x16x4096xf32, #tpu.memory_space<vmem>>, %arg4: memref<16x48xf32, #tpu.memory_space<vmem>>, %arg5: memref<16x1xf32, #tpu.memory_space<vmem>>, %arg6: memref<1x16x4096xf32, #tpu.memory_space<vmem>>) attributes {dimension_semantics = [#tpu.dimension_semantics<parallel>, #tpu.dimension_semantics<parallel>], iteration_bounds = array<i64: 2, 1>, scalar_prefetch = 0 : i64, scratch_operands = 0 : i64, tpu.core_type = #tpu.core_type<tc>, window_params = [{transform_indices = @transform_0, window_bounds = array<i64: 1, 48, 4096>}, {transform_indices = @transform_1, window_bounds = array<i64: 1, 16, 4096>}, {pipeline_mode = #tpu.pipeline_mode<synchronous>, transform_indices = @transform_2, window_bounds = array<i64: 16, 48>}, {pipeline_mode = #tpu.pipeline_mode<synchronous>, transform_indices = @transform_3, window_bounds = array<i64: 16, 1>}, {transform_indices = @transform_4, window_bounds = array<i64: 1, 16, 4096>}]} {
    %c0 = arith.constant 0 : index
    %c0_0 = arith.constant 0 : index
    %0 = vector.load %arg4[%c0, %c0_0] : memref<16x48xf32, #tpu.memory_space<vmem>>, vector<16x48xf32>
    %c0_1 = arith.constant 0 : index
    %c0_2 = arith.constant 0 : index
    %c0_3 = arith.constant 0 : index
    %1 = vector.load %arg2[%c0_1, %c0_2, %c0_3] : memref<1x48x4096xf32, #tpu.memory_space<vmem>>, vector<1x48x4096xf32>
    %2 = vector.shape_cast %1 : vector<1x48x4096xf32> to vector<48x4096xf32>
    %cst = arith.constant dense<0.000000e+00> : vector<16x4096xf32>
    %3 = tpu.matmul %0, %2, %cst {dimension_numbers = #tpu.dot_dimension_numbers<[1], [0], [0], [1], [0, 0, 1, 1], [], []>} : vector<16x48xf32>, vector<48x4096xf32>, vector<16x4096xf32> -> vector<16x4096xf32>
    %c0_4 = arith.constant 0 : index
    %c0_5 = arith.constant 0 : index
    %4 = vector.load %arg5[%c0_4, %c0_5] : memref<16x1xf32, #tpu.memory_space<vmem>>, vector<16x1xf32>
    %5 = vector.broadcast %4 : vector<16x1xf32> to vector<16x4096xf32>
    %6 = arith.addf %3, %5 : vector<16x4096xf32>
    %c0_6 = arith.constant 0 : index
    %c0_7 = arith.constant 0 : index
    %c0_8 = arith.constant 0 : index
    %7 = vector.load %arg3[%c0_6, %c0_7, %c0_8] : memref<1x16x4096xf32, #tpu.memory_space<vmem>>, vector<1x16x4096xf32>
    %8 = vector.shape_cast %7 : vector<1x16x4096xf32> to vector<16x4096xf32>
    %9 = arith.addf %6, %8 : vector<16x4096xf32>
    %c0_9 = arith.constant 0 : index
    %c0_10 = arith.constant 0 : index
    %c0_11 = arith.constant 0 : index
    %10 = vector.load %arg6[%c0_9, %c0_10, %c0_11] : memref<1x16x4096xf32, #tpu.memory_space<vmem>>, vector<1x16x4096xf32>
    %11 = vector.shape_cast %10 : vector<1x16x4096xf32> to vector<16x4096xf32>
    %12 = vector.shape_cast %9 : vector<16x4096xf32> to vector<1x16x4096xf32>
    tpu.vector_store %arg6[%c0_9, %c0_10, %c0_11], %12 {strides = array<i32>} : memref<1x16x4096xf32, #tpu.memory_space<vmem>>, vector<1x16x4096xf32>,
    return
  }
  func.func @transform_0(%arg0: i32, %arg1: i32) -> (i32, i32, i32) {
    %c0_i32 = arith.constant 0 : i32
    %c0_i32_0 = arith.constant 0 : i32
    return %arg0, %c0_i32, %arg1 : i32, i32, i32
  }
  func.func @transform_1(%arg0: i32, %arg1: i32) -> (i32, i32, i32) {
    %c0_i32 = arith.constant 0 : i32
    %c0_i32_0 = arith.constant 0 : i32
    return %arg0, %c0_i32, %arg1 : i32, i32, i32
  }
  func.func @transform_2(%arg0: i32, %arg1: i32) -> (i32, i32) {
    %c0_i32 = arith.constant 0 : i32
    %c0_i32_0 = arith.constant 0 : i32
    %c0_i32_1 = arith.constant 0 : i32
    return %c0_i32, %c0_i32_0 : i32, i32
  }
  func.func @transform_3(%arg0: i32, %arg1: i32) -> (i32, i32) {
    %c0_i32 = arith.constant 0 : i32
    %c0_i32_0 = arith.constant 0 : i32
    %c0_i32_1 = arith.constant 0 : i32
    return %c0_i32, %c0_i32_0 : i32, i32
  }
  func.func @transform_4(%arg0: i32, %arg1: i32) -> (i32, i32, i32) {
    %c0_i32 = arith.constant 0 : i32
    %c0_i32_0 = arith.constant 0 : i32
    return %arg0, %c0_i32, %arg1 : i32, i32, i32
  }
}

module attributes {stable_mosaic.version = 11 : i64} {
  func.func @conv1x1_res_kernel(%arg0: i32, %arg1: i32, %arg2: memref<1x48x1024xf32, #tpu.memory_space<vmem>>, %arg3: memref<1x16x1024xf32, #tpu.memory_space<vmem>>, %arg4: memref<16x48xf32, #tpu.memory_space<vmem>>, %arg5: memref<16x1xf32, #tpu.memory_space<vmem>>, %arg6: memref<1x16x1024xf32, #tpu.memory_space<vmem>>) attributes {dimension_semantics = [#tpu.dimension_semantics<parallel>, #tpu.dimension_semantics<parallel>], iteration_bounds = array<i64: 2, 1>, scalar_prefetch = 0 : i64, scratch_operands = 0 : i64, tpu.core_type = #tpu.core_type<tc>, window_params = [{transform_indices = @transform_0, window_bounds = array<i64: 1, 48, 1024>}, {transform_indices = @transform_1, window_bounds = array<i64: 1, 16, 1024>}, {pipeline_mode = #tpu.pipeline_mode<synchronous>, transform_indices = @transform_2, window_bounds = array<i64: 16, 48>}, {pipeline_mode = #tpu.pipeline_mode<synchronous>, transform_indices = @transform_3, window_bounds = array<i64: 16, 1>}, {transform_indices = @transform_4, window_bounds = array<i64: 1, 16, 1024>}]} {
    %c0 = arith.constant 0 : index
    %c0_0 = arith.constant 0 : index
    %0 = vector.load %arg4[%c0, %c0_0] : memref<16x48xf32, #tpu.memory_space<vmem>>, vector<16x48xf32>
    %c0_1 = arith.constant 0 : index
    %c0_2 = arith.constant 0 : index
    %c0_3 = arith.constant 0 : index
    %1 = vector.load %arg2[%c0_1, %c0_2, %c0_3] : memref<1x48x1024xf32, #tpu.memory_space<vmem>>, vector<1x48x1024xf32>
    %2 = vector.shape_cast %1 : vector<1x48x1024xf32> to vector<48x1024xf32>
    %cst = arith.constant dense<0.000000e+00> : vector<16x1024xf32>
    %3 = tpu.matmul %0, %2, %cst {dimension_numbers = #tpu.dot_dimension_numbers<[1], [0], [0], [1], [0, 0, 1, 1], [], []>} : vector<16x48xf32>, vector<48x1024xf32>, vector<16x1024xf32> -> vector<16x1024xf32>
    %c0_4 = arith.constant 0 : index
    %c0_5 = arith.constant 0 : index
    %4 = vector.load %arg5[%c0_4, %c0_5] : memref<16x1xf32, #tpu.memory_space<vmem>>, vector<16x1xf32>
    %5 = vector.broadcast %4 : vector<16x1xf32> to vector<16x1024xf32>
    %6 = arith.addf %3, %5 : vector<16x1024xf32>
    %c0_6 = arith.constant 0 : index
    %c0_7 = arith.constant 0 : index
    %c0_8 = arith.constant 0 : index
    %7 = vector.load %arg3[%c0_6, %c0_7, %c0_8] : memref<1x16x1024xf32, #tpu.memory_space<vmem>>, vector<1x16x1024xf32>
    %8 = vector.shape_cast %7 : vector<1x16x1024xf32> to vector<16x1024xf32>
    %9 = arith.addf %6, %8 : vector<16x1024xf32>
    %c0_9 = arith.constant 0 : index
    %c0_10 = arith.constant 0 : index
    %c0_11 = arith.constant 0 : index
    %10 = vector.load %arg6[%c0_9, %c0_10, %c0_11] : memref<1x16x1024xf32, #tpu.memory_space<vmem>>, vector<1x16x1024xf32>
    %11 = vector.shape_cast %10 : vector<1x16x1024xf32> to vector<16x1024xf32>
    %12 = vector.shape_cast %9 : vector<16x1024xf32> to vector<1x16x1024xf32>
    tpu.vector_store %arg6[%c0_9, %c0_10, %c0_11], %12 {strides = array<i32>} : memref<1x16x1024xf32, #tpu.memory_space<vmem>>, vector<1x16x1024xf32>,
    return
  }
  func.func @transform_0(%arg0: i32, %arg1: i32) -> (i32, i32, i32) {
    %c0_i32 = arith.constant 0 : i32
    %c0_i32_0 = arith.constant 0 : i32
    return %arg0, %c0_i32, %arg1 : i32, i32, i32
  }
  func.func @transform_1(%arg0: i32, %arg1: i32) -> (i32, i32, i32) {
    %c0_i32 = arith.constant 0 : i32
    %c0_i32_0 = arith.constant 0 : i32
    return %arg0, %c0_i32, %arg1 : i32, i32, i32
  }
  func.func @transform_2(%arg0: i32, %arg1: i32) -> (i32, i32) {
    %c0_i32 = arith.constant 0 : i32
    %c0_i32_0 = arith.constant 0 : i32
    %c0_i32_1 = arith.constant 0 : i32
    return %c0_i32, %c0_i32_0 : i32, i32
  }
  func.func @transform_3(%arg0: i32, %arg1: i32) -> (i32, i32) {
    %c0_i32 = arith.constant 0 : i32
    %c0_i32_0 = arith.constant 0 : i32
    %c0_i32_1 = arith.constant 0 : i32
    return %c0_i32, %c0_i32_0 : i32, i32
  }
  func.func @transform_4(%arg0: i32, %arg1: i32) -> (i32, i32, i32) {
    %c0_i32 = arith.constant 0 : i32
    %c0_i32_0 = arith.constant 0 : i32
    return %arg0, %c0_i32, %arg1 : i32, i32, i32
  }
}

module attributes {stable_mosaic.version = 11 : i64} {
  func.func @conv1x1_res_kernel(%arg0: i32, %arg1: i32, %arg2: memref<1x96x256xf32, #tpu.memory_space<vmem>>, %arg3: memref<1x32x256xf32, #tpu.memory_space<vmem>>, %arg4: memref<32x96xf32, #tpu.memory_space<vmem>>, %arg5: memref<32x1xf32, #tpu.memory_space<vmem>>, %arg6: memref<1x32x256xf32, #tpu.memory_space<vmem>>) attributes {dimension_semantics = [#tpu.dimension_semantics<parallel>, #tpu.dimension_semantics<parallel>], iteration_bounds = array<i64: 2, 1>, scalar_prefetch = 0 : i64, scratch_operands = 0 : i64, tpu.core_type = #tpu.core_type<tc>, window_params = [{transform_indices = @transform_0, window_bounds = array<i64: 1, 96, 256>}, {transform_indices = @transform_1, window_bounds = array<i64: 1, 32, 256>}, {pipeline_mode = #tpu.pipeline_mode<synchronous>, transform_indices = @transform_2, window_bounds = array<i64: 32, 96>}, {pipeline_mode = #tpu.pipeline_mode<synchronous>, transform_indices = @transform_3, window_bounds = array<i64: 32, 1>}, {transform_indices = @transform_4, window_bounds = array<i64: 1, 32, 256>}]} {
    %c0 = arith.constant 0 : index
    %c0_0 = arith.constant 0 : index
    %0 = vector.load %arg4[%c0, %c0_0] : memref<32x96xf32, #tpu.memory_space<vmem>>, vector<32x96xf32>
    %c0_1 = arith.constant 0 : index
    %c0_2 = arith.constant 0 : index
    %c0_3 = arith.constant 0 : index
    %1 = vector.load %arg2[%c0_1, %c0_2, %c0_3] : memref<1x96x256xf32, #tpu.memory_space<vmem>>, vector<1x96x256xf32>
    %2 = vector.shape_cast %1 : vector<1x96x256xf32> to vector<96x256xf32>
    %cst = arith.constant dense<0.000000e+00> : vector<32x256xf32>
    %3 = tpu.matmul %0, %2, %cst {dimension_numbers = #tpu.dot_dimension_numbers<[1], [0], [0], [1], [0, 0, 1, 1], [], []>} : vector<32x96xf32>, vector<96x256xf32>, vector<32x256xf32> -> vector<32x256xf32>
    %c0_4 = arith.constant 0 : index
    %c0_5 = arith.constant 0 : index
    %4 = vector.load %arg5[%c0_4, %c0_5] : memref<32x1xf32, #tpu.memory_space<vmem>>, vector<32x1xf32>
    %5 = vector.broadcast %4 : vector<32x1xf32> to vector<32x256xf32>
    %6 = arith.addf %3, %5 : vector<32x256xf32>
    %c0_6 = arith.constant 0 : index
    %c0_7 = arith.constant 0 : index
    %c0_8 = arith.constant 0 : index
    %7 = vector.load %arg3[%c0_6, %c0_7, %c0_8] : memref<1x32x256xf32, #tpu.memory_space<vmem>>, vector<1x32x256xf32>
    %8 = vector.shape_cast %7 : vector<1x32x256xf32> to vector<32x256xf32>
    %9 = arith.addf %6, %8 : vector<32x256xf32>
    %c0_9 = arith.constant 0 : index
    %c0_10 = arith.constant 0 : index
    %c0_11 = arith.constant 0 : index
    %10 = vector.load %arg6[%c0_9, %c0_10, %c0_11] : memref<1x32x256xf32, #tpu.memory_space<vmem>>, vector<1x32x256xf32>
    %11 = vector.shape_cast %10 : vector<1x32x256xf32> to vector<32x256xf32>
    %12 = vector.shape_cast %9 : vector<32x256xf32> to vector<1x32x256xf32>
    tpu.vector_store %arg6[%c0_9, %c0_10, %c0_11], %12 {strides = array<i32>} : memref<1x32x256xf32, #tpu.memory_space<vmem>>, vector<1x32x256xf32>,
    return
  }
  func.func @transform_0(%arg0: i32, %arg1: i32) -> (i32, i32, i32) {
    %c0_i32 = arith.constant 0 : i32
    %c0_i32_0 = arith.constant 0 : i32
    return %arg0, %c0_i32, %arg1 : i32, i32, i32
  }
  func.func @transform_1(%arg0: i32, %arg1: i32) -> (i32, i32, i32) {
    %c0_i32 = arith.constant 0 : i32
    %c0_i32_0 = arith.constant 0 : i32
    return %arg0, %c0_i32, %arg1 : i32, i32, i32
  }
  func.func @transform_2(%arg0: i32, %arg1: i32) -> (i32, i32) {
    %c0_i32 = arith.constant 0 : i32
    %c0_i32_0 = arith.constant 0 : i32
    %c0_i32_1 = arith.constant 0 : i32
    return %c0_i32, %c0_i32_0 : i32, i32
  }
  func.func @transform_3(%arg0: i32, %arg1: i32) -> (i32, i32) {
    %c0_i32 = arith.constant 0 : i32
    %c0_i32_0 = arith.constant 0 : i32
    %c0_i32_1 = arith.constant 0 : i32
    return %c0_i32, %c0_i32_0 : i32, i32
  }
  func.func @transform_4(%arg0: i32, %arg1: i32) -> (i32, i32, i32) {
    %c0_i32 = arith.constant 0 : i32
    %c0_i32_0 = arith.constant 0 : i32
    return %arg0, %c0_i32, %arg1 : i32, i32, i32
  }
}

module attributes {stable_mosaic.version = 11 : i64} {
  func.func @freq_fuse_kernel(%arg0: i32, %arg1: i32, %arg2: memref<1x64x256xf32, #tpu.memory_space<vmem>>, %arg3: memref<64x64xf32, #tpu.memory_space<vmem>>, %arg4: memref<64x1xf32, #tpu.memory_space<vmem>>, %arg5: memref<64x64xf32, #tpu.memory_space<vmem>>, %arg6: memref<64x1xf32, #tpu.memory_space<vmem>>, %arg7: memref<1x32x256xf32, #tpu.memory_space<vmem>>, %arg8: memref<1x32x256xf32, #tpu.memory_space<vmem>>) attributes {dimension_semantics = [#tpu.dimension_semantics<parallel>, #tpu.dimension_semantics<parallel>], iteration_bounds = array<i64: 2, 1>, scalar_prefetch = 0 : i64, scratch_operands = 0 : i64, tpu.core_type = #tpu.core_type<tc>, window_params = [{transform_indices = @transform_0, window_bounds = array<i64: 1, 64, 256>}, {pipeline_mode = #tpu.pipeline_mode<synchronous>, transform_indices = @transform_1, window_bounds = array<i64: 64, 64>}, {pipeline_mode = #tpu.pipeline_mode<synchronous>, transform_indices = @transform_2, window_bounds = array<i64: 64, 1>}, {pipeline_mode = #tpu.pipeline_mode<synchronous>, transform_indices = @transform_3, window_bounds = array<i64: 64, 64>}, {pipeline_mode = #tpu.pipeline_mode<synchronous>, transform_indices = @transform_4, window_bounds = array<i64: 64, 1>}, {transform_indices = @transform_5, window_bounds = array<i64: 1, 32, 256>}, {transform_indices = @transform_6, window_bounds = array<i64: 1, 32, 256>}]} {
    %c0 = arith.constant 0 : index
    %c0_0 = arith.constant 0 : index
    %0 = vector.load %arg3[%c0, %c0_0] : memref<64x64xf32, #tpu.memory_space<vmem>>, vector<64x64xf32>
    %c0_1 = arith.constant 0 : index
    %c0_2 = arith.constant 0 : index
    %c0_3 = arith.constant 0 : index
    %1 = vector.load %arg2[%c0_1, %c0_2, %c0_3] : memref<1x64x256xf32, #tpu.memory_space<vmem>>, vector<1x64x256xf32>
    %2 = vector.shape_cast %1 : vector<1x64x256xf32> to vector<64x256xf32>
    %cst = arith.constant dense<0.000000e+00> : vector<64x256xf32>
    %3 = tpu.matmul %0, %2, %cst {dimension_numbers = #tpu.dot_dimension_numbers<[1], [0], [0], [1], [0, 0, 1, 1], [], []>} : vector<64x64xf32>, vector<64x256xf32>, vector<64x256xf32> -> vector<64x256xf32>
    %c0_4 = arith.constant 0 : index
    %c0_5 = arith.constant 0 : index
    %4 = vector.load %arg4[%c0_4, %c0_5] : memref<64x1xf32, #tpu.memory_space<vmem>>, vector<64x1xf32>
    %5 = vector.broadcast %4 : vector<64x1xf32> to vector<64x256xf32>
    %6 = arith.addf %3, %5 : vector<64x256xf32>
    %cst_6 = arith.constant 0.000000e+00 : f32
    %7 = vector.broadcast %cst_6 : f32 to vector<64x256xf32>
    %8 = arith.cmpf oge, %6, %7 : vector<64x256xf32>
    %cst_7 = arith.constant 1.000000e-01 : f32
    %9 = vector.broadcast %cst_7 : f32 to vector<64x256xf32>
    %10 = arith.mulf %9, %6 : vector<64x256xf32>
    %11 = arith.select %8, %6, %10 : vector<64x256xi1>, vector<64x256xf32>
    %c0_8 = arith.constant 0 : index
    %c0_9 = arith.constant 0 : index
    %12 = vector.load %arg5[%c0_8, %c0_9] : memref<64x64xf32, #tpu.memory_space<vmem>>, vector<64x64xf32>
    %cst_10 = arith.constant dense<0.000000e+00> : vector<64x256xf32>
    %13 = tpu.matmul %12, %11, %cst_10 {dimension_numbers = #tpu.dot_dimension_numbers<[1], [0], [0], [1], [0, 0, 1, 1], [], []>} : vector<64x64xf32>, vector<64x256xf32>, vector<64x256xf32> -> vector<64x256xf32>
    %c0_11 = arith.constant 0 : index
    %c0_12 = arith.constant 0 : index
    %14 = vector.load %arg6[%c0_11, %c0_12] : memref<64x1xf32, #tpu.memory_space<vmem>>, vector<64x1xf32>
    %15 = vector.broadcast %14 : vector<64x1xf32> to vector<64x256xf32>
    %16 = arith.addf %13, %15 : vector<64x256xf32>
    %17 = vector.extract_strided_slice %16 {offsets = [0, 0], sizes = [32, 256], strides = [1, 1]} : vector<64x256xf32> to vector<32x256xf32>
    %18 = vector.extract_strided_slice %16 {offsets = [32, 0], sizes = [32, 256], strides = [1, 1]} : vector<64x256xf32> to vector<32x256xf32>
    %19 = math.cos %18 : vector<32x256xf32>
    %20 = arith.mulf %17, %19 : vector<32x256xf32>
    %c0_13 = arith.constant 0 : index
    %c0_14 = arith.constant 0 : index
    %c0_15 = arith.constant 0 : index
    %21 = vector.load %arg7[%c0_13, %c0_14, %c0_15] : memref<1x32x256xf32, #tpu.memory_space<vmem>>, vector<1x32x256xf32>
    %22 = vector.shape_cast %21 : vector<1x32x256xf32> to vector<32x256xf32>
    %23 = vector.shape_cast %20 : vector<32x256xf32> to vector<1x32x256xf32>
    tpu.vector_store %arg7[%c0_13, %c0_14, %c0_15], %23 {strides = array<i32>} : memref<1x32x256xf32, #tpu.memory_space<vmem>>, vector<1x32x256xf32>,
    %24 = math.sin %18 : vector<32x256xf32>
    %25 = arith.mulf %17, %24 : vector<32x256xf32>
    %c0_16 = arith.constant 0 : index
    %c0_17 = arith.constant 0 : index
    %c0_18 = arith.constant 0 : index
    %26 = vector.load %arg8[%c0_16, %c0_17, %c0_18] : memref<1x32x256xf32, #tpu.memory_space<vmem>>, vector<1x32x256xf32>
    %27 = vector.shape_cast %26 : vector<1x32x256xf32> to vector<32x256xf32>
    %28 = vector.shape_cast %25 : vector<32x256xf32> to vector<1x32x256xf32>
    tpu.vector_store %arg8[%c0_16, %c0_17, %c0_18], %28 {strides = array<i32>} : memref<1x32x256xf32, #tpu.memory_space<vmem>>, vector<1x32x256xf32>,
    return
  }
  func.func @transform_0(%arg0: i32, %arg1: i32) -> (i32, i32, i32) {
    %c0_i32 = arith.constant 0 : i32
    %c0_i32_0 = arith.constant 0 : i32
    return %arg0, %c0_i32, %arg1 : i32, i32, i32
  }
  func.func @transform_1(%arg0: i32, %arg1: i32) -> (i32, i32) {
    %c0_i32 = arith.constant 0 : i32
    %c0_i32_0 = arith.constant 0 : i32
    %c0_i32_1 = arith.constant 0 : i32
    return %c0_i32, %c0_i32_0 : i32, i32
  }
  func.func @transform_2(%arg0: i32, %arg1: i32) -> (i32, i32) {
    %c0_i32 = arith.constant 0 : i32
    %c0_i32_0 = arith.constant 0 : i32
    %c0_i32_1 = arith.constant 0 : i32
    return %c0_i32, %c0_i32_0 : i32, i32
  }
  func.func @transform_3(%arg0: i32, %arg1: i32) -> (i32, i32) {
    %c0_i32 = arith.constant 0 : i32
    %c0_i32_0 = arith.constant 0 : i32
    %c0_i32_1 = arith.constant 0 : i32
    return %c0_i32, %c0_i32_0 : i32, i32
  }
  func.func @transform_4(%arg0: i32, %arg1: i32) -> (i32, i32) {
    %c0_i32 = arith.constant 0 : i32
    %c0_i32_0 = arith.constant 0 : i32
    %c0_i32_1 = arith.constant 0 : i32
    return %c0_i32, %c0_i32_0 : i32, i32
  }
  func.func @transform_5(%arg0: i32, %arg1: i32) -> (i32, i32, i32) {
    %c0_i32 = arith.constant 0 : i32
    %c0_i32_0 = arith.constant 0 : i32
    return %arg0, %c0_i32, %arg1 : i32, i32, i32
  }
  func.func @transform_6(%arg0: i32, %arg1: i32) -> (i32, i32, i32) {
    %c0_i32 = arith.constant 0 : i32
    %c0_i32_0 = arith.constant 0 : i32
    return %arg0, %c0_i32, %arg1 : i32, i32, i32
  }
}

module attributes {stable_mosaic.version = 11 : i64} {
  func.func @post_fuse_kernel(%arg0: i32, %arg1: i32, %arg2: memref<1x32x1024xf32, #tpu.memory_space<vmem>>, %arg3: memref<1x16x1024xf32, #tpu.memory_space<vmem>>, %arg4: memref<16x16xf32, #tpu.memory_space<vmem>>, %arg5: memref<16x32xf32, #tpu.memory_space<vmem>>, %arg6: memref<16x1xf32, #tpu.memory_space<vmem>>, %arg7: memref<1x16x1024xf32, #tpu.memory_space<vmem>>) attributes {dimension_semantics = [#tpu.dimension_semantics<parallel>, #tpu.dimension_semantics<parallel>], iteration_bounds = array<i64: 2, 1>, scalar_prefetch = 0 : i64, scratch_operands = 0 : i64, tpu.core_type = #tpu.core_type<tc>, window_params = [{transform_indices = @transform_0, window_bounds = array<i64: 1, 32, 1024>}, {transform_indices = @transform_1, window_bounds = array<i64: 1, 16, 1024>}, {pipeline_mode = #tpu.pipeline_mode<synchronous>, transform_indices = @transform_2, window_bounds = array<i64: 16, 16>}, {pipeline_mode = #tpu.pipeline_mode<synchronous>, transform_indices = @transform_3, window_bounds = array<i64: 16, 32>}, {pipeline_mode = #tpu.pipeline_mode<synchronous>, transform_indices = @transform_4, window_bounds = array<i64: 16, 1>}, {transform_indices = @transform_5, window_bounds = array<i64: 1, 16, 1024>}]} {
    %c0 = arith.constant 0 : index
    %c0_0 = arith.constant 0 : index
    %0 = vector.load %arg4[%c0, %c0_0] : memref<16x16xf32, #tpu.memory_space<vmem>>, vector<16x16xf32>
    %c0_1 = arith.constant 0 : index
    %c0_2 = arith.constant 0 : index
    %c0_3 = arith.constant 0 : index
    %1 = vector.load %arg3[%c0_1, %c0_2, %c0_3] : memref<1x16x1024xf32, #tpu.memory_space<vmem>>, vector<1x16x1024xf32>
    %2 = vector.shape_cast %1 : vector<1x16x1024xf32> to vector<16x1024xf32>
    %cst = arith.constant dense<0.000000e+00> : vector<16x1024xf32>
    %3 = tpu.matmul %0, %2, %cst {dimension_numbers = #tpu.dot_dimension_numbers<[1], [0], [0], [1], [0, 0, 1, 1], [], []>} : vector<16x16xf32>, vector<16x1024xf32>, vector<16x1024xf32> -> vector<16x1024xf32>
    %c0_4 = arith.constant 0 : index
    %c0_5 = arith.constant 0 : index
    %4 = vector.load %arg5[%c0_4, %c0_5] : memref<16x32xf32, #tpu.memory_space<vmem>>, vector<16x32xf32>
    %c0_6 = arith.constant 0 : index
    %c0_7 = arith.constant 0 : index
    %c0_8 = arith.constant 0 : index
    %5 = vector.load %arg2[%c0_6, %c0_7, %c0_8] : memref<1x32x1024xf32, #tpu.memory_space<vmem>>, vector<1x32x1024xf32>
    %6 = vector.shape_cast %5 : vector<1x32x1024xf32> to vector<32x1024xf32>
    %cst_9 = arith.constant dense<0.000000e+00> : vector<16x1024xf32>
    %7 = tpu.matmul %4, %6, %cst_9 {dimension_numbers = #tpu.dot_dimension_numbers<[1], [0], [0], [1], [0, 0, 1, 1], [], []>} : vector<16x32xf32>, vector<32x1024xf32>, vector<16x1024xf32> -> vector<16x1024xf32>
    %8 = arith.addf %3, %7 : vector<16x1024xf32>
    %c0_10 = arith.constant 0 : index
    %c0_11 = arith.constant 0 : index
    %9 = vector.load %arg6[%c0_10, %c0_11] : memref<16x1xf32, #tpu.memory_space<vmem>>, vector<16x1xf32>
    %10 = vector.broadcast %9 : vector<16x1xf32> to vector<16x1024xf32>
    %11 = arith.addf %8, %10 : vector<16x1024xf32>
    %c0_12 = arith.constant 0 : index
    %c0_13 = arith.constant 0 : index
    %c0_14 = arith.constant 0 : index
    %12 = vector.load %arg7[%c0_12, %c0_13, %c0_14] : memref<1x16x1024xf32, #tpu.memory_space<vmem>>, vector<1x16x1024xf32>
    %13 = vector.shape_cast %12 : vector<1x16x1024xf32> to vector<16x1024xf32>
    %14 = vector.shape_cast %11 : vector<16x1024xf32> to vector<1x16x1024xf32>
    tpu.vector_store %arg7[%c0_12, %c0_13, %c0_14], %14 {strides = array<i32>} : memref<1x16x1024xf32, #tpu.memory_space<vmem>>, vector<1x16x1024xf32>,
    return
  }
  func.func @transform_0(%arg0: i32, %arg1: i32) -> (i32, i32, i32) {
    %c0_i32 = arith.constant 0 : i32
    %c0_i32_0 = arith.constant 0 : i32
    return %arg0, %c0_i32, %arg1 : i32, i32, i32
  }
  func.func @transform_1(%arg0: i32, %arg1: i32) -> (i32, i32, i32) {
    %c0_i32 = arith.constant 0 : i32
    %c0_i32_0 = arith.constant 0 : i32
    return %arg0, %c0_i32, %arg1 : i32, i32, i32
  }
  func.func @transform_2(%arg0: i32, %arg1: i32) -> (i32, i32) {
    %c0_i32 = arith.constant 0 : i32
    %c0_i32_0 = arith.constant 0 : i32
    %c0_i32_1 = arith.constant 0 : i32
    return %c0_i32, %c0_i32_0 : i32, i32
  }
  func.func @transform_3(%arg0: i32, %arg1: i32) -> (i32, i32) {
    %c0_i32 = arith.constant 0 : i32
    %c0_i32_0 = arith.constant 0 : i32
    %c0_i32_1 = arith.constant 0 : i32
    return %c0_i32, %c0_i32_0 : i32, i32
  }
  func.func @transform_4(%arg0: i32, %arg1: i32) -> (i32, i32) {
    %c0_i32 = arith.constant 0 : i32
    %c0_i32_0 = arith.constant 0 : i32
    %c0_i32_1 = arith.constant 0 : i32
    return %c0_i32, %c0_i32_0 : i32, i32
  }
  func.func @transform_5(%arg0: i32, %arg1: i32) -> (i32, i32, i32) {
    %c0_i32 = arith.constant 0 : i32
    %c0_i32_0 = arith.constant 0 : i32
    return %arg0, %c0_i32, %arg1 : i32, i32, i32
  }
}

</mosaic_0001>

<llo_original>
// kernel: _lambda_.8
$region0: #{_lambda_.8}
  #allocation0 [shape = 'u32[]', space=smem, size = 0x4, offset = 0x4, fixed_abs, tag = 'smem constant byte address 0x4 - core index']
  #allocation1 [shape = 'u32[144,128]{1,0:T(1,128)}', space=vmem, size = 0x12000, scoped, tag = 'internal scratch']
  %s0 = inlined_call_operand.vmem [shape: f32[2,48,4096], index: 0, kind: input, shape index: {}]
  %s1 = inlined_call_operand.vmem [shape: f32[2,16,4096], index: 1, kind: input, shape index: {}]
  %s2 = inlined_call_operand.vmem [shape: f32[16,48], index: 2, kind: input, shape index: {}]
  %s3 = inlined_call_operand.vmem [shape: f32[16,1], index: 3, kind: input, shape index: {}]
  %s4 = inlined_call_operand.vmem [shape: f32[2,16,4096], index: 4, kind: output, shape index: {}]
  %s5 = sld [smem:[#allocation0]]
  $region49: #{_lambda_.8} parent=0
    _
  %s7 = ssub.s32 1, %s5
  %s8 = scalar_select 0, %s7, %s5
  loop: start=0, step=1, limit=4
  $region2: #{_lambda_.8} parent=0 // loop_pre_header
    _
  $region3: #{_lambda_.8} parent=0 // loop_header
    %s10 = sphi 0, %s14
    %p11 = scmp.ge.s32.totalorder %s10, 4
    %s17 = sphi 0, %s29
    %s18 = sphi 0, %s25
    %s19 = sphi 0, %s17
    %s20 = sphi 0, %s18
    %s21 = sphi 0, %s19
    %s22 = sphi 0, %s20
    %s34 = sphi 0, %s36
    %s37 = sphi 0, %s34
    %s38 = sphi 0, %s37
    %s54 = sphi 0, %s38
    %s62 = sphi 0, %s64
    %s65 = sphi 0, %s62
    %s66 = sphi 0, %s65
    %s82 = sphi 0, %s66
    %s86 = sphi 0, %s86
    %s88 = sphi 0, %s86
    %s89 = sphi 0, %s88
    %s103 = sphi 0, %s89
    %s107 = sphi 0, %s107
    %s109 = sphi 0, %s107
    %s110 = sphi 0, %s109
    %s124 = sphi 0, %s110
    %s132 = sphi 0, %s134
    %s135 = sphi 0, %s132
    %s136 = sphi 0, %s135
    %s152 = sphi 0, %s136
  $region4: #{_lambda_.8} parent=0 // loop_header_branch
    %13 = sbr.rel (%p11) target = $region8
  $region5: #{_lambda_.8} parent=0 // loop_body
    %s15 = ssub.s32 %s10, 1
    %s16 = ssub.s32 %s10, 2
    %s23 = sadd.s32 1, %s18
    %p24 = scmp.ge.s32.totalorder %s23, 1
    %s25 = scalar_select %p24, 0, %s23
    %s26 = sadd.s32 1, %s17
    %s27 = scalar_select %p24, %s26, %s17
    %p28 = scmp.ge.s32.totalorder %s27, 2
    %s29 = scalar_select %p28, 0, %s27
    %s30 = ssub.s32 %s17, %s29
    %s31 = ssub.s32 %s18, %s25
    %s32 = sor.u32 %s30, %s31
    %p33 = scmp.eq.s32.totalorder %s32, 0
    %s35 = sadd.s32 %s34, 1
    %s36 = scalar_select %p33, %s34, %s35
    %p39 = pneg %p33
    %p40 = scmp.eq.s32.totalorder %s10, 1
    %p41 = por %p39, %p40
    %p42 = scmp.ne.s32.totalorder %s34, %s37
    %p43 = scmp.eq.s32.totalorder %s10, 0
    %p44 = por %p42, %p43
    %p45 = scmp.ne.s32.totalorder %s34, %s37
    %p46 = scmp.eq.s32.totalorder %s15, 1
    %p47 = por %p45, %p46
    %p48 = scmp.ne.s32.totalorder %s37, %s38
    %p49 = scmp.eq.s32.totalorder %s15, 0
    %p50 = por %p48, %p49
    %p51 = scmp.ne.s32.totalorder %s37, %s38
    %p52 = scmp.eq.s32.totalorder %s16, 1
    %p53 = por %p51, %p52
    %p55 = scmp.ne.s32.totalorder %s38, %s54
    %p56 = scmp.eq.s32.totalorder %s16, 0
    %p57 = por %p55, %p56
    %s58 = ssub.s32 %s17, %s29
    %s59 = ssub.s32 %s18, %s25
    %s60 = sor.u32 %s58, %s59
    %p61 = scmp.eq.s32.totalorder %s60, 0
    %s63 = sadd.s32 %s62, 1
    %s64 = scalar_select %p61, %s62, %s63
    %p67 = pneg %p61
    %p68 = scmp.eq.s32.totalorder %s10, 1
    %p69 = por %p67, %p68
    %p70 = scmp.ne.s32.totalorder %s62, %s65
    %p71 = scmp.eq.s32.totalorder %s10, 0
    %p72 = por %p70, %p71
    %p73 = scmp.ne.s32.totalorder %s62, %s65
    %p74 = scmp.eq.s32.totalorder %s15, 1
    %p75 = por %p73, %p74
    %p76 = scmp.ne.s32.totalorder %s65, %s66
    %p77 = scmp.eq.s32.totalorder %s15, 0
    %p78 = por %p76, %p77
    %p79 = scmp.ne.s32.totalorder %s65, %s66
    %p80 = scmp.eq.s32.totalorder %s16, 1
    %p81 = por %p79, %p80
    %p83 = scmp.ne.s32.totalorder %s66, %s82
    %p84 = scmp.eq.s32.totalorder %s16, 0
    %p85 = por %p83, %p84
    %s87 = sadd.s32 %s86, 1
    %p90 = scmp.eq.s32.totalorder %s10, 1
    %p91 = scmp.ne.s32.totalorder %s86, %s88
    %p92 = scmp.eq.s32.totalorder %s10, 0
    %p93 = por %p91, %p92
    %p94 = scmp.ne.s32.totalorder %s86, %s88
    %p95 = scmp.eq.s32.totalorder %s15, 1
    %p96 = por %p94, %p95
    %p97 = scmp.ne.s32.totalorder %s88, %s89
    %p98 = scmp.eq.s32.totalorder %s15, 0
    %p99 = por %p97, %p98
    %p100 = scmp.ne.s32.totalorder %s88, %s89
    %p101 = scmp.eq.s32.totalorder %s16, 1
    %p102 = por %p100, %p101
    %p104 = scmp.ne.s32.totalorder %s89, %s103
    %p105 = scmp.eq.s32.totalorder %s16, 0
    %p106 = por %p104, %p105
    %s108 = sadd.s32 %s107, 1
    %p111 = scmp.eq.s32.totalorder %s10, 1
    %p112 = scmp.ne.s32.totalorder %s107, %s109
    %p113 = scmp.eq.s32.totalorder %s10, 0
    %p114 = por %p112, %p113
    %p115 = scmp.ne.s32.totalorder %s107, %s109
    %p116 = scmp.eq.s32.totalorder %s15, 1
    %p117 = por %p115, %p116
    %p118 = scmp.ne.s32.totalorder %s109, %s110
    %p119 = scmp.eq.s32.totalorder %s15, 0
    %p120 = por %p118, %p119
    %p121 = scmp.ne.s32.totalorder %s109, %s110
    %p122 = scmp.eq.s32.totalorder %s16, 1
    %p123 = por %p121, %p122
    %p125 = scmp.ne.s32.totalorder %s110, %s124
    %p126 = scmp.eq.s32.totalorder %s16, 0
    %p127 = por %p125, %p126
    %s128 = ssub.s32 %s17, %s29
    %s129 = ssub.s32 %s18, %s25
    %s130 = sor.u32 %s128, %s129
    %p131 = scmp.eq.s32.totalorder %s130, 0
    %s133 = sadd.s32 %s132, 1
    %s134 = scalar_select %p131, %s132, %s133
    %p137 = pneg %p131
    %p138 = scmp.eq.s32.totalorder %s10, 1
    %p139 = por %p137, %p138
    %p140 = scmp.ne.s32.totalorder %s132, %s135
    %p141 = scmp.eq.s32.totalorder %s10, 0
    %p142 = por %p140, %p141
    %p143 = scmp.ne.s32.totalorder %s132, %s135
    %p144 = scmp.eq.s32.totalorder %s15, 1
    %p145 = por %p143, %p144
    %p146 = scmp.ne.s32.totalorder %s135, %s136
    %p147 = scmp.eq.s32.totalorder %s15, 0
    %p148 = por %p146, %p147
    %p149 = scmp.ne.s32.totalorder %s135, %s136
    %p150 = scmp.eq.s32.totalorder %s16, 1
    %p151 = por %p149, %p150
    %p153 = scmp.ne.s32.totalorder %s136, %s152
    %p154 = scmp.eq.s32.totalorder %s16, 0
    %p155 = por %p153, %p154
    %p156 = scmp.le.s32.totalorder 1, %s10
    %p157 = scmp.lt.s32.totalorder %s10, 3
    %p158 = pnand %p156, %p157
    %p159 = pneg %p158
    // Predicated region
    $region9: #{_lambda_.8} parent=5 // pred_check
      _
    $region10: #{_lambda_.8} parent=5 // pred_check_branch
      %161 = sbr.rel (%p158) target = $region12
    $region11: #{_lambda_.8} parent=5 // pred_region
      %s162 = ssub.s32 %s10, 1
      // Predicated region
      $region13: #{_lambda_.8} parent=11 // pred_check
        %p163 = pneg %p99
      $region14: #{_lambda_.8} parent=11 // pred_check_branch
        %165 = sbr.rel (%p163) target = $region16
      $region15: #{_lambda_.8} parent=11 // pred_region
        _
      $region16: #{_lambda_.8} parent=11 // pred_fallthru
        _
      // Predicated region
      $region17: #{_lambda_.8} parent=11 // pred_check
        %p166 = pneg %p120
      $region18: #{_lambda_.8} parent=11 // pred_check_branch
        %168 = sbr.rel (%p166) target = $region20
      $region19: #{_lambda_.8} parent=11 // pred_region
        _
      $region20: #{_lambda_.8} parent=11 // pred_fallthru
        _
    $region12: #{_lambda_.8} parent=5 // pred_fallthru
      _
    %p169 = scmp.lt.s32.totalorder %s10, 2
    // Predicated region
    $region21: #{_lambda_.8} parent=5 // pred_check
      %p170 = pneg %p169
    $region22: #{_lambda_.8} parent=5 // pred_check_branch
      %172 = sbr.rel (%p170) target = $region24
    $region23: #{_lambda_.8} parent=5 // pred_region
      // Predicated region
      $region25: #{_lambda_.8} parent=23 // pred_check
        %p173 = pneg %p44
      $region26: #{_lambda_.8} parent=23 // pred_check_branch
        %175 = sbr.rel (%p173) target = $region28
      $region27: #{_lambda_.8} parent=23 // pred_region
        %s176 = smul.u32 32, %s18
        %p177 = scmp.lt.s32.totalorder %s17, 1
        %s178 = scalar_select %p177, %s17, 1
        %p179 = scmp.lt.s32.totalorder %s176, 31
        %s180 = scalar_select %p179, %s176, 31
        %s181 = smul.addr %s178, 192
        %s182 = sadd.s32 %s180, %s181
        %s183 = smul.addr %s182, 8
        %s184 = scalar_lea.vmem %s0, %s183
        %s185 = smul.u32 32, %s18
      $region28: #{_lambda_.8} parent=23 // pred_fallthru
        _
      // Predicated region
      $region29: #{_lambda_.8} parent=23 // pred_check
        %p186 = pneg %p72
      $region30: #{_lambda_.8} parent=23 // pred_check_branch
        %188 = sbr.rel (%p186) target = $region32
      $region31: #{_lambda_.8} parent=23 // pred_region
        %s189 = smul.u32 32, %s18
        %p190 = scmp.lt.s32.totalorder %s17, 1
        %s191 = scalar_select %p190, %s17, 1
        %p192 = scmp.lt.s32.totalorder %s189, 31
        %s193 = scalar_select %p192, %s189, 31
        %s194 = smul.addr %s191, 64
        %s195 = sadd.s32 %s193, %s194
        %s196 = smul.addr %s195, 8
        %s197 = scalar_lea.vmem %s1, %s196
        %s198 = smul.u32 32, %s18
      $region32: #{_lambda_.8} parent=23 // pred_fallthru
        _
    $region24: #{_lambda_.8} parent=5 // pred_fallthru
      _
    %p199 = scmp.le.s32.totalorder 1, %s10
    %p200 = scmp.lt.s32.totalorder %s10, 3
    %p201 = pnand %p199, %p200
    %p202 = pneg %p201
    // Predicated region
    $region33: #{_lambda_.8} parent=5 // pred_check
      _
    $region34: #{_lambda_.8} parent=5 // pred_check_branch
      %204 = sbr.rel (%p201) target = $region36
    $region35: #{_lambda_.8} parent=5 // pred_region
      %s205 = ssub.s32 %s10, 1
      %s206 = smul.u32 32, %s20
      %p207 = scmp.lt.s32.totalorder %s19, 1
      %s208 = scalar_select %p207, %s19, 1
      %p209 = scmp.lt.s32.totalorder %s206, 31
      %s210 = scalar_select %p209, %s206, 31
      %s211 = smul.addr %s208, 192
      %s212 = sadd.s32 %s210, %s211
      %s213 = smul.addr %s212, 8
      %s214 = scalar_lea.vmem %s0, %s213
      %p215 = pneg %p50
      %p216 = pneg %p47
      %s217 = smul.u32 32, %s20
      %p218 = scmp.lt.s32.totalorder %s19, 1
      %s219 = scalar_select %p218, %s19, 1
      %p220 = scmp.lt.s32.totalorder %s217, 31
      %s221 = scalar_select %p220, %s217, 31
      %s222 = smul.addr %s219, 64
      %s223 = sadd.s32 %s221, %s222
      %s224 = smul.addr %s223, 8
      %s225 = scalar_lea.vmem %s1, %s224
      %p226 = pneg %p78
      %p227 = pneg %p75
      %p228 = pneg %p99
      %p229 = pneg %p96
      %p230 = pneg %p120
      %p231 = pneg %p117
      %p232 = pneg %p148
      %p233 = pneg %p145
      %s234 = smul.u32 32, %s20
      %p235 = scmp.lt.s32.totalorder %s19, 1
      %s236 = scalar_select %p235, %s19, 1
      %p237 = scmp.lt.s32.totalorder %s234, 31
      %s238 = scalar_select %p237, %s234, 31
      %s239 = smul.addr %s236, 64
      %s240 = sadd.s32 %s238, %s239
      %s241 = smul.addr %s240, 8
      %s242 = scalar_lea.vmem %s4, %s241
      %s243 = smul.u32 32, %s20
      %p244 = scmp.lt.s32.totalorder %s19, 1
      %s245 = scalar_select %p244, %s19, 1
      %p246 = scmp.lt.s32.totalorder %s243, 31
      %s247 = scalar_select %p246, %s243, 31
      %s248 = smul.addr %s245, 192
      %s249 = sadd.s32 %s247, %s248
      %s250 = smul.addr %s249, 8
      %s251 = scalar_lea.vmem %s0, %s250
      %s252 = smul.u32 32, %s20
      %s253 = smul.u32 32, %s20
      %p254 = scmp.lt.s32.totalorder %s19, 1
      %s255 = scalar_select %p254, %s19, 1
      %p256 = scmp.lt.s32.totalorder %s253, 31
      %s257 = scalar_select %p256, %s253, 31
      %s258 = smul.addr %s255, 64
      %s259 = sadd.s32 %s257, %s258
      %s260 = smul.addr %s259, 8
      %s261 = scalar_lea.vmem %s1, %s260
      %s262 = smul.u32 32, %s20
      %s263 = smul.u32 32, %s20
      %p264 = scmp.lt.s32.totalorder %s19, 1
      %s265 = scalar_select %p264, %s19, 1
      %p266 = scmp.lt.s32.totalorder %s263, 31
      %s267 = scalar_select %p266, %s263, 31
      %s268 = smul.addr %s265, 64
      %s269 = sadd.s32 %s267, %s268
      %s270 = smul.addr %s269, 8
      %s271 = scalar_lea.vmem %s4, %s270
      %s272 = smul.u32 32, %s20
      %v273 = vld [vmem:[%s2] sm:$0xff]
      %v274 = vld [vmem:[%s2 + $0x8] sm:$0xff]
      %v275 = vld [vmem:[%s251] sm:$0xff]
      %v276 = vld [vmem:[%s251 + $0x8] sm:$0xff]
      %v277 = vld [vmem:[%s251 + $0x10] sm:$0xff]
      %v278 = vld [vmem:[%s251 + $0x18] sm:$0xff]
      %v279 = vld [vmem:[%s251 + $0x20] sm:$0xff]
      %v280 = vld [vmem:[%s251 + $0x28] sm:$0xff]
      %v281 = vld [vmem:[%s251 + $0x30] sm:$0xff]
      %v282 = vld [vmem:[%s251 + $0x38] sm:$0xff]
      %v283 = vld [vmem:[%s251 + $0x40] sm:$0xff]
      %v284 = vld [vmem:[%s251 + $0x48] sm:$0xff]
      %v285 = vld [vmem:[%s251 + $0x50] sm:$0xff]
      %v286 = vld [vmem:[%s251 + $0x58] sm:$0xff]
      %v287 = vld [vmem:[%s251 + $0x60] sm:$0xff]
      %v288 = vld [vmem:[%s251 + $0x68] sm:$0xff]
      %v289 = vld [vmem:[%s251 + $0x70] sm:$0xff]
      %v290 = vld [vmem:[%s251 + $0x78] sm:$0xff]
      %v291 = vld [vmem:[%s251 + $0x80] sm:$0xff]
      %v292 = vld [vmem:[%s251 + $0x88] sm:$0xff]
      %v293 = vld [vmem:[%s251 + $0x90] sm:$0xff]
      %v294 = vld [vmem:[%s251 + $0x98] sm:$0xff]
      %v295 = vld [vmem:[%s251 + $0xa0] sm:$0xff]
      %v296 = vld [vmem:[%s251 + $0xa8] sm:$0xff]
      %v297 = vld [vmem:[%s251 + $0xb0] sm:$0xff]
      %v298 = vld [vmem:[%s251 + $0xb8] sm:$0xff]
      %v299 = vld [vmem:[%s251 + $0xc0] sm:$0xff]
      %v300 = vld [vmem:[%s251 + $0xc8] sm:$0xff]
      %v301 = vld [vmem:[%s251 + $0xd0] sm:$0xff]
      %v302 = vld [vmem:[%s251 + $0xd8] sm:$0xff]
      %v303 = vld [vmem:[%s251 + $0xe0] sm:$0xff]
      %v304 = vld [vmem:[%s251 + $0xe8] sm:$0xff]
      %v305 = vld [vmem:[%s251 + $0xf0] sm:$0xff]
      %v306 = vld [vmem:[%s251 + $0xf8] sm:$0xff]
      %v307 = vld [vmem:[%s251 + $0x100] sm:$0xff]
      %v308 = vld [vmem:[%s251 + $0x108] sm:$0xff]
      %v309 = vld [vmem:[%s251 + $0x110] sm:$0xff]
      %v310 = vld [vmem:[%s251 + $0x118] sm:$0xff]
      %v311 = vld [vmem:[%s251 + $0x120] sm:$0xff]
      %v312 = vld [vmem:[%s251 + $0x128] sm:$0xff]
      %v313 = vld [vmem:[%s251 + $0x130] sm:$0xff]
      %v314 = vld [vmem:[%s251 + $0x138] sm:$0xff]
      %v315 = vld [vmem:[%s251 + $0x140] sm:$0xff]
      %v316 = vld [vmem:[%s251 + $0x148] sm:$0xff]
      %v317 = vld [vmem:[%s251 + $0x150] sm:$0xff]
      %v318 = vld [vmem:[%s251 + $0x158] sm:$0xff]
      %v319 = vld [vmem:[%s251 + $0x160] sm:$0xff]
      %v320 = vld [vmem:[%s251 + $0x168] sm:$0xff]
      %v321 = vld [vmem:[%s251 + $0x170] sm:$0xff]
      %v322 = vld [vmem:[%s251 + $0x178] sm:$0xff]
      %v323 = vld [vmem:[%s251 + $0x180] sm:$0xff]
      %v324 = vld [vmem:[%s251 + $0x188] sm:$0xff]
      %v325 = vld [vmem:[%s251 + $0x190] sm:$0xff]
      %v326 = vld [vmem:[%s251 + $0x198] sm:$0xff]
      %v327 = vld [vmem:[%s251 + $0x1a0] sm:$0xff]
      %v328 = vld [vmem:[%s251 + $0x1a8] sm:$0xff]
      %v329 = vld [vmem:[%s251 + $0x1b0] sm:$0xff]
      %v330 = vld [vmem:[%s251 + $0x1b8] sm:$0xff]
      %v331 = vld [vmem:[%s251 + $0x1c0] sm:$0xff]
      %v332 = vld [vmem:[%s251 + $0x1c8] sm:$0xff]
      %v333 = vld [vmem:[%s251 + $0x1d0] sm:$0xff]
      %v334 = vld [vmem:[%s251 + $0x1d8] sm:$0xff]
      %v335 = vld [vmem:[%s251 + $0x1e0] sm:$0xff]
      %v336 = vld [vmem:[%s251 + $0x1e8] sm:$0xff]
      %v337 = vld [vmem:[%s251 + $0x1f0] sm:$0xff]
      %v338 = vld [vmem:[%s251 + $0x1f8] sm:$0xff]
      %v339 = vld [vmem:[%s251 + $0x200] sm:$0xff]
      %v340 = vld [vmem:[%s251 + $0x208] sm:$0xff]
      %v341 = vld [vmem:[%s251 + $0x210] sm:$0xff]
      %v342 = vld [vmem:[%s251 + $0x218] sm:$0xff]
      %v343 = vld [vmem:[%s251 + $0x220] sm:$0xff]
      %v344 = vld [vmem:[%s251 + $0x228] sm:$0xff]
      %v345 = vld [vmem:[%s251 + $0x230] sm:$0xff]
      %v346 = vld [vmem:[%s251 + $0x238] sm:$0xff]
      %v347 = vld [vmem:[%s251 + $0x240] sm:$0xff]
      %v348 = vld [vmem:[%s251 + $0x248] sm:$0xff]
      %v349 = vld [vmem:[%s251 + $0x250] sm:$0xff]
      %v350 = vld [vmem:[%s251 + $0x258] sm:$0xff]
      %v351 = vld [vmem:[%s251 + $0x260] sm:$0xff]
      %v352 = vld [vmem:[%s251 + $0x268] sm:$0xff]
      %v353 = vld [vmem:[%s251 + $0x270] sm:$0xff]
      %v354 = vld [vmem:[%s251 + $0x278] sm:$0xff]
      %v355 = vld [vmem:[%s251 + $0x280] sm:$0xff]
      %v356 = vld [vmem:[%s251 + $0x288] sm:$0xff]
      %v357 = vld [vmem:[%s251 + $0x290] sm:$0xff]
      %v358 = vld [vmem:[%s251 + $0x298] sm:$0xff]
      %v359 = vld [vmem:[%s251 + $0x2a0] sm:$0xff]
      %v360 = vld [vmem:[%s251 + $0x2a8] sm:$0xff]
      %v361 = vld [vmem:[%s251 + $0x2b0] sm:$0xff]
      %v362 = vld [vmem:[%s251 + $0x2b8] sm:$0xff]
      %v363 = vld [vmem:[%s251 + $0x2c0] sm:$0xff]
      %v364 = vld [vmem:[%s251 + $0x2c8] sm:$0xff]
      %v365 = vld [vmem:[%s251 + $0x2d0] sm:$0xff]
      %v366 = vld [vmem:[%s251 + $0x2d8] sm:$0xff]
      %v367 = vld [vmem:[%s251 + $0x2e0] sm:$0xff]
      %v368 = vld [vmem:[%s251 + $0x2e8] sm:$0xff]
      %v369 = vld [vmem:[%s251 + $0x2f0] sm:$0xff]
      %v370 = vld [vmem:[%s251 + $0x2f8] sm:$0xff]
      %v371 = vld [vmem:[%s251 + $0x300] sm:$0xff]
      %v372 = vld [vmem:[%s251 + $0x308] sm:$0xff]
      %v373 = vld [vmem:[%s251 + $0x310] sm:$0xff]
      %v374 = vld [vmem:[%s251 + $0x318] sm:$0xff]
      %v375 = vld [vmem:[%s251 + $0x320] sm:$0xff]
      %v376 = vld [vmem:[%s251 + $0x328] sm:$0xff]
      %v377 = vld [vmem:[%s251 + $0x330] sm:$0xff]
      %v378 = vld [vmem:[%s251 + $0x338] sm:$0xff]
      %v379 = vld [vmem:[%s251 + $0x340] sm:$0xff]
      %v380 = vld [vmem:[%s251 + $0x348] sm:$0xff]
      %v381 = vld [vmem:[%s251 + $0x350] sm:$0xff]
      %v382 = vld [vmem:[%s251 + $0x358] sm:$0xff]
      %v383 = vld [vmem:[%s251 + $0x360] sm:$0xff]
      %v384 = vld [vmem:[%s251 + $0x368] sm:$0xff]
      %v385 = vld [vmem:[%s251 + $0x370] sm:$0xff]
      %v386 = vld [vmem:[%s251 + $0x378] sm:$0xff]
      %v387 = vld [vmem:[%s251 + $0x380] sm:$0xff]
      %v388 = vld [vmem:[%s251 + $0x388] sm:$0xff]
      %v389 = vld [vmem:[%s251 + $0x390] sm:$0xff]
      %v390 = vld [vmem:[%s251 + $0x398] sm:$0xff]
      %v391 = vld [vmem:[%s251 + $0x3a0] sm:$0xff]
      %v392 = vld [vmem:[%s251 + $0x3a8] sm:$0xff]
      %v393 = vld [vmem:[%s251 + $0x3b0] sm:$0xff]
      %v394 = vld [vmem:[%s251 + $0x3b8] sm:$0xff]
      %v395 = vld [vmem:[%s251 + $0x3c0] sm:$0xff]
      %v396 = vld [vmem:[%s251 + $0x3c8] sm:$0xff]
      %v397 = vld [vmem:[%s251 + $0x3d0] sm:$0xff]
      %v398 = vld [vmem:[%s251 + $0x3d8] sm:$0xff]
      %v399 = vld [vmem:[%s251 + $0x3e0] sm:$0xff]
      %v400 = vld [vmem:[%s251 + $0x3e8] sm:$0xff]
      %v401 = vld [vmem:[%s251 + $0x3f0] sm:$0xff]
      %v402 = vld [vmem:[%s251 + $0x3f8] sm:$0xff]
      %v403 = vld [vmem:[%s251 + $0x400] sm:$0xff]
      %v404 = vld [vmem:[%s251 + $0x408] sm:$0xff]
      %v405 = vld [vmem:[%s251 + $0x410] sm:$0xff]
      %v406 = vld [vmem:[%s251 + $0x418] sm:$0xff]
      %v407 = vld [vmem:[%s251 + $0x420] sm:$0xff]
      %v408 = vld [vmem:[%s251 + $0x428] sm:$0xff]
      %v409 = vld [vmem:[%s251 + $0x430] sm:$0xff]
      %v410 = vld [vmem:[%s251 + $0x438] sm:$0xff]
      %v411 = vld [vmem:[%s251 + $0x440] sm:$0xff]
      %v412 = vld [vmem:[%s251 + $0x448] sm:$0xff]
      %v413 = vld [vmem:[%s251 + $0x450] sm:$0xff]
      %v414 = vld [vmem:[%s251 + $0x458] sm:$0xff]
      %v415 = vld [vmem:[%s251 + $0x460] sm:$0xff]
      %v416 = vld [vmem:[%s251 + $0x468] sm:$0xff]
      %v417 = vld [vmem:[%s251 + $0x470] sm:$0xff]
      %v418 = vld [vmem:[%s251 + $0x478] sm:$0xff]
      %v419 = vld [vmem:[%s251 + $0x480] sm:$0xff]
      %v420 = vld [vmem:[%s251 + $0x488] sm:$0xff]
      %v421 = vld [vmem:[%s251 + $0x490] sm:$0xff]
      %v422 = vld [vmem:[%s251 + $0x498] sm:$0xff]
      %v423 = vld [vmem:[%s251 + $0x4a0] sm:$0xff]
      %v424 = vld [vmem:[%s251 + $0x4a8] sm:$0xff]
      %v425 = vld [vmem:[%s251 + $0x4b0] sm:$0xff]
      %v426 = vld [vmem:[%s251 + $0x4b8] sm:$0xff]
      %v427 = vld [vmem:[%s251 + $0x4c0] sm:$0xff]
      %v428 = vld [vmem:[%s251 + $0x4c8] sm:$0xff]
      %v429 = vld [vmem:[%s251 + $0x4d0] sm:$0xff]
      %v430 = vld [vmem:[%s251 + $0x4d8] sm:$0xff]
      %v431 = vld [vmem:[%s251 + $0x4e0] sm:$0xff]
      %v432 = vld [vmem:[%s251 + $0x4e8] sm:$0xff]
      %v433 = vld [vmem:[%s251 + $0x4f0] sm:$0xff]
      %v434 = vld [vmem:[%s251 + $0x4f8] sm:$0xff]
      %v435 = vld [vmem:[%s251 + $0x500] sm:$0xff]
      %v436 = vld [vmem:[%s251 + $0x508] sm:$0xff]
      %v437 = vld [vmem:[%s251 + $0x510] sm:$0xff]
      %v438 = vld [vmem:[%s251 + $0x518] sm:$0xff]
      %v439 = vld [vmem:[%s251 + $0x520] sm:$0xff]
      %v440 = vld [vmem:[%s251 + $0x528] sm:$0xff]
      %v441 = vld [vmem:[%s251 + $0x530] sm:$0xff]
      %v442 = vld [vmem:[%s251 + $0x538] sm:$0xff]
      %v443 = vld [vmem:[%s251 + $0x540] sm:$0xff]
      %v444 = vld [vmem:[%s251 + $0x548] sm:$0xff]
      %v445 = vld [vmem:[%s251 + $0x550] sm:$0xff]
      %v446 = vld [vmem:[%s251 + $0x558] sm:$0xff]
      %v447 = vld [vmem:[%s251 + $0x560] sm:$0xff]
      %v448 = vld [vmem:[%s251 + $0x568] sm:$0xff]
      %v449 = vld [vmem:[%s251 + $0x570] sm:$0xff]
      %v450 = vld [vmem:[%s251 + $0x578] sm:$0xff]
      %v451 = vld [vmem:[%s251 + $0x580] sm:$0xff]
      %v452 = vld [vmem:[%s251 + $0x588] sm:$0xff]
      %v453 = vld [vmem:[%s251 + $0x590] sm:$0xff]
      %v454 = vld [vmem:[%s251 + $0x598] sm:$0xff]
      %v455 = vld [vmem:[%s251 + $0x5a0] sm:$0xff]
      %v456 = vld [vmem:[%s251 + $0x5a8] sm:$0xff]
      %v457 = vld [vmem:[%s251 + $0x5b0] sm:$0xff]
      %v458 = vld [vmem:[%s251 + $0x5b8] sm:$0xff]
      %v459 = vld [vmem:[%s251 + $0x5c0] sm:$0xff]
      %v460 = vld [vmem:[%s251 + $0x5c8] sm:$0xff]
      %v461 = vld [vmem:[%s251 + $0x5d0] sm:$0xff]
      %v462 = vld [vmem:[%s251 + $0x5d8] sm:$0xff]
      %v463 = vld [vmem:[%s251 + $0x5e0] sm:$0xff]
      %v464 = vld [vmem:[%s251 + $0x5e8] sm:$0xff]
      %v465 = vld [vmem:[%s251 + $0x5f0] sm:$0xff]
      %v466 = vld [vmem:[%s251 + $0x5f8] sm:$0xff]
      %v467 = vld [vmem:[%s3] sm:$0xff]
      %v468 = vld [vmem:[%s3 + $0x8] sm:$0xff]
      %470 = vset.pattern.permute.xlu0 0
      %471 = vperm.xlu0 %470, %v467
      %v472 = vpop.permute.xlu0 %471
      %475 = vset.pattern.permute.xlu0 0
      %476 = vperm.xlu0 %475, %v468
      %v477 = vpop.permute.xlu0 %476
      %vm479 = vcmask 392192
      %v481 = vsel %vm479, %v273, 0
      %v484 = vsel %vm479, %v274, 0
      %486 = vmatprep.subr.mxu0 %v276
      %487 = vmatpush1.msra.mxu0 %v275
      %488 = vmatprep.subr.mxu0 %v308
      %489 = vmatpush1.msra.mxu0 %v307
      %490 = vmatprep.subr.mxu0 %v340
      %491 = vmatpush1.msra.mxu0 %v339
      %492 = vmatprep.subr.mxu0 %v372
      %493 = vmatpush1.msra.mxu0 %v371
      %494 = vmatprep.subr.mxu0 %v404
      %495 = vmatpush1.msra.mxu0 %v403
      %496 = vmatprep.subr.mxu0 %v436
      %497 = vmatpush1.msra.mxu0 %v435
      %498 = vmatprep.subr.mxu0 0.0
      %499 = vmatpush1.msra.mxu0 0.0
      %500 = vmatprep.subr.mxu0 0.0
      %501 = vmatpush1.msra.mxu0 0.0
      %502 = vmatprep.subr.mxu0 0.0
      %503 = vmatpush1.msra.mxu0 0.0
      %504 = vmatprep.subr.mxu0 0.0
      %505 = vmatpush1.msra.mxu0 0.0
      %506 = vmatprep.subr.mxu0 0.0
      %507 = vmatpush1.msra.mxu0 0.0
      %508 = vmatprep.subr.mxu0 0.0
      %509 = vmatpush1.msra.mxu0 0.0
      %510 = vmatprep.subr.mxu0 0.0
      %511 = vmatpush1.msra.mxu0 0.0
      %512 = vmatprep.subr.mxu0 0.0
      %513 = vmatpush1.msra.mxu0 0.0
      %514 = vmatprep.subr.mxu0 0.0
      %515 = vmatpush1.msra.mxu0 0.0
      %516 = vmatprep.subr.mxu0 0.0
      %517 = vmatpush1.msra.mxu0 0.0
      %518 = vmatprep.subr.mxu0 0.0
      %519 = vmatpush1.msra.mxu0 0.0
      %520 = vmatprep.subr.mxu0 0.0
      %521 = vmatpush1.msra.mxu0 0.0
      %522 = vmatprep.subr.mxu0 0.0
      %523 = vmatpush1.msra.mxu0 0.0
      %524 = vmatprep.subr.mxu0 0.0
      %525 = vmatpush1.msra.mxu0 0.0
      %526 = vmatprep.subr.mxu0 0.0
      %527 = vmatpush1.msra.mxu0 0.0
      %528 = vmatprep.subr.mxu0 0.0
      %529 = vmatpush1.msra.mxu0 0.0
      %530 = vmatprep.subr.mxu0 0.0
      %531 = vmatpush1.msra.mxu0 0.0
      %532 = vmatprep.subr.mxu0 0.0
      %533 = vmatpush1.msra.mxu0 0.0
      %534 = vmatprep.subr.mxu0 0.0
      %535 = vmatpush1.msra.mxu0 0.0
      %536 = vmatprep.subr.mxu0 0.0
      %537 = vmatpush1.msra.mxu0 0.0
      %538 = vmatprep.subr.mxu0 0.0
      %539 = vmatpush1.msra.mxu0 0.0
      %540 = vmatprep.subr.mxu0 0.0
      %541 = vmatpush1.msra.mxu0 0.0
      %542 = vmatprep.subr.mxu0 0.0
      %543 = vmatpush1.msra.mxu0 0.0
      %544 = vmatprep.subr.mxu0 0.0
      %545 = vmatpush1.msra.mxu0 0.0
      %546 = vmatprep.subr.mxu0 0.0
      %547 = vmatpush1.msra.mxu0 0.0
      %548 = vmatprep.subr.mxu0 0.0
      %549 = vmatpush1.msra.mxu0 0.0
      %550 = vmatprep.mubr.f32.mxu0 0.0
      %551 = vmatmul.mubr.f32.gmra.mrb[0].mxu0 %v481
      %v552 = vpop.f32.mrb[0].mxu0
      %v553 = vadd.f32 %v472, %v552
      %v554 = vpop.f32.mrb[0].mxu0
      %v555 = vadd.f32 %v472, %v554
      %556 = vmatprep.mubr.f32.mxu0 0.0
      %557 = vmatmul.mubr.f32.gmra.mrb[0].mxu0 %v484
      %v558 = vpop.f32.mrb[0].mxu0
      %v559 = vadd.f32 %v477, %v558
      %v560 = vpop.f32.mrb[0].mxu0
      %v561 = vadd.f32 %v477, %v560
      %562 = vdwg.mxu0
      %563 = vmatprep.subr.mxu0 %v278
      %564 = vmatpush1.msra.mxu0 %v277
      %565 = vmatprep.subr.mxu0 %v310
      %566 = vmatpush1.msra.mxu0 %v309
      %567 = vmatprep.subr.mxu0 %v342
      %568 = vmatpush1.msra.mxu0 %v341
      %569 = vmatprep.subr.mxu0 %v374
      %570 = vmatpush1.msra.mxu0 %v373
      %571 = vmatprep.subr.mxu0 %v406
      %572 = vmatpush1.msra.mxu0 %v405
      %573 = vmatprep.subr.mxu0 %v438
      %574 = vmatpush1.msra.mxu0 %v437
      %575 = vmatprep.subr.mxu0 0.0
      %576 = vmatpush1.msra.mxu0 0.0
      %577 = vmatprep.subr.mxu0 0.0
      %578 = vmatpush1.msra.mxu0 0.0
      %579 = vmatprep.subr.mxu0 0.0
      %580 = vmatpush1.msra.mxu0 0.0
      %581 = vmatprep.subr.mxu0 0.0
      %582 = vmatpush1.msra.mxu0 0.0
      %583 = vmatprep.subr.mxu0 0.0
      %584 = vmatpush1.msra.mxu0 0.0
      %585 = vmatprep.subr.mxu0 0.0
      %586 = vmatpush1.msra.mxu0 0.0
      %587 = vmatprep.subr.mxu0 0.0
      %588 = vmatpush1.msra.mxu0 0.0
      %589 = vmatprep.subr.mxu0 0.0
      %590 = vmatpush1.msra.mxu0 0.0
      %591 = vmatprep.subr.mxu0 0.0
      %592 = vmatpush1.msra.mxu0 0.0
      %593 = vmatprep.subr.mxu0 0.0
      %594 = vmatpush1.msra.mxu0 0.0
      %595 = vmatprep.subr.mxu0 0.0
      %596 = vmatpush1.msra.mxu0 0.0
      %597 = vmatprep.subr.mxu0 0.0
      %598 = vmatpush1.msra.mxu0 0.0
      %599 = vmatprep.subr.mxu0 0.0
      %600 = vmatpush1.msra.mxu0 0.0
      %601 = vmatprep.subr.mxu0 0.0
      %602 = vmatpush1.msra.mxu0 0.0
      %603 = vmatprep.subr.mxu0 0.0
      %604 = vmatpush1.msra.mxu0 0.0
      %605 = vmatprep.subr.mxu0 0.0
      %606 = vmatpush1.msra.mxu0 0.0
      %607 = vmatprep.subr.mxu0 0.0
      %608 = vmatpush1.msra.mxu0 0.0
      %609 = vmatprep.subr.mxu0 0.0
      %610 = vmatpush1.msra.mxu0 0.0
      %611 = vmatprep.subr.mxu0 0.0
      %612 = vmatpush1.msra.mxu0 0.0
      %613 = vmatprep.subr.mxu0 0.0
      %614 = vmatpush1.msra.mxu0 0.0
      %615 = vmatprep.subr.mxu0 0.0
      %616 = vmatpush1.msra.mxu0 0.0
      %617 = vmatprep.subr.mxu0 0.0
      %618 = vmatpush1.msra.mxu0 0.0
      %619 = vmatprep.subr.mxu0 0.0
      %620 = vmatpush1.msra.mxu0 0.0
      %621 = vmatprep.subr.mxu0 0.0
      %622 = vmatpush1.msra.mxu0 0.0
      %623 = vmatprep.subr.mxu0 0.0
      %624 = vmatpush1.msra.mxu0 0.0
      %625 = vmatprep.subr.mxu0 0.0
      %626 = vmatpush1.msra.mxu0 0.0
      %627 = vmatprep.mubr.f32.mxu0 0.0
      %628 = vmatmul.mubr.f32.gmra.mrb[0].mxu0 %v481
      %v629 = vpop.f32.mrb[0].mxu0
      %v630 = vadd.f32 %v472, %v629
      %v631 = vpop.f32.mrb[0].mxu0
      %v632 = vadd.f32 %v472, %v631
      %633 = vmatprep.mubr.f32.mxu0 0.0
      %634 = vmatmul.mubr.f32.gmra.mrb[0].mxu0 %v484
      %v635 = vpop.f32.mrb[0].mxu0
      %v636 = vadd.f32 %v477, %v635
      %v637 = vpop.f32.mrb[0].mxu0
      %v638 = vadd.f32 %v477, %v637
      %639 = vdwg.mxu0
      %640 = vmatprep.subr.mxu0 %v280
      %641 = vmatpush1.msra.mxu0 %v279
      %642 = vmatprep.subr.mxu0 %v312
      %643 = vmatpush1.msra.mxu0 %v311
      %644 = vmatprep.subr.mxu0 %v344
      %645 = vmatpush1.msra.mxu0 %v343
      %646 = vmatprep.subr.mxu0 %v376
      %647 = vmatpush1.msra.mxu0 %v375
      %648 = vmatprep.subr.mxu0 %v408
      %649 = vmatpush1.msra.mxu0 %v407
      %650 = vmatprep.subr.mxu0 %v440
      %651 = vmatpush1.msra.mxu0 %v439
      %652 = vmatprep.subr.mxu0 0.0
      %653 = vmatpush1.msra.mxu0 0.0
      %654 = vmatprep.subr.mxu0 0.0
      %655 = vmatpush1.msra.mxu0 0.0
      %656 = vmatprep.subr.mxu0 0.0
      %657 = vmatpush1.msra.mxu0 0.0
      %658 = vmatprep.subr.mxu0 0.0
      %659 = vmatpush1.msra.mxu0 0.0
      %660 = vmatprep.subr.mxu0 0.0
      %661 = vmatpush1.msra.mxu0 0.0
      %662 = vmatprep.subr.mxu0 0.0
      %663 = vmatpush1.msra.mxu0 0.0
      %664 = vmatprep.subr.mxu0 0.0
      %665 = vmatpush1.msra.mxu0 0.0
      %666 = vmatprep.subr.mxu0 0.0
      %667 = vmatpush1.msra.mxu0 0.0
      %668 = vmatprep.subr.mxu0 0.0
      %669 = vmatpush1.msra.mxu0 0.0
      %670 = vmatprep.subr.mxu0 0.0
      %671 = vmatpush1.msra.mxu0 0.0
      %672 = vmatprep.subr.mxu0 0.0
      %673 = vmatpush1.msra.mxu0 0.0
      %674 = vmatprep.subr.mxu0 0.0
      %675 = vmatpush1.msra.mxu0 0.0
      %676 = vmatprep.subr.mxu0 0.0
      %677 = vmatpush1.msra.mxu0 0.0
      %678 = vmatprep.subr.mxu0 0.0
      %679 = vmatpush1.msra.mxu0 0.0
      %680 = vmatprep.subr.mxu0 0.0
      %681 = vmatpush1.msra.mxu0 0.0
      %682 = vmatprep.subr.mxu0 0.0
      %683 = vmatpush1.msra.mxu0 0.0
      %684 = vmatprep.subr.mxu0 0.0
      %685 = vmatpush1.msra.mxu0 0.0
      %686 = vmatprep.subr.mxu0 0.0
      %687 = vmatpush1.msra.mxu0 0.0
      %688 = vmatprep.subr.mxu0 0.0
      %689 = vmatpush1.msra.mxu0 0.0
      %690 = vmatprep.subr.mxu0 0.0
      %691 = vmatpush1.msra.mxu0 0.0
      %692 = vmatprep.subr.mxu0 0.0
      %693 = vmatpush1.msra.mxu0 0.0
      %694 = vmatprep.subr.mxu0 0.0
      %695 = vmatpush1.msra.mxu0 0.0
      %696 = vmatprep.subr.mxu0 0.0
      %697 = vmatpush1.msra.mxu0 0.0
      %698 = vmatprep.subr.mxu0 0.0
      %699 = vmatpush1.msra.mxu0 0.0
      %700 = vmatprep.subr.mxu0 0.0
      %701 = vmatpush1.msra.mxu0 0.0
      %702 = vmatprep.subr.mxu0 0.0
      %703 = vmatpush1.msra.mxu0 0.0
      %704 = vmatprep.mubr.f32.mxu0 0.0
      %705 = vmatmul.mubr.f32.gmra.mrb[0].mxu0 %v481
      %v706 = vpop.f32.mrb[0].mxu0
      %v707 = vadd.f32 %v472, %v706
      %v708 = vpop.f32.mrb[0].mxu0
      %v709 = vadd.f32 %v472, %v708
      %710 = vmatprep.mubr.f32.mxu0 0.0
      %711 = vmatmul.mubr.f32.gmra.mrb[0].mxu0 %v484
      %v712 = vpop.f32.mrb[0].mxu0
      %v713 = vadd.f32 %v477, %v712
      %v714 = vpop.f32.mrb[0].mxu0
      %v715 = vadd.f32 %v477, %v714
      %716 = vdwg.mxu0
      %717 = vmatprep.subr.mxu0 %v282
      %718 = vmatpush1.msra.mxu0 %v281
      %719 = vmatprep.subr.mxu0 %v314
      %720 = vmatpush1.msra.mxu0 %v313
      %721 = vmatprep.subr.mxu0 %v346
      %722 = vmatpush1.msra.mxu0 %v345
      %723 = vmatprep.subr.mxu0 %v378
      %724 = vmatpush1.msra.mxu0 %v377
      %725 = vmatprep.subr.mxu0 %v410
      %726 = vmatpush1.msra.mxu0 %v409
      %727 = vmatprep.subr.mxu0 %v442
      %728 = vmatpush1.msra.mxu0 %v441
      %729 = vmatprep.subr.mxu0 0.0
      %730 = vmatpush1.msra.mxu0 0.0
      %731 = vmatprep.subr.mxu0 0.0
      %732 = vmatpush1.msra.mxu0 0.0
      %733 = vmatprep.subr.mxu0 0.0
      %734 = vmatpush1.msra.mxu0 0.0
      %735 = vmatprep.subr.mxu0 0.0
      %736 = vmatpush1.msra.mxu0 0.0
      %737 = vmatprep.subr.mxu0 0.0
      %738 = vmatpush1.msra.mxu0 0.0
      %739 = vmatprep.subr.mxu0 0.0
      %740 = vmatpush1.msra.mxu0 0.0
      %741 = vmatprep.subr.mxu0 0.0
      %742 = vmatpush1.msra.mxu0 0.0
      %743 = vmatprep.subr.mxu0 0.0
      %744 = vmatpush1.msra.mxu0 0.0
      %745 = vmatprep.subr.mxu0 0.0
      %746 = vmatpush1.msra.mxu0 0.0
      %747 = vmatprep.subr.mxu0 0.0
      %748 = vmatpush1.msra.mxu0 0.0
      %749 = vmatprep.subr.mxu0 0.0
      %750 = vmatpush1.msra.mxu0 0.0
      %751 = vmatprep.subr.mxu0 0.0
      %752 = vmatpush1.msra.mxu0 0.0
      %753 = vmatprep.subr.mxu0 0.0
      %754 = vmatpush1.msra.mxu0 0.0
      %755 = vmatprep.subr.mxu0 0.0
      %756 = vmatpush1.msra.mxu0 0.0
      %757 = vmatprep.subr.mxu0 0.0
      %758 = vmatpush1.msra.mxu0 0.0
      %759 = vmatprep.subr.mxu0 0.0
      %760 = vmatpush1.msra.mxu0 0.0
      %761 = vmatprep.subr.mxu0 0.0
      %762 = vmatpush1.msra.mxu0 0.0
      %763 = vmatprep.subr.mxu0 0.0
      %764 = vmatpush1.msra.mxu0 0.0
      %765 = vmatprep.subr.mxu0 0.0
      %766 = vmatpush1.msra.mxu0 0.0
      %767 = vmatprep.subr.mxu0 0.0
      %768 = vmatpush1.msra.mxu0 0.0
      %769 = vmatprep.subr.mxu0 0.0
      %770 = vmatpush1.msra.mxu0 0.0
      %771 = vmatprep.subr.mxu0 0.0
      %772 = vmatpush1.msra.mxu0 0.0
      %773 = vmatprep.subr.mxu0 0.0
      %774 = vmatpush1.msra.mxu0 0.0
      %775 = vmatprep.subr.mxu0 0.0
      %776 = vmatpush1.msra.mxu0 0.0
      %777 = vmatprep.subr.mxu0 0.0
      %778 = vmatpush1.msra.mxu0 0.0
      %779 = vmatprep.subr.mxu0 0.0
      %780 = vmatpush1.msra.mxu0 0.0
      %781 = vmatprep.mubr.f32.mxu0 0.0
      %782 = vmatmul.mubr.f32.gmra.mrb[0].mxu0 %v481
      %v783 = vpop.f32.mrb[0].mxu0
      %v784 = vadd.f32 %v472, %v783
      %v785 = vpop.f32.mrb[0].mxu0
      %v786 = vadd.f32 %v472, %v785
      %787 = vmatprep.mubr.f32.mxu0 0.0
      %788 = vmatmul.mubr.f32.gmra.mrb[0].mxu0 %v484
      %v789 = vpop.f32.mrb[0].mxu0
      %v790 = vadd.f32 %v477, %v789
      %v791 = vpop.f32.mrb[0].mxu0
      %v792 = vadd.f32 %v477, %v791
      %793 = vdwg.mxu0
      %794 = vmatprep.subr.mxu0 %v284
      %795 = vmatpush1.msra.mxu0 %v283
      %796 = vmatprep.subr.mxu0 %v316
      %797 = vmatpush1.msra.mxu0 %v315
      %798 = vmatprep.subr.mxu0 %v348
      %799 = vmatpush1.msra.mxu0 %v347
      %800 = vmatprep.subr.mxu0 %v380
      %801 = vmatpush1.msra.mxu0 %v379
      %802 = vmatprep.subr.mxu0 %v412
      %803 = vmatpush1.msra.mxu0 %v411
      %804 = vmatprep.subr.mxu0 %v444
      %805 = vmatpush1.msra.mxu0 %v443
      %806 = vmatprep.subr.mxu0 0.0
      %807 = vmatpush1.msra.mxu0 0.0
      %808 = vmatprep.subr.mxu0 0.0
      %809 = vmatpush1.msra.mxu0 0.0
      %810 = vmatprep.subr.mxu0 0.0
      %811 = vmatpush1.msra.mxu0 0.0
      %812 = vmatprep.subr.mxu0 0.0
      %813 = vmatpush1.msra.mxu0 0.0
      %814 = vmatprep.subr.mxu0 0.0
      %815 = vmatpush1.msra.mxu0 0.0
      %816 = vmatprep.subr.mxu0 0.0
      %817 = vmatpush1.msra.mxu0 0.0
      %818 = vmatprep.subr.mxu0 0.0
      %819 = vmatpush1.msra.mxu0 0.0
      %820 = vmatprep.subr.mxu0 0.0
      %821 = vmatpush1.msra.mxu0 0.0
      %822 = vmatprep.subr.mxu0 0.0
      %823 = vmatpush1.msra.mxu0 0.0
      %824 = vmatprep.subr.mxu0 0.0
      %825 = vmatpush1.msra.mxu0 0.0
      %826 = vmatprep.subr.mxu0 0.0
      %827 = vmatpush1.msra.mxu0 0.0
      %828 = vmatprep.subr.mxu0 0.0
      %829 = vmatpush1.msra.mxu0 0.0
      %830 = vmatprep.subr.mxu0 0.0
      %831 = vmatpush1.msra.mxu0 0.0
      %832 = vmatprep.subr.mxu0 0.0
      %833 = vmatpush1.msra.mxu0 0.0
      %834 = vmatprep.subr.mxu0 0.0
      %835 = vmatpush1.msra.mxu0 0.0
      %836 = vmatprep.subr.mxu0 0.0
      %837 = vmatpush1.msra.mxu0 0.0
      %838 = vmatprep.subr.mxu0 0.0
      %839 = vmatpush1.msra.mxu0 0.0
      %840 = vmatprep.subr.mxu0 0.0
      %841 = vmatpush1.msra.mxu0 0.0
      %842 = vmatprep.subr.mxu0 0.0
      %843 = vmatpush1.msra.mxu0 0.0
      %844 = vmatprep.subr.mxu0 0.0
      %845 = vmatpush1.msra.mxu0 0.0
      %846 = vmatprep.subr.mxu0 0.0
      %847 = vmatpush1.msra.mxu0 0.0
      %848 = vmatprep.subr.mxu0 0.0
      %849 = vmatpush1.msra.mxu0 0.0
      %850 = vmatprep.subr.mxu0 0.0
      %851 = vmatpush1.msra.mxu0 0.0
      %852 = vmatprep.subr.mxu0 0.0
      %853 = vmatpush1.msra.mxu0 0.0
      %854 = vmatprep.subr.mxu0 0.0
      %855 = vmatpush1.msra.mxu0 0.0
      %856 = vmatprep.subr.mxu0 0.0
      %857 = vmatpush1.msra.mxu0 0.0
      %858 = vmatprep.mubr.f32.mxu0 0.0
      %859 = vmatmul.mubr.f32.gmra.mrb[0].mxu0 %v481
      %v860 = vpop.f32.mrb[0].mxu0
      %v861 = vadd.f32 %v472, %v860
      %v862 = vpop.f32.mrb[0].mxu0
      %v863 = vadd.f32 %v472, %v862
      %864 = vmatprep.mubr.f32.mxu0 0.0
      %865 = vmatmul.mubr.f32.gmra.mrb[0].mxu0 %v484
      %v866 = vpop.f32.mrb[0].mxu0
      %v867 = vadd.f32 %v477, %v866
      %v868 = vpop.f32.mrb[0].mxu0
      %v869 = vadd.f32 %v477, %v868
      %870 = vdwg.mxu0
      %871 = vmatprep.subr.mxu0 %v286
      %872 = vmatpush1.msra.mxu0 %v285
      %873 = vmatprep.subr.mxu0 %v318
      %874 = vmatpush1.msra.mxu0 %v317
      %875 = vmatprep.subr.mxu0 %v350
      %876 = vmatpush1.msra.mxu0 %v349
      %877 = vmatprep.subr.mxu0 %v382
      %878 = vmatpush1.msra.mxu0 %v381
      %879 = vmatprep.subr.mxu0 %v414
      %880 = vmatpush1.msra.mxu0 %v413
      %881 = vmatprep.subr.mxu0 %v446
      %882 = vmatpush1.msra.mxu0 %v445
      %883 = vmatprep.subr.mxu0 0.0
      %884 = vmatpush1.msra.mxu0 0.0
      %885 = vmatprep.subr.mxu0 0.0
      %886 = vmatpush1.msra.mxu0 0.0
      %887 = vmatprep.subr.mxu0 0.0
      %888 = vmatpush1.msra.mxu0 0.0
      %889 = vmatprep.subr.mxu0 0.0
      %890 = vmatpush1.msra.mxu0 0.0
      %891 = vmatprep.subr.mxu0 0.0
      %892 = vmatpush1.msra.mxu0 0.0
      %893 = vmatprep.subr.mxu0 0.0
      %894 = vmatpush1.msra.mxu0 0.0
      %895 = vmatprep.subr.mxu0 0.0
      %896 = vmatpush1.msra.mxu0 0.0
      %897 = vmatprep.subr.mxu0 0.0
      %898 = vmatpush1.msra.mxu0 0.0
      %899 = vmatprep.subr.mxu0 0.0
      %900 = vmatpush1.msra.mxu0 0.0
      %901 = vmatprep.subr.mxu0 0.0
      %902 = vmatpush1.msra.mxu0 0.0
      %903 = vmatprep.subr.mxu0 0.0
      %904 = vmatpush1.msra.mxu0 0.0
      %905 = vmatprep.subr.mxu0 0.0
      %906 = vmatpush1.msra.mxu0 0.0
      %907 = vmatprep.subr.mxu0 0.0
      %908 = vmatpush1.msra.mxu0 0.0
      %909 = vmatprep.subr.mxu0 0.0
      %910 = vmatpush1.msra.mxu0 0.0
      %911 = vmatprep.subr.mxu0 0.0
      %912 = vmatpush1.msra.mxu0 0.0
      %913 = vmatprep.subr.mxu0 0.0
      %914 = vmatpush1.msra.mxu0 0.0
      %915 = vmatprep.subr.mxu0 0.0
      %916 = vmatpush1.msra.mxu0 0.0
      %917 = vmatprep.subr.mxu0 0.0
      %918 = vmatpush1.msra.mxu0 0.0
      %919 = vmatprep.subr.mxu0 0.0
      %920 = vmatpush1.msra.mxu0 0.0
      %921 = vmatprep.subr.mxu0 0.0
      %922 = vmatpush1.msra.mxu0 0.0
      %923 = vmatprep.subr.mxu0 0.0
      %924 = vmatpush1.msra.mxu0 0.0
      %925 = vmatprep.subr.mxu0 0.0
      %926 = vmatpush1.msra.mxu0 0.0
      %927 = vmatprep.subr.mxu0 0.0
      %928 = vmatpush1.msra.mxu0 0.0
      %929 = vmatprep.subr.mxu0 0.0
      %930 = vmatpush1.msra.mxu0 0.0
      %931 = vmatprep.subr.mxu0 0.0
      %932 = vmatpush1.msra.mxu0 0.0
      %933 = vmatprep.subr.mxu0 0.0
      %934 = vmatpush1.msra.mxu0 0.0
      %935 = vmatprep.mubr.f32.mxu0 0.0
      %936 = vmatmul.mubr.f32.gmra.mrb[0].mxu0 %v481
      %v937 = vpop.f32.mrb[0].mxu0
      %v938 = vadd.f32 %v472, %v937
      %v939 = vpop.f32.mrb[0].mxu0
      %v940 = vadd.f32 %v472, %v939
      %941 = vmatprep.mubr.f32.mxu0 0.0
      %942 = vmatmul.mubr.f32.gmra.mrb[0].mxu0 %v484
      %v943 = vpop.f32.mrb[0].mxu0
      %v944 = vadd.f32 %v477, %v943
      %v945 = vpop.f32.mrb[0].mxu0
      %v946 = vadd.f32 %v477, %v945
      %947 = vdwg.mxu0
      %948 = vmatprep.subr.mxu0 %v288
      %949 = vmatpush1.msra.mxu0 %v287
      %950 = vmatprep.subr.mxu0 %v320
      %951 = vmatpush1.msra.mxu0 %v319
      %952 = vmatprep.subr.mxu0 %v352
      %953 = vmatpush1.msra.mxu0 %v351
      %954 = vmatprep.subr.mxu0 %v384
      %955 = vmatpush1.msra.mxu0 %v383
      %956 = vmatprep.subr.mxu0 %v416
      %957 = vmatpush1.msra.mxu0 %v415
      %958 = vmatprep.subr.mxu0 %v448
      %959 = vmatpush1.msra.mxu0 %v447
      %960 = vmatprep.subr.mxu0 0.0
      %961 = vmatpush1.msra.mxu0 0.0
      %962 = vmatprep.subr.mxu0 0.0
      %963 = vmatpush1.msra.mxu0 0.0
      %964 = vmatprep.subr.mxu0 0.0
      %965 = vmatpush1.msra.mxu0 0.0
      %966 = vmatprep.subr.mxu0 0.0
      %967 = vmatpush1.msra.mxu0 0.0
      %968 = vmatprep.subr.mxu0 0.0
      %969 = vmatpush1.msra.mxu0 0.0
      %970 = vmatprep.subr.mxu0 0.0
      %971 = vmatpush1.msra.mxu0 0.0
      %972 = vmatprep.subr.mxu0 0.0
      %973 = vmatpush1.msra.mxu0 0.0
      %974 = vmatprep.subr.mxu0 0.0
      %975 = vmatpush1.msra.mxu0 0.0
      %976 = vmatprep.subr.mxu0 0.0
      %977 = vmatpush1.msra.mxu0 0.0
      %978 = vmatprep.subr.mxu0 0.0
      %979 = vmatpush1.msra.mxu0 0.0
      %980 = vmatprep.subr.mxu0 0.0
      %981 = vmatpush1.msra.mxu0 0.0
      %982 = vmatprep.subr.mxu0 0.0
      %983 = vmatpush1.msra.mxu0 0.0
      %984 = vmatprep.subr.mxu0 0.0
      %985 = vmatpush1.msra.mxu0 0.0
      %986 = vmatprep.subr.mxu0 0.0
      %987 = vmatpush1.msra.mxu0 0.0
      %988 = vmatprep.subr.mxu0 0.0
      %989 = vmatpush1.msra.mxu0 0.0
      %990 = vmatprep.subr.mxu0 0.0
      %991 = vmatpush1.msra.mxu0 0.0
      %992 = vmatprep.subr.mxu0 0.0
      %993 = vmatpush1.msra.mxu0 0.0
      %994 = vmatprep.subr.mxu0 0.0
      %995 = vmatpush1.msra.mxu0 0.0
      %996 = vmatprep.subr.mxu0 0.0
      %997 = vmatpush1.msra.mxu0 0.0
      %998 = vmatprep.subr.mxu0 0.0
      %999 = vmatpush1.msra.mxu0 0.0
      %1000 = vmatprep.subr.mxu0 0.0
      %1001 = vmatpush1.msra.mxu0 0.0
      %1002 = vmatprep.subr.mxu0 0.0
      %1003 = vmatpush1.msra.mxu0 0.0
      %1004 = vmatprep.subr.mxu0 0.0
      %1005 = vmatpush1.msra.mxu0 0.0
      %1006 = vmatprep.subr.mxu0 0.0
      %1007 = vmatpush1.msra.mxu0 0.0
      %1008 = vmatprep.subr.mxu0 0.0
      %1009 = vmatpush1.msra.mxu0 0.0
      %1010 = vmatprep.subr.mxu0 0.0
      %1011 = vmatpush1.msra.mxu0 0.0
      %1012 = vmatprep.mubr.f32.mxu0 0.0
      %1013 = vmatmul.mubr.f32.gmra.mrb[0].mxu0 %v481
      %v1014 = vpop.f32.mrb[0].mxu0
      %v1015 = vadd.f32 %v472, %v1014
      %v1016 = vpop.f32.mrb[0].mxu0
      %v1017 = vadd.f32 %v472, %v1016
      %1018 = vmatprep.mubr.f32.mxu0 0.0
      %1019 = vmatmul.mubr.f32.gmra.mrb[0].mxu0 %v484
      %v1020 = vpop.f32.mrb[0].mxu0
      %v1021 = vadd.f32 %v477, %v1020
      %v1022 = vpop.f32.mrb[0].mxu0
      %v1023 = vadd.f32 %v477, %v1022
      %1024 = vdwg.mxu0
      %1025 = vmatprep.subr.mxu0 %v290
      %1026 = vmatpush1.msra.mxu0 %v289
      %1027 = vmatprep.subr.mxu0 %v322
      %1028 = vmatpush1.msra.mxu0 %v321
      %1029 = vmatprep.subr.mxu0 %v354
      %1030 = vmatpush1.msra.mxu0 %v353
      %1031 = vmatprep.subr.mxu0 %v386
      %1032 = vmatpush1.msra.mxu0 %v385
      %1033 = vmatprep.subr.mxu0 %v418
      %1034 = vmatpush1.msra.mxu0 %v417
      %1035 = vmatprep.subr.mxu0 %v450
      %1036 = vmatpush1.msra.mxu0 %v449
      %1037 = vmatprep.subr.mxu0 0.0
      %1038 = vmatpush1.msra.mxu0 0.0
      %1039 = vmatprep.subr.mxu0 0.0
      %1040 = vmatpush1.msra.mxu0 0.0
      %1041 = vmatprep.subr.mxu0 0.0
      %1042 = vmatpush1.msra.mxu0 0.0
      %1043 = vmatprep.subr.mxu0 0.0
      %1044 = vmatpush1.msra.mxu0 0.0
      %1045 = vmatprep.subr.mxu0 0.0
      %1046 = vmatpush1.msra.mxu0 0.0
      %1047 = vmatprep.subr.mxu0 0.0
      %1048 = vmatpush1.msra.mxu0 0.0
      %1049 = vmatprep.subr.mxu0 0.0
      %1050 = vmatpush1.msra.mxu0 0.0
      %1051 = vmatprep.subr.mxu0 0.0
      %1052 = vmatpush1.msra.mxu0 0.0
      %1053 = vmatprep.subr.mxu0 0.0
      %1054 = vmatpush1.msra.mxu0 0.0
      %1055 = vmatprep.subr.mxu0 0.0
      %1056 = vmatpush1.msra.mxu0 0.0
      %1057 = vmatprep.subr.mxu0 0.0
      %1058 = vmatpush1.msra.mxu0 0.0
      %1059 = vmatprep.subr.mxu0 0.0
      %1060 = vmatpush1.msra.mxu0 0.0
      %1061 = vmatprep.subr.mxu0 0.0
      %1062 = vmatpush1.msra.mxu0 0.0
      %1063 = vmatprep.subr.mxu0 0.0
      %1064 = vmatpush1.msra.mxu0 0.0
      %1065 = vmatprep.subr.mxu0 0.0
      %1066 = vmatpush1.msra.mxu0 0.0
      %1067 = vmatprep.subr.mxu0 0.0
      %1068 = vmatpush1.msra.mxu0 0.0
      %1069 = vmatprep.subr.mxu0 0.0
      %1070 = vmatpush1.msra.mxu0 0.0
      %1071 = vmatprep.subr.mxu0 0.0
      %1072 = vmatpush1.msra.mxu0 0.0
      %1073 = vmatprep.subr.mxu0 0.0
      %1074 = vmatpush1.msra.mxu0 0.0
      %1075 = vmatprep.subr.mxu0 0.0
      %1076 = vmatpush1.msra.mxu0 0.0
      %1077 = vmatprep.subr.mxu0 0.0
      %1078 = vmatpush1.msra.mxu0 0.0
      %1079 = vmatprep.subr.mxu0 0.0
      %1080 = vmatpush1.msra.mxu0 0.0
      %1081 = vmatprep.subr.mxu0 0.0
      %1082 = vmatpush1.msra.mxu0 0.0
      %1083 = vmatprep.subr.mxu0 0.0
      %1084 = vmatpush1.msra.mxu0 0.0
      %1085 = vmatprep.subr.mxu0 0.0
      %1086 = vmatpush1.msra.mxu0 0.0
      %1087 = vmatprep.subr.mxu0 0.0
      %1088 = vmatpush1.msra.mxu0 0.0
      %1089 = vmatprep.mubr.f32.mxu0 0.0
      %1090 = vmatmul.mubr.f32.gmra.mrb[0].mxu0 %v481
      %v1091 = vpop.f32.mrb[0].mxu0
      %v1092 = vadd.f32 %v472, %v1091
      %v1093 = vpop.f32.mrb[0].mxu0
      %v1094 = vadd.f32 %v472, %v1093
      %1095 = vmatprep.mubr.f32.mxu0 0.0
      %1096 = vmatmul.mubr.f32.gmra.mrb[0].mxu0 %v484
      %v1097 = vpop.f32.mrb[0].mxu0
      %v1098 = vadd.f32 %v477, %v1097
      %v1099 = vpop.f32.mrb[0].mxu0
      %v1100 = vadd.f32 %v477, %v1099
      %1101 = vdwg.mxu0
      %1102 = vmatprep.subr.mxu0 %v292
      %1103 = vmatpush1.msra.mxu0 %v291
      %1104 = vmatprep.subr.mxu0 %v324
      %1105 = vmatpush1.msra.mxu0 %v323
      %1106 = vmatprep.subr.mxu0 %v356
      %1107 = vmatpush1.msra.mxu0 %v355
      %1108 = vmatprep.subr.mxu0 %v388
      %1109 = vmatpush1.msra.mxu0 %v387
      %1110 = vmatprep.subr.mxu0 %v420
      %1111 = vmatpush1.msra.mxu0 %v419
      %1112 = vmatprep.subr.mxu0 %v452
      %1113 = vmatpush1.msra.mxu0 %v451
      %1114 = vmatprep.subr.mxu0 0.0
      %1115 = vmatpush1.msra.mxu0 0.0
      %1116 = vmatprep.subr.mxu0 0.0
      %1117 = vmatpush1.msra.mxu0 0.0
      %1118 = vmatprep.subr.mxu0 0.0
      %1119 = vmatpush1.msra.mxu0 0.0
      %1120 = vmatprep.subr.mxu0 0.0
      %1121 = vmatpush1.msra.mxu0 0.0
      %1122 = vmatprep.subr.mxu0 0.0
      %1123 = vmatpush1.msra.mxu0 0.0
      %1124 = vmatprep.subr.mxu0 0.0
      %1125 = vmatpush1.msra.mxu0 0.0
      %1126 = vmatprep.subr.mxu0 0.0
      %1127 = vmatpush1.msra.mxu0 0.0
      %1128 = vmatprep.subr.mxu0 0.0
      %1129 = vmatpush1.msra.mxu0 0.0
      %1130 = vmatprep.subr.mxu0 0.0
      %1131 = vmatpush1.msra.mxu0 0.0
      %1132 = vmatprep.subr.mxu0 0.0
      %1133 = vmatpush1.msra.mxu0 0.0
      %1134 = vmatprep.subr.mxu0 0.0
      %1135 = vmatpush1.msra.mxu0 0.0
      %1136 = vmatprep.subr.mxu0 0.0
      %1137 = vmatpush1.msra.mxu0 0.0
      %1138 = vmatprep.subr.mxu0 0.0
      %1139 = vmatpush1.msra.mxu0 0.0
      %1140 = vmatprep.subr.mxu0 0.0
      %1141 = vmatpush1.msra.mxu0 0.0
      %1142 = vmatprep.subr.mxu0 0.0
      %1143 = vmatpush1.msra.mxu0 0.0
      %1144 = vmatprep.subr.mxu0 0.0
      %1145 = vmatpush1.msra.mxu0 0.0
      %1146 = vmatprep.subr.mxu0 0.0
      %1147 = vmatpush1.msra.mxu0 0.0
      %1148 = vmatprep.subr.mxu0 0.0
      %1149 = vmatpush1.msra.mxu0 0.0
      %1150 = vmatprep.subr.mxu0 0.0
      %1151 = vmatpush1.msra.mxu0 0.0
      %1152 = vmatprep.subr.mxu0 0.0
      %1153 = vmatpush1.msra.mxu0 0.0
      %1154 = vmatprep.subr.mxu0 0.0
      %1155 = vmatpush1.msra.mxu0 0.0
      %1156 = vmatprep.subr.mxu0 0.0
      %1157 = vmatpush1.msra.mxu0 0.0
      %1158 = vmatprep.subr.mxu0 0.0
      %1159 = vmatpush1.msra.mxu0 0.0
      %1160 = vmatprep.subr.mxu0 0.0
      %1161 = vmatpush1.msra.mxu0 0.0
      %1162 = vmatprep.subr.mxu0 0.0
      %1163 = vmatpush1.msra.mxu0 0.0
      %1164 = vmatprep.subr.mxu0 0.0
      %1165 = vmatpush1.msra.mxu0 0.0
      %1166 = vmatprep.mubr.f32.mxu0 0.0
      %1167 = vmatmul.mubr.f32.gmra.mrb[0].mxu0 %v481
      %v1168 = vpop.f32.mrb[0].mxu0
      %v1169 = vadd.f32 %v472, %v1168
      %v1170 = vpop.f32.mrb[0].mxu0
      %v1171 = vadd.f32 %v472, %v1170
      %1172 = vmatprep.mubr.f32.mxu0 0.0
      %1173 = vmatmul.mubr.f32.gmra.mrb[0].mxu0 %v484
      %v1174 = vpop.f32.mrb[0].mxu0
      %v1175 = vadd.f32 %v477, %v1174
      %v1176 = vpop.f32.mrb[0].mxu0
      %v1177 = vadd.f32 %v477, %v1176
      %1178 = vdwg.mxu0
      %1179 = vmatprep.subr.mxu0 %v294
      %1180 = vmatpush1.msra.mxu0 %v293
      %1181 = vmatprep.subr.mxu0 %v326
      %1182 = vmatpush1.msra.mxu0 %v325
      %1183 = vmatprep.subr.mxu0 %v358
      %1184 = vmatpush1.msra.mxu0 %v357
      %1185 = vmatprep.subr.mxu0 %v390
      %1186 = vmatpush1.msra.mxu0 %v389
      %1187 = vmatprep.subr.mxu0 %v422
      %1188 = vmatpush1.msra.mxu0 %v421
      %1189 = vmatprep.subr.mxu0 %v454
      %1190 = vmatpush1.msra.mxu0 %v453
      %1191 = vmatprep.subr.mxu0 0.0
      %1192 = vmatpush1.msra.mxu0 0.0
      %1193 = vmatprep.subr.mxu0 0.0
      %1194 = vmatpush1.msra.mxu0 0.0
      %1195 = vmatprep.subr.mxu0 0.0
      %1196 = vmatpush1.msra.mxu0 0.0
      %1197 = vmatprep.subr.mxu0 0.0
      %1198 = vmatpush1.msra.mxu0 0.0
      %1199 = vmatprep.subr.mxu0 0.0
      %1200 = vmatpush1.msra.mxu0 0.0
      %1201 = vmatprep.subr.mxu0 0.0
      %1202 = vmatpush1.msra.mxu0 0.0
      %1203 = vmatprep.subr.mxu0 0.0
      %1204 = vmatpush1.msra.mxu0 0.0
      %1205 = vmatprep.subr.mxu0 0.0
      %1206 = vmatpush1.msra.mxu0 0.0
      %1207 = vmatprep.subr.mxu0 0.0
      %1208 = vmatpush1.msra.mxu0 0.0
      %1209 = vmatprep.subr.mxu0 0.0
      %1210 = vmatpush1.msra.mxu0 0.0
      %1211 = vmatprep.subr.mxu0 0.0
      %1212 = vmatpush1.msra.mxu0 0.0
      %1213 = vmatprep.subr.mxu0 0.0
      %1214 = vmatpush1.msra.mxu0 0.0
      %1215 = vmatprep.subr.mxu0 0.0
      %1216 = vmatpush1.msra.mxu0 0.0
      %1217 = vmatprep.subr.mxu0 0.0
      %1218 = vmatpush1.msra.mxu0 0.0
      %1219 = vmatprep.subr.mxu0 0.0
      %1220 = vmatpush1.msra.mxu0 0.0
      %1221 = vmatprep.subr.mxu0 0.0
      %1222 = vmatpush1.msra.mxu0 0.0
      %1223 = vmatprep.subr.mxu0 0.0
      %1224 = vmatpush1.msra.mxu0 0.0
      %1225 = vmatprep.subr.mxu0 0.0
      %1226 = vmatpush1.msra.mxu0 0.0
      %1227 = vmatprep.subr.mxu0 0.0
      %1228 = vmatpush1.msra.mxu0 0.0
      %1229 = vmatprep.subr.mxu0 0.0
      %1230 = vmatpush1.msra.mxu0 0.0
      %1231 = vmatprep.subr.mxu0 0.0
      %1232 = vmatpush1.msra.mxu0 0.0
      %1233 = vmatprep.subr.mxu0 0.0
      %1234 = vmatpush1.msra.mxu0 0.0
      %1235 = vmatprep.subr.mxu0 0.0
      %1236 = vmatpush1.msra.mxu0 0.0
      %1237 = vmatprep.subr.mxu0 0.0
      %1238 = vmatpush1.msra.mxu0 0.0
      %1239 = vmatprep.subr.mxu0 0.0
      %1240 = vmatpush1.msra.mxu0 0.0
      %1241 = vmatprep.subr.mxu0 0.0
      %1242 = vmatpush1.msra.mxu0 0.0
      %1243 = vmatprep.mubr.f32.mxu0 0.0
      %1244 = vmatmul.mubr.f32.gmra.mrb[0].mxu0 %v481
      %v1245 = vpop.f32.mrb[0].mxu0
      %v1246 = vadd.f32 %v472, %v1245
      %v1247 = vpop.f32.mrb[0].mxu0
      %v1248 = vadd.f32 %v472, %v1247
      %1249 = vmatprep.mubr.f32.mxu0 0.0
      %1250 = vmatmul.mubr.f32.gmra.mrb[0].mxu0 %v484
      %v1251 = vpop.f32.mrb[0].mxu0
      %v1252 = vadd.f32 %v477, %v1251
      %v1253 = vpop.f32.mrb[0].mxu0
      %v1254 = vadd.f32 %v477, %v1253
      %1255 = vdwg.mxu0
      %1256 = vmatprep.subr.mxu0 %v296
      %1257 = vmatpush1.msra.mxu0 %v295
      %1258 = vmatprep.subr.mxu0 %v328
      %1259 = vmatpush1.msra.mxu0 %v327
      %1260 = vmatprep.subr.mxu0 %v360
      %1261 = vmatpush1.msra.mxu0 %v359
      %1262 = vmatprep.subr.mxu0 %v392
      %1263 = vmatpush1.msra.mxu0 %v391
      %1264 = vmatprep.subr.mxu0 %v424
      %1265 = vmatpush1.msra.mxu0 %v423
      %1266 = vmatprep.subr.mxu0 %v456
      %1267 = vmatpush1.msra.mxu0 %v455
      %1268 = vmatprep.subr.mxu0 0.0
      %1269 = vmatpush1.msra.mxu0 0.0
      %1270 = vmatprep.subr.mxu0 0.0
      %1271 = vmatpush1.msra.mxu0 0.0
      %1272 = vmatprep.subr.mxu0 0.0
      %1273 = vmatpush1.msra.mxu0 0.0
      %1274 = vmatprep.subr.mxu0 0.0
      %1275 = vmatpush1.msra.mxu0 0.0
      %1276 = vmatprep.subr.mxu0 0.0
      %1277 = vmatpush1.msra.mxu0 0.0
      %1278 = vmatprep.subr.mxu0 0.0
      %1279 = vmatpush1.msra.mxu0 0.0
      %1280 = vmatprep.subr.mxu0 0.0
      %1281 = vmatpush1.msra.mxu0 0.0
      %1282 = vmatprep.subr.mxu0 0.0
      %1283 = vmatpush1.msra.mxu0 0.0
      %1284 = vmatprep.subr.mxu0 0.0
      %1285 = vmatpush1.msra.mxu0 0.0
      %1286 = vmatprep.subr.mxu0 0.0
      %1287 = vmatpush1.msra.mxu0 0.0
      %1288 = vmatprep.subr.mxu0 0.0
      %1289 = vmatpush1.msra.mxu0 0.0
      %1290 = vmatprep.subr.mxu0 0.0
      %1291 = vmatpush1.msra.mxu0 0.0
      %1292 = vmatprep.subr.mxu0 0.0
      %1293 = vmatpush1.msra.mxu0 0.0
      %1294 = vmatprep.subr.mxu0 0.0
      %1295 = vmatpush1.msra.mxu0 0.0
      %1296 = vmatprep.subr.mxu0 0.0
      %1297 = vmatpush1.msra.mxu0 0.0
      %1298 = vmatprep.subr.mxu0 0.0
      %1299 = vmatpush1.msra.mxu0 0.0
      %1300 = vmatprep.subr.mxu0 0.0
      %1301 = vmatpush1.msra.mxu0 0.0
      %1302 = vmatprep.subr.mxu0 0.0
      %1303 = vmatpush1.msra.mxu0 0.0
      %1304 = vmatprep.subr.mxu0 0.0
      %1305 = vmatpush1.msra.mxu0 0.0
      %1306 = vmatprep.subr.mxu0 0.0
      %1307 = vmatpush1.msra.mxu0 0.0
      %1308 = vmatprep.subr.mxu0 0.0
      %1309 = vmatpush1.msra.mxu0 0.0
      %1310 = vmatprep.subr.mxu0 0.0
      %1311 = vmatpush1.msra.mxu0 0.0
      %1312 = vmatprep.subr.mxu0 0.0
      %1313 = vmatpush1.msra.mxu0 0.0
      %1314 = vmatprep.subr.mxu0 0.0
      %1315 = vmatpush1.msra.mxu0 0.0
      %1316 = vmatprep.subr.mxu0 0.0
      %1317 = vmatpush1.msra.mxu0 0.0
      %1318 = vmatprep.subr.mxu0 0.0
      %1319 = vmatpush1.msra.mxu0 0.0
      %1320 = vmatprep.mubr.f32.mxu0 0.0
      %1321 = vmatmul.mubr.f32.gmra.mrb[0].mxu0 %v481
      %v1322 = vpop.f32.mrb[0].mxu0
      %v1323 = vadd.f32 %v472, %v1322
      %v1324 = vpop.f32.mrb[0].mxu0
      %v1325 = vadd.f32 %v472, %v1324
      %1326 = vmatprep.mubr.f32.mxu0 0.0
      %1327 = vmatmul.mubr.f32.gmra.mrb[0].mxu0 %v484
      %v1328 = vpop.f32.mrb[0].mxu0
      %v1329 = vadd.f32 %v477, %v1328
      %v1330 = vpop.f32.mrb[0].mxu0
      %v1331 = vadd.f32 %v477, %v1330
      %1332 = vdwg.mxu0
      %1333 = vmatprep.subr.mxu0 %v298
      %1334 = vmatpush1.msra.mxu0 %v297
      %1335 = vmatprep.subr.mxu0 %v330
      %1336 = vmatpush1.msra.mxu0 %v329
      %1337 = vmatprep.subr.mxu0 %v362
      %1338 = vmatpush1.msra.mxu0 %v361
      %1339 = vmatprep.subr.mxu0 %v394
      %1340 = vmatpush1.msra.mxu0 %v393
      %1341 = vmatprep.subr.mxu0 %v426
      %1342 = vmatpush1.msra.mxu0 %v425
      %1343 = vmatprep.subr.mxu0 %v458
      %1344 = vmatpush1.msra.mxu0 %v457
      %1345 = vmatprep.subr.mxu0 0.0
      %1346 = vmatpush1.msra.mxu0 0.0
      %1347 = vmatprep.subr.mxu0 0.0
      %1348 = vmatpush1.msra.mxu0 0.0
      %1349 = vmatprep.subr.mxu0 0.0
      %1350 = vmatpush1.msra.mxu0 0.0
      %1351 = vmatprep.subr.mxu0 0.0
      %1352 = vmatpush1.msra.mxu0 0.0
      %1353 = vmatprep.subr.mxu0 0.0
      %1354 = vmatpush1.msra.mxu0 0.0
      %1355 = vmatprep.subr.mxu0 0.0
      %1356 = vmatpush1.msra.mxu0 0.0
      %1357 = vmatprep.subr.mxu0 0.0
      %1358 = vmatpush1.msra.mxu0 0.0
      %1359 = vmatprep.subr.mxu0 0.0
      %1360 = vmatpush1.msra.mxu0 0.0
      %1361 = vmatprep.subr.mxu0 0.0
      %1362 = vmatpush1.msra.mxu0 0.0
      %1363 = vmatprep.subr.mxu0 0.0
      %1364 = vmatpush1.msra.mxu0 0.0
      %1365 = vmatprep.subr.mxu0 0.0
      %1366 = vmatpush1.msra.mxu0 0.0
      %1367 = vmatprep.subr.mxu0 0.0
      %1368 = vmatpush1.msra.mxu0 0.0
      %1369 = vmatprep.subr.mxu0 0.0
      %1370 = vmatpush1.msra.mxu0 0.0
      %1371 = vmatprep.subr.mxu0 0.0
      %1372 = vmatpush1.msra.mxu0 0.0
      %1373 = vmatprep.subr.mxu0 0.0
      %1374 = vmatpush1.msra.mxu0 0.0
      %1375 = vmatprep.subr.mxu0 0.0
      %1376 = vmatpush1.msra.mxu0 0.0
      %1377 = vmatprep.subr.mxu0 0.0
      %1378 = vmatpush1.msra.mxu0 0.0
      %1379 = vmatprep.subr.mxu0 0.0
      %1380 = vmatpush1.msra.mxu0 0.0
      %1381 = vmatprep.subr.mxu0 0.0
      %1382 = vmatpush1.msra.mxu0 0.0
      %1383 = vmatprep.subr.mxu0 0.0
      %1384 = vmatpush1.msra.mxu0 0.0
      %1385 = vmatprep.subr.mxu0 0.0
      %1386 = vmatpush1.msra.mxu0 0.0
      %1387 = vmatprep.subr.mxu0 0.0
      %1388 = vmatpush1.msra.mxu0 0.0
      %1389 = vmatprep.subr.mxu0 0.0
      %1390 = vmatpush1.msra.mxu0 0.0
      %1391 = vmatprep.subr.mxu0 0.0
      %1392 = vmatpush1.msra.mxu0 0.0
      %1393 = vmatprep.subr.mxu0 0.0
      %1394 = vmatpush1.msra.mxu0 0.0
      %1395 = vmatprep.subr.mxu0 0.0
      %1396 = vmatpush1.msra.mxu0 0.0
      %1397 = vmatprep.mubr.f32.mxu0 0.0
      %1398 = vmatmul.mubr.f32.gmra.mrb[0].mxu0 %v481
      %v1399 = vpop.f32.mrb[0].mxu0
      %v1400 = vadd.f32 %v472, %v1399
      %v1401 = vpop.f32.mrb[0].mxu0
      %v1402 = vadd.f32 %v472, %v1401
      %1403 = vmatprep.mubr.f32.mxu0 0.0
      %1404 = vmatmul.mubr.f32.gmra.mrb[0].mxu0 %v484
      %v1405 = vpop.f32.mrb[0].mxu0
      %v1406 = vadd.f32 %v477, %v1405
      %v1407 = vpop.f32.mrb[0].mxu0
      %v1408 = vadd.f32 %v477, %v1407
      %1409 = vdwg.mxu0
      %1410 = vmatprep.subr.mxu0 %v300
      %1411 = vmatpush1.msra.mxu0 %v299
      %1412 = vmatprep.subr.mxu0 %v332
      %1413 = vmatpush1.msra.mxu0 %v331
      %1414 = vmatprep.subr.mxu0 %v364
      %1415 = vmatpush1.msra.mxu0 %v363
      %1416 = vmatprep.subr.mxu0 %v396
      %1417 = vmatpush1.msra.mxu0 %v395
      %1418 = vmatprep.subr.mxu0 %v428
      %1419 = vmatpush1.msra.mxu0 %v427
      %1420 = vmatprep.subr.mxu0 %v460
      %1421 = vmatpush1.msra.mxu0 %v459
      %1422 = vmatprep.subr.mxu0 0.0
      %1423 = vmatpush1.msra.mxu0 0.0
      %1424 = vmatprep.subr.mxu0 0.0
      %1425 = vmatpush1.msra.mxu0 0.0
      %1426 = vmatprep.subr.mxu0 0.0
      %1427 = vmatpush1.msra.mxu0 0.0
      %1428 = vmatprep.subr.mxu0 0.0
      %1429 = vmatpush1.msra.mxu0 0.0
      %1430 = vmatprep.subr.mxu0 0.0
      %1431 = vmatpush1.msra.mxu0 0.0
      %1432 = vmatprep.subr.mxu0 0.0
      %1433 = vmatpush1.msra.mxu0 0.0
      %1434 = vmatprep.subr.mxu0 0.0
      %1435 = vmatpush1.msra.mxu0 0.0
      %1436 = vmatprep.subr.mxu0 0.0
      %1437 = vmatpush1.msra.mxu0 0.0
      %1438 = vmatprep.subr.mxu0 0.0
      %1439 = vmatpush1.msra.mxu0 0.0
      %1440 = vmatprep.subr.mxu0 0.0
      %1441 = vmatpush1.msra.mxu0 0.0
      %1442 = vmatprep.subr.mxu0 0.0
      %1443 = vmatpush1.msra.mxu0 0.0
      %1444 = vmatprep.subr.mxu0 0.0
      %1445 = vmatpush1.msra.mxu0 0.0
      %1446 = vmatprep.subr.mxu0 0.0
      %1447 = vmatpush1.msra.mxu0 0.0
      %1448 = vmatprep.subr.mxu0 0.0
      %1449 = vmatpush1.msra.mxu0 0.0
      %1450 = vmatprep.subr.mxu0 0.0
      %1451 = vmatpush1.msra.mxu0 0.0
      %1452 = vmatprep.subr.mxu0 0.0
      %1453 = vmatpush1.msra.mxu0 0.0
      %1454 = vmatprep.subr.mxu0 0.0
      %1455 = vmatpush1.msra.mxu0 0.0
      %1456 = vmatprep.subr.mxu0 0.0
      %1457 = vmatpush1.msra.mxu0 0.0
      %1458 = vmatprep.subr.mxu0 0.0
      %1459 = vmatpush1.msra.mxu0 0.0
      %1460 = vmatprep.subr.mxu0 0.0
      %1461 = vmatpush1.msra.mxu0 0.0
      %1462 = vmatprep.subr.mxu0 0.0
      %1463 = vmatpush1.msra.mxu0 0.0
      %1464 = vmatprep.subr.mxu0 0.0
      %1465 = vmatpush1.msra.mxu0 0.0
      %1466 = vmatprep.subr.mxu0 0.0
      %1467 = vmatpush1.msra.mxu0 0.0
      %1468 = vmatprep.subr.mxu0 0.0
      %1469 = vmatpush1.msra.mxu0 0.0
      %1470 = vmatprep.subr.mxu0 0.0
      %1471 = vmatpush1.msra.mxu0 0.0
      %1472 = vmatprep.subr.mxu0 0.0
      %1473 = vmatpush1.msra.mxu0 0.0
      %1474 = vmatprep.mubr.f32.mxu0 0.0
      %1475 = vmatmul.mubr.f32.gmra.mrb[0].mxu0 %v481
      %v1476 = vpop.f32.mrb[0].mxu0
      %v1477 = vadd.f32 %v472, %v1476
      %v1478 = vpop.f32.mrb[0].mxu0
      %v1479 = vadd.f32 %v472, %v1478
      %1480 = vmatprep.mubr.f32.mxu0 0.0
      %1481 = vmatmul.mubr.f32.gmra.mrb[0].mxu0 %v484
      %v1482 = vpop.f32.mrb[0].mxu0
      %v1483 = vadd.f32 %v477, %v1482
      %v1484 = vpop.f32.mrb[0].mxu0
      %v1485 = vadd.f32 %v477, %v1484
      %1486 = vdwg.mxu0
      %1487 = vmatprep.subr.mxu0 %v302
      %1488 = vmatpush1.msra.mxu0 %v301
      %1489 = vmatprep.subr.mxu0 %v334
      %1490 = vmatpush1.msra.mxu0 %v333
      %1491 = vmatprep.subr.mxu0 %v366
      %1492 = vmatpush1.msra.mxu0 %v365
      %1493 = vmatprep.subr.mxu0 %v398
      %1494 = vmatpush1.msra.mxu0 %v397
      %1495 = vmatprep.subr.mxu0 %v430
      %1496 = vmatpush1.msra.mxu0 %v429
      %1497 = vmatprep.subr.mxu0 %v462
      %1498 = vmatpush1.msra.mxu0 %v461
      %1499 = vmatprep.subr.mxu0 0.0
      %1500 = vmatpush1.msra.mxu0 0.0
      %1501 = vmatprep.subr.mxu0 0.0
      %1502 = vmatpush1.msra.mxu0 0.0
      %1503 = vmatprep.subr.mxu0 0.0
      %1504 = vmatpush1.msra.mxu0 0.0
      %1505 = vmatprep.subr.mxu0 0.0
      %1506 = vmatpush1.msra.mxu0 0.0
      %1507 = vmatprep.subr.mxu0 0.0
      %1508 = vmatpush1.msra.mxu0 0.0
      %1509 = vmatprep.subr.mxu0 0.0
      %1510 = vmatpush1.msra.mxu0 0.0
      %1511 = vmatprep.subr.mxu0 0.0
      %1512 = vmatpush1.msra.mxu0 0.0
      %1513 = vmatprep.subr.mxu0 0.0
      %1514 = vmatpush1.msra.mxu0 0.0
      %1515 = vmatprep.subr.mxu0 0.0
      %1516 = vmatpush1.msra.mxu0 0.0
      %1517 = vmatprep.subr.mxu0 0.0
      %1518 = vmatpush1.msra.mxu0 0.0
      %1519 = vmatprep.subr.mxu0 0.0
      %1520 = vmatpush1.msra.mxu0 0.0
      %1521 = vmatprep.subr.mxu0 0.0
      %1522 = vmatpush1.msra.mxu0 0.0
      %1523 = vmatprep.subr.mxu0 0.0
      %1524 = vmatpush1.msra.mxu0 0.0
      %1525 = vmatprep.subr.mxu0 0.0
      %1526 = vmatpush1.msra.mxu0 0.0
      %1527 = vmatprep.subr.mxu0 0.0
      %1528 = vmatpush1.msra.mxu0 0.0
      %1529 = vmatprep.subr.mxu0 0.0
      %1530 = vmatpush1.msra.mxu0 0.0
      %1531 = vmatprep.subr.mxu0 0.0
      %1532 = vmatpush1.msra.mxu0 0.0
      %1533 = vmatprep.subr.mxu0 0.0
      %1534 = vmatpush1.msra.mxu0 0.0
      %1535 = vmatprep.subr.mxu0 0.0
      %1536 = vmatpush1.msra.mxu0 0.0
      %1537 = vmatprep.subr.mxu0 0.0
      %1538 = vmatpush1.msra.mxu0 0.0
      %1539 = vmatprep.subr.mxu0 0.0
      %1540 = vmatpush1.msra.mxu0 0.0
      %1541 = vmatprep.subr.mxu0 0.0
      %1542 = vmatpush1.msra.mxu0 0.0
      %1543 = vmatprep.subr.mxu0 0.0
      %1544 = vmatpush1.msra.mxu0 0.0
      %1545 = vmatprep.subr.mxu0 0.0
      %1546 = vmatpush1.msra.mxu0 0.0
      %1547 = vmatprep.subr.mxu0 0.0
      %1548 = vmatpush1.msra.mxu0 0.0
      %1549 = vmatprep.subr.mxu0 0.0
      %1550 = vmatpush1.msra.mxu0 0.0
      %1551 = vmatprep.mubr.f32.mxu0 0.0
      %1552 = vmatmul.mubr.f32.gmra.mrb[0].mxu0 %v481
      %v1553 = vpop.f32.mrb[0].mxu0
      %v1554 = vadd.f32 %v472, %v1553
      %v1555 = vpop.f32.mrb[0].mxu0
      %v1556 = vadd.f32 %v472, %v1555
      %1557 = vmatprep.mubr.f32.mxu0 0.0
      %1558 = vmatmul.mubr.f32.gmra.mrb[0].mxu0 %v484
      %v1559 = vpop.f32.mrb[0].mxu0
      %v1560 = vadd.f32 %v477, %v1559
      %v1561 = vpop.f32.mrb[0].mxu0
      %v1562 = vadd.f32 %v477, %v1561
      %1563 = vdwg.mxu0
      %1564 = vmatprep.subr.mxu0 %v304
      %1565 = vmatpush1.msra.mxu0 %v303
      %1566 = vmatprep.subr.mxu0 %v336
      %1567 = vmatpush1.msra.mxu0 %v335
      %1568 = vmatprep.subr.mxu0 %v368
      %1569 = vmatpush1.msra.mxu0 %v367
      %1570 = vmatprep.subr.mxu0 %v400
      %1571 = vmatpush1.msra.mxu0 %v399
      %1572 = vmatprep.subr.mxu0 %v432
      %1573 = vmatpush1.msra.mxu0 %v431
      %1574 = vmatprep.subr.mxu0 %v464
      %1575 = vmatpush1.msra.mxu0 %v463
      %1576 = vmatprep.subr.mxu0 0.0
      %1577 = vmatpush1.msra.mxu0 0.0
      %1578 = vmatprep.subr.mxu0 0.0
      %1579 = vmatpush1.msra.mxu0 0.0
      %1580 = vmatprep.subr.mxu0 0.0
      %1581 = vmatpush1.msra.mxu0 0.0
      %1582 = vmatprep.subr.mxu0 0.0
      %1583 = vmatpush1.msra.mxu0 0.0
      %1584 = vmatprep.subr.mxu0 0.0
      %1585 = vmatpush1.msra.mxu0 0.0
      %1586 = vmatprep.subr.mxu0 0.0
      %1587 = vmatpush1.msra.mxu0 0.0
      %1588 = vmatprep.subr.mxu0 0.0
      %1589 = vmatpush1.msra.mxu0 0.0
      %1590 = vmatprep.subr.mxu0 0.0
      %1591 = vmatpush1.msra.mxu0 0.0
      %1592 = vmatprep.subr.mxu0 0.0
      %1593 = vmatpush1.msra.mxu0 0.0
      %1594 = vmatprep.subr.mxu0 0.0
      %1595 = vmatpush1.msra.mxu0 0.0
      %1596 = vmatprep.subr.mxu0 0.0
      %1597 = vmatpush1.msra.mxu0 0.0
      %1598 = vmatprep.subr.mxu0 0.0
      %1599 = vmatpush1.msra.mxu0 0.0
      %1600 = vmatprep.subr.mxu0 0.0
      %1601 = vmatpush1.msra.mxu0 0.0
      %1602 = vmatprep.subr.mxu0 0.0
      %1603 = vmatpush1.msra.mxu0 0.0
      %1604 = vmatprep.subr.mxu0 0.0
      %1605 = vmatpush1.msra.mxu0 0.0
      %1606 = vmatprep.subr.mxu0 0.0
      %1607 = vmatpush1.msra.mxu0 0.0
      %1608 = vmatprep.subr.mxu0 0.0
      %1609 = vmatpush1.msra.mxu0 0.0
      %1610 = vmatprep.subr.mxu0 0.0
      %1611 = vmatpush1.msra.mxu0 0.0
      %1612 = vmatprep.subr.mxu0 0.0
      %1613 = vmatpush1.msra.mxu0 0.0
      %1614 = vmatprep.subr.mxu0 0.0
      %1615 = vmatpush1.msra.mxu0 0.0
      %1616 = vmatprep.subr.mxu0 0.0
      %1617 = vmatpush1.msra.mxu0 0.0
      %1618 = vmatprep.subr.mxu0 0.0
      %1619 = vmatpush1.msra.mxu0 0.0
      %1620 = vmatprep.subr.mxu0 0.0
      %1621 = vmatpush1.msra.mxu0 0.0
      %1622 = vmatprep.subr.mxu0 0.0
      %1623 = vmatpush1.msra.mxu0 0.0
      %1624 = vmatprep.subr.mxu0 0.0
      %1625 = vmatpush1.msra.mxu0 0.0
      %1626 = vmatprep.subr.mxu0 0.0
      %1627 = vmatpush1.msra.mxu0 0.0
      %1628 = vmatprep.mubr.f32.mxu0 0.0
      %1629 = vmatmul.mubr.f32.gmra.mrb[0].mxu0 %v481
      %v1630 = vpop.f32.mrb[0].mxu0
      %v1631 = vadd.f32 %v472, %v1630
      %v1632 = vpop.f32.mrb[0].mxu0
      %v1633 = vadd.f32 %v472, %v1632
      %1634 = vmatprep.mubr.f32.mxu0 0.0
      %1635 = vmatmul.mubr.f32.gmra.mrb[0].mxu0 %v484
      %v1636 = vpop.f32.mrb[0].mxu0
      %v1637 = vadd.f32 %v477, %v1636
      %v1638 = vpop.f32.mrb[0].mxu0
      %v1639 = vadd.f32 %v477, %v1638
      %1640 = vdwg.mxu0
      %1641 = vmatprep.subr.mxu0 %v306
      %1642 = vmatpush1.msra.mxu0 %v305
      %1643 = vmatprep.subr.mxu0 %v338
      %1644 = vmatpush1.msra.mxu0 %v337
      %1645 = vmatprep.subr.mxu0 %v370
      %1646 = vmatpush1.msra.mxu0 %v369
      %1647 = vmatprep.subr.mxu0 %v402
      %1648 = vmatpush1.msra.mxu0 %v401
      %1649 = vmatprep.subr.mxu0 %v434
      %1650 = vmatpush1.msra.mxu0 %v433
      %1651 = vmatprep.subr.mxu0 %v466
      %1652 = vmatpush1.msra.mxu0 %v465
      %1653 = vmatprep.subr.mxu0 0.0
      %1654 = vmatpush1.msra.mxu0 0.0
      %1655 = vmatprep.subr.mxu0 0.0
      %1656 = vmatpush1.msra.mxu0 0.0
      %1657 = vmatprep.subr.mxu0 0.0
      %1658 = vmatpush1.msra.mxu0 0.0
      %1659 = vmatprep.subr.mxu0 0.0
      %1660 = vmatpush1.msra.mxu0 0.0
      %1661 = vmatprep.subr.mxu0 0.0
      %1662 = vmatpush1.msra.mxu0 0.0
      %1663 = vmatprep.subr.mxu0 0.0
      %1664 = vmatpush1.msra.mxu0 0.0
      %1665 = vmatprep.subr.mxu0 0.0
      %1666 = vmatpush1.msra.mxu0 0.0
      %1667 = vmatprep.subr.mxu0 0.0
      %1668 = vmatpush1.msra.mxu0 0.0
      %1669 = vmatprep.subr.mxu0 0.0
      %1670 = vmatpush1.msra.mxu0 0.0
      %1671 = vmatprep.subr.mxu0 0.0
      %1672 = vmatpush1.msra.mxu0 0.0
      %1673 = vmatprep.subr.mxu0 0.0
      %1674 = vmatpush1.msra.mxu0 0.0
      %1675 = vmatprep.subr.mxu0 0.0
      %1676 = vmatpush1.msra.mxu0 0.0
      %1677 = vmatprep.subr.mxu0 0.0
      %1678 = vmatpush1.msra.mxu0 0.0
      %1679 = vmatprep.subr.mxu0 0.0
      %1680 = vmatpush1.msra.mxu0 0.0
      %1681 = vmatprep.subr.mxu0 0.0
      %1682 = vmatpush1.msra.mxu0 0.0
      %1683 = vmatprep.subr.mxu0 0.0
      %1684 = vmatpush1.msra.mxu0 0.0
      %1685 = vmatprep.subr.mxu0 0.0
      %1686 = vmatpush1.msra.mxu0 0.0
      %1687 = vmatprep.subr.mxu0 0.0
      %1688 = vmatpush1.msra.mxu0 0.0
      %1689 = vmatprep.subr.mxu0 0.0
      %1690 = vmatpush1.msra.mxu0 0.0
      %1691 = vmatprep.subr.mxu0 0.0
      %1692 = vmatpush1.msra.mxu0 0.0
      %1693 = vmatprep.subr.mxu0 0.0
      %1694 = vmatpush1.msra.mxu0 0.0
      %1695 = vmatprep.subr.mxu0 0.0
      %1696 = vmatpush1.msra.mxu0 0.0
      %1697 = vmatprep.subr.mxu0 0.0
      %1698 = vmatpush1.msra.mxu0 0.0
      %1699 = vmatprep.subr.mxu0 0.0
      %1700 = vmatpush1.msra.mxu0 0.0
      %1701 = vmatprep.subr.mxu0 0.0
      %1702 = vmatpush1.msra.mxu0 0.0
      %1703 = vmatprep.subr.mxu0 0.0
      %1704 = vmatpush1.msra.mxu0 0.0
      %1705 = vmatprep.mubr.f32.mxu0 0.0
      %1706 = vmatmul.mubr.f32.gmra.mrb[0].mxu0 %v481
      %v1707 = vpop.f32.mrb[0].mxu0
      %v1708 = vadd.f32 %v472, %v1707
      %v1709 = vpop.f32.mrb[0].mxu0
      %v1710 = vadd.f32 %v472, %v1709
      %1711 = vmatprep.mubr.f32.mxu0 0.0
      %1712 = vmatmul.mubr.f32.gmra.mrb[0].mxu0 %v484
      %v1713 = vpop.f32.mrb[0].mxu0
      %v1714 = vadd.f32 %v477, %v1713
      %v1715 = vpop.f32.mrb[0].mxu0
      %v1716 = vadd.f32 %v477, %v1715
      %1717 = vdwg.mxu0
      %v1718 = vld [vmem:[%s261] sm:$0xff]
      %v1719 = vld [vmem:[%s261 + $0x8] sm:$0xff]
      %v1720 = vld [vmem:[%s261 + $0x10] sm:$0xff]
      %v1721 = vld [vmem:[%s261 + $0x18] sm:$0xff]
      %v1722 = vld [vmem:[%s261 + $0x20] sm:$0xff]
      %v1723 = vld [vmem:[%s261 + $0x28] sm:$0xff]
      %v1724 = vld [vmem:[%s261 + $0x30] sm:$0xff]
      %v1725 = vld [vmem:[%s261 + $0x38] sm:$0xff]
      %v1726 = vld [vmem:[%s261 + $0x40] sm:$0xff]
      %v1727 = vld [vmem:[%s261 + $0x48] sm:$0xff]
      %v1728 = vld [vmem:[%s261 + $0x50] sm:$0xff]
      %v1729 = vld [vmem:[%s261 + $0x58] sm:$0xff]
      %v1730 = vld [vmem:[%s261 + $0x60] sm:$0xff]
      %v1731 = vld [vmem:[%s261 + $0x68] sm:$0xff]
      %v1732 = vld [vmem:[%s261 + $0x70] sm:$0xff]
      %v1733 = vld [vmem:[%s261 + $0x78] sm:$0xff]
      %v1734 = vld [vmem:[%s261 + $0x80] sm:$0xff]
      %v1735 = vld [vmem:[%s261 + $0x88] sm:$0xff]
      %v1736 = vld [vmem:[%s261 + $0x90] sm:$0xff]
      %v1737 = vld [vmem:[%s261 + $0x98] sm:$0xff]
      %v1738 = vld [vmem:[%s261 + $0xa0] sm:$0xff]
      %v1739 = vld [vmem:[%s261 + $0xa8] sm:$0xff]
      %v1740 = vld [vmem:[%s261 + $0xb0] sm:$0xff]
      %v1741 = vld [vmem:[%s261 + $0xb8] sm:$0xff]
      %v1742 = vld [vmem:[%s261 + $0xc0] sm:$0xff]
      %v1743 = vld [vmem:[%s261 + $0xc8] sm:$0xff]
      %v1744 = vld [vmem:[%s261 + $0xd0] sm:$0xff]
      %v1745 = vld [vmem:[%s261 + $0xd8] sm:$0xff]
      %v1746 = vld [vmem:[%s261 + $0xe0] sm:$0xff]
      %v1747 = vld [vmem:[%s261 + $0xe8] sm:$0xff]
      %v1748 = vld [vmem:[%s261 + $0xf0] sm:$0xff]
      %v1749 = vld [vmem:[%s261 + $0xf8] sm:$0xff]
      %v1750 = vld [vmem:[%s261 + $0x100] sm:$0xff]
      %v1751 = vld [vmem:[%s261 + $0x108] sm:$0xff]
      %v1752 = vld [vmem:[%s261 + $0x110] sm:$0xff]
      %v1753 = vld [vmem:[%s261 + $0x118] sm:$0xff]
      %v1754 = vld [vmem:[%s261 + $0x120] sm:$0xff]
      %v1755 = vld [vmem:[%s261 + $0x128] sm:$0xff]
      %v1756 = vld [vmem:[%s261 + $0x130] sm:$0xff]
      %v1757 = vld [vmem:[%s261 + $0x138] sm:$0xff]
      %v1758 = vld [vmem:[%s261 + $0x140] sm:$0xff]
      %v1759 = vld [vmem:[%s261 + $0x148] sm:$0xff]
      %v1760 = vld [vmem:[%s261 + $0x150] sm:$0xff]
      %v1761 = vld [vmem:[%s261 + $0x158] sm:$0xff]
      %v1762 = vld [vmem:[%s261 + $0x160] sm:$0xff]
      %v1763 = vld [vmem:[%s261 + $0x168] sm:$0xff]
      %v1764 = vld [vmem:[%s261 + $0x170] sm:$0xff]
      %v1765 = vld [vmem:[%s261 + $0x178] sm:$0xff]
      %v1766 = vld [vmem:[%s261 + $0x180] sm:$0xff]
      %v1767 = vld [vmem:[%s261 + $0x188] sm:$0xff]
      %v1768 = vld [vmem:[%s261 + $0x190] sm:$0xff]
      %v1769 = vld [vmem:[%s261 + $0x198] sm:$0xff]
      %v1770 = vld [vmem:[%s261 + $0x1a0] sm:$0xff]
      %v1771 = vld [vmem:[%s261 + $0x1a8] sm:$0xff]
      %v1772 = vld [vmem:[%s261 + $0x1b0] sm:$0xff]
      %v1773 = vld [vmem:[%s261 + $0x1b8] sm:$0xff]
      %v1774 = vld [vmem:[%s261 + $0x1c0] sm:$0xff]
      %v1775 = vld [vmem:[%s261 + $0x1c8] sm:$0xff]
      %v1776 = vld [vmem:[%s261 + $0x1d0] sm:$0xff]
      %v1777 = vld [vmem:[%s261 + $0x1d8] sm:$0xff]
      %v1778 = vld [vmem:[%s261 + $0x1e0] sm:$0xff]
      %v1779 = vld [vmem:[%s261 + $0x1e8] sm:$0xff]
      %v1780 = vld [vmem:[%s261 + $0x1f0] sm:$0xff]
      %v1781 = vld [vmem:[%s261 + $0x1f8] sm:$0xff]
      %v1782 = vadd.f32 %v553, %v1718
      %v1783 = vadd.f32 %v555, %v1719
      %v1784 = vadd.f32 %v630, %v1720
      %v1785 = vadd.f32 %v632, %v1721
      %v1786 = vadd.f32 %v707, %v1722
      %v1787 = vadd.f32 %v709, %v1723
      %v1788 = vadd.f32 %v784, %v1724
      %v1789 = vadd.f32 %v786, %v1725
      %v1790 = vadd.f32 %v861, %v1726
      %v1791 = vadd.f32 %v863, %v1727
      %v1792 = vadd.f32 %v938, %v1728
      %v1793 = vadd.f32 %v940, %v1729
      %v1794 = vadd.f32 %v1015, %v1730
      %v1795 = vadd.f32 %v1017, %v1731
      %v1796 = vadd.f32 %v1092, %v1732
      %v1797 = vadd.f32 %v1094, %v1733
      %v1798 = vadd.f32 %v1169, %v1734
      %v1799 = vadd.f32 %v1171, %v1735
      %v1800 = vadd.f32 %v1246, %v1736
      %v1801 = vadd.f32 %v1248, %v1737
      %v1802 = vadd.f32 %v1323, %v1738
      %v1803 = vadd.f32 %v1325, %v1739
      %v1804 = vadd.f32 %v1400, %v1740
      %v1805 = vadd.f32 %v1402, %v1741
      %v1806 = vadd.f32 %v1477, %v1742
      %v1807 = vadd.f32 %v1479, %v1743
      %v1808 = vadd.f32 %v1554, %v1744
      %v1809 = vadd.f32 %v1556, %v1745
      %v1810 = vadd.f32 %v1631, %v1746
      %v1811 = vadd.f32 %v1633, %v1747
      %v1812 = vadd.f32 %v1708, %v1748
      %v1813 = vadd.f32 %v1710, %v1749
      %v1814 = vadd.f32 %v559, %v1750
      %v1815 = vadd.f32 %v561, %v1751
      %v1816 = vadd.f32 %v636, %v1752
      %v1817 = vadd.f32 %v638, %v1753
      %v1818 = vadd.f32 %v713, %v1754
      %v1819 = vadd.f32 %v715, %v1755
      %v1820 = vadd.f32 %v790, %v1756
      %v1821 = vadd.f32 %v792, %v1757
      %v1822 = vadd.f32 %v867, %v1758
      %v1823 = vadd.f32 %v869, %v1759
      %v1824 = vadd.f32 %v944, %v1760
      %v1825 = vadd.f32 %v946, %v1761
      %v1826 = vadd.f32 %v1021, %v1762
      %v1827 = vadd.f32 %v1023, %v1763
      %v1828 = vadd.f32 %v1098, %v1764
      %v1829 = vadd.f32 %v1100, %v1765
      %v1830 = vadd.f32 %v1175, %v1766
      %v1831 = vadd.f32 %v1177, %v1767
      %v1832 = vadd.f32 %v1252, %v1768
      %v1833 = vadd.f32 %v1254, %v1769
      %v1834 = vadd.f32 %v1329, %v1770
      %v1835 = vadd.f32 %v1331, %v1771
      %v1836 = vadd.f32 %v1406, %v1772
      %v1837 = vadd.f32 %v1408, %v1773
      %v1838 = vadd.f32 %v1483, %v1774
      %v1839 = vadd.f32 %v1485, %v1775
      %v1840 = vadd.f32 %v1560, %v1776
      %v1841 = vadd.f32 %v1562, %v1777
      %v1842 = vadd.f32 %v1637, %v1778
      %v1843 = vadd.f32 %v1639, %v1779
      %v1844 = vadd.f32 %v1714, %v1780
      %v1845 = vadd.f32 %v1716, %v1781
      %1846 = vst [vmem:[%s271] sm:$0xff] %v1782
      %1847 = vst [vmem:[%s271 + $0x8] sm:$0xff] %v1783
      %1848 = vst [vmem:[%s271 + $0x10] sm:$0xff] %v1784
      %1849 = vst [vmem:[%s271 + $0x18] sm:$0xff] %v1785
      %1850 = vst [vmem:[%s271 + $0x20] sm:$0xff] %v1786
      %1851 = vst [vmem:[%s271 + $0x28] sm:$0xff] %v1787
      %1852 = vst [vmem:[%s271 + $0x30] sm:$0xff] %v1788
      %1853 = vst [vmem:[%s271 + $0x38] sm:$0xff] %v1789
      %1854 = vst [vmem:[%s271 + $0x40] sm:$0xff] %v1790
      %1855 = vst [vmem:[%s271 + $0x48] sm:$0xff] %v1791
      %1856 = vst [vmem:[%s271 + $0x50] sm:$0xff] %v1792
      %1857 = vst [vmem:[%s271 + $0x58] sm:$0xff] %v1793
      %1858 = vst [vmem:[%s271 + $0x60] sm:$0xff] %v1794
      %1859 = vst [vmem:[%s271 + $0x68] sm:$0xff] %v1795
      %1860 = vst [vmem:[%s271 + $0x70] sm:$0xff] %v1796
      %1861 = vst [vmem:[%s271 + $0x78] sm:$0xff] %v1797
      %1862 = vst [vmem:[%s271 + $0x80] sm:$0xff] %v1798
      %1863 = vst [vmem:[%s271 + $0x88] sm:$0xff] %v1799
      %1864 = vst [vmem:[%s271 + $0x90] sm:$0xff] %v1800
      %1865 = vst [vmem:[%s271 + $0x98] sm:$0xff] %v1801
      %1866 = vst [vmem:[%s271 + $0xa0] sm:$0xff] %v1802
      %1867 = vst [vmem:[%s271 + $0xa8] sm:$0xff] %v1803
      %1868 = vst [vmem:[%s271 + $0xb0] sm:$0xff] %v1804
      %1869 = vst [vmem:[%s271 + $0xb8] sm:$0xff] %v1805
      %1870 = vst [vmem:[%s271 + $0xc0] sm:$0xff] %v1806
      %1871 = vst [vmem:[%s271 + $0xc8] sm:$0xff] %v1807
      %1872 = vst [vmem:[%s271 + $0xd0] sm:$0xff] %v1808
      %1873 = vst [vmem:[%s271 + $0xd8] sm:$0xff] %v1809
      %1874 = vst [vmem:[%s271 + $0xe0] sm:$0xff] %v1810
      %1875 = vst [vmem:[%s271 + $0xe8] sm:$0xff] %v1811
      %1876 = vst [vmem:[%s271 + $0xf0] sm:$0xff] %v1812
      %1877 = vst [vmem:[%s271 + $0xf8] sm:$0xff] %v1813
      %1878 = vst [vmem:[%s271 + $0x100] sm:$0xff] %v1814
      %1879 = vst [vmem:[%s271 + $0x108] sm:$0xff] %v1815
      %1880 = vst [vmem:[%s271 + $0x110] sm:$0xff] %v1816
      %1881 = vst [vmem:[%s271 + $0x118] sm:$0xff] %v1817
      %1882 = vst [vmem:[%s271 + $0x120] sm:$0xff] %v1818
      %1883 = vst [vmem:[%s271 + $0x128] sm:$0xff] %v1819
      %1884 = vst [vmem:[%s271 + $0x130] sm:$0xff] %v1820
      %1885 = vst [vmem:[%s271 + $0x138] sm:$0xff] %v1821
      %1886 = vst [vmem:[%s271 + $0x140] sm:$0xff] %v1822
      %1887 = vst [vmem:[%s271 + $0x148] sm:$0xff] %v1823
      %1888 = vst [vmem:[%s271 + $0x150] sm:$0xff] %v1824
      %1889 = vst [vmem:[%s271 + $0x158] sm:$0xff] %v1825
      %1890 = vst [vmem:[%s271 + $0x160] sm:$0xff] %v1826
      %1891 = vst [vmem:[%s271 + $0x168] sm:$0xff] %v1827
      %1892 = vst [vmem:[%s271 + $0x170] sm:$0xff] %v1828
      %1893 = vst [vmem:[%s271 + $0x178] sm:$0xff] %v1829
      %1894 = vst [vmem:[%s271 + $0x180] sm:$0xff] %v1830
      %1895 = vst [vmem:[%s271 + $0x188] sm:$0xff] %v1831
      %1896 = vst [vmem:[%s271 + $0x190] sm:$0xff] %v1832
      %1897 = vst [vmem:[%s271 + $0x198] sm:$0xff] %v1833
      %1898 = vst [vmem:[%s271 + $0x1a0] sm:$0xff] %v1834
      %1899 = vst [vmem:[%s271 + $0x1a8] sm:$0xff] %v1835
      %1900 = vst [vmem:[%s271 + $0x1b0] sm:$0xff] %v1836
      %1901 = vst [vmem:[%s271 + $0x1b8] sm:$0xff] %v1837
      %1902 = vst [vmem:[%s271 + $0x1c0] sm:$0xff] %v1838
      %1903 = vst [vmem:[%s271 + $0x1c8] sm:$0xff] %v1839
      %1904 = vst [vmem:[%s271 + $0x1d0] sm:$0xff] %v1840
      %1905 = vst [vmem:[%s271 + $0x1d8] sm:$0xff] %v1841
      %1906 = vst [vmem:[%s271 + $0x1e0] sm:$0xff] %v1842
      %1907 = vst [vmem:[%s271 + $0x1e8] sm:$0xff] %v1843
      %1908 = vst [vmem:[%s271 + $0x1f0] sm:$0xff] %v1844
      %1909 = vst [vmem:[%s271 + $0x1f8] sm:$0xff] %v1845
      %s1910 = smul.u32 32, %s20
      %p1911 = scmp.lt.s32.totalorder %s19, 1
      %s1912 = scalar_select %p1911, %s19, 1
      %p1913 = scmp.lt.s32.totalorder %s1910, 31
      %s1914 = scalar_select %p1913, %s1910, 31
      %s1915 = smul.addr %s1912, 64
      %s1916 = sadd.s32 %s1914, %s1915
      %s1917 = smul.addr %s1916, 8
      %s1918 = scalar_lea.vmem %s4, %s1917
      // Predicated region
      $region37: #{_lambda_.8} parent=35 // pred_check
        %p1919 = pneg %p145
      $region38: #{_lambda_.8} parent=35 // pred_check_branch
        %1921 = sbr.rel (%p1919) target = $region40
      $region39: #{_lambda_.8} parent=35 // pred_region
        %s1922 = smul.u32 32, %s20
      $region40: #{_lambda_.8} parent=35 // pred_fallthru
        _
    $region36: #{_lambda_.8} parent=5 // pred_fallthru
      _
    %p1923 = scmp.le.s32.totalorder 2, %s10
    // Predicated region
    $region41: #{_lambda_.8} parent=5 // pred_check
      %p1924 = pneg %p1923
    $region42: #{_lambda_.8} parent=5 // pred_check_branch
      %1926 = sbr.rel (%p1924) target = $region44
    $region43: #{_lambda_.8} parent=5 // pred_region
      %s1927 = ssub.s32 %s10, 2
      // Predicated region
      $region45: #{_lambda_.8} parent=43 // pred_check
        %p1928 = pneg %p151
      $region46: #{_lambda_.8} parent=43 // pred_check_branch
        %1930 = sbr.rel (%p1928) target = $region48
      $region47: #{_lambda_.8} parent=43 // pred_region
        %s1931 = smul.u32 32, %s22
        %p1932 = scmp.lt.s32.totalorder %s21, 1
        %s1933 = scalar_select %p1932, %s21, 1
        %p1934 = scmp.lt.s32.totalorder %s1931, 31
        %s1935 = scalar_select %p1934, %s1931, 31
        %s1936 = smul.addr %s1933, 64
        %s1937 = sadd.s32 %s1935, %s1936
        %s1938 = smul.addr %s1937, 8
        %s1939 = scalar_lea.vmem %s4, %s1938
      $region48: #{_lambda_.8} parent=43 // pred_fallthru
        _
    $region44: #{_lambda_.8} parent=5 // pred_fallthru
      _
  $region6: #{_lambda_.8} parent=0 // loop_footer
    %s14 = sadd.s32 1, %s10
  $region7: #{_lambda_.8} parent=0 // loop_footer_branch
    %9 = sbr.rel target = $region3
  $region8: #{_lambda_.8} parent=0 // loop_exit
    _

// kernel: _lambda_.9
$region0: #{_lambda_.9}
  #allocation0 [shape = 'u32[]', space=smem, size = 0x4, offset = 0x4, fixed_abs, tag = 'smem constant byte address 0x4 - core index']
  #allocation1 [shape = 'u32[144,128]{1,0:T(1,128)}', space=vmem, size = 0x12000, scoped, tag = 'internal scratch']
  %s0 = inlined_call_operand.vmem [shape: f32[2,48,1024], index: 0, kind: input, shape index: {}]
  %s1 = inlined_call_operand.vmem [shape: f32[2,16,1024], index: 1, kind: input, shape index: {}]
  %s2 = inlined_call_operand.vmem [shape: f32[16,48], index: 2, kind: input, shape index: {}]
  %s3 = inlined_call_operand.vmem [shape: f32[16,1], index: 3, kind: input, shape index: {}]
  %s4 = inlined_call_operand.vmem [shape: f32[2,16,1024], index: 4, kind: output, shape index: {}]
  %s5 = sld [smem:[#allocation0]]
  $region49: #{_lambda_.9} parent=0
    _
  %s7 = ssub.s32 1, %s5
  %s8 = scalar_select 0, %s7, %s5
  loop: start=0, step=1, limit=4
  $region2: #{_lambda_.9} parent=0 // loop_pre_header
    _
  $region3: #{_lambda_.9} parent=0 // loop_header
    %s10 = sphi 0, %s14
    %p11 = scmp.ge.s32.totalorder %s10, 4
    %s17 = sphi 0, %s29
    %s18 = sphi 0, %s25
    %s19 = sphi 0, %s17
    %s20 = sphi 0, %s18
    %s21 = sphi 0, %s19
    %s22 = sphi 0, %s20
    %s34 = sphi 0, %s36
    %s37 = sphi 0, %s34
    %s38 = sphi 0, %s37
    %s54 = sphi 0, %s38
    %s62 = sphi 0, %s64
    %s65 = sphi 0, %s62
    %s66 = sphi 0, %s65
    %s82 = sphi 0, %s66
    %s86 = sphi 0, %s86
    %s88 = sphi 0, %s86
    %s89 = sphi 0, %s88
    %s103 = sphi 0, %s89
    %s107 = sphi 0, %s107
    %s109 = sphi 0, %s107
    %s110 = sphi 0, %s109
    %s124 = sphi 0, %s110
    %s132 = sphi 0, %s134
    %s135 = sphi 0, %s132
    %s136 = sphi 0, %s135
    %s152 = sphi 0, %s136
  $region4: #{_lambda_.9} parent=0 // loop_header_branch
    %13 = sbr.rel (%p11) target = $region8
  $region5: #{_lambda_.9} parent=0 // loop_body
    %s15 = ssub.s32 %s10, 1
    %s16 = ssub.s32 %s10, 2
    %s23 = sadd.s32 1, %s18
    %p24 = scmp.ge.s32.totalorder %s23, 1
    %s25 = scalar_select %p24, 0, %s23
    %s26 = sadd.s32 1, %s17
    %s27 = scalar_select %p24, %s26, %s17
    %p28 = scmp.ge.s32.totalorder %s27, 2
    %s29 = scalar_select %p28, 0, %s27
    %s30 = ssub.s32 %s17, %s29
    %s31 = ssub.s32 %s18, %s25
    %s32 = sor.u32 %s30, %s31
    %p33 = scmp.eq.s32.totalorder %s32, 0
    %s35 = sadd.s32 %s34, 1
    %s36 = scalar_select %p33, %s34, %s35
    %p39 = pneg %p33
    %p40 = scmp.eq.s32.totalorder %s10, 1
    %p41 = por %p39, %p40
    %p42 = scmp.ne.s32.totalorder %s34, %s37
    %p43 = scmp.eq.s32.totalorder %s10, 0
    %p44 = por %p42, %p43
    %p45 = scmp.ne.s32.totalorder %s34, %s37
    %p46 = scmp.eq.s32.totalorder %s15, 1
    %p47 = por %p45, %p46
    %p48 = scmp.ne.s32.totalorder %s37, %s38
    %p49 = scmp.eq.s32.totalorder %s15, 0
    %p50 = por %p48, %p49
    %p51 = scmp.ne.s32.totalorder %s37, %s38
    %p52 = scmp.eq.s32.totalorder %s16, 1
    %p53 = por %p51, %p52
    %p55 = scmp.ne.s32.totalorder %s38, %s54
    %p56 = scmp.eq.s32.totalorder %s16, 0
    %p57 = por %p55, %p56
    %s58 = ssub.s32 %s17, %s29
    %s59 = ssub.s32 %s18, %s25
    %s60 = sor.u32 %s58, %s59
    %p61 = scmp.eq.s32.totalorder %s60, 0
    %s63 = sadd.s32 %s62, 1
    %s64 = scalar_select %p61, %s62, %s63
    %p67 = pneg %p61
    %p68 = scmp.eq.s32.totalorder %s10, 1
    %p69 = por %p67, %p68
    %p70 = scmp.ne.s32.totalorder %s62, %s65
    %p71 = scmp.eq.s32.totalorder %s10, 0
    %p72 = por %p70, %p71
    %p73 = scmp.ne.s32.totalorder %s62, %s65
    %p74 = scmp.eq.s32.totalorder %s15, 1
    %p75 = por %p73, %p74
    %p76 = scmp.ne.s32.totalorder %s65, %s66
    %p77 = scmp.eq.s32.totalorder %s15, 0
    %p78 = por %p76, %p77
    %p79 = scmp.ne.s32.totalorder %s65, %s66
    %p80 = scmp.eq.s32.totalorder %s16, 1
    %p81 = por %p79, %p80
    %p83 = scmp.ne.s32.totalorder %s66, %s82
    %p84 = scmp.eq.s32.totalorder %s16, 0
    %p85 = por %p83, %p84
    %s87 = sadd.s32 %s86, 1
    %p90 = scmp.eq.s32.totalorder %s10, 1
    %p91 = scmp.ne.s32.totalorder %s86, %s88
    %p92 = scmp.eq.s32.totalorder %s10, 0
    %p93 = por %p91, %p92
    %p94 = scmp.ne.s32.totalorder %s86, %s88
    %p95 = scmp.eq.s32.totalorder %s15, 1
    %p96 = por %p94, %p95
    %p97 = scmp.ne.s32.totalorder %s88, %s89
    %p98 = scmp.eq.s32.totalorder %s15, 0
    %p99 = por %p97, %p98
    %p100 = scmp.ne.s32.totalorder %s88, %s89
    %p101 = scmp.eq.s32.totalorder %s16, 1
    %p102 = por %p100, %p101
    %p104 = scmp.ne.s32.totalorder %s89, %s103
    %p105 = scmp.eq.s32.totalorder %s16, 0
    %p106 = por %p104, %p105
    %s108 = sadd.s32 %s107, 1
    %p111 = scmp.eq.s32.totalorder %s10, 1
    %p112 = scmp.ne.s32.totalorder %s107, %s109
    %p113 = scmp.eq.s32.totalorder %s10, 0
    %p114 = por %p112, %p113
    %p115 = scmp.ne.s32.totalorder %s107, %s109
    %p116 = scmp.eq.s32.totalorder %s15, 1
    %p117 = por %p115, %p116
    %p118 = scmp.ne.s32.totalorder %s109, %s110
    %p119 = scmp.eq.s32.totalorder %s15, 0
    %p120 = por %p118, %p119
    %p121 = scmp.ne.s32.totalorder %s109, %s110
    %p122 = scmp.eq.s32.totalorder %s16, 1
    %p123 = por %p121, %p122
    %p125 = scmp.ne.s32.totalorder %s110, %s124
    %p126 = scmp.eq.s32.totalorder %s16, 0
    %p127 = por %p125, %p126
    %s128 = ssub.s32 %s17, %s29
    %s129 = ssub.s32 %s18, %s25
    %s130 = sor.u32 %s128, %s129
    %p131 = scmp.eq.s32.totalorder %s130, 0
    %s133 = sadd.s32 %s132, 1
    %s134 = scalar_select %p131, %s132, %s133
    %p137 = pneg %p131
    %p138 = scmp.eq.s32.totalorder %s10, 1
    %p139 = por %p137, %p138
    %p140 = scmp.ne.s32.totalorder %s132, %s135
    %p141 = scmp.eq.s32.totalorder %s10, 0
    %p142 = por %p140, %p141
    %p143 = scmp.ne.s32.totalorder %s132, %s135
    %p144 = scmp.eq.s32.totalorder %s15, 1
    %p145 = por %p143, %p144
    %p146 = scmp.ne.s32.totalorder %s135, %s136
    %p147 = scmp.eq.s32.totalorder %s15, 0
    %p148 = por %p146, %p147
    %p149 = scmp.ne.s32.totalorder %s135, %s136
    %p150 = scmp.eq.s32.totalorder %s16, 1
    %p151 = por %p149, %p150
    %p153 = scmp.ne.s32.totalorder %s136, %s152
    %p154 = scmp.eq.s32.totalorder %s16, 0
    %p155 = por %p153, %p154
    %p156 = scmp.le.s32.totalorder 1, %s10
    %p157 = scmp.lt.s32.totalorder %s10, 3
    %p158 = pnand %p156, %p157
    %p159 = pneg %p158
    // Predicated region
    $region9: #{_lambda_.9} parent=5 // pred_check
      _
    $region10: #{_lambda_.9} parent=5 // pred_check_branch
      %161 = sbr.rel (%p158) target = $region12
    $region11: #{_lambda_.9} parent=5 // pred_region
      %s162 = ssub.s32 %s10, 1
      // Predicated region
      $region13: #{_lambda_.9} parent=11 // pred_check
        %p163 = pneg %p99
      $region14: #{_lambda_.9} parent=11 // pred_check_branch
        %165 = sbr.rel (%p163) target = $region16
      $region15: #{_lambda_.9} parent=11 // pred_region
        _
      $region16: #{_lambda_.9} parent=11 // pred_fallthru
        _
      // Predicated region
      $region17: #{_lambda_.9} parent=11 // pred_check
        %p166 = pneg %p120
      $region18: #{_lambda_.9} parent=11 // pred_check_branch
        %168 = sbr.rel (%p166) target = $region20
      $region19: #{_lambda_.9} parent=11 // pred_region
        _
      $region20: #{_lambda_.9} parent=11 // pred_fallthru
        _
    $region12: #{_lambda_.9} parent=5 // pred_fallthru
      _
    %p169 = scmp.lt.s32.totalorder %s10, 2
    // Predicated region
    $region21: #{_lambda_.9} parent=5 // pred_check
      %p170 = pneg %p169
    $region22: #{_lambda_.9} parent=5 // pred_check_branch
      %172 = sbr.rel (%p170) target = $region24
    $region23: #{_lambda_.9} parent=5 // pred_region
      // Predicated region
      $region25: #{_lambda_.9} parent=23 // pred_check
        %p173 = pneg %p44
      $region26: #{_lambda_.9} parent=23 // pred_check_branch
        %175 = sbr.rel (%p173) target = $region28
      $region27: #{_lambda_.9} parent=23 // pred_region
        %s176 = smul.u32 8, %s18
        %p177 = scmp.lt.s32.totalorder %s17, 1
        %s178 = scalar_select %p177, %s17, 1
        %p179 = scmp.lt.s32.totalorder %s176, 7
        %s180 = scalar_select %p179, %s176, 7
        %s181 = smul.addr %s178, 48
        %s182 = sadd.s32 %s180, %s181
        %s183 = smul.addr %s182, 8
        %s184 = scalar_lea.vmem %s0, %s183
        %s185 = smul.u32 8, %s18
      $region28: #{_lambda_.9} parent=23 // pred_fallthru
        _
      // Predicated region
      $region29: #{_lambda_.9} parent=23 // pred_check
        %p186 = pneg %p72
      $region30: #{_lambda_.9} parent=23 // pred_check_branch
        %188 = sbr.rel (%p186) target = $region32
      $region31: #{_lambda_.9} parent=23 // pred_region
        %s189 = smul.u32 8, %s18
        %p190 = scmp.lt.s32.totalorder %s17, 1
        %s191 = scalar_select %p190, %s17, 1
        %p192 = scmp.lt.s32.totalorder %s189, 7
        %s193 = scalar_select %p192, %s189, 7
        %s194 = smul.addr %s191, 16
        %s195 = sadd.s32 %s193, %s194
        %s196 = smul.addr %s195, 8
        %s197 = scalar_lea.vmem %s1, %s196
        %s198 = smul.u32 8, %s18
      $region32: #{_lambda_.9} parent=23 // pred_fallthru
        _
    $region24: #{_lambda_.9} parent=5 // pred_fallthru
      _
    %p199 = scmp.le.s32.totalorder 1, %s10
    %p200 = scmp.lt.s32.totalorder %s10, 3
    %p201 = pnand %p199, %p200
    %p202 = pneg %p201
    // Predicated region
    $region33: #{_lambda_.9} parent=5 // pred_check
      _
    $region34: #{_lambda_.9} parent=5 // pred_check_branch
      %204 = sbr.rel (%p201) target = $region36
    $region35: #{_lambda_.9} parent=5 // pred_region
      %s205 = ssub.s32 %s10, 1
      %s206 = smul.u32 8, %s20
      %p207 = scmp.lt.s32.totalorder %s19, 1
      %s208 = scalar_select %p207, %s19, 1
      %p209 = scmp.lt.s32.totalorder %s206, 7
      %s210 = scalar_select %p209, %s206, 7
      %s211 = smul.addr %s208, 48
      %s212 = sadd.s32 %s210, %s211
      %s213 = smul.addr %s212, 8
      %s214 = scalar_lea.vmem %s0, %s213
      %p215 = pneg %p50
      %p216 = pneg %p47
      %s217 = smul.u32 8, %s20
      %p218 = scmp.lt.s32.totalorder %s19, 1
      %s219 = scalar_select %p218, %s19, 1
      %p220 = scmp.lt.s32.totalorder %s217, 7
      %s221 = scalar_select %p220, %s217, 7
      %s222 = smul.addr %s219, 16
      %s223 = sadd.s32 %s221, %s222
      %s224 = smul.addr %s223, 8
      %s225 = scalar_lea.vmem %s1, %s224
      %p226 = pneg %p78
      %p227 = pneg %p75
      %p228 = pneg %p99
      %p229 = pneg %p96
      %p230 = pneg %p120
      %p231 = pneg %p117
      %p232 = pneg %p148
      %p233 = pneg %p145
      %s234 = smul.u32 8, %s20
      %p235 = scmp.lt.s32.totalorder %s19, 1
      %s236 = scalar_select %p235, %s19, 1
      %p237 = scmp.lt.s32.totalorder %s234, 7
      %s238 = scalar_select %p237, %s234, 7
      %s239 = smul.addr %s236, 16
      %s240 = sadd.s32 %s238, %s239
      %s241 = smul.addr %s240, 8
      %s242 = scalar_lea.vmem %s4, %s241
      %s243 = smul.u32 8, %s20
      %p244 = scmp.lt.s32.totalorder %s19, 1
      %s245 = scalar_select %p244, %s19, 1
      %p246 = scmp.lt.s32.totalorder %s243, 7
      %s247 = scalar_select %p246, %s243, 7
      %s248 = smul.addr %s245, 48
      %s249 = sadd.s32 %s247, %s248
      %s250 = smul.addr %s249, 8
      %s251 = scalar_lea.vmem %s0, %s250
      %s252 = smul.u32 8, %s20
      %s253 = smul.u32 8, %s20
      %p254 = scmp.lt.s32.totalorder %s19, 1
      %s255 = scalar_select %p254, %s19, 1
      %p256 = scmp.lt.s32.totalorder %s253, 7
      %s257 = scalar_select %p256, %s253, 7
      %s258 = smul.addr %s255, 16
      %s259 = sadd.s32 %s257, %s258
      %s260 = smul.addr %s259, 8
      %s261 = scalar_lea.vmem %s1, %s260
      %s262 = smul.u32 8, %s20
      %s263 = smul.u32 8, %s20
      %p264 = scmp.lt.s32.totalorder %s19, 1
      %s265 = scalar_select %p264, %s19, 1
      %p266 = scmp.lt.s32.totalorder %s263, 7
      %s267 = scalar_select %p266, %s263, 7
      %s268 = smul.addr %s265, 16
      %s269 = sadd.s32 %s267, %s268
      %s270 = smul.addr %s269, 8
      %s271 = scalar_lea.vmem %s4, %s270
      %s272 = smul.u32 8, %s20
      %v273 = vld [vmem:[%s2] sm:$0xff]
      %v274 = vld [vmem:[%s2 + $0x8] sm:$0xff]
      %v275 = vld [vmem:[%s251] sm:$0xff]
      %v276 = vld [vmem:[%s251 + $0x8] sm:$0xff]
      %v277 = vld [vmem:[%s251 + $0x10] sm:$0xff]
      %v278 = vld [vmem:[%s251 + $0x18] sm:$0xff]
      %v279 = vld [vmem:[%s251 + $0x20] sm:$0xff]
      %v280 = vld [vmem:[%s251 + $0x28] sm:$0xff]
      %v281 = vld [vmem:[%s251 + $0x30] sm:$0xff]
      %v282 = vld [vmem:[%s251 + $0x38] sm:$0xff]
      %v283 = vld [vmem:[%s251 + $0x40] sm:$0xff]
      %v284 = vld [vmem:[%s251 + $0x48] sm:$0xff]
      %v285 = vld [vmem:[%s251 + $0x50] sm:$0xff]
      %v286 = vld [vmem:[%s251 + $0x58] sm:$0xff]
      %v287 = vld [vmem:[%s251 + $0x60] sm:$0xff]
      %v288 = vld [vmem:[%s251 + $0x68] sm:$0xff]
      %v289 = vld [vmem:[%s251 + $0x70] sm:$0xff]
      %v290 = vld [vmem:[%s251 + $0x78] sm:$0xff]
      %v291 = vld [vmem:[%s251 + $0x80] sm:$0xff]
      %v292 = vld [vmem:[%s251 + $0x88] sm:$0xff]
      %v293 = vld [vmem:[%s251 + $0x90] sm:$0xff]
      %v294 = vld [vmem:[%s251 + $0x98] sm:$0xff]
      %v295 = vld [vmem:[%s251 + $0xa0] sm:$0xff]
      %v296 = vld [vmem:[%s251 + $0xa8] sm:$0xff]
      %v297 = vld [vmem:[%s251 + $0xb0] sm:$0xff]
      %v298 = vld [vmem:[%s251 + $0xb8] sm:$0xff]
      %v299 = vld [vmem:[%s251 + $0xc0] sm:$0xff]
      %v300 = vld [vmem:[%s251 + $0xc8] sm:$0xff]
      %v301 = vld [vmem:[%s251 + $0xd0] sm:$0xff]
      %v302 = vld [vmem:[%s251 + $0xd8] sm:$0xff]
      %v303 = vld [vmem:[%s251 + $0xe0] sm:$0xff]
      %v304 = vld [vmem:[%s251 + $0xe8] sm:$0xff]
      %v305 = vld [vmem:[%s251 + $0xf0] sm:$0xff]
      %v306 = vld [vmem:[%s251 + $0xf8] sm:$0xff]
      %v307 = vld [vmem:[%s251 + $0x100] sm:$0xff]
      %v308 = vld [vmem:[%s251 + $0x108] sm:$0xff]
      %v309 = vld [vmem:[%s251 + $0x110] sm:$0xff]
      %v310 = vld [vmem:[%s251 + $0x118] sm:$0xff]
      %v311 = vld [vmem:[%s251 + $0x120] sm:$0xff]
      %v312 = vld [vmem:[%s251 + $0x128] sm:$0xff]
      %v313 = vld [vmem:[%s251 + $0x130] sm:$0xff]
      %v314 = vld [vmem:[%s251 + $0x138] sm:$0xff]
      %v315 = vld [vmem:[%s251 + $0x140] sm:$0xff]
      %v316 = vld [vmem:[%s251 + $0x148] sm:$0xff]
      %v317 = vld [vmem:[%s251 + $0x150] sm:$0xff]
      %v318 = vld [vmem:[%s251 + $0x158] sm:$0xff]
      %v319 = vld [vmem:[%s251 + $0x160] sm:$0xff]
      %v320 = vld [vmem:[%s251 + $0x168] sm:$0xff]
      %v321 = vld [vmem:[%s251 + $0x170] sm:$0xff]
      %v322 = vld [vmem:[%s251 + $0x178] sm:$0xff]
      %v323 = vld [vmem:[%s3] sm:$0xff]
      %v324 = vld [vmem:[%s3 + $0x8] sm:$0xff]
      %326 = vset.pattern.permute.xlu0 0
      %327 = vperm.xlu0 %326, %v323
      %v328 = vpop.permute.xlu0 %327
      %331 = vset.pattern.permute.xlu0 0
      %332 = vperm.xlu0 %331, %v324
      %v333 = vpop.permute.xlu0 %332
      %vm335 = vcmask 392192
      %v337 = vsel %vm335, %v273, 0
      %v340 = vsel %vm335, %v274, 0
      %342 = vmatprep.subr.mxu0 %v276
      %343 = vmatpush1.msra.mxu0 %v275
      %344 = vmatprep.subr.mxu0 %v284
      %345 = vmatpush1.msra.mxu0 %v283
      %346 = vmatprep.subr.mxu0 %v292
      %347 = vmatpush1.msra.mxu0 %v291
      %348 = vmatprep.subr.mxu0 %v300
      %349 = vmatpush1.msra.mxu0 %v299
      %350 = vmatprep.subr.mxu0 %v308
      %351 = vmatpush1.msra.mxu0 %v307
      %352 = vmatprep.subr.mxu0 %v316
      %353 = vmatpush1.msra.mxu0 %v315
      %354 = vmatprep.subr.mxu0 0.0
      %355 = vmatpush1.msra.mxu0 0.0
      %356 = vmatprep.subr.mxu0 0.0
      %357 = vmatpush1.msra.mxu0 0.0
      %358 = vmatprep.subr.mxu0 0.0
      %359 = vmatpush1.msra.mxu0 0.0
      %360 = vmatprep.subr.mxu0 0.0
      %361 = vmatpush1.msra.mxu0 0.0
      %362 = vmatprep.subr.mxu0 0.0
      %363 = vmatpush1.msra.mxu0 0.0
      %364 = vmatprep.subr.mxu0 0.0
      %365 = vmatpush1.msra.mxu0 0.0
      %366 = vmatprep.subr.mxu0 0.0
      %367 = vmatpush1.msra.mxu0 0.0
      %368 = vmatprep.subr.mxu0 0.0
      %369 = vmatpush1.msra.mxu0 0.0
      %370 = vmatprep.subr.mxu0 0.0
      %371 = vmatpush1.msra.mxu0 0.0
      %372 = vmatprep.subr.mxu0 0.0
      %373 = vmatpush1.msra.mxu0 0.0
      %374 = vmatprep.subr.mxu0 0.0
      %375 = vmatpush1.msra.mxu0 0.0
      %376 = vmatprep.subr.mxu0 0.0
      %377 = vmatpush1.msra.mxu0 0.0
      %378 = vmatprep.subr.mxu0 0.0
      %379 = vmatpush1.msra.mxu0 0.0
      %380 = vmatprep.subr.mxu0 0.0
      %381 = vmatpush1.msra.mxu0 0.0
      %382 = vmatprep.subr.mxu0 0.0
      %383 = vmatpush1.msra.mxu0 0.0
      %384 = vmatprep.subr.mxu0 0.0
      %385 = vmatpush1.msra.mxu0 0.0
      %386 = vmatprep.subr.mxu0 0.0
      %387 = vmatpush1.msra.mxu0 0.0
      %388 = vmatprep.subr.mxu0 0.0
      %389 = vmatpush1.msra.mxu0 0.0
      %390 = vmatprep.subr.mxu0 0.0
      %391 = vmatpush1.msra.mxu0 0.0
      %392 = vmatprep.subr.mxu0 0.0
      %393 = vmatpush1.msra.mxu0 0.0
      %394 = vmatprep.subr.mxu0 0.0
      %395 = vmatpush1.msra.mxu0 0.0
      %396 = vmatprep.subr.mxu0 0.0
      %397 = vmatpush1.msra.mxu0 0.0
      %398 = vmatprep.subr.mxu0 0.0
      %399 = vmatpush1.msra.mxu0 0.0
      %400 = vmatprep.subr.mxu0 0.0
      %401 = vmatpush1.msra.mxu0 0.0
      %402 = vmatprep.subr.mxu0 0.0
      %403 = vmatpush1.msra.mxu0 0.0
      %404 = vmatprep.subr.mxu0 0.0
      %405 = vmatpush1.msra.mxu0 0.0
      %406 = vmatprep.mubr.f32.mxu0 0.0
      %407 = vmatmul.mubr.f32.gmra.mrb[0].mxu0 %v337
      %v408 = vpop.f32.mrb[0].mxu0
      %v409 = vadd.f32 %v328, %v408
      %v410 = vpop.f32.mrb[0].mxu0
      %v411 = vadd.f32 %v328, %v410
      %412 = vmatprep.mubr.f32.mxu0 0.0
      %413 = vmatmul.mubr.f32.gmra.mrb[0].mxu0 %v340
      %v414 = vpop.f32.mrb[0].mxu0
      %v415 = vadd.f32 %v333, %v414
      %v416 = vpop.f32.mrb[0].mxu0
      %v417 = vadd.f32 %v333, %v416
      %418 = vdwg.mxu0
      %419 = vmatprep.subr.mxu0 %v278
      %420 = vmatpush1.msra.mxu0 %v277
      %421 = vmatprep.subr.mxu0 %v286
      %422 = vmatpush1.msra.mxu0 %v285
      %423 = vmatprep.subr.mxu0 %v294
      %424 = vmatpush1.msra.mxu0 %v293
      %425 = vmatprep.subr.mxu0 %v302
      %426 = vmatpush1.msra.mxu0 %v301
      %427 = vmatprep.subr.mxu0 %v310
      %428 = vmatpush1.msra.mxu0 %v309
      %429 = vmatprep.subr.mxu0 %v318
      %430 = vmatpush1.msra.mxu0 %v317
      %431 = vmatprep.subr.mxu0 0.0
      %432 = vmatpush1.msra.mxu0 0.0
      %433 = vmatprep.subr.mxu0 0.0
      %434 = vmatpush1.msra.mxu0 0.0
      %435 = vmatprep.subr.mxu0 0.0
      %436 = vmatpush1.msra.mxu0 0.0
      %437 = vmatprep.subr.mxu0 0.0
      %438 = vmatpush1.msra.mxu0 0.0
      %439 = vmatprep.subr.mxu0 0.0
      %440 = vmatpush1.msra.mxu0 0.0
      %441 = vmatprep.subr.mxu0 0.0
      %442 = vmatpush1.msra.mxu0 0.0
      %443 = vmatprep.subr.mxu0 0.0
      %444 = vmatpush1.msra.mxu0 0.0
      %445 = vmatprep.subr.mxu0 0.0
      %446 = vmatpush1.msra.mxu0 0.0
      %447 = vmatprep.subr.mxu0 0.0
      %448 = vmatpush1.msra.mxu0 0.0
      %449 = vmatprep.subr.mxu0 0.0
      %450 = vmatpush1.msra.mxu0 0.0
      %451 = vmatprep.subr.mxu0 0.0
      %452 = vmatpush1.msra.mxu0 0.0
      %453 = vmatprep.subr.mxu0 0.0
      %454 = vmatpush1.msra.mxu0 0.0
      %455 = vmatprep.subr.mxu0 0.0
      %456 = vmatpush1.msra.mxu0 0.0
      %457 = vmatprep.subr.mxu0 0.0
      %458 = vmatpush1.msra.mxu0 0.0
      %459 = vmatprep.subr.mxu0 0.0
      %460 = vmatpush1.msra.mxu0 0.0
      %461 = vmatprep.subr.mxu0 0.0
      %462 = vmatpush1.msra.mxu0 0.0
      %463 = vmatprep.subr.mxu0 0.0
      %464 = vmatpush1.msra.mxu0 0.0
      %465 = vmatprep.subr.mxu0 0.0
      %466 = vmatpush1.msra.mxu0 0.0
      %467 = vmatprep.subr.mxu0 0.0
      %468 = vmatpush1.msra.mxu0 0.0
      %469 = vmatprep.subr.mxu0 0.0
      %470 = vmatpush1.msra.mxu0 0.0
      %471 = vmatprep.subr.mxu0 0.0
      %472 = vmatpush1.msra.mxu0 0.0
      %473 = vmatprep.subr.mxu0 0.0
      %474 = vmatpush1.msra.mxu0 0.0
      %475 = vmatprep.subr.mxu0 0.0
      %476 = vmatpush1.msra.mxu0 0.0
      %477 = vmatprep.subr.mxu0 0.0
      %478 = vmatpush1.msra.mxu0 0.0
      %479 = vmatprep.subr.mxu0 0.0
      %480 = vmatpush1.msra.mxu0 0.0
      %481 = vmatprep.subr.mxu0 0.0
      %482 = vmatpush1.msra.mxu0 0.0
      %483 = vmatprep.mubr.f32.mxu0 0.0
      %484 = vmatmul.mubr.f32.gmra.mrb[0].mxu0 %v337
      %v485 = vpop.f32.mrb[0].mxu0
      %v486 = vadd.f32 %v328, %v485
      %v487 = vpop.f32.mrb[0].mxu0
      %v488 = vadd.f32 %v328, %v487
      %489 = vmatprep.mubr.f32.mxu0 0.0
      %490 = vmatmul.mubr.f32.gmra.mrb[0].mxu0 %v340
      %v491 = vpop.f32.mrb[0].mxu0
      %v492 = vadd.f32 %v333, %v491
      %v493 = vpop.f32.mrb[0].mxu0
      %v494 = vadd.f32 %v333, %v493
      %495 = vdwg.mxu0
      %496 = vmatprep.subr.mxu0 %v280
      %497 = vmatpush1.msra.mxu0 %v279
      %498 = vmatprep.subr.mxu0 %v288
      %499 = vmatpush1.msra.mxu0 %v287
      %500 = vmatprep.subr.mxu0 %v296
      %501 = vmatpush1.msra.mxu0 %v295
      %502 = vmatprep.subr.mxu0 %v304
      %503 = vmatpush1.msra.mxu0 %v303
      %504 = vmatprep.subr.mxu0 %v312
      %505 = vmatpush1.msra.mxu0 %v311
      %506 = vmatprep.subr.mxu0 %v320
      %507 = vmatpush1.msra.mxu0 %v319
      %508 = vmatprep.subr.mxu0 0.0
      %509 = vmatpush1.msra.mxu0 0.0
      %510 = vmatprep.subr.mxu0 0.0
      %511 = vmatpush1.msra.mxu0 0.0
      %512 = vmatprep.subr.mxu0 0.0
      %513 = vmatpush1.msra.mxu0 0.0
      %514 = vmatprep.subr.mxu0 0.0
      %515 = vmatpush1.msra.mxu0 0.0
      %516 = vmatprep.subr.mxu0 0.0
      %517 = vmatpush1.msra.mxu0 0.0
      %518 = vmatprep.subr.mxu0 0.0
      %519 = vmatpush1.msra.mxu0 0.0
      %520 = vmatprep.subr.mxu0 0.0
      %521 = vmatpush1.msra.mxu0 0.0
      %522 = vmatprep.subr.mxu0 0.0
      %523 = vmatpush1.msra.mxu0 0.0
      %524 = vmatprep.subr.mxu0 0.0
      %525 = vmatpush1.msra.mxu0 0.0
      %526 = vmatprep.subr.mxu0 0.0
      %527 = vmatpush1.msra.mxu0 0.0
      %528 = vmatprep.subr.mxu0 0.0
      %529 = vmatpush1.msra.mxu0 0.0
      %530 = vmatprep.subr.mxu0 0.0
      %531 = vmatpush1.msra.mxu0 0.0
      %532 = vmatprep.subr.mxu0 0.0
      %533 = vmatpush1.msra.mxu0 0.0
      %534 = vmatprep.subr.mxu0 0.0
      %535 = vmatpush1.msra.mxu0 0.0
      %536 = vmatprep.subr.mxu0 0.0
      %537 = vmatpush1.msra.mxu0 0.0
      %538 = vmatprep.subr.mxu0 0.0
      %539 = vmatpush1.msra.mxu0 0.0
      %540 = vmatprep.subr.mxu0 0.0
      %541 = vmatpush1.msra.mxu0 0.0
      %542 = vmatprep.subr.mxu0 0.0
      %543 = vmatpush1.msra.mxu0 0.0
      %544 = vmatprep.subr.mxu0 0.0
      %545 = vmatpush1.msra.mxu0 0.0
      %546 = vmatprep.subr.mxu0 0.0
      %547 = vmatpush1.msra.mxu0 0.0
      %548 = vmatprep.subr.mxu0 0.0
      %549 = vmatpush1.msra.mxu0 0.0
      %550 = vmatprep.subr.mxu0 0.0
      %551 = vmatpush1.msra.mxu0 0.0
      %552 = vmatprep.subr.mxu0 0.0
      %553 = vmatpush1.msra.mxu0 0.0
      %554 = vmatprep.subr.mxu0 0.0
      %555 = vmatpush1.msra.mxu0 0.0
      %556 = vmatprep.subr.mxu0 0.0
      %557 = vmatpush1.msra.mxu0 0.0
      %558 = vmatprep.subr.mxu0 0.0
      %559 = vmatpush1.msra.mxu0 0.0
      %560 = vmatprep.mubr.f32.mxu0 0.0
      %561 = vmatmul.mubr.f32.gmra.mrb[0].mxu0 %v337
      %v562 = vpop.f32.mrb[0].mxu0
      %v563 = vadd.f32 %v328, %v562
      %v564 = vpop.f32.mrb[0].mxu0
      %v565 = vadd.f32 %v328, %v564
      %566 = vmatprep.mubr.f32.mxu0 0.0
      %567 = vmatmul.mubr.f32.gmra.mrb[0].mxu0 %v340
      %v568 = vpop.f32.mrb[0].mxu0
      %v569 = vadd.f32 %v333, %v568
      %v570 = vpop.f32.mrb[0].mxu0
      %v571 = vadd.f32 %v333, %v570
      %572 = vdwg.mxu0
      %573 = vmatprep.subr.mxu0 %v282
      %574 = vmatpush1.msra.mxu0 %v281
      %575 = vmatprep.subr.mxu0 %v290
      %576 = vmatpush1.msra.mxu0 %v289
      %577 = vmatprep.subr.mxu0 %v298
      %578 = vmatpush1.msra.mxu0 %v297
      %579 = vmatprep.subr.mxu0 %v306
      %580 = vmatpush1.msra.mxu0 %v305
      %581 = vmatprep.subr.mxu0 %v314
      %582 = vmatpush1.msra.mxu0 %v313
      %583 = vmatprep.subr.mxu0 %v322
      %584 = vmatpush1.msra.mxu0 %v321
      %585 = vmatprep.subr.mxu0 0.0
      %586 = vmatpush1.msra.mxu0 0.0
      %587 = vmatprep.subr.mxu0 0.0
      %588 = vmatpush1.msra.mxu0 0.0
      %589 = vmatprep.subr.mxu0 0.0
      %590 = vmatpush1.msra.mxu0 0.0
      %591 = vmatprep.subr.mxu0 0.0
      %592 = vmatpush1.msra.mxu0 0.0
      %593 = vmatprep.subr.mxu0 0.0
      %594 = vmatpush1.msra.mxu0 0.0
      %595 = vmatprep.subr.mxu0 0.0
      %596 = vmatpush1.msra.mxu0 0.0
      %597 = vmatprep.subr.mxu0 0.0
      %598 = vmatpush1.msra.mxu0 0.0
      %599 = vmatprep.subr.mxu0 0.0
      %600 = vmatpush1.msra.mxu0 0.0
      %601 = vmatprep.subr.mxu0 0.0
      %602 = vmatpush1.msra.mxu0 0.0
      %603 = vmatprep.subr.mxu0 0.0
      %604 = vmatpush1.msra.mxu0 0.0
      %605 = vmatprep.subr.mxu0 0.0
      %606 = vmatpush1.msra.mxu0 0.0
      %607 = vmatprep.subr.mxu0 0.0
      %608 = vmatpush1.msra.mxu0 0.0
      %609 = vmatprep.subr.mxu0 0.0
      %610 = vmatpush1.msra.mxu0 0.0
      %611 = vmatprep.subr.mxu0 0.0
      %612 = vmatpush1.msra.mxu0 0.0
      %613 = vmatprep.subr.mxu0 0.0
      %614 = vmatpush1.msra.mxu0 0.0
      %615 = vmatprep.subr.mxu0 0.0
      %616 = vmatpush1.msra.mxu0 0.0
      %617 = vmatprep.subr.mxu0 0.0
      %618 = vmatpush1.msra.mxu0 0.0
      %619 = vmatprep.subr.mxu0 0.0
      %620 = vmatpush1.msra.mxu0 0.0
      %621 = vmatprep.subr.mxu0 0.0
      %622 = vmatpush1.msra.mxu0 0.0
      %623 = vmatprep.subr.mxu0 0.0
      %624 = vmatpush1.msra.mxu0 0.0
      %625 = vmatprep.subr.mxu0 0.0
      %626 = vmatpush1.msra.mxu0 0.0
      %627 = vmatprep.subr.mxu0 0.0
      %628 = vmatpush1.msra.mxu0 0.0
      %629 = vmatprep.subr.mxu0 0.0
      %630 = vmatpush1.msra.mxu0 0.0
      %631 = vmatprep.subr.mxu0 0.0
      %632 = vmatpush1.msra.mxu0 0.0
      %633 = vmatprep.subr.mxu0 0.0
      %634 = vmatpush1.msra.mxu0 0.0
      %635 = vmatprep.subr.mxu0 0.0
      %636 = vmatpush1.msra.mxu0 0.0
      %637 = vmatprep.mubr.f32.mxu0 0.0
      %638 = vmatmul.mubr.f32.gmra.mrb[0].mxu0 %v337
      %v639 = vpop.f32.mrb[0].mxu0
      %v640 = vadd.f32 %v328, %v639
      %v641 = vpop.f32.mrb[0].mxu0
      %v642 = vadd.f32 %v328, %v641
      %643 = vmatprep.mubr.f32.mxu0 0.0
      %644 = vmatmul.mubr.f32.gmra.mrb[0].mxu0 %v340
      %v645 = vpop.f32.mrb[0].mxu0
      %v646 = vadd.f32 %v333, %v645
      %v647 = vpop.f32.mrb[0].mxu0
      %v648 = vadd.f32 %v333, %v647
      %649 = vdwg.mxu0
      %v650 = vld [vmem:[%s261] sm:$0xff]
      %v651 = vld [vmem:[%s261 + $0x8] sm:$0xff]
      %v652 = vld [vmem:[%s261 + $0x10] sm:$0xff]
      %v653 = vld [vmem:[%s261 + $0x18] sm:$0xff]
      %v654 = vld [vmem:[%s261 + $0x20] sm:$0xff]
      %v655 = vld [vmem:[%s261 + $0x28] sm:$0xff]
      %v656 = vld [vmem:[%s261 + $0x30] sm:$0xff]
      %v657 = vld [vmem:[%s261 + $0x38] sm:$0xff]
      %v658 = vld [vmem:[%s261 + $0x40] sm:$0xff]
      %v659 = vld [vmem:[%s261 + $0x48] sm:$0xff]
      %v660 = vld [vmem:[%s261 + $0x50] sm:$0xff]
      %v661 = vld [vmem:[%s261 + $0x58] sm:$0xff]
      %v662 = vld [vmem:[%s261 + $0x60] sm:$0xff]
      %v663 = vld [vmem:[%s261 + $0x68] sm:$0xff]
      %v664 = vld [vmem:[%s261 + $0x70] sm:$0xff]
      %v665 = vld [vmem:[%s261 + $0x78] sm:$0xff]
      %v666 = vadd.f32 %v409, %v650
      %v667 = vadd.f32 %v411, %v651
      %v668 = vadd.f32 %v486, %v652
      %v669 = vadd.f32 %v488, %v653
      %v670 = vadd.f32 %v563, %v654
      %v671 = vadd.f32 %v565, %v655
      %v672 = vadd.f32 %v640, %v656
      %v673 = vadd.f32 %v642, %v657
      %v674 = vadd.f32 %v415, %v658
      %v675 = vadd.f32 %v417, %v659
      %v676 = vadd.f32 %v492, %v660
      %v677 = vadd.f32 %v494, %v661
      %v678 = vadd.f32 %v569, %v662
      %v679 = vadd.f32 %v571, %v663
      %v680 = vadd.f32 %v646, %v664
      %v681 = vadd.f32 %v648, %v665
      %682 = vst [vmem:[%s271] sm:$0xff] %v666
      %683 = vst [vmem:[%s271 + $0x8] sm:$0xff] %v667
      %684 = vst [vmem:[%s271 + $0x10] sm:$0xff] %v668
      %685 = vst [vmem:[%s271 + $0x18] sm:$0xff] %v669
      %686 = vst [vmem:[%s271 + $0x20] sm:$0xff] %v670
      %687 = vst [vmem:[%s271 + $0x28] sm:$0xff] %v671
      %688 = vst [vmem:[%s271 + $0x30] sm:$0xff] %v672
      %689 = vst [vmem:[%s271 + $0x38] sm:$0xff] %v673
      %690 = vst [vmem:[%s271 + $0x40] sm:$0xff] %v674
      %691 = vst [vmem:[%s271 + $0x48] sm:$0xff] %v675
      %692 = vst [vmem:[%s271 + $0x50] sm:$0xff] %v676
      %693 = vst [vmem:[%s271 + $0x58] sm:$0xff] %v677
      %694 = vst [vmem:[%s271 + $0x60] sm:$0xff] %v678
      %695 = vst [vmem:[%s271 + $0x68] sm:$0xff] %v679
      %696 = vst [vmem:[%s271 + $0x70] sm:$0xff] %v680
      %697 = vst [vmem:[%s271 + $0x78] sm:$0xff] %v681
      %s698 = smul.u32 8, %s20
      %p699 = scmp.lt.s32.totalorder %s19, 1
      %s700 = scalar_select %p699, %s19, 1
      %p701 = scmp.lt.s32.totalorder %s698, 7
      %s702 = scalar_select %p701, %s698, 7
      %s703 = smul.addr %s700, 16
      %s704 = sadd.s32 %s702, %s703
      %s705 = smul.addr %s704, 8
      %s706 = scalar_lea.vmem %s4, %s705
      // Predicated region
      $region37: #{_lambda_.9} parent=35 // pred_check
        %p707 = pneg %p145
      $region38: #{_lambda_.9} parent=35 // pred_check_branch
        %709 = sbr.rel (%p707) target = $region40
      $region39: #{_lambda_.9} parent=35 // pred_region
        %s710 = smul.u32 8, %s20
      $region40: #{_lambda_.9} parent=35 // pred_fallthru
        _
    $region36: #{_lambda_.9} parent=5 // pred_fallthru
      _
    %p711 = scmp.le.s32.totalorder 2, %s10
    // Predicated region
    $region41: #{_lambda_.9} parent=5 // pred_check
      %p712 = pneg %p711
    $region42: #{_lambda_.9} parent=5 // pred_check_branch
      %714 = sbr.rel (%p712) target = $region44
    $region43: #{_lambda_.9} parent=5 // pred_region
      %s715 = ssub.s32 %s10, 2
      // Predicated region
      $region45: #{_lambda_.9} parent=43 // pred_check
        %p716 = pneg %p151
      $region46: #{_lambda_.9} parent=43 // pred_check_branch
        %718 = sbr.rel (%p716) target = $region48
      $region47: #{_lambda_.9} parent=43 // pred_region
        %s719 = smul.u32 8, %s22
        %p720 = scmp.lt.s32.totalorder %s21, 1
        %s721 = scalar_select %p720, %s21, 1
        %p722 = scmp.lt.s32.totalorder %s719, 7
        %s723 = scalar_select %p722, %s719, 7
        %s724 = smul.addr %s721, 16
        %s725 = sadd.s32 %s723, %s724
        %s726 = smul.addr %s725, 8
        %s727 = scalar_lea.vmem %s4, %s726
      $region48: #{_lambda_.9} parent=43 // pred_fallthru
        _
    $region44: #{_lambda_.9} parent=5 // pred_fallthru
      _
  $region6: #{_lambda_.9} parent=0 // loop_footer
    %s14 = sadd.s32 1, %s10
  $region7: #{_lambda_.9} parent=0 // loop_footer_branch
    %9 = sbr.rel target = $region3
  $region8: #{_lambda_.9} parent=0 // loop_exit
    _

// kernel: _lambda_.10
$region0: #{_lambda_.10}
  #allocation0 [shape = 'u32[]', space=smem, size = 0x4, offset = 0x4, fixed_abs, tag = 'smem constant byte address 0x4 - core index']
  #allocation1 [shape = 'u32[144,128]{1,0:T(1,128)}', space=vmem, size = 0x12000, scoped, tag = 'internal scratch']
  %s0 = inlined_call_operand.vmem [shape: f32[2,96,256], index: 0, kind: input, shape index: {}]
  %s1 = inlined_call_operand.vmem [shape: f32[2,32,256], index: 1, kind: input, shape index: {}]
  %s2 = inlined_call_operand.vmem [shape: f32[32,96], index: 2, kind: input, shape index: {}]
  %s3 = inlined_call_operand.vmem [shape: f32[32,1], index: 3, kind: input, shape index: {}]
  %s4 = inlined_call_operand.vmem [shape: f32[2,32,256], index: 4, kind: output, shape index: {}]
  %s5 = sld [smem:[#allocation0]]
  $region49: #{_lambda_.10} parent=0
    _
  %s7 = ssub.s32 1, %s5
  %s8 = scalar_select 0, %s7, %s5
  loop: start=0, step=1, limit=4
  $region2: #{_lambda_.10} parent=0 // loop_pre_header
    _
  $region3: #{_lambda_.10} parent=0 // loop_header
    %s10 = sphi 0, %s14
    %p11 = scmp.ge.s32.totalorder %s10, 4
    %s17 = sphi 0, %s29
    %s18 = sphi 0, %s25
    %s19 = sphi 0, %s17
    %s20 = sphi 0, %s18
    %s21 = sphi 0, %s19
    %s22 = sphi 0, %s20
    %s34 = sphi 0, %s36
    %s37 = sphi 0, %s34
    %s38 = sphi 0, %s37
    %s54 = sphi 0, %s38
    %s62 = sphi 0, %s64
    %s65 = sphi 0, %s62
    %s66 = sphi 0, %s65
    %s82 = sphi 0, %s66
    %s86 = sphi 0, %s86
    %s88 = sphi 0, %s86
    %s89 = sphi 0, %s88
    %s103 = sphi 0, %s89
    %s107 = sphi 0, %s107
    %s109 = sphi 0, %s107
    %s110 = sphi 0, %s109
    %s124 = sphi 0, %s110
    %s132 = sphi 0, %s134
    %s135 = sphi 0, %s132
    %s136 = sphi 0, %s135
    %s152 = sphi 0, %s136
  $region4: #{_lambda_.10} parent=0 // loop_header_branch
    %13 = sbr.rel (%p11) target = $region8
  $region5: #{_lambda_.10} parent=0 // loop_body
    %s15 = ssub.s32 %s10, 1
    %s16 = ssub.s32 %s10, 2
    %s23 = sadd.s32 1, %s18
    %p24 = scmp.ge.s32.totalorder %s23, 1
    %s25 = scalar_select %p24, 0, %s23
    %s26 = sadd.s32 1, %s17
    %s27 = scalar_select %p24, %s26, %s17
    %p28 = scmp.ge.s32.totalorder %s27, 2
    %s29 = scalar_select %p28, 0, %s27
    %s30 = ssub.s32 %s17, %s29
    %s31 = ssub.s32 %s18, %s25
    %s32 = sor.u32 %s30, %s31
    %p33 = scmp.eq.s32.totalorder %s32, 0
    %s35 = sadd.s32 %s34, 1
    %s36 = scalar_select %p33, %s34, %s35
    %p39 = pneg %p33
    %p40 = scmp.eq.s32.totalorder %s10, 1
    %p41 = por %p39, %p40
    %p42 = scmp.ne.s32.totalorder %s34, %s37
    %p43 = scmp.eq.s32.totalorder %s10, 0
    %p44 = por %p42, %p43
    %p45 = scmp.ne.s32.totalorder %s34, %s37
    %p46 = scmp.eq.s32.totalorder %s15, 1
    %p47 = por %p45, %p46
    %p48 = scmp.ne.s32.totalorder %s37, %s38
    %p49 = scmp.eq.s32.totalorder %s15, 0
    %p50 = por %p48, %p49
    %p51 = scmp.ne.s32.totalorder %s37, %s38
    %p52 = scmp.eq.s32.totalorder %s16, 1
    %p53 = por %p51, %p52
    %p55 = scmp.ne.s32.totalorder %s38, %s54
    %p56 = scmp.eq.s32.totalorder %s16, 0
    %p57 = por %p55, %p56
    %s58 = ssub.s32 %s17, %s29
    %s59 = ssub.s32 %s18, %s25
    %s60 = sor.u32 %s58, %s59
    %p61 = scmp.eq.s32.totalorder %s60, 0
    %s63 = sadd.s32 %s62, 1
    %s64 = scalar_select %p61, %s62, %s63
    %p67 = pneg %p61
    %p68 = scmp.eq.s32.totalorder %s10, 1
    %p69 = por %p67, %p68
    %p70 = scmp.ne.s32.totalorder %s62, %s65
    %p71 = scmp.eq.s32.totalorder %s10, 0
    %p72 = por %p70, %p71
    %p73 = scmp.ne.s32.totalorder %s62, %s65
    %p74 = scmp.eq.s32.totalorder %s15, 1
    %p75 = por %p73, %p74
    %p76 = scmp.ne.s32.totalorder %s65, %s66
    %p77 = scmp.eq.s32.totalorder %s15, 0
    %p78 = por %p76, %p77
    %p79 = scmp.ne.s32.totalorder %s65, %s66
    %p80 = scmp.eq.s32.totalorder %s16, 1
    %p81 = por %p79, %p80
    %p83 = scmp.ne.s32.totalorder %s66, %s82
    %p84 = scmp.eq.s32.totalorder %s16, 0
    %p85 = por %p83, %p84
    %s87 = sadd.s32 %s86, 1
    %p90 = scmp.eq.s32.totalorder %s10, 1
    %p91 = scmp.ne.s32.totalorder %s86, %s88
    %p92 = scmp.eq.s32.totalorder %s10, 0
    %p93 = por %p91, %p92
    %p94 = scmp.ne.s32.totalorder %s86, %s88
    %p95 = scmp.eq.s32.totalorder %s15, 1
    %p96 = por %p94, %p95
    %p97 = scmp.ne.s32.totalorder %s88, %s89
    %p98 = scmp.eq.s32.totalorder %s15, 0
    %p99 = por %p97, %p98
    %p100 = scmp.ne.s32.totalorder %s88, %s89
    %p101 = scmp.eq.s32.totalorder %s16, 1
    %p102 = por %p100, %p101
    %p104 = scmp.ne.s32.totalorder %s89, %s103
    %p105 = scmp.eq.s32.totalorder %s16, 0
    %p106 = por %p104, %p105
    %s108 = sadd.s32 %s107, 1
    %p111 = scmp.eq.s32.totalorder %s10, 1
    %p112 = scmp.ne.s32.totalorder %s107, %s109
    %p113 = scmp.eq.s32.totalorder %s10, 0
    %p114 = por %p112, %p113
    %p115 = scmp.ne.s32.totalorder %s107, %s109
    %p116 = scmp.eq.s32.totalorder %s15, 1
    %p117 = por %p115, %p116
    %p118 = scmp.ne.s32.totalorder %s109, %s110
    %p119 = scmp.eq.s32.totalorder %s15, 0
    %p120 = por %p118, %p119
    %p121 = scmp.ne.s32.totalorder %s109, %s110
    %p122 = scmp.eq.s32.totalorder %s16, 1
    %p123 = por %p121, %p122
    %p125 = scmp.ne.s32.totalorder %s110, %s124
    %p126 = scmp.eq.s32.totalorder %s16, 0
    %p127 = por %p125, %p126
    %s128 = ssub.s32 %s17, %s29
    %s129 = ssub.s32 %s18, %s25
    %s130 = sor.u32 %s128, %s129
    %p131 = scmp.eq.s32.totalorder %s130, 0
    %s133 = sadd.s32 %s132, 1
    %s134 = scalar_select %p131, %s132, %s133
    %p137 = pneg %p131
    %p138 = scmp.eq.s32.totalorder %s10, 1
    %p139 = por %p137, %p138
    %p140 = scmp.ne.s32.totalorder %s132, %s135
    %p141 = scmp.eq.s32.totalorder %s10, 0
    %p142 = por %p140, %p141
    %p143 = scmp.ne.s32.totalorder %s132, %s135
    %p144 = scmp.eq.s32.totalorder %s15, 1
    %p145 = por %p143, %p144
    %p146 = scmp.ne.s32.totalorder %s135, %s136
    %p147 = scmp.eq.s32.totalorder %s15, 0
    %p148 = por %p146, %p147
    %p149 = scmp.ne.s32.totalorder %s135, %s136
    %p150 = scmp.eq.s32.totalorder %s16, 1
    %p151 = por %p149, %p150
    %p153 = scmp.ne.s32.totalorder %s136, %s152
    %p154 = scmp.eq.s32.totalorder %s16, 0
    %p155 = por %p153, %p154
    %p156 = scmp.le.s32.totalorder 1, %s10
    %p157 = scmp.lt.s32.totalorder %s10, 3
    %p158 = pnand %p156, %p157
    %p159 = pneg %p158
    // Predicated region
    $region9: #{_lambda_.10} parent=5 // pred_check
      _
    $region10: #{_lambda_.10} parent=5 // pred_check_branch
      %161 = sbr.rel (%p158) target = $region12
    $region11: #{_lambda_.10} parent=5 // pred_region
      %s162 = ssub.s32 %s10, 1
      // Predicated region
      $region13: #{_lambda_.10} parent=11 // pred_check
        %p163 = pneg %p99
      $region14: #{_lambda_.10} parent=11 // pred_check_branch
        %165 = sbr.rel (%p163) target = $region16
      $region15: #{_lambda_.10} parent=11 // pred_region
        _
      $region16: #{_lambda_.10} parent=11 // pred_fallthru
        _
      // Predicated region
      $region17: #{_lambda_.10} parent=11 // pred_check
        %p166 = pneg %p120
      $region18: #{_lambda_.10} parent=11 // pred_check_branch
        %168 = sbr.rel (%p166) target = $region20
      $region19: #{_lambda_.10} parent=11 // pred_region
        _
      $region20: #{_lambda_.10} parent=11 // pred_fallthru
        _
    $region12: #{_lambda_.10} parent=5 // pred_fallthru
      _
    %p169 = scmp.lt.s32.totalorder %s10, 2
    // Predicated region
    $region21: #{_lambda_.10} parent=5 // pred_check
      %p170 = pneg %p169
    $region22: #{_lambda_.10} parent=5 // pred_check_branch
      %172 = sbr.rel (%p170) target = $region24
    $region23: #{_lambda_.10} parent=5 // pred_region
      // Predicated region
      $region25: #{_lambda_.10} parent=23 // pred_check
        %p173 = pneg %p44
      $region26: #{_lambda_.10} parent=23 // pred_check_branch
        %175 = sbr.rel (%p173) target = $region28
      $region27: #{_lambda_.10} parent=23 // pred_region
        %s176 = smul.u32 2, %s18
        %p177 = scmp.lt.s32.totalorder %s17, 1
        %s178 = scalar_select %p177, %s17, 1
        %p179 = scmp.lt.s32.totalorder %s176, 1
        %s180 = scalar_select %p179, %s176, 1
        %s181 = smul.addr %s178, 24
        %s182 = sadd.s32 %s180, %s181
        %s183 = smul.addr %s182, 8
        %s184 = scalar_lea.vmem %s0, %s183
        %s185 = smul.u32 2, %s18
      $region28: #{_lambda_.10} parent=23 // pred_fallthru
        _
      // Predicated region
      $region29: #{_lambda_.10} parent=23 // pred_check
        %p186 = pneg %p72
      $region30: #{_lambda_.10} parent=23 // pred_check_branch
        %188 = sbr.rel (%p186) target = $region32
      $region31: #{_lambda_.10} parent=23 // pred_region
        %s189 = smul.u32 2, %s18
        %p190 = scmp.lt.s32.totalorder %s17, 1
        %s191 = scalar_select %p190, %s17, 1
        %p192 = scmp.lt.s32.totalorder %s189, 1
        %s193 = scalar_select %p192, %s189, 1
        %s194 = smul.addr %s191, 8
        %s195 = sadd.s32 %s193, %s194
        %s196 = smul.addr %s195, 8
        %s197 = scalar_lea.vmem %s1, %s196
        %s198 = smul.u32 2, %s18
      $region32: #{_lambda_.10} parent=23 // pred_fallthru
        _
    $region24: #{_lambda_.10} parent=5 // pred_fallthru
      _
    %p199 = scmp.le.s32.totalorder 1, %s10
    %p200 = scmp.lt.s32.totalorder %s10, 3
    %p201 = pnand %p199, %p200
    %p202 = pneg %p201
    // Predicated region
    $region33: #{_lambda_.10} parent=5 // pred_check
      _
    $region34: #{_lambda_.10} parent=5 // pred_check_branch
      %204 = sbr.rel (%p201) target = $region36
    $region35: #{_lambda_.10} parent=5 // pred_region
      %s205 = ssub.s32 %s10, 1
      %s206 = smul.u32 2, %s20
      %p207 = scmp.lt.s32.totalorder %s19, 1
      %s208 = scalar_select %p207, %s19, 1
      %p209 = scmp.lt.s32.totalorder %s206, 1
      %s210 = scalar_select %p209, %s206, 1
      %s211 = smul.addr %s208, 24
      %s212 = sadd.s32 %s210, %s211
      %s213 = smul.addr %s212, 8
      %s214 = scalar_lea.vmem %s0, %s213
      %p215 = pneg %p50
      %p216 = pneg %p47
      %s217 = smul.u32 2, %s20
      %p218 = scmp.lt.s32.totalorder %s19, 1
      %s219 = scalar_select %p218, %s19, 1
      %p220 = scmp.lt.s32.totalorder %s217, 1
      %s221 = scalar_select %p220, %s217, 1
      %s222 = smul.addr %s219, 8
      %s223 = sadd.s32 %s221, %s222
      %s224 = smul.addr %s223, 8
      %s225 = scalar_lea.vmem %s1, %s224
      %p226 = pneg %p78
      %p227 = pneg %p75
      %p228 = pneg %p99
      %p229 = pneg %p96
      %p230 = pneg %p120
      %p231 = pneg %p117
      %p232 = pneg %p148
      %p233 = pneg %p145
      %s234 = smul.u32 2, %s20
      %p235 = scmp.lt.s32.totalorder %s19, 1
      %s236 = scalar_select %p235, %s19, 1
      %p237 = scmp.lt.s32.totalorder %s234, 1
      %s238 = scalar_select %p237, %s234, 1
      %s239 = smul.addr %s236, 8
      %s240 = sadd.s32 %s238, %s239
      %s241 = smul.addr %s240, 8
      %s242 = scalar_lea.vmem %s4, %s241
      %s243 = smul.u32 2, %s20
      %p244 = scmp.lt.s32.totalorder %s19, 1
      %s245 = scalar_select %p244, %s19, 1
      %p246 = scmp.lt.s32.totalorder %s243, 1
      %s247 = scalar_select %p246, %s243, 1
      %s248 = smul.addr %s245, 24
      %s249 = sadd.s32 %s247, %s248
      %s250 = smul.addr %s249, 8
      %s251 = scalar_lea.vmem %s0, %s250
      %s252 = smul.u32 2, %s20
      %s253 = smul.u32 2, %s20
      %p254 = scmp.lt.s32.totalorder %s19, 1
      %s255 = scalar_select %p254, %s19, 1
      %p256 = scmp.lt.s32.totalorder %s253, 1
      %s257 = scalar_select %p256, %s253, 1
      %s258 = smul.addr %s255, 8
      %s259 = sadd.s32 %s257, %s258
      %s260 = smul.addr %s259, 8
      %s261 = scalar_lea.vmem %s1, %s260
      %s262 = smul.u32 2, %s20
      %s263 = smul.u32 2, %s20
      %p264 = scmp.lt.s32.totalorder %s19, 1
      %s265 = scalar_select %p264, %s19, 1
      %p266 = scmp.lt.s32.totalorder %s263, 1
      %s267 = scalar_select %p266, %s263, 1
      %s268 = smul.addr %s265, 8
      %s269 = sadd.s32 %s267, %s268
      %s270 = smul.addr %s269, 8
      %s271 = scalar_lea.vmem %s4, %s270
      %s272 = smul.u32 2, %s20
      %v273 = vld [vmem:[%s2] sm:$0xff]
      %v274 = vld [vmem:[%s2 + $0x8] sm:$0xff]
      %v275 = vld [vmem:[%s2 + $0x10] sm:$0xff]
      %v276 = vld [vmem:[%s2 + $0x18] sm:$0xff]
      %v277 = vld [vmem:[%s251] sm:$0xff]
      %v278 = vld [vmem:[%s251 + $0x8] sm:$0xff]
      %v279 = vld [vmem:[%s251 + $0x10] sm:$0xff]
      %v280 = vld [vmem:[%s251 + $0x18] sm:$0xff]
      %v281 = vld [vmem:[%s251 + $0x20] sm:$0xff]
      %v282 = vld [vmem:[%s251 + $0x28] sm:$0xff]
      %v283 = vld [vmem:[%s251 + $0x30] sm:$0xff]
      %v284 = vld [vmem:[%s251 + $0x38] sm:$0xff]
      %v285 = vld [vmem:[%s251 + $0x40] sm:$0xff]
      %v286 = vld [vmem:[%s251 + $0x48] sm:$0xff]
      %v287 = vld [vmem:[%s251 + $0x50] sm:$0xff]
      %v288 = vld [vmem:[%s251 + $0x58] sm:$0xff]
      %v289 = vld [vmem:[%s251 + $0x60] sm:$0xff]
      %v290 = vld [vmem:[%s251 + $0x68] sm:$0xff]
      %v291 = vld [vmem:[%s251 + $0x70] sm:$0xff]
      %v292 = vld [vmem:[%s251 + $0x78] sm:$0xff]
      %v293 = vld [vmem:[%s251 + $0x80] sm:$0xff]
      %v294 = vld [vmem:[%s251 + $0x88] sm:$0xff]
      %v295 = vld [vmem:[%s251 + $0x90] sm:$0xff]
      %v296 = vld [vmem:[%s251 + $0x98] sm:$0xff]
      %v297 = vld [vmem:[%s251 + $0xa0] sm:$0xff]
      %v298 = vld [vmem:[%s251 + $0xa8] sm:$0xff]
      %v299 = vld [vmem:[%s251 + $0xb0] sm:$0xff]
      %v300 = vld [vmem:[%s251 + $0xb8] sm:$0xff]
      %v301 = vld [vmem:[%s3] sm:$0xff]
      %v302 = vld [vmem:[%s3 + $0x8] sm:$0xff]
      %v303 = vld [vmem:[%s3 + $0x10] sm:$0xff]
      %v304 = vld [vmem:[%s3 + $0x18] sm:$0xff]
      %306 = vset.pattern.permute.xlu0 0
      %307 = vperm.xlu0 %306, %v301
      %v308 = vpop.permute.xlu0 %307
      %311 = vset.pattern.permute.xlu0 0
      %312 = vperm.xlu0 %311, %v302
      %v313 = vpop.permute.xlu0 %312
      %316 = vset.pattern.permute.xlu0 0
      %317 = vperm.xlu0 %316, %v303
      %v318 = vpop.permute.xlu0 %317
      %321 = vset.pattern.permute.xlu0 0
      %322 = vperm.xlu0 %321, %v304
      %v323 = vpop.permute.xlu0 %322
      %vm325 = vcmask 785408
      %v327 = vsel %vm325, %v273, 0
      %v330 = vsel %vm325, %v274, 0
      %v333 = vsel %vm325, %v275, 0
      %v336 = vsel %vm325, %v276, 0
      %338 = vmatprep.subr.mxu0 %v278
      %339 = vmatpush1.msra.mxu0 %v277
      %340 = vmatprep.subr.mxu0 %v280
      %341 = vmatpush1.msra.mxu0 %v279
      %342 = vmatprep.subr.mxu0 %v282
      %343 = vmatpush1.msra.mxu0 %v281
      %344 = vmatprep.subr.mxu0 %v284
      %345 = vmatpush1.msra.mxu0 %v283
      %346 = vmatprep.subr.mxu0 %v286
      %347 = vmatpush1.msra.mxu0 %v285
      %348 = vmatprep.subr.mxu0 %v288
      %349 = vmatpush1.msra.mxu0 %v287
      %350 = vmatprep.subr.mxu0 %v290
      %351 = vmatpush1.msra.mxu0 %v289
      %352 = vmatprep.subr.mxu0 %v292
      %353 = vmatpush1.msra.mxu0 %v291
      %354 = vmatprep.subr.mxu0 %v294
      %355 = vmatpush1.msra.mxu0 %v293
      %356 = vmatprep.subr.mxu0 %v296
      %357 = vmatpush1.msra.mxu0 %v295
      %358 = vmatprep.subr.mxu0 %v298
      %359 = vmatpush1.msra.mxu0 %v297
      %360 = vmatprep.subr.mxu0 %v300
      %361 = vmatpush1.msra.mxu0 %v299
      %362 = vmatprep.subr.mxu0 0.0
      %363 = vmatpush1.msra.mxu0 0.0
      %364 = vmatprep.subr.mxu0 0.0
      %365 = vmatpush1.msra.mxu0 0.0
      %366 = vmatprep.subr.mxu0 0.0
      %367 = vmatpush1.msra.mxu0 0.0
      %368 = vmatprep.subr.mxu0 0.0
      %369 = vmatpush1.msra.mxu0 0.0
      %370 = vmatprep.subr.mxu0 0.0
      %371 = vmatpush1.msra.mxu0 0.0
      %372 = vmatprep.subr.mxu0 0.0
      %373 = vmatpush1.msra.mxu0 0.0
      %374 = vmatprep.subr.mxu0 0.0
      %375 = vmatpush1.msra.mxu0 0.0
      %376 = vmatprep.subr.mxu0 0.0
      %377 = vmatpush1.msra.mxu0 0.0
      %378 = vmatprep.subr.mxu0 0.0
      %379 = vmatpush1.msra.mxu0 0.0
      %380 = vmatprep.subr.mxu0 0.0
      %381 = vmatpush1.msra.mxu0 0.0
      %382 = vmatprep.subr.mxu0 0.0
      %383 = vmatpush1.msra.mxu0 0.0
      %384 = vmatprep.subr.mxu0 0.0
      %385 = vmatpush1.msra.mxu0 0.0
      %386 = vmatprep.subr.mxu0 0.0
      %387 = vmatpush1.msra.mxu0 0.0
      %388 = vmatprep.subr.mxu0 0.0
      %389 = vmatpush1.msra.mxu0 0.0
      %390 = vmatprep.subr.mxu0 0.0
      %391 = vmatpush1.msra.mxu0 0.0
      %392 = vmatprep.subr.mxu0 0.0
      %393 = vmatpush1.msra.mxu0 0.0
      %394 = vmatprep.subr.mxu0 0.0
      %395 = vmatpush1.msra.mxu0 0.0
      %396 = vmatprep.subr.mxu0 0.0
      %397 = vmatpush1.msra.mxu0 0.0
      %398 = vmatprep.subr.mxu0 0.0
      %399 = vmatpush1.msra.mxu0 0.0
      %400 = vmatprep.subr.mxu0 0.0
      %401 = vmatpush1.msra.mxu0 0.0
      %402 = vmatprep.mubr.f32.mxu0 0.0
      %403 = vmatmul.mubr.f32.gmra.mrb[0].mxu0 %v327
      %v404 = vpop.f32.mrb[0].mxu0
      %v405 = vadd.f32 %v308, %v404
      %v406 = vpop.f32.mrb[0].mxu0
      %v407 = vadd.f32 %v308, %v406
      %408 = vmatprep.mubr.f32.mxu0 0.0
      %409 = vmatmul.mubr.f32.gmra.mrb[0].mxu0 %v330
      %v410 = vpop.f32.mrb[0].mxu0
      %v411 = vadd.f32 %v313, %v410
      %v412 = vpop.f32.mrb[0].mxu0
      %v413 = vadd.f32 %v313, %v412
      %414 = vmatprep.mubr.f32.mxu0 0.0
      %415 = vmatmul.mubr.f32.gmra.mrb[0].mxu0 %v333
      %v416 = vpop.f32.mrb[0].mxu0
      %v417 = vadd.f32 %v318, %v416
      %v418 = vpop.f32.mrb[0].mxu0
      %v419 = vadd.f32 %v318, %v418
      %420 = vmatprep.mubr.f32.mxu0 0.0
      %421 = vmatmul.mubr.f32.gmra.mrb[0].mxu0 %v336
      %v422 = vpop.f32.mrb[0].mxu0
      %v423 = vadd.f32 %v323, %v422
      %v424 = vpop.f32.mrb[0].mxu0
      %v425 = vadd.f32 %v323, %v424
      %426 = vdwg.mxu0
      %v427 = vld [vmem:[%s261] sm:$0xff]
      %v428 = vld [vmem:[%s261 + $0x8] sm:$0xff]
      %v429 = vld [vmem:[%s261 + $0x10] sm:$0xff]
      %v430 = vld [vmem:[%s261 + $0x18] sm:$0xff]
      %v431 = vld [vmem:[%s261 + $0x20] sm:$0xff]
      %v432 = vld [vmem:[%s261 + $0x28] sm:$0xff]
      %v433 = vld [vmem:[%s261 + $0x30] sm:$0xff]
      %v434 = vld [vmem:[%s261 + $0x38] sm:$0xff]
      %v435 = vadd.f32 %v405, %v427
      %v436 = vadd.f32 %v407, %v428
      %v437 = vadd.f32 %v411, %v429
      %v438 = vadd.f32 %v413, %v430
      %v439 = vadd.f32 %v417, %v431
      %v440 = vadd.f32 %v419, %v432
      %v441 = vadd.f32 %v423, %v433
      %v442 = vadd.f32 %v425, %v434
      %443 = vst [vmem:[%s271] sm:$0xff] %v435
      %444 = vst [vmem:[%s271 + $0x8] sm:$0xff] %v436
      %445 = vst [vmem:[%s271 + $0x10] sm:$0xff] %v437
      %446 = vst [vmem:[%s271 + $0x18] sm:$0xff] %v438
      %447 = vst [vmem:[%s271 + $0x20] sm:$0xff] %v439
      %448 = vst [vmem:[%s271 + $0x28] sm:$0xff] %v440
      %449 = vst [vmem:[%s271 + $0x30] sm:$0xff] %v441
      %450 = vst [vmem:[%s271 + $0x38] sm:$0xff] %v442
      %s451 = smul.u32 2, %s20
      %p452 = scmp.lt.s32.totalorder %s19, 1
      %s453 = scalar_select %p452, %s19, 1
      %p454 = scmp.lt.s32.totalorder %s451, 1
      %s455 = scalar_select %p454, %s451, 1
      %s456 = smul.addr %s453, 8
      %s457 = sadd.s32 %s455, %s456
      %s458 = smul.addr %s457, 8
      %s459 = scalar_lea.vmem %s4, %s458
      // Predicated region
      $region37: #{_lambda_.10} parent=35 // pred_check
        %p460 = pneg %p145
      $region38: #{_lambda_.10} parent=35 // pred_check_branch
        %462 = sbr.rel (%p460) target = $region40
      $region39: #{_lambda_.10} parent=35 // pred_region
        %s463 = smul.u32 2, %s20
      $region40: #{_lambda_.10} parent=35 // pred_fallthru
        _
    $region36: #{_lambda_.10} parent=5 // pred_fallthru
      _
    %p464 = scmp.le.s32.totalorder 2, %s10
    // Predicated region
    $region41: #{_lambda_.10} parent=5 // pred_check
      %p465 = pneg %p464
    $region42: #{_lambda_.10} parent=5 // pred_check_branch
      %467 = sbr.rel (%p465) target = $region44
    $region43: #{_lambda_.10} parent=5 // pred_region
      %s468 = ssub.s32 %s10, 2
      // Predicated region
      $region45: #{_lambda_.10} parent=43 // pred_check
        %p469 = pneg %p151
      $region46: #{_lambda_.10} parent=43 // pred_check_branch
        %471 = sbr.rel (%p469) target = $region48
      $region47: #{_lambda_.10} parent=43 // pred_region
        %s472 = smul.u32 2, %s22
        %p473 = scmp.lt.s32.totalorder %s21, 1
        %s474 = scalar_select %p473, %s21, 1
        %p475 = scmp.lt.s32.totalorder %s472, 1
        %s476 = scalar_select %p475, %s472, 1
        %s477 = smul.addr %s474, 8
        %s478 = sadd.s32 %s476, %s477
        %s479 = smul.addr %s478, 8
        %s480 = scalar_lea.vmem %s4, %s479
      $region48: #{_lambda_.10} parent=43 // pred_fallthru
        _
    $region44: #{_lambda_.10} parent=5 // pred_fallthru
      _
  $region6: #{_lambda_.10} parent=0 // loop_footer
    %s14 = sadd.s32 1, %s10
  $region7: #{_lambda_.10} parent=0 // loop_footer_branch
    %9 = sbr.rel target = $region3
  $region8: #{_lambda_.10} parent=0 // loop_exit
    _

// kernel: _lambda_.12
$region0: #{_lambda_.12}
  #allocation0 [shape = 'u32[]', space=smem, size = 0x4, offset = 0x4, fixed_abs, tag = 'smem constant byte address 0x4 - core index']
  #allocation1 [shape = 'u32[144,128]{1,0:T(1,128)}', space=vmem, size = 0x12000, scoped, tag = 'internal scratch']
  %s0 = inlined_call_operand.vmem [shape: f32[2,64,256], index: 0, kind: input, shape index: {}]
  %s1 = inlined_call_operand.vmem [shape: f32[64,64], index: 1, kind: input, shape index: {}]
  %s2 = inlined_call_operand.vmem [shape: f32[64,1], index: 2, kind: input, shape index: {}]
  %s3 = inlined_call_operand.vmem [shape: f32[64,64], index: 3, kind: input, shape index: {}]
  %s4 = inlined_call_operand.vmem [shape: f32[64,1], index: 4, kind: input, shape index: {}]
  %s5 = inlined_call_operand.vmem [shape: f32[2,32,256], index: 5, kind: output, shape index: {0}]
  %s6 = inlined_call_operand.vmem [shape: f32[2,32,256], index: 6, kind: output, shape index: {1}]
  %7 = xla_tuple %s5, %s6
  %s8 = sld [smem:[#allocation0]]
  $region61: #{_lambda_.12} parent=0
    _
  %s10 = ssub.s32 1, %s8
  %s11 = scalar_select 0, %s10, %s8
  loop: start=0, step=1, limit=4
  $region2: #{_lambda_.12} parent=0 // loop_pre_header
    _
  $region3: #{_lambda_.12} parent=0 // loop_header
    %s13 = sphi 0, %s17
    %p14 = scmp.ge.s32.totalorder %s13, 4
    %s20 = sphi 0, %s32
    %s21 = sphi 0, %s28
    %s22 = sphi 0, %s20
    %s23 = sphi 0, %s21
    %s24 = sphi 0, %s22
    %s25 = sphi 0, %s23
    %s37 = sphi 0, %s39
    %s40 = sphi 0, %s37
    %s41 = sphi 0, %s40
    %s57 = sphi 0, %s41
    %s61 = sphi 0, %s61
    %s63 = sphi 0, %s61
    %s64 = sphi 0, %s63
    %s78 = sphi 0, %s64
    %s82 = sphi 0, %s82
    %s84 = sphi 0, %s82
    %s85 = sphi 0, %s84
    %s99 = sphi 0, %s85
    %s103 = sphi 0, %s103
    %s105 = sphi 0, %s103
    %s106 = sphi 0, %s105
    %s120 = sphi 0, %s106
    %s124 = sphi 0, %s124
    %s126 = sphi 0, %s124
    %s127 = sphi 0, %s126
    %s141 = sphi 0, %s127
    %s149 = sphi 0, %s151
    %s152 = sphi 0, %s149
    %s153 = sphi 0, %s152
    %s169 = sphi 0, %s153
    %s177 = sphi 0, %s179
    %s180 = sphi 0, %s177
    %s181 = sphi 0, %s180
    %s197 = sphi 0, %s181
  $region4: #{_lambda_.12} parent=0 // loop_header_branch
    %16 = sbr.rel (%p14) target = $region8
  $region5: #{_lambda_.12} parent=0 // loop_body
    %s18 = ssub.s32 %s13, 1
    %s19 = ssub.s32 %s13, 2
    %s26 = sadd.s32 1, %s21
    %p27 = scmp.ge.s32.totalorder %s26, 1
    %s28 = scalar_select %p27, 0, %s26
    %s29 = sadd.s32 1, %s20
    %s30 = scalar_select %p27, %s29, %s20
    %p31 = scmp.ge.s32.totalorder %s30, 2
    %s32 = scalar_select %p31, 0, %s30
    %s33 = ssub.s32 %s20, %s32
    %s34 = ssub.s32 %s21, %s28
    %s35 = sor.u32 %s33, %s34
    %p36 = scmp.eq.s32.totalorder %s35, 0
    %s38 = sadd.s32 %s37, 1
    %s39 = scalar_select %p36, %s37, %s38
    %p42 = pneg %p36
    %p43 = scmp.eq.s32.totalorder %s13, 1
    %p44 = por %p42, %p43
    %p45 = scmp.ne.s32.totalorder %s37, %s40
    %p46 = scmp.eq.s32.totalorder %s13, 0
    %p47 = por %p45, %p46
    %p48 = scmp.ne.s32.totalorder %s37, %s40
    %p49 = scmp.eq.s32.totalorder %s18, 1
    %p50 = por %p48, %p49
    %p51 = scmp.ne.s32.totalorder %s40, %s41
    %p52 = scmp.eq.s32.totalorder %s18, 0
    %p53 = por %p51, %p52
    %p54 = scmp.ne.s32.totalorder %s40, %s41
    %p55 = scmp.eq.s32.totalorder %s19, 1
    %p56 = por %p54, %p55
    %p58 = scmp.ne.s32.totalorder %s41, %s57
    %p59 = scmp.eq.s32.totalorder %s19, 0
    %p60 = por %p58, %p59
    %s62 = sadd.s32 %s61, 1
    %p65 = scmp.eq.s32.totalorder %s13, 1
    %p66 = scmp.ne.s32.totalorder %s61, %s63
    %p67 = scmp.eq.s32.totalorder %s13, 0
    %p68 = por %p66, %p67
    %p69 = scmp.ne.s32.totalorder %s61, %s63
    %p70 = scmp.eq.s32.totalorder %s18, 1
    %p71 = por %p69, %p70
    %p72 = scmp.ne.s32.totalorder %s63, %s64
    %p73 = scmp.eq.s32.totalorder %s18, 0
    %p74 = por %p72, %p73
    %p75 = scmp.ne.s32.totalorder %s63, %s64
    %p76 = scmp.eq.s32.totalorder %s19, 1
    %p77 = por %p75, %p76
    %p79 = scmp.ne.s32.totalorder %s64, %s78
    %p80 = scmp.eq.s32.totalorder %s19, 0
    %p81 = por %p79, %p80
    %s83 = sadd.s32 %s82, 1
    %p86 = scmp.eq.s32.totalorder %s13, 1
    %p87 = scmp.ne.s32.totalorder %s82, %s84
    %p88 = scmp.eq.s32.totalorder %s13, 0
    %p89 = por %p87, %p88
    %p90 = scmp.ne.s32.totalorder %s82, %s84
    %p91 = scmp.eq.s32.totalorder %s18, 1
    %p92 = por %p90, %p91
    %p93 = scmp.ne.s32.totalorder %s84, %s85
    %p94 = scmp.eq.s32.totalorder %s18, 0
    %p95 = por %p93, %p94
    %p96 = scmp.ne.s32.totalorder %s84, %s85
    %p97 = scmp.eq.s32.totalorder %s19, 1
    %p98 = por %p96, %p97
    %p100 = scmp.ne.s32.totalorder %s85, %s99
    %p101 = scmp.eq.s32.totalorder %s19, 0
    %p102 = por %p100, %p101
    %s104 = sadd.s32 %s103, 1
    %p107 = scmp.eq.s32.totalorder %s13, 1
    %p108 = scmp.ne.s32.totalorder %s103, %s105
    %p109 = scmp.eq.s32.totalorder %s13, 0
    %p110 = por %p108, %p109
    %p111 = scmp.ne.s32.totalorder %s103, %s105
    %p112 = scmp.eq.s32.totalorder %s18, 1
    %p113 = por %p111, %p112
    %p114 = scmp.ne.s32.totalorder %s105, %s106
    %p115 = scmp.eq.s32.totalorder %s18, 0
    %p116 = por %p114, %p115
    %p117 = scmp.ne.s32.totalorder %s105, %s106
    %p118 = scmp.eq.s32.totalorder %s19, 1
    %p119 = por %p117, %p118
    %p121 = scmp.ne.s32.totalorder %s106, %s120
    %p122 = scmp.eq.s32.totalorder %s19, 0
    %p123 = por %p121, %p122
    %s125 = sadd.s32 %s124, 1
    %p128 = scmp.eq.s32.totalorder %s13, 1
    %p129 = scmp.ne.s32.totalorder %s124, %s126
    %p130 = scmp.eq.s32.totalorder %s13, 0
    %p131 = por %p129, %p130
    %p132 = scmp.ne.s32.totalorder %s124, %s126
    %p133 = scmp.eq.s32.totalorder %s18, 1
    %p134 = por %p132, %p133
    %p135 = scmp.ne.s32.totalorder %s126, %s127
    %p136 = scmp.eq.s32.totalorder %s18, 0
    %p137 = por %p135, %p136
    %p138 = scmp.ne.s32.totalorder %s126, %s127
    %p139 = scmp.eq.s32.totalorder %s19, 1
    %p140 = por %p138, %p139
    %p142 = scmp.ne.s32.totalorder %s127, %s141
    %p143 = scmp.eq.s32.totalorder %s19, 0
    %p144 = por %p142, %p143
    %s145 = ssub.s32 %s20, %s32
    %s146 = ssub.s32 %s21, %s28
    %s147 = sor.u32 %s145, %s146
    %p148 = scmp.eq.s32.totalorder %s147, 0
    %s150 = sadd.s32 %s149, 1
    %s151 = scalar_select %p148, %s149, %s150
    %p154 = pneg %p148
    %p155 = scmp.eq.s32.totalorder %s13, 1
    %p156 = por %p154, %p155
    %p157 = scmp.ne.s32.totalorder %s149, %s152
    %p158 = scmp.eq.s32.totalorder %s13, 0
    %p159 = por %p157, %p158
    %p160 = scmp.ne.s32.totalorder %s149, %s152
    %p161 = scmp.eq.s32.totalorder %s18, 1
    %p162 = por %p160, %p161
    %p163 = scmp.ne.s32.totalorder %s152, %s153
    %p164 = scmp.eq.s32.totalorder %s18, 0
    %p165 = por %p163, %p164
    %p166 = scmp.ne.s32.totalorder %s152, %s153
    %p167 = scmp.eq.s32.totalorder %s19, 1
    %p168 = por %p166, %p167
    %p170 = scmp.ne.s32.totalorder %s153, %s169
    %p171 = scmp.eq.s32.totalorder %s19, 0
    %p172 = por %p170, %p171
    %s173 = ssub.s32 %s20, %s32
    %s174 = ssub.s32 %s21, %s28
    %s175 = sor.u32 %s173, %s174
    %p176 = scmp.eq.s32.totalorder %s175, 0
    %s178 = sadd.s32 %s177, 1
    %s179 = scalar_select %p176, %s177, %s178
    %p182 = pneg %p176
    %p183 = scmp.eq.s32.totalorder %s13, 1
    %p184 = por %p182, %p183
    %p185 = scmp.ne.s32.totalorder %s177, %s180
    %p186 = scmp.eq.s32.totalorder %s13, 0
    %p187 = por %p185, %p186
    %p188 = scmp.ne.s32.totalorder %s177, %s180
    %p189 = scmp.eq.s32.totalorder %s18, 1
    %p190 = por %p188, %p189
    %p191 = scmp.ne.s32.totalorder %s180, %s181
    %p192 = scmp.eq.s32.totalorder %s18, 0
    %p193 = por %p191, %p192
    %p194 = scmp.ne.s32.totalorder %s180, %s181
    %p195 = scmp.eq.s32.totalorder %s19, 1
    %p196 = por %p194, %p195
    %p198 = scmp.ne.s32.totalorder %s181, %s197
    %p199 = scmp.eq.s32.totalorder %s19, 0
    %p200 = por %p198, %p199
    %p201 = scmp.le.s32.totalorder 1, %s13
    %p202 = scmp.lt.s32.totalorder %s13, 3
    %p203 = pnand %p201, %p202
    %p204 = pneg %p203
    // Predicated region
    $region9: #{_lambda_.12} parent=5 // pred_check
      _
    $region10: #{_lambda_.12} parent=5 // pred_check_branch
      %206 = sbr.rel (%p203) target = $region12
    $region11: #{_lambda_.12} parent=5 // pred_region
      %s207 = ssub.s32 %s13, 1
      // Predicated region
      $region13: #{_lambda_.12} parent=11 // pred_check
        %p208 = pneg %p74
      $region14: #{_lambda_.12} parent=11 // pred_check_branch
        %210 = sbr.rel (%p208) target = $region16
      $region15: #{_lambda_.12} parent=11 // pred_region
        _
      $region16: #{_lambda_.12} parent=11 // pred_fallthru
        _
      // Predicated region
      $region17: #{_lambda_.12} parent=11 // pred_check
        %p211 = pneg %p95
      $region18: #{_lambda_.12} parent=11 // pred_check_branch
        %213 = sbr.rel (%p211) target = $region20
      $region19: #{_lambda_.12} parent=11 // pred_region
        _
      $region20: #{_lambda_.12} parent=11 // pred_fallthru
        _
      // Predicated region
      $region21: #{_lambda_.12} parent=11 // pred_check
        %p214 = pneg %p116
      $region22: #{_lambda_.12} parent=11 // pred_check_branch
        %216 = sbr.rel (%p214) target = $region24
      $region23: #{_lambda_.12} parent=11 // pred_region
        _
      $region24: #{_lambda_.12} parent=11 // pred_fallthru
        _
      // Predicated region
      $region25: #{_lambda_.12} parent=11 // pred_check
        %p217 = pneg %p137
      $region26: #{_lambda_.12} parent=11 // pred_check_branch
        %219 = sbr.rel (%p217) target = $region28
      $region27: #{_lambda_.12} parent=11 // pred_region
        _
      $region28: #{_lambda_.12} parent=11 // pred_fallthru
        _
    $region12: #{_lambda_.12} parent=5 // pred_fallthru
      _
    %p220 = scmp.lt.s32.totalorder %s13, 2
    // Predicated region
    $region29: #{_lambda_.12} parent=5 // pred_check
      %p221 = pneg %p220
    $region30: #{_lambda_.12} parent=5 // pred_check_branch
      %223 = sbr.rel (%p221) target = $region32
    $region31: #{_lambda_.12} parent=5 // pred_region
      // Predicated region
      $region33: #{_lambda_.12} parent=31 // pred_check
        %p224 = pneg %p47
      $region34: #{_lambda_.12} parent=31 // pred_check_branch
        %226 = sbr.rel (%p224) target = $region36
      $region35: #{_lambda_.12} parent=31 // pred_region
        %s227 = smul.u32 2, %s21
        %p228 = scmp.lt.s32.totalorder %s20, 1
        %s229 = scalar_select %p228, %s20, 1
        %p230 = scmp.lt.s32.totalorder %s227, 1
        %s231 = scalar_select %p230, %s227, 1
        %s232 = smul.addr %s229, 16
        %s233 = sadd.s32 %s231, %s232
        %s234 = smul.addr %s233, 8
        %s235 = scalar_lea.vmem %s0, %s234
        %s236 = smul.u32 2, %s21
      $region36: #{_lambda_.12} parent=31 // pred_fallthru
        _
    $region32: #{_lambda_.12} parent=5 // pred_fallthru
      _
    %p237 = scmp.le.s32.totalorder 1, %s13
    %p238 = scmp.lt.s32.totalorder %s13, 3
    %p239 = pnand %p237, %p238
    %p240 = pneg %p239
    // Predicated region
    $region37: #{_lambda_.12} parent=5 // pred_check
      _
    $region38: #{_lambda_.12} parent=5 // pred_check_branch
      %242 = sbr.rel (%p239) target = $region40
    $region39: #{_lambda_.12} parent=5 // pred_region
      %s243 = ssub.s32 %s13, 1
      %s244 = smul.u32 2, %s23
      %p245 = scmp.lt.s32.totalorder %s22, 1
      %s246 = scalar_select %p245, %s22, 1
      %p247 = scmp.lt.s32.totalorder %s244, 1
      %s248 = scalar_select %p247, %s244, 1
      %s249 = smul.addr %s246, 16
      %s250 = sadd.s32 %s248, %s249
      %s251 = smul.addr %s250, 8
      %s252 = scalar_lea.vmem %s0, %s251
      %p253 = pneg %p53
      %p254 = pneg %p50
      %p255 = pneg %p74
      %p256 = pneg %p71
      %p257 = pneg %p95
      %p258 = pneg %p92
      %p259 = pneg %p116
      %p260 = pneg %p113
      %p261 = pneg %p137
      %p262 = pneg %p134
      %p263 = pneg %p165
      %p264 = pneg %p162
      %s265 = smul.u32 2, %s23
      %p266 = scmp.lt.s32.totalorder %s22, 1
      %s267 = scalar_select %p266, %s22, 1
      %p268 = scmp.lt.s32.totalorder %s265, 1
      %s269 = scalar_select %p268, %s265, 1
      %s270 = smul.addr %s267, 8
      %s271 = sadd.s32 %s269, %s270
      %s272 = smul.addr %s271, 8
      %s273 = scalar_lea.vmem %s5, %s272
      %p274 = pneg %p193
      %p275 = pneg %p190
      %s276 = smul.u32 2, %s23
      %p277 = scmp.lt.s32.totalorder %s22, 1
      %s278 = scalar_select %p277, %s22, 1
      %p279 = scmp.lt.s32.totalorder %s276, 1
      %s280 = scalar_select %p279, %s276, 1
      %s281 = smul.addr %s278, 8
      %s282 = sadd.s32 %s280, %s281
      %s283 = smul.addr %s282, 8
      %s284 = scalar_lea.vmem %s6, %s283
      %s285 = smul.u32 2, %s23
      %p286 = scmp.lt.s32.totalorder %s22, 1
      %s287 = scalar_select %p286, %s22, 1
      %p288 = scmp.lt.s32.totalorder %s285, 1
      %s289 = scalar_select %p288, %s285, 1
      %s290 = smul.addr %s287, 16
      %s291 = sadd.s32 %s289, %s290
      %s292 = smul.addr %s291, 8
      %s293 = scalar_lea.vmem %s0, %s292
      %s294 = smul.u32 2, %s23
      %s295 = smul.u32 2, %s23
      %p296 = scmp.lt.s32.totalorder %s22, 1
      %s297 = scalar_select %p296, %s22, 1
      %p298 = scmp.lt.s32.totalorder %s295, 1
      %s299 = scalar_select %p298, %s295, 1
      %s300 = smul.addr %s297, 8
      %s301 = sadd.s32 %s299, %s300
      %s302 = smul.addr %s301, 8
      %s303 = scalar_lea.vmem %s5, %s302
      %s304 = smul.u32 2, %s23
      %s305 = smul.u32 2, %s23
      %p306 = scmp.lt.s32.totalorder %s22, 1
      %s307 = scalar_select %p306, %s22, 1
      %p308 = scmp.lt.s32.totalorder %s305, 1
      %s309 = scalar_select %p308, %s305, 1
      %s310 = smul.addr %s307, 8
      %s311 = sadd.s32 %s309, %s310
      %s312 = smul.addr %s311, 8
      %s313 = scalar_lea.vmem %s6, %s312
      %s314 = smul.u32 2, %s23
      %v315 = vld [vmem:[%s1] sm:$0xff]
      %v316 = vld [vmem:[%s1 + $0x8] sm:$0xff]
      %v317 = vld [vmem:[%s1 + $0x10] sm:$0xff]
      %v318 = vld [vmem:[%s1 + $0x18] sm:$0xff]
      %v319 = vld [vmem:[%s1 + $0x20] sm:$0xff]
      %v320 = vld [vmem:[%s1 + $0x28] sm:$0xff]
      %v321 = vld [vmem:[%s1 + $0x30] sm:$0xff]
      %v322 = vld [vmem:[%s1 + $0x38] sm:$0xff]
      %v323 = vld [vmem:[%s293] sm:$0xff]
      %v324 = vld [vmem:[%s293 + $0x8] sm:$0xff]
      %v325 = vld [vmem:[%s293 + $0x10] sm:$0xff]
      %v326 = vld [vmem:[%s293 + $0x18] sm:$0xff]
      %v327 = vld [vmem:[%s293 + $0x20] sm:$0xff]
      %v328 = vld [vmem:[%s293 + $0x28] sm:$0xff]
      %v329 = vld [vmem:[%s293 + $0x30] sm:$0xff]
      %v330 = vld [vmem:[%s293 + $0x38] sm:$0xff]
      %v331 = vld [vmem:[%s293 + $0x40] sm:$0xff]
      %v332 = vld [vmem:[%s293 + $0x48] sm:$0xff]
      %v333 = vld [vmem:[%s293 + $0x50] sm:$0xff]
      %v334 = vld [vmem:[%s293 + $0x58] sm:$0xff]
      %v335 = vld [vmem:[%s293 + $0x60] sm:$0xff]
      %v336 = vld [vmem:[%s293 + $0x68] sm:$0xff]
      %v337 = vld [vmem:[%s293 + $0x70] sm:$0xff]
      %v338 = vld [vmem:[%s293 + $0x78] sm:$0xff]
      %v339 = vld [vmem:[%s2] sm:$0xff]
      %v340 = vld [vmem:[%s2 + $0x8] sm:$0xff]
      %v341 = vld [vmem:[%s2 + $0x10] sm:$0xff]
      %v342 = vld [vmem:[%s2 + $0x18] sm:$0xff]
      %v343 = vld [vmem:[%s2 + $0x20] sm:$0xff]
      %v344 = vld [vmem:[%s2 + $0x28] sm:$0xff]
      %v345 = vld [vmem:[%s2 + $0x30] sm:$0xff]
      %v346 = vld [vmem:[%s2 + $0x38] sm:$0xff]
      %348 = vset.pattern.permute.xlu0 0
      %349 = vperm.xlu0 %348, %v339
      %v350 = vpop.permute.xlu0 %349
      %353 = vset.pattern.permute.xlu0 0
      %354 = vperm.xlu0 %353, %v340
      %v355 = vpop.permute.xlu0 %354
      %358 = vset.pattern.permute.xlu0 0
      %359 = vperm.xlu0 %358, %v341
      %v360 = vpop.permute.xlu0 %359
      %363 = vset.pattern.permute.xlu0 0
      %364 = vperm.xlu0 %363, %v342
      %v365 = vpop.permute.xlu0 %364
      %368 = vset.pattern.permute.xlu0 0
      %369 = vperm.xlu0 %368, %v343
      %v370 = vpop.permute.xlu0 %369
      %373 = vset.pattern.permute.xlu0 0
      %374 = vperm.xlu0 %373, %v344
      %v375 = vpop.permute.xlu0 %374
      %378 = vset.pattern.permute.xlu0 0
      %379 = vperm.xlu0 %378, %v345
      %v380 = vpop.permute.xlu0 %379
      %383 = vset.pattern.permute.xlu0 0
      %384 = vperm.xlu0 %383, %v346
      %v385 = vpop.permute.xlu0 %384
      %vm387 = vcmask 523264
      %v389 = vsel %vm387, %v315, 0
      %v392 = vsel %vm387, %v316, 0
      %v395 = vsel %vm387, %v317, 0
      %v398 = vsel %vm387, %v318, 0
      %v401 = vsel %vm387, %v319, 0
      %v404 = vsel %vm387, %v320, 0
      %v407 = vsel %vm387, %v321, 0
      %v410 = vsel %vm387, %v322, 0
      %412 = vmatprep.subr.mxu0 %v324
      %413 = vmatpush1.msra.mxu0 %v323
      %414 = vmatprep.subr.mxu0 %v326
      %415 = vmatpush1.msra.mxu0 %v325
      %416 = vmatprep.subr.mxu0 %v328
      %417 = vmatpush1.msra.mxu0 %v327
      %418 = vmatprep.subr.mxu0 %v330
      %419 = vmatpush1.msra.mxu0 %v329
      %420 = vmatprep.subr.mxu0 %v332
      %421 = vmatpush1.msra.mxu0 %v331
      %422 = vmatprep.subr.mxu0 %v334
      %423 = vmatpush1.msra.mxu0 %v333
      %424 = vmatprep.subr.mxu0 %v336
      %425 = vmatpush1.msra.mxu0 %v335
      %426 = vmatprep.subr.mxu0 %v338
      %427 = vmatpush1.msra.mxu0 %v337
      %428 = vmatprep.subr.mxu0 0.0
      %429 = vmatpush1.msra.mxu0 0.0
      %430 = vmatprep.subr.mxu0 0.0
      %431 = vmatpush1.msra.mxu0 0.0
      %432 = vmatprep.subr.mxu0 0.0
      %433 = vmatpush1.msra.mxu0 0.0
      %434 = vmatprep.subr.mxu0 0.0
      %435 = vmatpush1.msra.mxu0 0.0
      %436 = vmatprep.subr.mxu0 0.0
      %437 = vmatpush1.msra.mxu0 0.0
      %438 = vmatprep.subr.mxu0 0.0
      %439 = vmatpush1.msra.mxu0 0.0
      %440 = vmatprep.subr.mxu0 0.0
      %441 = vmatpush1.msra.mxu0 0.0
      %442 = vmatprep.subr.mxu0 0.0
      %443 = vmatpush1.msra.mxu0 0.0
      %444 = vmatprep.subr.mxu0 0.0
      %445 = vmatpush1.msra.mxu0 0.0
      %446 = vmatprep.subr.mxu0 0.0
      %447 = vmatpush1.msra.mxu0 0.0
      %448 = vmatprep.subr.mxu0 0.0
      %449 = vmatpush1.msra.mxu0 0.0
      %450 = vmatprep.subr.mxu0 0.0
      %451 = vmatpush1.msra.mxu0 0.0
      %452 = vmatprep.subr.mxu0 0.0
      %453 = vmatpush1.msra.mxu0 0.0
      %454 = vmatprep.subr.mxu0 0.0
      %455 = vmatpush1.msra.mxu0 0.0
      %456 = vmatprep.subr.mxu0 0.0
      %457 = vmatpush1.msra.mxu0 0.0
      %458 = vmatprep.subr.mxu0 0.0
      %459 = vmatpush1.msra.mxu0 0.0
      %460 = vmatprep.subr.mxu0 0.0
      %461 = vmatpush1.msra.mxu0 0.0
      %462 = vmatprep.subr.mxu0 0.0
      %463 = vmatpush1.msra.mxu0 0.0
      %464 = vmatprep.subr.mxu0 0.0
      %465 = vmatpush1.msra.mxu0 0.0
      %466 = vmatprep.subr.mxu0 0.0
      %467 = vmatpush1.msra.mxu0 0.0
      %468 = vmatprep.subr.mxu0 0.0
      %469 = vmatpush1.msra.mxu0 0.0
      %470 = vmatprep.subr.mxu0 0.0
      %471 = vmatpush1.msra.mxu0 0.0
      %472 = vmatprep.subr.mxu0 0.0
      %473 = vmatpush1.msra.mxu0 0.0
      %474 = vmatprep.subr.mxu0 0.0
      %475 = vmatpush1.msra.mxu0 0.0
      %476 = vmatprep.mubr.f32.mxu0 0.0
      %477 = vmatmul.mubr.f32.gmra.mrb[0].mxu0 %v389
      %v478 = vpop.f32.mrb[0].mxu0
      %v479 = vadd.f32 %v350, %v478
      %v480 = vpop.f32.mrb[0].mxu0
      %v481 = vadd.f32 %v350, %v480
      %482 = vmatprep.mubr.f32.mxu0 0.0
      %483 = vmatmul.mubr.f32.gmra.mrb[0].mxu0 %v392
      %v484 = vpop.f32.mrb[0].mxu0
      %v485 = vadd.f32 %v355, %v484
      %v486 = vpop.f32.mrb[0].mxu0
      %v487 = vadd.f32 %v355, %v486
      %488 = vmatprep.mubr.f32.mxu0 0.0
      %489 = vmatmul.mubr.f32.gmra.mrb[0].mxu0 %v395
      %v490 = vpop.f32.mrb[0].mxu0
      %v491 = vadd.f32 %v360, %v490
      %v492 = vpop.f32.mrb[0].mxu0
      %v493 = vadd.f32 %v360, %v492
      %494 = vmatprep.mubr.f32.mxu0 0.0
      %495 = vmatmul.mubr.f32.gmra.mrb[0].mxu0 %v398
      %v496 = vpop.f32.mrb[0].mxu0
      %v497 = vadd.f32 %v365, %v496
      %v498 = vpop.f32.mrb[0].mxu0
      %v499 = vadd.f32 %v365, %v498
      %500 = vmatprep.mubr.f32.mxu0 0.0
      %501 = vmatmul.mubr.f32.gmra.mrb[0].mxu0 %v401
      %v502 = vpop.f32.mrb[0].mxu0
      %v503 = vadd.f32 %v370, %v502
      %v504 = vpop.f32.mrb[0].mxu0
      %v505 = vadd.f32 %v370, %v504
      %506 = vmatprep.mubr.f32.mxu0 0.0
      %507 = vmatmul.mubr.f32.gmra.mrb[0].mxu0 %v404
      %v508 = vpop.f32.mrb[0].mxu0
      %v509 = vadd.f32 %v375, %v508
      %v510 = vpop.f32.mrb[0].mxu0
      %v511 = vadd.f32 %v375, %v510
      %512 = vmatprep.mubr.f32.mxu0 0.0
      %513 = vmatmul.mubr.f32.gmra.mrb[0].mxu0 %v407
      %v514 = vpop.f32.mrb[0].mxu0
      %v515 = vadd.f32 %v380, %v514
      %v516 = vpop.f32.mrb[0].mxu0
      %v517 = vadd.f32 %v380, %v516
      %518 = vmatprep.mubr.f32.mxu0 0.0
      %519 = vmatmul.mubr.f32.gmra.mrb[0].mxu0 %v410
      %v520 = vpop.f32.mrb[0].mxu0
      %v521 = vadd.f32 %v385, %v520
      %v522 = vpop.f32.mrb[0].mxu0
      %v523 = vadd.f32 %v385, %v522
      %524 = vdwg.mxu0
      %vm525 = vcmp.ge.f32.partialorder %v479, 0.0
      %vm526 = vcmp.ge.f32.partialorder %v481, 0.0
      %vm527 = vcmp.ge.f32.partialorder %v485, 0.0
      %vm528 = vcmp.ge.f32.partialorder %v487, 0.0
      %vm529 = vcmp.ge.f32.partialorder %v491, 0.0
      %vm530 = vcmp.ge.f32.partialorder %v493, 0.0
      %vm531 = vcmp.ge.f32.partialorder %v497, 0.0
      %vm532 = vcmp.ge.f32.partialorder %v499, 0.0
      %vm533 = vcmp.ge.f32.partialorder %v503, 0.0
      %vm534 = vcmp.ge.f32.partialorder %v505, 0.0
      %vm535 = vcmp.ge.f32.partialorder %v509, 0.0
      %vm536 = vcmp.ge.f32.partialorder %v511, 0.0
      %vm537 = vcmp.ge.f32.partialorder %v515, 0.0
      %vm538 = vcmp.ge.f32.partialorder %v517, 0.0
      %vm539 = vcmp.ge.f32.partialorder %v521, 0.0
      %vm540 = vcmp.ge.f32.partialorder %v523, 0.0
      %v541 = vmul.f32 %v479, 0.1
      %v542 = vmul.f32 %v481, 0.1
      %v543 = vmul.f32 %v485, 0.1
      %v544 = vmul.f32 %v487, 0.1
      %v545 = vmul.f32 %v491, 0.1
      %v546 = vmul.f32 %v493, 0.1
      %v547 = vmul.f32 %v497, 0.1
      %v548 = vmul.f32 %v499, 0.1
      %v549 = vmul.f32 %v503, 0.1
      %v550 = vmul.f32 %v505, 0.1
      %v551 = vmul.f32 %v509, 0.1
      %v552 = vmul.f32 %v511, 0.1
      %v553 = vmul.f32 %v515, 0.1
      %v554 = vmul.f32 %v517, 0.1
      %v555 = vmul.f32 %v521, 0.1
      %v556 = vmul.f32 %v523, 0.1
      %v557 = vsel %vm525, %v479, %v541
      %v558 = vsel %vm526, %v481, %v542
      %v559 = vsel %vm527, %v485, %v543
      %v560 = vsel %vm528, %v487, %v544
      %v561 = vsel %vm529, %v491, %v545
      %v562 = vsel %vm530, %v493, %v546
      %v563 = vsel %vm531, %v497, %v547
      %v564 = vsel %vm532, %v499, %v548
      %v565 = vsel %vm533, %v503, %v549
      %v566 = vsel %vm534, %v505, %v550
      %v567 = vsel %vm535, %v509, %v551
      %v568 = vsel %vm536, %v511, %v552
      %v569 = vsel %vm537, %v515, %v553
      %v570 = vsel %vm538, %v517, %v554
      %v571 = vsel %vm539, %v521, %v555
      %v572 = vsel %vm540, %v523, %v556
      %v573 = vld [vmem:[%s3] sm:$0xff]
      %v574 = vld [vmem:[%s3 + $0x8] sm:$0xff]
      %v575 = vld [vmem:[%s3 + $0x10] sm:$0xff]
      %v576 = vld [vmem:[%s3 + $0x18] sm:$0xff]
      %v577 = vld [vmem:[%s3 + $0x20] sm:$0xff]
      %v578 = vld [vmem:[%s3 + $0x28] sm:$0xff]
      %v579 = vld [vmem:[%s3 + $0x30] sm:$0xff]
      %v580 = vld [vmem:[%s3 + $0x38] sm:$0xff]
      %v581 = vld [vmem:[%s4] sm:$0xff]
      %v582 = vld [vmem:[%s4 + $0x8] sm:$0xff]
      %v583 = vld [vmem:[%s4 + $0x10] sm:$0xff]
      %v584 = vld [vmem:[%s4 + $0x18] sm:$0xff]
      %v585 = vld [vmem:[%s4 + $0x20] sm:$0xff]
      %v586 = vld [vmem:[%s4 + $0x28] sm:$0xff]
      %v587 = vld [vmem:[%s4 + $0x30] sm:$0xff]
      %v588 = vld [vmem:[%s4 + $0x38] sm:$0xff]
      %590 = vset.pattern.permute.xlu0 0
      %591 = vperm.xlu0 %590, %v581
      %v592 = vpop.permute.xlu0 %591
      %595 = vset.pattern.permute.xlu0 0
      %596 = vperm.xlu0 %595, %v582
      %v597 = vpop.permute.xlu0 %596
      %600 = vset.pattern.permute.xlu0 0
      %601 = vperm.xlu0 %600, %v583
      %v602 = vpop.permute.xlu0 %601
      %605 = vset.pattern.permute.xlu0 0
      %606 = vperm.xlu0 %605, %v584
      %v607 = vpop.permute.xlu0 %606
      %610 = vset.pattern.permute.xlu0 0
      %611 = vperm.xlu0 %610, %v585
      %v612 = vpop.permute.xlu0 %611
      %615 = vset.pattern.permute.xlu0 0
      %616 = vperm.xlu0 %615, %v586
      %v617 = vpop.permute.xlu0 %616
      %620 = vset.pattern.permute.xlu0 0
      %621 = vperm.xlu0 %620, %v587
      %v622 = vpop.permute.xlu0 %621
      %625 = vset.pattern.permute.xlu0 0
      %626 = vperm.xlu0 %625, %v588
      %v627 = vpop.permute.xlu0 %626
      %v630 = vsel %vm387, %v573, 0
      %v633 = vsel %vm387, %v574, 0
      %v636 = vsel %vm387, %v575, 0
      %v639 = vsel %vm387, %v576, 0
      %v642 = vsel %vm387, %v577, 0
      %v645 = vsel %vm387, %v578, 0
      %v648 = vsel %vm387, %v579, 0
      %v651 = vsel %vm387, %v580, 0
      %653 = vmatprep.subr.mxu0 %v558
      %654 = vmatpush1.msra.mxu0 %v557
      %655 = vmatprep.subr.mxu0 %v560
      %656 = vmatpush1.msra.mxu0 %v559
      %657 = vmatprep.subr.mxu0 %v562
      %658 = vmatpush1.msra.mxu0 %v561
      %659 = vmatprep.subr.mxu0 %v564
      %660 = vmatpush1.msra.mxu0 %v563
      %661 = vmatprep.subr.mxu0 %v566
      %662 = vmatpush1.msra.mxu0 %v565
      %663 = vmatprep.subr.mxu0 %v568
      %664 = vmatpush1.msra.mxu0 %v567
      %665 = vmatprep.subr.mxu0 %v570
      %666 = vmatpush1.msra.mxu0 %v569
      %667 = vmatprep.subr.mxu0 %v572
      %668 = vmatpush1.msra.mxu0 %v571
      %669 = vmatprep.subr.mxu0 0.0
      %670 = vmatpush1.msra.mxu0 0.0
      %671 = vmatprep.subr.mxu0 0.0
      %672 = vmatpush1.msra.mxu0 0.0
      %673 = vmatprep.subr.mxu0 0.0
      %674 = vmatpush1.msra.mxu0 0.0
      %675 = vmatprep.subr.mxu0 0.0
      %676 = vmatpush1.msra.mxu0 0.0
      %677 = vmatprep.subr.mxu0 0.0
      %678 = vmatpush1.msra.mxu0 0.0
      %679 = vmatprep.subr.mxu0 0.0
      %680 = vmatpush1.msra.mxu0 0.0
      %681 = vmatprep.subr.mxu0 0.0
      %682 = vmatpush1.msra.mxu0 0.0
      %683 = vmatprep.subr.mxu0 0.0
      %684 = vmatpush1.msra.mxu0 0.0
      %685 = vmatprep.subr.mxu0 0.0
      %686 = vmatpush1.msra.mxu0 0.0
      %687 = vmatprep.subr.mxu0 0.0
      %688 = vmatpush1.msra.mxu0 0.0
      %689 = vmatprep.subr.mxu0 0.0
      %690 = vmatpush1.msra.mxu0 0.0
      %691 = vmatprep.subr.mxu0 0.0
      %692 = vmatpush1.msra.mxu0 0.0
      %693 = vmatprep.subr.mxu0 0.0
      %694 = vmatpush1.msra.mxu0 0.0
      %695 = vmatprep.subr.mxu0 0.0
      %696 = vmatpush1.msra.mxu0 0.0
      %697 = vmatprep.subr.mxu0 0.0
      %698 = vmatpush1.msra.mxu0 0.0
      %699 = vmatprep.subr.mxu0 0.0
      %700 = vmatpush1.msra.mxu0 0.0
      %701 = vmatprep.subr.mxu0 0.0
      %702 = vmatpush1.msra.mxu0 0.0
      %703 = vmatprep.subr.mxu0 0.0
      %704 = vmatpush1.msra.mxu0 0.0
      %705 = vmatprep.subr.mxu0 0.0
      %706 = vmatpush1.msra.mxu0 0.0
      %707 = vmatprep.subr.mxu0 0.0
      %708 = vmatpush1.msra.mxu0 0.0
      %709 = vmatprep.subr.mxu0 0.0
      %710 = vmatpush1.msra.mxu0 0.0
      %711 = vmatprep.subr.mxu0 0.0
      %712 = vmatpush1.msra.mxu0 0.0
      %713 = vmatprep.subr.mxu0 0.0
      %714 = vmatpush1.msra.mxu0 0.0
      %715 = vmatprep.subr.mxu0 0.0
      %716 = vmatpush1.msra.mxu0 0.0
      %717 = vmatprep.mubr.f32.mxu0 0.0
      %718 = vmatmul.mubr.f32.gmra.mrb[0].mxu0 %v630
      %v719 = vpop.f32.mrb[0].mxu0
      %v720 = vadd.f32 %v592, %v719
      %v721 = vpop.f32.mrb[0].mxu0
      %v722 = vadd.f32 %v592, %v721
      %723 = vmatprep.mubr.f32.mxu0 0.0
      %724 = vmatmul.mubr.f32.gmra.mrb[0].mxu0 %v633
      %v725 = vpop.f32.mrb[0].mxu0
      %v726 = vadd.f32 %v597, %v725
      %v727 = vpop.f32.mrb[0].mxu0
      %v728 = vadd.f32 %v597, %v727
      %729 = vmatprep.mubr.f32.mxu0 0.0
      %730 = vmatmul.mubr.f32.gmra.mrb[0].mxu0 %v636
      %v731 = vpop.f32.mrb[0].mxu0
      %v732 = vadd.f32 %v602, %v731
      %v733 = vpop.f32.mrb[0].mxu0
      %v734 = vadd.f32 %v602, %v733
      %735 = vmatprep.mubr.f32.mxu0 0.0
      %736 = vmatmul.mubr.f32.gmra.mrb[0].mxu0 %v639
      %v737 = vpop.f32.mrb[0].mxu0
      %v738 = vadd.f32 %v607, %v737
      %v739 = vpop.f32.mrb[0].mxu0
      %v740 = vadd.f32 %v607, %v739
      %741 = vmatprep.mubr.f32.mxu0 0.0
      %742 = vmatmul.mubr.f32.gmra.mrb[0].mxu0 %v642
      %v743 = vpop.f32.mrb[0].mxu0
      %v744 = vadd.f32 %v612, %v743
      %v745 = vpop.f32.mrb[0].mxu0
      %v746 = vadd.f32 %v612, %v745
      %747 = vmatprep.mubr.f32.mxu0 0.0
      %748 = vmatmul.mubr.f32.gmra.mrb[0].mxu0 %v645
      %v749 = vpop.f32.mrb[0].mxu0
      %v750 = vadd.f32 %v617, %v749
      %v751 = vpop.f32.mrb[0].mxu0
      %v752 = vadd.f32 %v617, %v751
      %753 = vmatprep.mubr.f32.mxu0 0.0
      %754 = vmatmul.mubr.f32.gmra.mrb[0].mxu0 %v648
      %v755 = vpop.f32.mrb[0].mxu0
      %v756 = vadd.f32 %v622, %v755
      %v757 = vpop.f32.mrb[0].mxu0
      %v758 = vadd.f32 %v622, %v757
      %759 = vmatprep.mubr.f32.mxu0 0.0
      %760 = vmatmul.mubr.f32.gmra.mrb[0].mxu0 %v651
      %v761 = vpop.f32.mrb[0].mxu0
      %v762 = vadd.f32 %v627, %v761
      %v763 = vpop.f32.mrb[0].mxu0
      %v764 = vadd.f32 %v627, %v763
      %765 = vdwg.mxu0
      %v766 = vand.u32 2147483647, %v744
      %vm767 = vcmp.le.f32.partialorder %v766, 0.7853982
      %vm768 = vcmp.lt.s32.totalorder %v744, 0
      %v769 = vand.u32 %v744, 2139095040
      %v770 = vshrl.u32 %v769, 23
      %v771 = vsub.s32 %v770, 127
      %v772 = vand.u32 2147483647, %v744
      %v773 = vand.u32 %v772, 8388607
      %v774 = vor.u32 %v773, 8388608
      %v775 = vsub.s32 0, %v774
      %v776 = vadd.s32 %v771, 1
      %vm777 = vcmp.gt.s32.totalorder %v776, 0
      %v778 = vsel %vm777, %v776, 0
      %v779 = vshrl.u32 %v778, 5
      %v780 = vand.u32 %v778, 31
      %v781 = vsub.s32 32, %v780
      %v782 = vshrl.u32 683565275, %v781
      %v783 = vshll.u32 683565275, %v780
      %v784 = vshrl.u32 2475754826, %v781
      %v785 = vor.u32 %v783, %v784
      %v786 = vshll.u32 2475754826, %v780
      %v787 = vshrl.u32 2131351028, %v781
      %v788 = vor.u32 %v786, %v787
      %v789 = vshll.u32 2131351028, %v780
      %v790 = vshrl.u32 2102212464, %v781
      %v791 = vor.u32 %v789, %v790
      %v792 = vshll.u32 2102212464, %v780
      %v793 = vshrl.u32 920167782, %v781
      %v794 = vor.u32 %v792, %v793
      %v795 = vshll.u32 920167782, %v780
      %v796 = vshrl.u32 1326507024, %v781
      %v797 = vor.u32 %v795, %v796
      %vm798 = vcmp.lt.s32.totalorder %v779, 1
      %vm799 = vcmp.lt.s32.totalorder %v779, 2
      %vm800 = vcmp.lt.s32.totalorder %v779, 3
      %vm801 = vcmp.lt.s32.totalorder %v779, 4
      %v802 = vsel %vm798, %v782, %v785
      %v803 = vsel %vm801, %v791, 2102212464
      %v804 = vsel %vm800, %v788, %v803
      %v805 = vsel %vm799, %v802, %v804
      %v806 = vsel %vm798, %v785, %v788
      %v807 = vsel %vm801, %v794, 920167782
      %v808 = vsel %vm800, %v791, %v807
      %v809 = vsel %vm799, %v806, %v808
      %v810 = vsel %vm798, %v788, %v791
      %v811 = vsel %vm801, %v797, 1326507024
      %v812 = vsel %vm800, %v794, %v811
      %v813 = vsel %vm799, %v810, %v812
      %v814 = vshll.u32 %v774, 8
      %v815 = vmul.u32.u64.compose %v814, %v813
      %v816 = vextract.low.u32 %v815
      %v817 = vextract.high.u32 %v815
      %v818 = vmul.u32.u64.compose %v814, %v809
      %v819 = vextract.low.u32 %v818
      %v820 = vextract.high.u32 %v818
      %v821 = vmul.u32 %v814, %v805
      %v822 = vadd.s32 %v817, %v819
      %vm823 = vc.u32 %v817, %v819
      %v824 = vadd.s32 %v820, 1
      %v825 = vsel %vm823, %v824, %v820
      %v826 = vadd.s32 %v821, %v825
      %v827 = vadd.s32 %v826, 536870912
      %v828 = vshrl.u32 %v827, 30
      %v829 = vshll.u32 %v828, 30
      %v830 = vsub.s32 %v826, %v829
      %vm831 = vcmp.lt.s32.totalorder %v830, 0
      %v832 = vsub.s32 0, %v830
      %v833 = vsel %vm831, %v832, %v830
      %v834 = vclz %v833
      %v835 = vsub.s32 %v834, 2
      %vm836 = vcmp.gt.s32.totalorder 0, %v835
      %v837 = vsel %vm836, 0, %v835
      %v838 = vsub.s32 32, %v837
      %v839 = vshll.u32 %v830, %v837
      %v840 = vshrl.u32 %v822, %v838
      %v841 = vor.u32 %v839, %v840
      %v842 = vsub.s32 4294967266, %v837
      %v843 = vadd.s32 %v842, 127
      %v844 = vshll.u32 %v843, 23
      %v845 = vor.u32 4788187, %v844
      %v846 = vand.u32 2147483647, %v845
      %v848 = vcvt.s32.f32 %v841
      %v849 = vmul.f32 %v848, %v846
      %v850 = vxor.u32 %v849, 2147483648
      %v851 = vsel %vm768, %v850, %v849
      %v852 = vsub.s32 4, %v828
      %v853 = vsel %vm768, %v852, %v828
      %v854 = vsel %vm767, %v744, %v851
      %v855 = vsel %vm767, 0, %v853
      %v856 = vcosq.f32.pop %v854
      %v857 = vsinq.f32.pop %v854
      %vm858 = vweird.f32 %v744
      %v859 = vand.u32 %v855, 3
      %vm860 = vcmp.lt.s32.totalorder %v859, 2
      %vm861 = vcmp.eq.s32.totalorder %v859, 0
      %v862 = vxor.u32 %v857, 2147483648
      %v863 = vsel %vm861, %v856, %v862
      %vm864 = vcmp.eq.s32.totalorder %v859, 2
      %v865 = vxor.u32 %v856, 2147483648
      %v866 = vsel %vm864, %v865, %v857
      %v867 = vsel %vm860, %v863, %v866
      %v868 = vsel %vm858, nan, %v867
      %v869 = vand.u32 2147483647, %v746
      %vm870 = vcmp.le.f32.partialorder %v869, 0.7853982
      %vm871 = vcmp.lt.s32.totalorder %v746, 0
      %v872 = vand.u32 %v746, 2139095040
      %v873 = vshrl.u32 %v872, 23
      %v874 = vsub.s32 %v873, 127
      %v875 = vand.u32 2147483647, %v746
      %v876 = vand.u32 %v875, 8388607
      %v877 = vor.u32 %v876, 8388608
      %v878 = vsub.s32 0, %v877
      %v879 = vadd.s32 %v874, 1
      %vm880 = vcmp.gt.s32.totalorder %v879, 0
      %v881 = vsel %vm880, %v879, 0
      %v882 = vshrl.u32 %v881, 5
      %v883 = vand.u32 %v881, 31
      %v884 = vsub.s32 32, %v883
      %v885 = vshrl.u32 683565275, %v884
      %v886 = vshll.u32 683565275, %v883
      %v887 = vshrl.u32 2475754826, %v884
      %v888 = vor.u32 %v886, %v887
      %v889 = vshll.u32 2475754826, %v883
      %v890 = vshrl.u32 2131351028, %v884
      %v891 = vor.u32 %v889, %v890
      %v892 = vshll.u32 2131351028, %v883
      %v893 = vshrl.u32 2102212464, %v884
      %v894 = vor.u32 %v892, %v893
      %v895 = vshll.u32 2102212464, %v883
      %v896 = vshrl.u32 920167782, %v884
      %v897 = vor.u32 %v895, %v896
      %v898 = vshll.u32 920167782, %v883
      %v899 = vshrl.u32 1326507024, %v884
      %v900 = vor.u32 %v898, %v899
      %vm901 = vcmp.lt.s32.totalorder %v882, 1
      %vm902 = vcmp.lt.s32.totalorder %v882, 2
      %vm903 = vcmp.lt.s32.totalorder %v882, 3
      %vm904 = vcmp.lt.s32.totalorder %v882, 4
      %v905 = vsel %vm901, %v885, %v888
      %v906 = vsel %vm904, %v894, 2102212464
      %v907 = vsel %vm903, %v891, %v906
      %v908 = vsel %vm902, %v905, %v907
      %v909 = vsel %vm901, %v888, %v891
      %v910 = vsel %vm904, %v897, 920167782
      %v911 = vsel %vm903, %v894, %v910
      %v912 = vsel %vm902, %v909, %v911
      %v913 = vsel %vm901, %v891, %v894
      %v914 = vsel %vm904, %v900, 1326507024
      %v915 = vsel %vm903, %v897, %v914
      %v916 = vsel %vm902, %v913, %v915
      %v917 = vshll.u32 %v877, 8
      %v918 = vmul.u32.u64.compose %v917, %v916
      %v919 = vextract.low.u32 %v918
      %v920 = vextract.high.u32 %v918
      %v921 = vmul.u32.u64.compose %v917, %v912
      %v922 = vextract.low.u32 %v921
      %v923 = vextract.high.u32 %v921
      %v924 = vmul.u32 %v917, %v908
      %v925 = vadd.s32 %v920, %v922
      %vm926 = vc.u32 %v920, %v922
      %v927 = vadd.s32 %v923, 1
      %v928 = vsel %vm926, %v927, %v923
      %v929 = vadd.s32 %v924, %v928
      %v930 = vadd.s32 %v929, 536870912
      %v931 = vshrl.u32 %v930, 30
      %v932 = vshll.u32 %v931, 30
      %v933 = vsub.s32 %v929, %v932
      %vm934 = vcmp.lt.s32.totalorder %v933, 0
      %v935 = vsub.s32 0, %v933
      %v936 = vsel %vm934, %v935, %v933
      %v937 = vclz %v936
      %v938 = vsub.s32 %v937, 2
      %vm939 = vcmp.gt.s32.totalorder 0, %v938
      %v940 = vsel %vm939, 0, %v938
      %v941 = vsub.s32 32, %v940
      %v942 = vshll.u32 %v933, %v940
      %v943 = vshrl.u32 %v925, %v941
      %v944 = vor.u32 %v942, %v943
      %v945 = vsub.s32 4294967266, %v940
      %v946 = vadd.s32 %v945, 127
      %v947 = vshll.u32 %v946, 23
      %v948 = vor.u32 4788187, %v947
      %v949 = vand.u32 2147483647, %v948
      %v951 = vcvt.s32.f32 %v944
      %v952 = vmul.f32 %v951, %v949
      %v953 = vxor.u32 %v952, 2147483648
      %v954 = vsel %vm871, %v953, %v952
      %v955 = vsub.s32 4, %v931
      %v956 = vsel %vm871, %v955, %v931
      %v957 = vsel %vm870, %v746, %v954
      %v958 = vsel %vm870, 0, %v956
      %v959 = vcosq.f32.pop %v957
      %v960 = vsinq.f32.pop %v957
      %vm961 = vweird.f32 %v746
      %v962 = vand.u32 %v958, 3
      %vm963 = vcmp.lt.s32.totalorder %v962, 2
      %vm964 = vcmp.eq.s32.totalorder %v962, 0
      %v965 = vxor.u32 %v960, 2147483648
      %v966 = vsel %vm964, %v959, %v965
      %vm967 = vcmp.eq.s32.totalorder %v962, 2
      %v968 = vxor.u32 %v959, 2147483648
      %v969 = vsel %vm967, %v968, %v960
      %v970 = vsel %vm963, %v966, %v969
      %v971 = vsel %vm961, nan, %v970
      %v972 = vand.u32 2147483647, %v750
      %vm973 = vcmp.le.f32.partialorder %v972, 0.7853982
      %vm974 = vcmp.lt.s32.totalorder %v750, 0
      %v975 = vand.u32 %v750, 2139095040
      %v976 = vshrl.u32 %v975, 23
      %v977 = vsub.s32 %v976, 127
      %v978 = vand.u32 2147483647, %v750
      %v979 = vand.u32 %v978, 8388607
      %v980 = vor.u32 %v979, 8388608
      %v981 = vsub.s32 0, %v980
      %v982 = vadd.s32 %v977, 1
      %vm983 = vcmp.gt.s32.totalorder %v982, 0
      %v984 = vsel %vm983, %v982, 0
      %v985 = vshrl.u32 %v984, 5
      %v986 = vand.u32 %v984, 31
      %v987 = vsub.s32 32, %v986
      %v988 = vshrl.u32 683565275, %v987
      %v989 = vshll.u32 683565275, %v986
      %v990 = vshrl.u32 2475754826, %v987
      %v991 = vor.u32 %v989, %v990
      %v992 = vshll.u32 2475754826, %v986
      %v993 = vshrl.u32 2131351028, %v987
      %v994 = vor.u32 %v992, %v993
      %v995 = vshll.u32 2131351028, %v986
      %v996 = vshrl.u32 2102212464, %v987
      %v997 = vor.u32 %v995, %v996
      %v998 = vshll.u32 2102212464, %v986
      %v999 = vshrl.u32 920167782, %v987
      %v1000 = vor.u32 %v998, %v999
      %v1001 = vshll.u32 920167782, %v986
      %v1002 = vshrl.u32 1326507024, %v987
      %v1003 = vor.u32 %v1001, %v1002
      %vm1004 = vcmp.lt.s32.totalorder %v985, 1
      %vm1005 = vcmp.lt.s32.totalorder %v985, 2
      %vm1006 = vcmp.lt.s32.totalorder %v985, 3
      %vm1007 = vcmp.lt.s32.totalorder %v985, 4
      %v1008 = vsel %vm1004, %v988, %v991
      %v1009 = vsel %vm1007, %v997, 2102212464
      %v1010 = vsel %vm1006, %v994, %v1009
      %v1011 = vsel %vm1005, %v1008, %v1010
      %v1012 = vsel %vm1004, %v991, %v994
      %v1013 = vsel %vm1007, %v1000, 920167782
      %v1014 = vsel %vm1006, %v997, %v1013
      %v1015 = vsel %vm1005, %v1012, %v1014
      %v1016 = vsel %vm1004, %v994, %v997
      %v1017 = vsel %vm1007, %v1003, 1326507024
      %v1018 = vsel %vm1006, %v1000, %v1017
      %v1019 = vsel %vm1005, %v1016, %v1018
      %v1020 = vshll.u32 %v980, 8
      %v1021 = vmul.u32.u64.compose %v1020, %v1019
      %v1022 = vextract.low.u32 %v1021
      %v1023 = vextract.high.u32 %v1021
      %v1024 = vmul.u32.u64.compose %v1020, %v1015
      %v1025 = vextract.low.u32 %v1024
      %v1026 = vextract.high.u32 %v1024
      %v1027 = vmul.u32 %v1020, %v1011
      %v1028 = vadd.s32 %v1023, %v1025
      %vm1029 = vc.u32 %v1023, %v1025
      %v1030 = vadd.s32 %v1026, 1
      %v1031 = vsel %vm1029, %v1030, %v1026
      %v1032 = vadd.s32 %v1027, %v1031
      %v1033 = vadd.s32 %v1032, 536870912
      %v1034 = vshrl.u32 %v1033, 30
      %v1035 = vshll.u32 %v1034, 30
      %v1036 = vsub.s32 %v1032, %v1035
      %vm1037 = vcmp.lt.s32.totalorder %v1036, 0
      %v1038 = vsub.s32 0, %v1036
      %v1039 = vsel %vm1037, %v1038, %v1036
      %v1040 = vclz %v1039
      %v1041 = vsub.s32 %v1040, 2
      %vm1042 = vcmp.gt.s32.totalorder 0, %v1041
      %v1043 = vsel %vm1042, 0, %v1041
      %v1044 = vsub.s32 32, %v1043
      %v1045 = vshll.u32 %v1036, %v1043
      %v1046 = vshrl.u32 %v1028, %v1044
      %v1047 = vor.u32 %v1045, %v1046
      %v1048 = vsub.s32 4294967266, %v1043
      %v1049 = vadd.s32 %v1048, 127
      %v1050 = vshll.u32 %v1049, 23
      %v1051 = vor.u32 4788187, %v1050
      %v1052 = vand.u32 2147483647, %v1051
      %v1054 = vcvt.s32.f32 %v1047
      %v1055 = vmul.f32 %v1054, %v1052
      %v1056 = vxor.u32 %v1055, 2147483648
      %v1057 = vsel %vm974, %v1056, %v1055
      %v1058 = vsub.s32 4, %v1034
      %v1059 = vsel %vm974, %v1058, %v1034
      %v1060 = vsel %vm973, %v750, %v1057
      %v1061 = vsel %vm973, 0, %v1059
      %v1062 = vcosq.f32.pop %v1060
      %v1063 = vsinq.f32.pop %v1060
      %vm1064 = vweird.f32 %v750
      %v1065 = vand.u32 %v1061, 3
      %vm1066 = vcmp.lt.s32.totalorder %v1065, 2
      %vm1067 = vcmp.eq.s32.totalorder %v1065, 0
      %v1068 = vxor.u32 %v1063, 2147483648
      %v1069 = vsel %vm1067, %v1062, %v1068
      %vm1070 = vcmp.eq.s32.totalorder %v1065, 2
      %v1071 = vxor.u32 %v1062, 2147483648
      %v1072 = vsel %vm1070, %v1071, %v1063
      %v1073 = vsel %vm1066, %v1069, %v1072
      %v1074 = vsel %vm1064, nan, %v1073
      %v1075 = vand.u32 2147483647, %v752
      %vm1076 = vcmp.le.f32.partialorder %v1075, 0.7853982
      %vm1077 = vcmp.lt.s32.totalorder %v752, 0
      %v1078 = vand.u32 %v752, 2139095040
      %v1079 = vshrl.u32 %v1078, 23
      %v1080 = vsub.s32 %v1079, 127
      %v1081 = vand.u32 2147483647, %v752
      %v1082 = vand.u32 %v1081, 8388607
      %v1083 = vor.u32 %v1082, 8388608
      %v1084 = vsub.s32 0, %v1083
      %v1085 = vadd.s32 %v1080, 1
      %vm1086 = vcmp.gt.s32.totalorder %v1085, 0
      %v1087 = vsel %vm1086, %v1085, 0
      %v1088 = vshrl.u32 %v1087, 5
      %v1089 = vand.u32 %v1087, 31
      %v1090 = vsub.s32 32, %v1089
      %v1091 = vshrl.u32 683565275, %v1090
      %v1092 = vshll.u32 683565275, %v1089
      %v1093 = vshrl.u32 2475754826, %v1090
      %v1094 = vor.u32 %v1092, %v1093
      %v1095 = vshll.u32 2475754826, %v1089
      %v1096 = vshrl.u32 2131351028, %v1090
      %v1097 = vor.u32 %v1095, %v1096
      %v1098 = vshll.u32 2131351028, %v1089
      %v1099 = vshrl.u32 2102212464, %v1090
      %v1100 = vor.u32 %v1098, %v1099
      %v1101 = vshll.u32 2102212464, %v1089
      %v1102 = vshrl.u32 920167782, %v1090
      %v1103 = vor.u32 %v1101, %v1102
      %v1104 = vshll.u32 920167782, %v1089
      %v1105 = vshrl.u32 1326507024, %v1090
      %v1106 = vor.u32 %v1104, %v1105
      %vm1107 = vcmp.lt.s32.totalorder %v1088, 1
      %vm1108 = vcmp.lt.s32.totalorder %v1088, 2
      %vm1109 = vcmp.lt.s32.totalorder %v1088, 3
      %vm1110 = vcmp.lt.s32.totalorder %v1088, 4
      %v1111 = vsel %vm1107, %v1091, %v1094
      %v1112 = vsel %vm1110, %v1100, 2102212464
      %v1113 = vsel %vm1109, %v1097, %v1112
      %v1114 = vsel %vm1108, %v1111, %v1113
      %v1115 = vsel %vm1107, %v1094, %v1097
      %v1116 = vsel %vm1110, %v1103, 920167782
      %v1117 = vsel %vm1109, %v1100, %v1116
      %v1118 = vsel %vm1108, %v1115, %v1117
      %v1119 = vsel %vm1107, %v1097, %v1100
      %v1120 = vsel %vm1110, %v1106, 1326507024
      %v1121 = vsel %vm1109, %v1103, %v1120
      %v1122 = vsel %vm1108, %v1119, %v1121
      %v1123 = vshll.u32 %v1083, 8
      %v1124 = vmul.u32.u64.compose %v1123, %v1122
      %v1125 = vextract.low.u32 %v1124
      %v1126 = vextract.high.u32 %v1124
      %v1127 = vmul.u32.u64.compose %v1123, %v1118
      %v1128 = vextract.low.u32 %v1127
      %v1129 = vextract.high.u32 %v1127
      %v1130 = vmul.u32 %v1123, %v1114
      %v1131 = vadd.s32 %v1126, %v1128
      %vm1132 = vc.u32 %v1126, %v1128
      %v1133 = vadd.s32 %v1129, 1
      %v1134 = vsel %vm1132, %v1133, %v1129
      %v1135 = vadd.s32 %v1130, %v1134
      %v1136 = vadd.s32 %v1135, 536870912
      %v1137 = vshrl.u32 %v1136, 30
      %v1138 = vshll.u32 %v1137, 30
      %v1139 = vsub.s32 %v1135, %v1138
      %vm1140 = vcmp.lt.s32.totalorder %v1139, 0
      %v1141 = vsub.s32 0, %v1139
      %v1142 = vsel %vm1140, %v1141, %v1139
      %v1143 = vclz %v1142
      %v1144 = vsub.s32 %v1143, 2
      %vm1145 = vcmp.gt.s32.totalorder 0, %v1144
      %v1146 = vsel %vm1145, 0, %v1144
      %v1147 = vsub.s32 32, %v1146
      %v1148 = vshll.u32 %v1139, %v1146
      %v1149 = vshrl.u32 %v1131, %v1147
      %v1150 = vor.u32 %v1148, %v1149
      %v1151 = vsub.s32 4294967266, %v1146
      %v1152 = vadd.s32 %v1151, 127
      %v1153 = vshll.u32 %v1152, 23
      %v1154 = vor.u32 4788187, %v1153
      %v1155 = vand.u32 2147483647, %v1154
      %v1157 = vcvt.s32.f32 %v1150
      %v1158 = vmul.f32 %v1157, %v1155
      %v1159 = vxor.u32 %v1158, 2147483648
      %v1160 = vsel %vm1077, %v1159, %v1158
      %v1161 = vsub.s32 4, %v1137
      %v1162 = vsel %vm1077, %v1161, %v1137
      %v1163 = vsel %vm1076, %v752, %v1160
      %v1164 = vsel %vm1076, 0, %v1162
      %v1165 = vcosq.f32.pop %v1163
      %v1166 = vsinq.f32.pop %v1163
      %vm1167 = vweird.f32 %v752
      %v1168 = vand.u32 %v1164, 3
      %vm1169 = vcmp.lt.s32.totalorder %v1168, 2
      %vm1170 = vcmp.eq.s32.totalorder %v1168, 0
      %v1171 = vxor.u32 %v1166, 2147483648
      %v1172 = vsel %vm1170, %v1165, %v1171
      %vm1173 = vcmp.eq.s32.totalorder %v1168, 2
      %v1174 = vxor.u32 %v1165, 2147483648
      %v1175 = vsel %vm1173, %v1174, %v1166
      %v1176 = vsel %vm1169, %v1172, %v1175
      %v1177 = vsel %vm1167, nan, %v1176
      %v1178 = vand.u32 2147483647, %v756
      %vm1179 = vcmp.le.f32.partialorder %v1178, 0.7853982
      %vm1180 = vcmp.lt.s32.totalorder %v756, 0
      %v1181 = vand.u32 %v756, 2139095040
      %v1182 = vshrl.u32 %v1181, 23
      %v1183 = vsub.s32 %v1182, 127
      %v1184 = vand.u32 2147483647, %v756
      %v1185 = vand.u32 %v1184, 8388607
      %v1186 = vor.u32 %v1185, 8388608
      %v1187 = vsub.s32 0, %v1186
      %v1188 = vadd.s32 %v1183, 1
      %vm1189 = vcmp.gt.s32.totalorder %v1188, 0
      %v1190 = vsel %vm1189, %v1188, 0
      %v1191 = vshrl.u32 %v1190, 5
      %v1192 = vand.u32 %v1190, 31
      %v1193 = vsub.s32 32, %v1192
      %v1194 = vshrl.u32 683565275, %v1193
      %v1195 = vshll.u32 683565275, %v1192
      %v1196 = vshrl.u32 2475754826, %v1193
      %v1197 = vor.u32 %v1195, %v1196
      %v1198 = vshll.u32 2475754826, %v1192
      %v1199 = vshrl.u32 2131351028, %v1193
      %v1200 = vor.u32 %v1198, %v1199
      %v1201 = vshll.u32 2131351028, %v1192
      %v1202 = vshrl.u32 2102212464, %v1193
      %v1203 = vor.u32 %v1201, %v1202
      %v1204 = vshll.u32 2102212464, %v1192
      %v1205 = vshrl.u32 920167782, %v1193
      %v1206 = vor.u32 %v1204, %v1205
      %v1207 = vshll.u32 920167782, %v1192
      %v1208 = vshrl.u32 1326507024, %v1193
      %v1209 = vor.u32 %v1207, %v1208
      %vm1210 = vcmp.lt.s32.totalorder %v1191, 1
      %vm1211 = vcmp.lt.s32.totalorder %v1191, 2
      %vm1212 = vcmp.lt.s32.totalorder %v1191, 3
      %vm1213 = vcmp.lt.s32.totalorder %v1191, 4
      %v1214 = vsel %vm1210, %v1194, %v1197
      %v1215 = vsel %vm1213, %v1203, 2102212464
      %v1216 = vsel %vm1212, %v1200, %v1215
      %v1217 = vsel %vm1211, %v1214, %v1216
      %v1218 = vsel %vm1210, %v1197, %v1200
      %v1219 = vsel %vm1213, %v1206, 920167782
      %v1220 = vsel %vm1212, %v1203, %v1219
      %v1221 = vsel %vm1211, %v1218, %v1220
      %v1222 = vsel %vm1210, %v1200, %v1203
      %v1223 = vsel %vm1213, %v1209, 1326507024
      %v1224 = vsel %vm1212, %v1206, %v1223
      %v1225 = vsel %vm1211, %v1222, %v1224
      %v1226 = vshll.u32 %v1186, 8
      %v1227 = vmul.u32.u64.compose %v1226, %v1225
      %v1228 = vextract.low.u32 %v1227
      %v1229 = vextract.high.u32 %v1227
      %v1230 = vmul.u32.u64.compose %v1226, %v1221
      %v1231 = vextract.low.u32 %v1230
      %v1232 = vextract.high.u32 %v1230
      %v1233 = vmul.u32 %v1226, %v1217
      %v1234 = vadd.s32 %v1229, %v1231
      %vm1235 = vc.u32 %v1229, %v1231
      %v1236 = vadd.s32 %v1232, 1
      %v1237 = vsel %vm1235, %v1236, %v1232
      %v1238 = vadd.s32 %v1233, %v1237
      %v1239 = vadd.s32 %v1238, 536870912
      %v1240 = vshrl.u32 %v1239, 30
      %v1241 = vshll.u32 %v1240, 30
      %v1242 = vsub.s32 %v1238, %v1241
      %vm1243 = vcmp.lt.s32.totalorder %v1242, 0
      %v1244 = vsub.s32 0, %v1242
      %v1245 = vsel %vm1243, %v1244, %v1242
      %v1246 = vclz %v1245
      %v1247 = vsub.s32 %v1246, 2
      %vm1248 = vcmp.gt.s32.totalorder 0, %v1247
      %v1249 = vsel %vm1248, 0, %v1247
      %v1250 = vsub.s32 32, %v1249
      %v1251 = vshll.u32 %v1242, %v1249
      %v1252 = vshrl.u32 %v1234, %v1250
      %v1253 = vor.u32 %v1251, %v1252
      %v1254 = vsub.s32 4294967266, %v1249
      %v1255 = vadd.s32 %v1254, 127
      %v1256 = vshll.u32 %v1255, 23
      %v1257 = vor.u32 4788187, %v1256
      %v1258 = vand.u32 2147483647, %v1257
      %v1260 = vcvt.s32.f32 %v1253
      %v1261 = vmul.f32 %v1260, %v1258
      %v1262 = vxor.u32 %v1261, 2147483648
      %v1263 = vsel %vm1180, %v1262, %v1261
      %v1264 = vsub.s32 4, %v1240
      %v1265 = vsel %vm1180, %v1264, %v1240
      %v1266 = vsel %vm1179, %v756, %v1263
      %v1267 = vsel %vm1179, 0, %v1265
      %v1268 = vcosq.f32.pop %v1266
      %v1269 = vsinq.f32.pop %v1266
      %vm1270 = vweird.f32 %v756
      %v1271 = vand.u32 %v1267, 3
      %vm1272 = vcmp.lt.s32.totalorder %v1271, 2
      %vm1273 = vcmp.eq.s32.totalorder %v1271, 0
      %v1274 = vxor.u32 %v1269, 2147483648
      %v1275 = vsel %vm1273, %v1268, %v1274
      %vm1276 = vcmp.eq.s32.totalorder %v1271, 2
      %v1277 = vxor.u32 %v1268, 2147483648
      %v1278 = vsel %vm1276, %v1277, %v1269
      %v1279 = vsel %vm1272, %v1275, %v1278
      %v1280 = vsel %vm1270, nan, %v1279
      %v1281 = vand.u32 2147483647, %v758
      %vm1282 = vcmp.le.f32.partialorder %v1281, 0.7853982
      %vm1283 = vcmp.lt.s32.totalorder %v758, 0
      %v1284 = vand.u32 %v758, 2139095040
      %v1285 = vshrl.u32 %v1284, 23
      %v1286 = vsub.s32 %v1285, 127
      %v1287 = vand.u32 2147483647, %v758
      %v1288 = vand.u32 %v1287, 8388607
      %v1289 = vor.u32 %v1288, 8388608
      %v1290 = vsub.s32 0, %v1289
      %v1291 = vadd.s32 %v1286, 1
      %vm1292 = vcmp.gt.s32.totalorder %v1291, 0
      %v1293 = vsel %vm1292, %v1291, 0
      %v1294 = vshrl.u32 %v1293, 5
      %v1295 = vand.u32 %v1293, 31
      %v1296 = vsub.s32 32, %v1295
      %v1297 = vshrl.u32 683565275, %v1296
      %v1298 = vshll.u32 683565275, %v1295
      %v1299 = vshrl.u32 2475754826, %v1296
      %v1300 = vor.u32 %v1298, %v1299
      %v1301 = vshll.u32 2475754826, %v1295
      %v1302 = vshrl.u32 2131351028, %v1296
      %v1303 = vor.u32 %v1301, %v1302
      %v1304 = vshll.u32 2131351028, %v1295
      %v1305 = vshrl.u32 2102212464, %v1296
      %v1306 = vor.u32 %v1304, %v1305
      %v1307 = vshll.u32 2102212464, %v1295
      %v1308 = vshrl.u32 920167782, %v1296
      %v1309 = vor.u32 %v1307, %v1308
      %v1310 = vshll.u32 920167782, %v1295
      %v1311 = vshrl.u32 1326507024, %v1296
      %v1312 = vor.u32 %v1310, %v1311
      %vm1313 = vcmp.lt.s32.totalorder %v1294, 1
      %vm1314 = vcmp.lt.s32.totalorder %v1294, 2
      %vm1315 = vcmp.lt.s32.totalorder %v1294, 3
      %vm1316 = vcmp.lt.s32.totalorder %v1294, 4
      %v1317 = vsel %vm1313, %v1297, %v1300
      %v1318 = vsel %vm1316, %v1306, 2102212464
      %v1319 = vsel %vm1315, %v1303, %v1318
      %v1320 = vsel %vm1314, %v1317, %v1319
      %v1321 = vsel %vm1313, %v1300, %v1303
      %v1322 = vsel %vm1316, %v1309, 920167782
      %v1323 = vsel %vm1315, %v1306, %v1322
      %v1324 = vsel %vm1314, %v1321, %v1323
      %v1325 = vsel %vm1313, %v1303, %v1306
      %v1326 = vsel %vm1316, %v1312, 1326507024
      %v1327 = vsel %vm1315, %v1309, %v1326
      %v1328 = vsel %vm1314, %v1325, %v1327
      %v1329 = vshll.u32 %v1289, 8
      %v1330 = vmul.u32.u64.compose %v1329, %v1328
      %v1331 = vextract.low.u32 %v1330
      %v1332 = vextract.high.u32 %v1330
      %v1333 = vmul.u32.u64.compose %v1329, %v1324
      %v1334 = vextract.low.u32 %v1333
      %v1335 = vextract.high.u32 %v1333
      %v1336 = vmul.u32 %v1329, %v1320
      %v1337 = vadd.s32 %v1332, %v1334
      %vm1338 = vc.u32 %v1332, %v1334
      %v1339 = vadd.s32 %v1335, 1
      %v1340 = vsel %vm1338, %v1339, %v1335
      %v1341 = vadd.s32 %v1336, %v1340
      %v1342 = vadd.s32 %v1341, 536870912
      %v1343 = vshrl.u32 %v1342, 30
      %v1344 = vshll.u32 %v1343, 30
      %v1345 = vsub.s32 %v1341, %v1344
      %vm1346 = vcmp.lt.s32.totalorder %v1345, 0
      %v1347 = vsub.s32 0, %v1345
      %v1348 = vsel %vm1346, %v1347, %v1345
      %v1349 = vclz %v1348
      %v1350 = vsub.s32 %v1349, 2
      %vm1351 = vcmp.gt.s32.totalorder 0, %v1350
      %v1352 = vsel %vm1351, 0, %v1350
      %v1353 = vsub.s32 32, %v1352
      %v1354 = vshll.u32 %v1345, %v1352
      %v1355 = vshrl.u32 %v1337, %v1353
      %v1356 = vor.u32 %v1354, %v1355
      %v1357 = vsub.s32 4294967266, %v1352
      %v1358 = vadd.s32 %v1357, 127
      %v1359 = vshll.u32 %v1358, 23
      %v1360 = vor.u32 4788187, %v1359
      %v1361 = vand.u32 2147483647, %v1360
      %v1363 = vcvt.s32.f32 %v1356
      %v1364 = vmul.f32 %v1363, %v1361
      %v1365 = vxor.u32 %v1364, 2147483648
      %v1366 = vsel %vm1283, %v1365, %v1364
      %v1367 = vsub.s32 4, %v1343
      %v1368 = vsel %vm1283, %v1367, %v1343
      %v1369 = vsel %vm1282, %v758, %v1366
      %v1370 = vsel %vm1282, 0, %v1368
      %v1371 = vcosq.f32.pop %v1369
      %v1372 = vsinq.f32.pop %v1369
      %vm1373 = vweird.f32 %v758
      %v1374 = vand.u32 %v1370, 3
      %vm1375 = vcmp.lt.s32.totalorder %v1374, 2
      %vm1376 = vcmp.eq.s32.totalorder %v1374, 0
      %v1377 = vxor.u32 %v1372, 2147483648
      %v1378 = vsel %vm1376, %v1371, %v1377
      %vm1379 = vcmp.eq.s32.totalorder %v1374, 2
      %v1380 = vxor.u32 %v1371, 2147483648
      %v1381 = vsel %vm1379, %v1380, %v1372
      %v1382 = vsel %vm1375, %v1378, %v1381
      %v1383 = vsel %vm1373, nan, %v1382
      %v1384 = vand.u32 2147483647, %v762
      %vm1385 = vcmp.le.f32.partialorder %v1384, 0.7853982
      %vm1386 = vcmp.lt.s32.totalorder %v762, 0
      %v1387 = vand.u32 %v762, 2139095040
      %v1388 = vshrl.u32 %v1387, 23
      %v1389 = vsub.s32 %v1388, 127
      %v1390 = vand.u32 2147483647, %v762
      %v1391 = vand.u32 %v1390, 8388607
      %v1392 = vor.u32 %v1391, 8388608
      %v1393 = vsub.s32 0, %v1392
      %v1394 = vadd.s32 %v1389, 1
      %vm1395 = vcmp.gt.s32.totalorder %v1394, 0
      %v1396 = vsel %vm1395, %v1394, 0
      %v1397 = vshrl.u32 %v1396, 5
      %v1398 = vand.u32 %v1396, 31
      %v1399 = vsub.s32 32, %v1398
      %v1400 = vshrl.u32 683565275, %v1399
      %v1401 = vshll.u32 683565275, %v1398
      %v1402 = vshrl.u32 2475754826, %v1399
      %v1403 = vor.u32 %v1401, %v1402
      %v1404 = vshll.u32 2475754826, %v1398
      %v1405 = vshrl.u32 2131351028, %v1399
      %v1406 = vor.u32 %v1404, %v1405
      %v1407 = vshll.u32 2131351028, %v1398
      %v1408 = vshrl.u32 2102212464, %v1399
      %v1409 = vor.u32 %v1407, %v1408
      %v1410 = vshll.u32 2102212464, %v1398
      %v1411 = vshrl.u32 920167782, %v1399
      %v1412 = vor.u32 %v1410, %v1411
      %v1413 = vshll.u32 920167782, %v1398
      %v1414 = vshrl.u32 1326507024, %v1399
      %v1415 = vor.u32 %v1413, %v1414
      %vm1416 = vcmp.lt.s32.totalorder %v1397, 1
      %vm1417 = vcmp.lt.s32.totalorder %v1397, 2
      %vm1418 = vcmp.lt.s32.totalorder %v1397, 3
      %vm1419 = vcmp.lt.s32.totalorder %v1397, 4
      %v1420 = vsel %vm1416, %v1400, %v1403
      %v1421 = vsel %vm1419, %v1409, 2102212464
      %v1422 = vsel %vm1418, %v1406, %v1421
      %v1423 = vsel %vm1417, %v1420, %v1422
      %v1424 = vsel %vm1416, %v1403, %v1406
      %v1425 = vsel %vm1419, %v1412, 920167782
      %v1426 = vsel %vm1418, %v1409, %v1425
      %v1427 = vsel %vm1417, %v1424, %v1426
      %v1428 = vsel %vm1416, %v1406, %v1409
      %v1429 = vsel %vm1419, %v1415, 1326507024
      %v1430 = vsel %vm1418, %v1412, %v1429
      %v1431 = vsel %vm1417, %v1428, %v1430
      %v1432 = vshll.u32 %v1392, 8
      %v1433 = vmul.u32.u64.compose %v1432, %v1431
      %v1434 = vextract.low.u32 %v1433
      %v1435 = vextract.high.u32 %v1433
      %v1436 = vmul.u32.u64.compose %v1432, %v1427
      %v1437 = vextract.low.u32 %v1436
      %v1438 = vextract.high.u32 %v1436
      %v1439 = vmul.u32 %v1432, %v1423
      %v1440 = vadd.s32 %v1435, %v1437
      %vm1441 = vc.u32 %v1435, %v1437
      %v1442 = vadd.s32 %v1438, 1
      %v1443 = vsel %vm1441, %v1442, %v1438
      %v1444 = vadd.s32 %v1439, %v1443
      %v1445 = vadd.s32 %v1444, 536870912
      %v1446 = vshrl.u32 %v1445, 30
      %v1447 = vshll.u32 %v1446, 30
      %v1448 = vsub.s32 %v1444, %v1447
      %vm1449 = vcmp.lt.s32.totalorder %v1448, 0
      %v1450 = vsub.s32 0, %v1448
      %v1451 = vsel %vm1449, %v1450, %v1448
      %v1452 = vclz %v1451
      %v1453 = vsub.s32 %v1452, 2
      %vm1454 = vcmp.gt.s32.totalorder 0, %v1453
      %v1455 = vsel %vm1454, 0, %v1453
      %v1456 = vsub.s32 32, %v1455
      %v1457 = vshll.u32 %v1448, %v1455
      %v1458 = vshrl.u32 %v1440, %v1456
      %v1459 = vor.u32 %v1457, %v1458
      %v1460 = vsub.s32 4294967266, %v1455
      %v1461 = vadd.s32 %v1460, 127
      %v1462 = vshll.u32 %v1461, 23
      %v1463 = vor.u32 4788187, %v1462
      %v1464 = vand.u32 2147483647, %v1463
      %v1466 = vcvt.s32.f32 %v1459
      %v1467 = vmul.f32 %v1466, %v1464
      %v1468 = vxor.u32 %v1467, 2147483648
      %v1469 = vsel %vm1386, %v1468, %v1467
      %v1470 = vsub.s32 4, %v1446
      %v1471 = vsel %vm1386, %v1470, %v1446
      %v1472 = vsel %vm1385, %v762, %v1469
      %v1473 = vsel %vm1385, 0, %v1471
      %v1474 = vcosq.f32.pop %v1472
      %v1475 = vsinq.f32.pop %v1472
      %vm1476 = vweird.f32 %v762
      %v1477 = vand.u32 %v1473, 3
      %vm1478 = vcmp.lt.s32.totalorder %v1477, 2
      %vm1479 = vcmp.eq.s32.totalorder %v1477, 0
      %v1480 = vxor.u32 %v1475, 2147483648
      %v1481 = vsel %vm1479, %v1474, %v1480
      %vm1482 = vcmp.eq.s32.totalorder %v1477, 2
      %v1483 = vxor.u32 %v1474, 2147483648
      %v1484 = vsel %vm1482, %v1483, %v1475
      %v1485 = vsel %vm1478, %v1481, %v1484
      %v1486 = vsel %vm1476, nan, %v1485
      %v1487 = vand.u32 2147483647, %v764
      %vm1488 = vcmp.le.f32.partialorder %v1487, 0.7853982
      %vm1489 = vcmp.lt.s32.totalorder %v764, 0
      %v1490 = vand.u32 %v764, 2139095040
      %v1491 = vshrl.u32 %v1490, 23
      %v1492 = vsub.s32 %v1491, 127
      %v1493 = vand.u32 2147483647, %v764
      %v1494 = vand.u32 %v1493, 8388607
      %v1495 = vor.u32 %v1494, 8388608
      %v1496 = vsub.s32 0, %v1495
      %v1497 = vadd.s32 %v1492, 1
      %vm1498 = vcmp.gt.s32.totalorder %v1497, 0
      %v1499 = vsel %vm1498, %v1497, 0
      %v1500 = vshrl.u32 %v1499, 5
      %v1501 = vand.u32 %v1499, 31
      %v1502 = vsub.s32 32, %v1501
      %v1503 = vshrl.u32 683565275, %v1502
      %v1504 = vshll.u32 683565275, %v1501
      %v1505 = vshrl.u32 2475754826, %v1502
      %v1506 = vor.u32 %v1504, %v1505
      %v1507 = vshll.u32 2475754826, %v1501
      %v1508 = vshrl.u32 2131351028, %v1502
      %v1509 = vor.u32 %v1507, %v1508
      %v1510 = vshll.u32 2131351028, %v1501
      %v1511 = vshrl.u32 2102212464, %v1502
      %v1512 = vor.u32 %v1510, %v1511
      %v1513 = vshll.u32 2102212464, %v1501
      %v1514 = vshrl.u32 920167782, %v1502
      %v1515 = vor.u32 %v1513, %v1514
      %v1516 = vshll.u32 920167782, %v1501
      %v1517 = vshrl.u32 1326507024, %v1502
      %v1518 = vor.u32 %v1516, %v1517
      %vm1519 = vcmp.lt.s32.totalorder %v1500, 1
      %vm1520 = vcmp.lt.s32.totalorder %v1500, 2
      %vm1521 = vcmp.lt.s32.totalorder %v1500, 3
      %vm1522 = vcmp.lt.s32.totalorder %v1500, 4
      %v1523 = vsel %vm1519, %v1503, %v1506
      %v1524 = vsel %vm1522, %v1512, 2102212464
      %v1525 = vsel %vm1521, %v1509, %v1524
      %v1526 = vsel %vm1520, %v1523, %v1525
      %v1527 = vsel %vm1519, %v1506, %v1509
      %v1528 = vsel %vm1522, %v1515, 920167782
      %v1529 = vsel %vm1521, %v1512, %v1528
      %v1530 = vsel %vm1520, %v1527, %v1529
      %v1531 = vsel %vm1519, %v1509, %v1512
      %v1532 = vsel %vm1522, %v1518, 1326507024
      %v1533 = vsel %vm1521, %v1515, %v1532
      %v1534 = vsel %vm1520, %v1531, %v1533
      %v1535 = vshll.u32 %v1495, 8
      %v1536 = vmul.u32.u64.compose %v1535, %v1534
      %v1537 = vextract.low.u32 %v1536
      %v1538 = vextract.high.u32 %v1536
      %v1539 = vmul.u32.u64.compose %v1535, %v1530
      %v1540 = vextract.low.u32 %v1539
      %v1541 = vextract.high.u32 %v1539
      %v1542 = vmul.u32 %v1535, %v1526
      %v1543 = vadd.s32 %v1538, %v1540
      %vm1544 = vc.u32 %v1538, %v1540
      %v1545 = vadd.s32 %v1541, 1
      %v1546 = vsel %vm1544, %v1545, %v1541
      %v1547 = vadd.s32 %v1542, %v1546
      %v1548 = vadd.s32 %v1547, 536870912
      %v1549 = vshrl.u32 %v1548, 30
      %v1550 = vshll.u32 %v1549, 30
      %v1551 = vsub.s32 %v1547, %v1550
      %vm1552 = vcmp.lt.s32.totalorder %v1551, 0
      %v1553 = vsub.s32 0, %v1551
      %v1554 = vsel %vm1552, %v1553, %v1551
      %v1555 = vclz %v1554
      %v1556 = vsub.s32 %v1555, 2
      %vm1557 = vcmp.gt.s32.totalorder 0, %v1556
      %v1558 = vsel %vm1557, 0, %v1556
      %v1559 = vsub.s32 32, %v1558
      %v1560 = vshll.u32 %v1551, %v1558
      %v1561 = vshrl.u32 %v1543, %v1559
      %v1562 = vor.u32 %v1560, %v1561
      %v1563 = vsub.s32 4294967266, %v1558
      %v1564 = vadd.s32 %v1563, 127
      %v1565 = vshll.u32 %v1564, 23
      %v1566 = vor.u32 4788187, %v1565
      %v1567 = vand.u32 2147483647, %v1566
      %v1569 = vcvt.s32.f32 %v1562
      %v1570 = vmul.f32 %v1569, %v1567
      %v1571 = vxor.u32 %v1570, 2147483648
      %v1572 = vsel %vm1489, %v1571, %v1570
      %v1573 = vsub.s32 4, %v1549
      %v1574 = vsel %vm1489, %v1573, %v1549
      %v1575 = vsel %vm1488, %v764, %v1572
      %v1576 = vsel %vm1488, 0, %v1574
      %v1577 = vcosq.f32.pop %v1575
      %v1578 = vsinq.f32.pop %v1575
      %vm1579 = vweird.f32 %v764
      %v1580 = vand.u32 %v1576, 3
      %vm1581 = vcmp.lt.s32.totalorder %v1580, 2
      %vm1582 = vcmp.eq.s32.totalorder %v1580, 0
      %v1583 = vxor.u32 %v1578, 2147483648
      %v1584 = vsel %vm1582, %v1577, %v1583
      %vm1585 = vcmp.eq.s32.totalorder %v1580, 2
      %v1586 = vxor.u32 %v1577, 2147483648
      %v1587 = vsel %vm1585, %v1586, %v1578
      %v1588 = vsel %vm1581, %v1584, %v1587
      %v1589 = vsel %vm1579, nan, %v1588
      %v1590 = vmul.f32 %v720, %v868
      %v1591 = vmul.f32 %v722, %v971
      %v1592 = vmul.f32 %v726, %v1074
      %v1593 = vmul.f32 %v728, %v1177
      %v1594 = vmul.f32 %v732, %v1280
      %v1595 = vmul.f32 %v734, %v1383
      %v1596 = vmul.f32 %v738, %v1486
      %v1597 = vmul.f32 %v740, %v1589
      %1598 = vst [vmem:[%s303] sm:$0xff] %v1590
      %1599 = vst [vmem:[%s303 + $0x8] sm:$0xff] %v1591
      %1600 = vst [vmem:[%s303 + $0x10] sm:$0xff] %v1592
      %1601 = vst [vmem:[%s303 + $0x18] sm:$0xff] %v1593
      %1602 = vst [vmem:[%s303 + $0x20] sm:$0xff] %v1594
      %1603 = vst [vmem:[%s303 + $0x28] sm:$0xff] %v1595
      %1604 = vst [vmem:[%s303 + $0x30] sm:$0xff] %v1596
      %1605 = vst [vmem:[%s303 + $0x38] sm:$0xff] %v1597
      %v1606 = vand.u32 2147483647, %v744
      %vm1607 = vcmp.le.f32.partialorder %v1606, 0.7853982
      %vm1608 = vcmp.lt.s32.totalorder %v744, 0
      %v1609 = vand.u32 %v744, 2139095040
      %v1610 = vshrl.u32 %v1609, 23
      %v1611 = vsub.s32 %v1610, 127
      %v1612 = vand.u32 2147483647, %v744
      %v1613 = vand.u32 %v1612, 8388607
      %v1614 = vor.u32 %v1613, 8388608
      %v1615 = vsub.s32 0, %v1614
      %v1616 = vadd.s32 %v1611, 1
      %vm1617 = vcmp.gt.s32.totalorder %v1616, 0
      %v1618 = vsel %vm1617, %v1616, 0
      %v1619 = vshrl.u32 %v1618, 5
      %v1620 = vand.u32 %v1618, 31
      %v1621 = vsub.s32 32, %v1620
      %v1622 = vshrl.u32 683565275, %v1621
      %v1623 = vshll.u32 683565275, %v1620
      %v1624 = vshrl.u32 2475754826, %v1621
      %v1625 = vor.u32 %v1623, %v1624
      %v1626 = vshll.u32 2475754826, %v1620
      %v1627 = vshrl.u32 2131351028, %v1621
      %v1628 = vor.u32 %v1626, %v1627
      %v1629 = vshll.u32 2131351028, %v1620
      %v1630 = vshrl.u32 2102212464, %v1621
      %v1631 = vor.u32 %v1629, %v1630
      %v1632 = vshll.u32 2102212464, %v1620
      %v1633 = vshrl.u32 920167782, %v1621
      %v1634 = vor.u32 %v1632, %v1633
      %v1635 = vshll.u32 920167782, %v1620
      %v1636 = vshrl.u32 1326507024, %v1621
      %v1637 = vor.u32 %v1635, %v1636
      %vm1638 = vcmp.lt.s32.totalorder %v1619, 1
      %vm1639 = vcmp.lt.s32.totalorder %v1619, 2
      %vm1640 = vcmp.lt.s32.totalorder %v1619, 3
      %vm1641 = vcmp.lt.s32.totalorder %v1619, 4
      %v1642 = vsel %vm1638, %v1622, %v1625
      %v1643 = vsel %vm1641, %v1631, 2102212464
      %v1644 = vsel %vm1640, %v1628, %v1643
      %v1645 = vsel %vm1639, %v1642, %v1644
      %v1646 = vsel %vm1638, %v1625, %v1628
      %v1647 = vsel %vm1641, %v1634, 920167782
      %v1648 = vsel %vm1640, %v1631, %v1647
      %v1649 = vsel %vm1639, %v1646, %v1648
      %v1650 = vsel %vm1638, %v1628, %v1631
      %v1651 = vsel %vm1641, %v1637, 1326507024
      %v1652 = vsel %vm1640, %v1634, %v1651
      %v1653 = vsel %vm1639, %v1650, %v1652
      %v1654 = vshll.u32 %v1614, 8
      %v1655 = vmul.u32.u64.compose %v1654, %v1653
      %v1656 = vextract.low.u32 %v1655
      %v1657 = vextract.high.u32 %v1655
      %v1658 = vmul.u32.u64.compose %v1654, %v1649
      %v1659 = vextract.low.u32 %v1658
      %v1660 = vextract.high.u32 %v1658
      %v1661 = vmul.u32 %v1654, %v1645
      %v1662 = vadd.s32 %v1657, %v1659
      %vm1663 = vc.u32 %v1657, %v1659
      %v1664 = vadd.s32 %v1660, 1
      %v1665 = vsel %vm1663, %v1664, %v1660
      %v1666 = vadd.s32 %v1661, %v1665
      %v1667 = vadd.s32 %v1666, 536870912
      %v1668 = vshrl.u32 %v1667, 30
      %v1669 = vshll.u32 %v1668, 30
      %v1670 = vsub.s32 %v1666, %v1669
      %vm1671 = vcmp.lt.s32.totalorder %v1670, 0
      %v1672 = vsub.s32 0, %v1670
      %v1673 = vsel %vm1671, %v1672, %v1670
      %v1674 = vclz %v1673
      %v1675 = vsub.s32 %v1674, 2
      %vm1676 = vcmp.gt.s32.totalorder 0, %v1675
      %v1677 = vsel %vm1676, 0, %v1675
      %v1678 = vsub.s32 32, %v1677
      %v1679 = vshll.u32 %v1670, %v1677
      %v1680 = vshrl.u32 %v1662, %v1678
      %v1681 = vor.u32 %v1679, %v1680
      %v1682 = vsub.s32 4294967266, %v1677
      %v1683 = vadd.s32 %v1682, 127
      %v1684 = vshll.u32 %v1683, 23
      %v1685 = vor.u32 4788187, %v1684
      %v1686 = vand.u32 2147483647, %v1685
      %v1688 = vcvt.s32.f32 %v1681
      %v1689 = vmul.f32 %v1688, %v1686
      %v1690 = vxor.u32 %v1689, 2147483648
      %v1691 = vsel %vm1608, %v1690, %v1689
      %v1692 = vsub.s32 4, %v1668
      %v1693 = vsel %vm1608, %v1692, %v1668
      %v1694 = vsel %vm1607, %v744, %v1691
      %v1695 = vsel %vm1607, 0, %v1693
      %v1696 = vcosq.f32.pop %v1694
      %v1697 = vsinq.f32.pop %v1694
      %vm1698 = vweird.f32 %v744
      %v1699 = vadd.s32 %v1695, 3
      %v1700 = vand.u32 %v1699, 3
      %vm1701 = vcmp.lt.s32.totalorder %v1700, 2
      %vm1702 = vcmp.eq.s32.totalorder %v1700, 0
      %v1703 = vxor.u32 %v1697, 2147483648
      %v1704 = vsel %vm1702, %v1696, %v1703
      %vm1705 = vcmp.eq.s32.totalorder %v1700, 2
      %v1706 = vxor.u32 %v1696, 2147483648
      %v1707 = vsel %vm1705, %v1706, %v1697
      %v1708 = vsel %vm1701, %v1704, %v1707
      %v1709 = vsel %vm1698, nan, %v1708
      %v1710 = vand.u32 2147483647, %v746
      %vm1711 = vcmp.le.f32.partialorder %v1710, 0.7853982
      %vm1712 = vcmp.lt.s32.totalorder %v746, 0
      %v1713 = vand.u32 %v746, 2139095040
      %v1714 = vshrl.u32 %v1713, 23
      %v1715 = vsub.s32 %v1714, 127
      %v1716 = vand.u32 2147483647, %v746
      %v1717 = vand.u32 %v1716, 8388607
      %v1718 = vor.u32 %v1717, 8388608
      %v1719 = vsub.s32 0, %v1718
      %v1720 = vadd.s32 %v1715, 1
      %vm1721 = vcmp.gt.s32.totalorder %v1720, 0
      %v1722 = vsel %vm1721, %v1720, 0
      %v1723 = vshrl.u32 %v1722, 5
      %v1724 = vand.u32 %v1722, 31
      %v1725 = vsub.s32 32, %v1724
      %v1726 = vshrl.u32 683565275, %v1725
      %v1727 = vshll.u32 683565275, %v1724
      %v1728 = vshrl.u32 2475754826, %v1725
      %v1729 = vor.u32 %v1727, %v1728
      %v1730 = vshll.u32 2475754826, %v1724
      %v1731 = vshrl.u32 2131351028, %v1725
      %v1732 = vor.u32 %v1730, %v1731
      %v1733 = vshll.u32 2131351028, %v1724
      %v1734 = vshrl.u32 2102212464, %v1725
      %v1735 = vor.u32 %v1733, %v1734
      %v1736 = vshll.u32 2102212464, %v1724
      %v1737 = vshrl.u32 920167782, %v1725
      %v1738 = vor.u32 %v1736, %v1737
      %v1739 = vshll.u32 920167782, %v1724
      %v1740 = vshrl.u32 1326507024, %v1725
      %v1741 = vor.u32 %v1739, %v1740
      %vm1742 = vcmp.lt.s32.totalorder %v1723, 1
      %vm1743 = vcmp.lt.s32.totalorder %v1723, 2
      %vm1744 = vcmp.lt.s32.totalorder %v1723, 3
      %vm1745 = vcmp.lt.s32.totalorder %v1723, 4
      %v1746 = vsel %vm1742, %v1726, %v1729
      %v1747 = vsel %vm1745, %v1735, 2102212464
      %v1748 = vsel %vm1744, %v1732, %v1747
      %v1749 = vsel %vm1743, %v1746, %v1748
      %v1750 = vsel %vm1742, %v1729, %v1732
      %v1751 = vsel %vm1745, %v1738, 920167782
      %v1752 = vsel %vm1744, %v1735, %v1751
      %v1753 = vsel %vm1743, %v1750, %v1752
      %v1754 = vsel %vm1742, %v1732, %v1735
      %v1755 = vsel %vm1745, %v1741, 1326507024
      %v1756 = vsel %vm1744, %v1738, %v1755
      %v1757 = vsel %vm1743, %v1754, %v1756
      %v1758 = vshll.u32 %v1718, 8
      %v1759 = vmul.u32.u64.compose %v1758, %v1757
      %v1760 = vextract.low.u32 %v1759
      %v1761 = vextract.high.u32 %v1759
      %v1762 = vmul.u32.u64.compose %v1758, %v1753
      %v1763 = vextract.low.u32 %v1762
      %v1764 = vextract.high.u32 %v1762
      %v1765 = vmul.u32 %v1758, %v1749
      %v1766 = vadd.s32 %v1761, %v1763
      %vm1767 = vc.u32 %v1761, %v1763
      %v1768 = vadd.s32 %v1764, 1
      %v1769 = vsel %vm1767, %v1768, %v1764
      %v1770 = vadd.s32 %v1765, %v1769
      %v1771 = vadd.s32 %v1770, 536870912
      %v1772 = vshrl.u32 %v1771, 30
      %v1773 = vshll.u32 %v1772, 30
      %v1774 = vsub.s32 %v1770, %v1773
      %vm1775 = vcmp.lt.s32.totalorder %v1774, 0
      %v1776 = vsub.s32 0, %v1774
      %v1777 = vsel %vm1775, %v1776, %v1774
      %v1778 = vclz %v1777
      %v1779 = vsub.s32 %v1778, 2
      %vm1780 = vcmp.gt.s32.totalorder 0, %v1779
      %v1781 = vsel %vm1780, 0, %v1779
      %v1782 = vsub.s32 32, %v1781
      %v1783 = vshll.u32 %v1774, %v1781
      %v1784 = vshrl.u32 %v1766, %v1782
      %v1785 = vor.u32 %v1783, %v1784
      %v1786 = vsub.s32 4294967266, %v1781
      %v1787 = vadd.s32 %v1786, 127
      %v1788 = vshll.u32 %v1787, 23
      %v1789 = vor.u32 4788187, %v1788
      %v1790 = vand.u32 2147483647, %v1789
      %v1792 = vcvt.s32.f32 %v1785
      %v1793 = vmul.f32 %v1792, %v1790
      %v1794 = vxor.u32 %v1793, 2147483648
      %v1795 = vsel %vm1712, %v1794, %v1793
      %v1796 = vsub.s32 4, %v1772
      %v1797 = vsel %vm1712, %v1796, %v1772
      %v1798 = vsel %vm1711, %v746, %v1795
      %v1799 = vsel %vm1711, 0, %v1797
      %v1800 = vcosq.f32.pop %v1798
      %v1801 = vsinq.f32.pop %v1798
      %vm1802 = vweird.f32 %v746
      %v1803 = vadd.s32 %v1799, 3
      %v1804 = vand.u32 %v1803, 3
      %vm1805 = vcmp.lt.s32.totalorder %v1804, 2
      %vm1806 = vcmp.eq.s32.totalorder %v1804, 0
      %v1807 = vxor.u32 %v1801, 2147483648
      %v1808 = vsel %vm1806, %v1800, %v1807
      %vm1809 = vcmp.eq.s32.totalorder %v1804, 2
      %v1810 = vxor.u32 %v1800, 2147483648
      %v1811 = vsel %vm1809, %v1810, %v1801
      %v1812 = vsel %vm1805, %v1808, %v1811
      %v1813 = vsel %vm1802, nan, %v1812
      %v1814 = vand.u32 2147483647, %v750
      %vm1815 = vcmp.le.f32.partialorder %v1814, 0.7853982
      %vm1816 = vcmp.lt.s32.totalorder %v750, 0
      %v1817 = vand.u32 %v750, 2139095040
      %v1818 = vshrl.u32 %v1817, 23
      %v1819 = vsub.s32 %v1818, 127
      %v1820 = vand.u32 2147483647, %v750
      %v1821 = vand.u32 %v1820, 8388607
      %v1822 = vor.u32 %v1821, 8388608
      %v1823 = vsub.s32 0, %v1822
      %v1824 = vadd.s32 %v1819, 1
      %vm1825 = vcmp.gt.s32.totalorder %v1824, 0
      %v1826 = vsel %vm1825, %v1824, 0
      %v1827 = vshrl.u32 %v1826, 5
      %v1828 = vand.u32 %v1826, 31
      %v1829 = vsub.s32 32, %v1828
      %v1830 = vshrl.u32 683565275, %v1829
      %v1831 = vshll.u32 683565275, %v1828
      %v1832 = vshrl.u32 2475754826, %v1829
      %v1833 = vor.u32 %v1831, %v1832
      %v1834 = vshll.u32 2475754826, %v1828
      %v1835 = vshrl.u32 2131351028, %v1829
      %v1836 = vor.u32 %v1834, %v1835
      %v1837 = vshll.u32 2131351028, %v1828
      %v1838 = vshrl.u32 2102212464, %v1829
      %v1839 = vor.u32 %v1837, %v1838
      %v1840 = vshll.u32 2102212464, %v1828
      %v1841 = vshrl.u32 920167782, %v1829
      %v1842 = vor.u32 %v1840, %v1841
      %v1843 = vshll.u32 920167782, %v1828
      %v1844 = vshrl.u32 1326507024, %v1829
      %v1845 = vor.u32 %v1843, %v1844
      %vm1846 = vcmp.lt.s32.totalorder %v1827, 1
      %vm1847 = vcmp.lt.s32.totalorder %v1827, 2
      %vm1848 = vcmp.lt.s32.totalorder %v1827, 3
      %vm1849 = vcmp.lt.s32.totalorder %v1827, 4
      %v1850 = vsel %vm1846, %v1830, %v1833
      %v1851 = vsel %vm1849, %v1839, 2102212464
      %v1852 = vsel %vm1848, %v1836, %v1851
      %v1853 = vsel %vm1847, %v1850, %v1852
      %v1854 = vsel %vm1846, %v1833, %v1836
      %v1855 = vsel %vm1849, %v1842, 920167782
      %v1856 = vsel %vm1848, %v1839, %v1855
      %v1857 = vsel %vm1847, %v1854, %v1856
      %v1858 = vsel %vm1846, %v1836, %v1839
      %v1859 = vsel %vm1849, %v1845, 1326507024
      %v1860 = vsel %vm1848, %v1842, %v1859
      %v1861 = vsel %vm1847, %v1858, %v1860
      %v1862 = vshll.u32 %v1822, 8
      %v1863 = vmul.u32.u64.compose %v1862, %v1861
      %v1864 = vextract.low.u32 %v1863
      %v1865 = vextract.high.u32 %v1863
      %v1866 = vmul.u32.u64.compose %v1862, %v1857
      %v1867 = vextract.low.u32 %v1866
      %v1868 = vextract.high.u32 %v1866
      %v1869 = vmul.u32 %v1862, %v1853
      %v1870 = vadd.s32 %v1865, %v1867
      %vm1871 = vc.u32 %v1865, %v1867
      %v1872 = vadd.s32 %v1868, 1
      %v1873 = vsel %vm1871, %v1872, %v1868
      %v1874 = vadd.s32 %v1869, %v1873
      %v1875 = vadd.s32 %v1874, 536870912
      %v1876 = vshrl.u32 %v1875, 30
      %v1877 = vshll.u32 %v1876, 30
      %v1878 = vsub.s32 %v1874, %v1877
      %vm1879 = vcmp.lt.s32.totalorder %v1878, 0
      %v1880 = vsub.s32 0, %v1878
      %v1881 = vsel %vm1879, %v1880, %v1878
      %v1882 = vclz %v1881
      %v1883 = vsub.s32 %v1882, 2
      %vm1884 = vcmp.gt.s32.totalorder 0, %v1883
      %v1885 = vsel %vm1884, 0, %v1883
      %v1886 = vsub.s32 32, %v1885
      %v1887 = vshll.u32 %v1878, %v1885
      %v1888 = vshrl.u32 %v1870, %v1886
      %v1889 = vor.u32 %v1887, %v1888
      %v1890 = vsub.s32 4294967266, %v1885
      %v1891 = vadd.s32 %v1890, 127
      %v1892 = vshll.u32 %v1891, 23
      %v1893 = vor.u32 4788187, %v1892
      %v1894 = vand.u32 2147483647, %v1893
      %v1896 = vcvt.s32.f32 %v1889
      %v1897 = vmul.f32 %v1896, %v1894
      %v1898 = vxor.u32 %v1897, 2147483648
      %v1899 = vsel %vm1816, %v1898, %v1897
      %v1900 = vsub.s32 4, %v1876
      %v1901 = vsel %vm1816, %v1900, %v1876
      %v1902 = vsel %vm1815, %v750, %v1899
      %v1903 = vsel %vm1815, 0, %v1901
      %v1904 = vcosq.f32.pop %v1902
      %v1905 = vsinq.f32.pop %v1902
      %vm1906 = vweird.f32 %v750
      %v1907 = vadd.s32 %v1903, 3
      %v1908 = vand.u32 %v1907, 3
      %vm1909 = vcmp.lt.s32.totalorder %v1908, 2
      %vm1910 = vcmp.eq.s32.totalorder %v1908, 0
      %v1911 = vxor.u32 %v1905, 2147483648
      %v1912 = vsel %vm1910, %v1904, %v1911
      %vm1913 = vcmp.eq.s32.totalorder %v1908, 2
      %v1914 = vxor.u32 %v1904, 2147483648
      %v1915 = vsel %vm1913, %v1914, %v1905
      %v1916 = vsel %vm1909, %v1912, %v1915
      %v1917 = vsel %vm1906, nan, %v1916
      %v1918 = vand.u32 2147483647, %v752
      %vm1919 = vcmp.le.f32.partialorder %v1918, 0.7853982
      %vm1920 = vcmp.lt.s32.totalorder %v752, 0
      %v1921 = vand.u32 %v752, 2139095040
      %v1922 = vshrl.u32 %v1921, 23
      %v1923 = vsub.s32 %v1922, 127
      %v1924 = vand.u32 2147483647, %v752
      %v1925 = vand.u32 %v1924, 8388607
      %v1926 = vor.u32 %v1925, 8388608
      %v1927 = vsub.s32 0, %v1926
      %v1928 = vadd.s32 %v1923, 1
      %vm1929 = vcmp.gt.s32.totalorder %v1928, 0
      %v1930 = vsel %vm1929, %v1928, 0
      %v1931 = vshrl.u32 %v1930, 5
      %v1932 = vand.u32 %v1930, 31
      %v1933 = vsub.s32 32, %v1932
      %v1934 = vshrl.u32 683565275, %v1933
      %v1935 = vshll.u32 683565275, %v1932
      %v1936 = vshrl.u32 2475754826, %v1933
      %v1937 = vor.u32 %v1935, %v1936
      %v1938 = vshll.u32 2475754826, %v1932
      %v1939 = vshrl.u32 2131351028, %v1933
      %v1940 = vor.u32 %v1938, %v1939
      %v1941 = vshll.u32 2131351028, %v1932
      %v1942 = vshrl.u32 2102212464, %v1933
      %v1943 = vor.u32 %v1941, %v1942
      %v1944 = vshll.u32 2102212464, %v1932
      %v1945 = vshrl.u32 920167782, %v1933
      %v1946 = vor.u32 %v1944, %v1945
      %v1947 = vshll.u32 920167782, %v1932
      %v1948 = vshrl.u32 1326507024, %v1933
      %v1949 = vor.u32 %v1947, %v1948
      %vm1950 = vcmp.lt.s32.totalorder %v1931, 1
      %vm1951 = vcmp.lt.s32.totalorder %v1931, 2
      %vm1952 = vcmp.lt.s32.totalorder %v1931, 3
      %vm1953 = vcmp.lt.s32.totalorder %v1931, 4
      %v1954 = vsel %vm1950, %v1934, %v1937
      %v1955 = vsel %vm1953, %v1943, 2102212464
      %v1956 = vsel %vm1952, %v1940, %v1955
      %v1957 = vsel %vm1951, %v1954, %v1956
      %v1958 = vsel %vm1950, %v1937, %v1940
      %v1959 = vsel %vm1953, %v1946, 920167782
      %v1960 = vsel %vm1952, %v1943, %v1959
      %v1961 = vsel %vm1951, %v1958, %v1960
      %v1962 = vsel %vm1950, %v1940, %v1943
      %v1963 = vsel %vm1953, %v1949, 1326507024
      %v1964 = vsel %vm1952, %v1946, %v1963
      %v1965 = vsel %vm1951, %v1962, %v1964
      %v1966 = vshll.u32 %v1926, 8
      %v1967 = vmul.u32.u64.compose %v1966, %v1965
      %v1968 = vextract.low.u32 %v1967
      %v1969 = vextract.high.u32 %v1967
      %v1970 = vmul.u32.u64.compose %v1966, %v1961
      %v1971 = vextract.low.u32 %v1970
      %v1972 = vextract.high.u32 %v1970
      %v1973 = vmul.u32 %v1966, %v1957
      %v1974 = vadd.s32 %v1969, %v1971
      %vm1975 = vc.u32 %v1969, %v1971
      %v1976 = vadd.s32 %v1972, 1
      %v1977 = vsel %vm1975, %v1976, %v1972
      %v1978 = vadd.s32 %v1973, %v1977
      %v1979 = vadd.s32 %v1978, 536870912
      %v1980 = vshrl.u32 %v1979, 30
      %v1981 = vshll.u32 %v1980, 30
      %v1982 = vsub.s32 %v1978, %v1981
      %vm1983 = vcmp.lt.s32.totalorder %v1982, 0
      %v1984 = vsub.s32 0, %v1982
      %v1985 = vsel %vm1983, %v1984, %v1982
      %v1986 = vclz %v1985
      %v1987 = vsub.s32 %v1986, 2
      %vm1988 = vcmp.gt.s32.totalorder 0, %v1987
      %v1989 = vsel %vm1988, 0, %v1987
      %v1990 = vsub.s32 32, %v1989
      %v1991 = vshll.u32 %v1982, %v1989
      %v1992 = vshrl.u32 %v1974, %v1990
      %v1993 = vor.u32 %v1991, %v1992
      %v1994 = vsub.s32 4294967266, %v1989
      %v1995 = vadd.s32 %v1994, 127
      %v1996 = vshll.u32 %v1995, 23
      %v1997 = vor.u32 4788187, %v1996
      %v1998 = vand.u32 2147483647, %v1997
      %v2000 = vcvt.s32.f32 %v1993
      %v2001 = vmul.f32 %v2000, %v1998
      %v2002 = vxor.u32 %v2001, 2147483648
      %v2003 = vsel %vm1920, %v2002, %v2001
      %v2004 = vsub.s32 4, %v1980
      %v2005 = vsel %vm1920, %v2004, %v1980
      %v2006 = vsel %vm1919, %v752, %v2003
      %v2007 = vsel %vm1919, 0, %v2005
      %v2008 = vcosq.f32.pop %v2006
      %v2009 = vsinq.f32.pop %v2006
      %vm2010 = vweird.f32 %v752
      %v2011 = vadd.s32 %v2007, 3
      %v2012 = vand.u32 %v2011, 3
      %vm2013 = vcmp.lt.s32.totalorder %v2012, 2
      %vm2014 = vcmp.eq.s32.totalorder %v2012, 0
      %v2015 = vxor.u32 %v2009, 2147483648
      %v2016 = vsel %vm2014, %v2008, %v2015
      %vm2017 = vcmp.eq.s32.totalorder %v2012, 2
      %v2018 = vxor.u32 %v2008, 2147483648
      %v2019 = vsel %vm2017, %v2018, %v2009
      %v2020 = vsel %vm2013, %v2016, %v2019
      %v2021 = vsel %vm2010, nan, %v2020
      %v2022 = vand.u32 2147483647, %v756
      %vm2023 = vcmp.le.f32.partialorder %v2022, 0.7853982
      %vm2024 = vcmp.lt.s32.totalorder %v756, 0
      %v2025 = vand.u32 %v756, 2139095040
      %v2026 = vshrl.u32 %v2025, 23
      %v2027 = vsub.s32 %v2026, 127
      %v2028 = vand.u32 2147483647, %v756
      %v2029 = vand.u32 %v2028, 8388607
      %v2030 = vor.u32 %v2029, 8388608
      %v2031 = vsub.s32 0, %v2030
      %v2032 = vadd.s32 %v2027, 1
      %vm2033 = vcmp.gt.s32.totalorder %v2032, 0
      %v2034 = vsel %vm2033, %v2032, 0
      %v2035 = vshrl.u32 %v2034, 5
      %v2036 = vand.u32 %v2034, 31
      %v2037 = vsub.s32 32, %v2036
      %v2038 = vshrl.u32 683565275, %v2037
      %v2039 = vshll.u32 683565275, %v2036
      %v2040 = vshrl.u32 2475754826, %v2037
      %v2041 = vor.u32 %v2039, %v2040
      %v2042 = vshll.u32 2475754826, %v2036
      %v2043 = vshrl.u32 2131351028, %v2037
      %v2044 = vor.u32 %v2042, %v2043
      %v2045 = vshll.u32 2131351028, %v2036
      %v2046 = vshrl.u32 2102212464, %v2037
      %v2047 = vor.u32 %v2045, %v2046
      %v2048 = vshll.u32 2102212464, %v2036
      %v2049 = vshrl.u32 920167782, %v2037
      %v2050 = vor.u32 %v2048, %v2049
      %v2051 = vshll.u32 920167782, %v2036
      %v2052 = vshrl.u32 1326507024, %v2037
      %v2053 = vor.u32 %v2051, %v2052
      %vm2054 = vcmp.lt.s32.totalorder %v2035, 1
      %vm2055 = vcmp.lt.s32.totalorder %v2035, 2
      %vm2056 = vcmp.lt.s32.totalorder %v2035, 3
      %vm2057 = vcmp.lt.s32.totalorder %v2035, 4
      %v2058 = vsel %vm2054, %v2038, %v2041
      %v2059 = vsel %vm2057, %v2047, 2102212464
      %v2060 = vsel %vm2056, %v2044, %v2059
      %v2061 = vsel %vm2055, %v2058, %v2060
      %v2062 = vsel %vm2054, %v2041, %v2044
      %v2063 = vsel %vm2057, %v2050, 920167782
      %v2064 = vsel %vm2056, %v2047, %v2063
      %v2065 = vsel %vm2055, %v2062, %v2064
      %v2066 = vsel %vm2054, %v2044, %v2047
      %v2067 = vsel %vm2057, %v2053, 1326507024
      %v2068 = vsel %vm2056, %v2050, %v2067
      %v2069 = vsel %vm2055, %v2066, %v2068
      %v2070 = vshll.u32 %v2030, 8
      %v2071 = vmul.u32.u64.compose %v2070, %v2069
      %v2072 = vextract.low.u32 %v2071
      %v2073 = vextract.high.u32 %v2071
      %v2074 = vmul.u32.u64.compose %v2070, %v2065
      %v2075 = vextract.low.u32 %v2074
      %v2076 = vextract.high.u32 %v2074
      %v2077 = vmul.u32 %v2070, %v2061
      %v2078 = vadd.s32 %v2073, %v2075
      %vm2079 = vc.u32 %v2073, %v2075
      %v2080 = vadd.s32 %v2076, 1
      %v2081 = vsel %vm2079, %v2080, %v2076
      %v2082 = vadd.s32 %v2077, %v2081
      %v2083 = vadd.s32 %v2082, 536870912
      %v2084 = vshrl.u32 %v2083, 30
      %v2085 = vshll.u32 %v2084, 30
      %v2086 = vsub.s32 %v2082, %v2085
      %vm2087 = vcmp.lt.s32.totalorder %v2086, 0
      %v2088 = vsub.s32 0, %v2086
      %v2089 = vsel %vm2087, %v2088, %v2086
      %v2090 = vclz %v2089
      %v2091 = vsub.s32 %v2090, 2
      %vm2092 = vcmp.gt.s32.totalorder 0, %v2091
      %v2093 = vsel %vm2092, 0, %v2091
      %v2094 = vsub.s32 32, %v2093
      %v2095 = vshll.u32 %v2086, %v2093
      %v2096 = vshrl.u32 %v2078, %v2094
      %v2097 = vor.u32 %v2095, %v2096
      %v2098 = vsub.s32 4294967266, %v2093
      %v2099 = vadd.s32 %v2098, 127
      %v2100 = vshll.u32 %v2099, 23
      %v2101 = vor.u32 4788187, %v2100
      %v2102 = vand.u32 2147483647, %v2101
      %v2104 = vcvt.s32.f32 %v2097
      %v2105 = vmul.f32 %v2104, %v2102
      %v2106 = vxor.u32 %v2105, 2147483648
      %v2107 = vsel %vm2024, %v2106, %v2105
      %v2108 = vsub.s32 4, %v2084
      %v2109 = vsel %vm2024, %v2108, %v2084
      %v2110 = vsel %vm2023, %v756, %v2107
      %v2111 = vsel %vm2023, 0, %v2109
      %v2112 = vcosq.f32.pop %v2110
      %v2113 = vsinq.f32.pop %v2110
      %vm2114 = vweird.f32 %v756
      %v2115 = vadd.s32 %v2111, 3
      %v2116 = vand.u32 %v2115, 3
      %vm2117 = vcmp.lt.s32.totalorder %v2116, 2
      %vm2118 = vcmp.eq.s32.totalorder %v2116, 0
      %v2119 = vxor.u32 %v2113, 2147483648
      %v2120 = vsel %vm2118, %v2112, %v2119
      %vm2121 = vcmp.eq.s32.totalorder %v2116, 2
      %v2122 = vxor.u32 %v2112, 2147483648
      %v2123 = vsel %vm2121, %v2122, %v2113
      %v2124 = vsel %vm2117, %v2120, %v2123
      %v2125 = vsel %vm2114, nan, %v2124
      %v2126 = vand.u32 2147483647, %v758
      %vm2127 = vcmp.le.f32.partialorder %v2126, 0.7853982
      %vm2128 = vcmp.lt.s32.totalorder %v758, 0
      %v2129 = vand.u32 %v758, 2139095040
      %v2130 = vshrl.u32 %v2129, 23
      %v2131 = vsub.s32 %v2130, 127
      %v2132 = vand.u32 2147483647, %v758
      %v2133 = vand.u32 %v2132, 8388607
      %v2134 = vor.u32 %v2133, 8388608
      %v2135 = vsub.s32 0, %v2134
      %v2136 = vadd.s32 %v2131, 1
      %vm2137 = vcmp.gt.s32.totalorder %v2136, 0
      %v2138 = vsel %vm2137, %v2136, 0
      %v2139 = vshrl.u32 %v2138, 5
      %v2140 = vand.u32 %v2138, 31
      %v2141 = vsub.s32 32, %v2140
      %v2142 = vshrl.u32 683565275, %v2141
      %v2143 = vshll.u32 683565275, %v2140
      %v2144 = vshrl.u32 2475754826, %v2141
      %v2145 = vor.u32 %v2143, %v2144
      %v2146 = vshll.u32 2475754826, %v2140
      %v2147 = vshrl.u32 2131351028, %v2141
      %v2148 = vor.u32 %v2146, %v2147
      %v2149 = vshll.u32 2131351028, %v2140
      %v2150 = vshrl.u32 2102212464, %v2141
      %v2151 = vor.u32 %v2149, %v2150
      %v2152 = vshll.u32 2102212464, %v2140
      %v2153 = vshrl.u32 920167782, %v2141
      %v2154 = vor.u32 %v2152, %v2153
      %v2155 = vshll.u32 920167782, %v2140
      %v2156 = vshrl.u32 1326507024, %v2141
      %v2157 = vor.u32 %v2155, %v2156
      %vm2158 = vcmp.lt.s32.totalorder %v2139, 1
      %vm2159 = vcmp.lt.s32.totalorder %v2139, 2
      %vm2160 = vcmp.lt.s32.totalorder %v2139, 3
      %vm2161 = vcmp.lt.s32.totalorder %v2139, 4
      %v2162 = vsel %vm2158, %v2142, %v2145
      %v2163 = vsel %vm2161, %v2151, 2102212464
      %v2164 = vsel %vm2160, %v2148, %v2163
      %v2165 = vsel %vm2159, %v2162, %v2164
      %v2166 = vsel %vm2158, %v2145, %v2148
      %v2167 = vsel %vm2161, %v2154, 920167782
      %v2168 = vsel %vm2160, %v2151, %v2167
      %v2169 = vsel %vm2159, %v2166, %v2168
      %v2170 = vsel %vm2158, %v2148, %v2151
      %v2171 = vsel %vm2161, %v2157, 1326507024
      %v2172 = vsel %vm2160, %v2154, %v2171
      %v2173 = vsel %vm2159, %v2170, %v2172
      %v2174 = vshll.u32 %v2134, 8
      %v2175 = vmul.u32.u64.compose %v2174, %v2173
      %v2176 = vextract.low.u32 %v2175
      %v2177 = vextract.high.u32 %v2175
      %v2178 = vmul.u32.u64.compose %v2174, %v2169
      %v2179 = vextract.low.u32 %v2178
      %v2180 = vextract.high.u32 %v2178
      %v2181 = vmul.u32 %v2174, %v2165
      %v2182 = vadd.s32 %v2177, %v2179
      %vm2183 = vc.u32 %v2177, %v2179
      %v2184 = vadd.s32 %v2180, 1
      %v2185 = vsel %vm2183, %v2184, %v2180
      %v2186 = vadd.s32 %v2181, %v2185
      %v2187 = vadd.s32 %v2186, 536870912
      %v2188 = vshrl.u32 %v2187, 30
      %v2189 = vshll.u32 %v2188, 30
      %v2190 = vsub.s32 %v2186, %v2189
      %vm2191 = vcmp.lt.s32.totalorder %v2190, 0
      %v2192 = vsub.s32 0, %v2190
      %v2193 = vsel %vm2191, %v2192, %v2190
      %v2194 = vclz %v2193
      %v2195 = vsub.s32 %v2194, 2
      %vm2196 = vcmp.gt.s32.totalorder 0, %v2195
      %v2197 = vsel %vm2196, 0, %v2195
      %v2198 = vsub.s32 32, %v2197
      %v2199 = vshll.u32 %v2190, %v2197
      %v2200 = vshrl.u32 %v2182, %v2198
      %v2201 = vor.u32 %v2199, %v2200
      %v2202 = vsub.s32 4294967266, %v2197
      %v2203 = vadd.s32 %v2202, 127
      %v2204 = vshll.u32 %v2203, 23
      %v2205 = vor.u32 4788187, %v2204
      %v2206 = vand.u32 2147483647, %v2205
      %v2208 = vcvt.s32.f32 %v2201
      %v2209 = vmul.f32 %v2208, %v2206
      %v2210 = vxor.u32 %v2209, 2147483648
      %v2211 = vsel %vm2128, %v2210, %v2209
      %v2212 = vsub.s32 4, %v2188
      %v2213 = vsel %vm2128, %v2212, %v2188
      %v2214 = vsel %vm2127, %v758, %v2211
      %v2215 = vsel %vm2127, 0, %v2213
      %v2216 = vcosq.f32.pop %v2214
      %v2217 = vsinq.f32.pop %v2214
      %vm2218 = vweird.f32 %v758
      %v2219 = vadd.s32 %v2215, 3
      %v2220 = vand.u32 %v2219, 3
      %vm2221 = vcmp.lt.s32.totalorder %v2220, 2
      %vm2222 = vcmp.eq.s32.totalorder %v2220, 0
      %v2223 = vxor.u32 %v2217, 2147483648
      %v2224 = vsel %vm2222, %v2216, %v2223
      %vm2225 = vcmp.eq.s32.totalorder %v2220, 2
      %v2226 = vxor.u32 %v2216, 2147483648
      %v2227 = vsel %vm2225, %v2226, %v2217
      %v2228 = vsel %vm2221, %v2224, %v2227
      %v2229 = vsel %vm2218, nan, %v2228
      %v2230 = vand.u32 2147483647, %v762
      %vm2231 = vcmp.le.f32.partialorder %v2230, 0.7853982
      %vm2232 = vcmp.lt.s32.totalorder %v762, 0
      %v2233 = vand.u32 %v762, 2139095040
      %v2234 = vshrl.u32 %v2233, 23
      %v2235 = vsub.s32 %v2234, 127
      %v2236 = vand.u32 2147483647, %v762
      %v2237 = vand.u32 %v2236, 8388607
      %v2238 = vor.u32 %v2237, 8388608
      %v2239 = vsub.s32 0, %v2238
      %v2240 = vadd.s32 %v2235, 1
      %vm2241 = vcmp.gt.s32.totalorder %v2240, 0
      %v2242 = vsel %vm2241, %v2240, 0
      %v2243 = vshrl.u32 %v2242, 5
      %v2244 = vand.u32 %v2242, 31
      %v2245 = vsub.s32 32, %v2244
      %v2246 = vshrl.u32 683565275, %v2245
      %v2247 = vshll.u32 683565275, %v2244
      %v2248 = vshrl.u32 2475754826, %v2245
      %v2249 = vor.u32 %v2247, %v2248
      %v2250 = vshll.u32 2475754826, %v2244
      %v2251 = vshrl.u32 2131351028, %v2245
      %v2252 = vor.u32 %v2250, %v2251
      %v2253 = vshll.u32 2131351028, %v2244
      %v2254 = vshrl.u32 2102212464, %v2245
      %v2255 = vor.u32 %v2253, %v2254
      %v2256 = vshll.u32 2102212464, %v2244
      %v2257 = vshrl.u32 920167782, %v2245
      %v2258 = vor.u32 %v2256, %v2257
      %v2259 = vshll.u32 920167782, %v2244
      %v2260 = vshrl.u32 1326507024, %v2245
      %v2261 = vor.u32 %v2259, %v2260
      %vm2262 = vcmp.lt.s32.totalorder %v2243, 1
      %vm2263 = vcmp.lt.s32.totalorder %v2243, 2
      %vm2264 = vcmp.lt.s32.totalorder %v2243, 3
      %vm2265 = vcmp.lt.s32.totalorder %v2243, 4
      %v2266 = vsel %vm2262, %v2246, %v2249
      %v2267 = vsel %vm2265, %v2255, 2102212464
      %v2268 = vsel %vm2264, %v2252, %v2267
      %v2269 = vsel %vm2263, %v2266, %v2268
      %v2270 = vsel %vm2262, %v2249, %v2252
      %v2271 = vsel %vm2265, %v2258, 920167782
      %v2272 = vsel %vm2264, %v2255, %v2271
      %v2273 = vsel %vm2263, %v2270, %v2272
      %v2274 = vsel %vm2262, %v2252, %v2255
      %v2275 = vsel %vm2265, %v2261, 1326507024
      %v2276 = vsel %vm2264, %v2258, %v2275
      %v2277 = vsel %vm2263, %v2274, %v2276
      %v2278 = vshll.u32 %v2238, 8
      %v2279 = vmul.u32.u64.compose %v2278, %v2277
      %v2280 = vextract.low.u32 %v2279
      %v2281 = vextract.high.u32 %v2279
      %v2282 = vmul.u32.u64.compose %v2278, %v2273
      %v2283 = vextract.low.u32 %v2282
      %v2284 = vextract.high.u32 %v2282
      %v2285 = vmul.u32 %v2278, %v2269
      %v2286 = vadd.s32 %v2281, %v2283
      %vm2287 = vc.u32 %v2281, %v2283
      %v2288 = vadd.s32 %v2284, 1
      %v2289 = vsel %vm2287, %v2288, %v2284
      %v2290 = vadd.s32 %v2285, %v2289
      %v2291 = vadd.s32 %v2290, 536870912
      %v2292 = vshrl.u32 %v2291, 30
      %v2293 = vshll.u32 %v2292, 30
      %v2294 = vsub.s32 %v2290, %v2293
      %vm2295 = vcmp.lt.s32.totalorder %v2294, 0
      %v2296 = vsub.s32 0, %v2294
      %v2297 = vsel %vm2295, %v2296, %v2294
      %v2298 = vclz %v2297
      %v2299 = vsub.s32 %v2298, 2
      %vm2300 = vcmp.gt.s32.totalorder 0, %v2299
      %v2301 = vsel %vm2300, 0, %v2299
      %v2302 = vsub.s32 32, %v2301
      %v2303 = vshll.u32 %v2294, %v2301
      %v2304 = vshrl.u32 %v2286, %v2302
      %v2305 = vor.u32 %v2303, %v2304
      %v2306 = vsub.s32 4294967266, %v2301
      %v2307 = vadd.s32 %v2306, 127
      %v2308 = vshll.u32 %v2307, 23
      %v2309 = vor.u32 4788187, %v2308
      %v2310 = vand.u32 2147483647, %v2309
      %v2312 = vcvt.s32.f32 %v2305
      %v2313 = vmul.f32 %v2312, %v2310
      %v2314 = vxor.u32 %v2313, 2147483648
      %v2315 = vsel %vm2232, %v2314, %v2313
      %v2316 = vsub.s32 4, %v2292
      %v2317 = vsel %vm2232, %v2316, %v2292
      %v2318 = vsel %vm2231, %v762, %v2315
      %v2319 = vsel %vm2231, 0, %v2317
      %v2320 = vcosq.f32.pop %v2318
      %v2321 = vsinq.f32.pop %v2318
      %vm2322 = vweird.f32 %v762
      %v2323 = vadd.s32 %v2319, 3
      %v2324 = vand.u32 %v2323, 3
      %vm2325 = vcmp.lt.s32.totalorder %v2324, 2
      %vm2326 = vcmp.eq.s32.totalorder %v2324, 0
      %v2327 = vxor.u32 %v2321, 2147483648
      %v2328 = vsel %vm2326, %v2320, %v2327
      %vm2329 = vcmp.eq.s32.totalorder %v2324, 2
      %v2330 = vxor.u32 %v2320, 2147483648
      %v2331 = vsel %vm2329, %v2330, %v2321
      %v2332 = vsel %vm2325, %v2328, %v2331
      %v2333 = vsel %vm2322, nan, %v2332
      %v2334 = vand.u32 2147483647, %v764
      %vm2335 = vcmp.le.f32.partialorder %v2334, 0.7853982
      %vm2336 = vcmp.lt.s32.totalorder %v764, 0
      %v2337 = vand.u32 %v764, 2139095040
      %v2338 = vshrl.u32 %v2337, 23
      %v2339 = vsub.s32 %v2338, 127
      %v2340 = vand.u32 2147483647, %v764
      %v2341 = vand.u32 %v2340, 8388607
      %v2342 = vor.u32 %v2341, 8388608
      %v2343 = vsub.s32 0, %v2342
      %v2344 = vadd.s32 %v2339, 1
      %vm2345 = vcmp.gt.s32.totalorder %v2344, 0
      %v2346 = vsel %vm2345, %v2344, 0
      %v2347 = vshrl.u32 %v2346, 5
      %v2348 = vand.u32 %v2346, 31
      %v2349 = vsub.s32 32, %v2348
      %v2350 = vshrl.u32 683565275, %v2349
      %v2351 = vshll.u32 683565275, %v2348
      %v2352 = vshrl.u32 2475754826, %v2349
      %v2353 = vor.u32 %v2351, %v2352
      %v2354 = vshll.u32 2475754826, %v2348
      %v2355 = vshrl.u32 2131351028, %v2349
      %v2356 = vor.u32 %v2354, %v2355
      %v2357 = vshll.u32 2131351028, %v2348
      %v2358 = vshrl.u32 2102212464, %v2349
      %v2359 = vor.u32 %v2357, %v2358
      %v2360 = vshll.u32 2102212464, %v2348
      %v2361 = vshrl.u32 920167782, %v2349
      %v2362 = vor.u32 %v2360, %v2361
      %v2363 = vshll.u32 920167782, %v2348
      %v2364 = vshrl.u32 1326507024, %v2349
      %v2365 = vor.u32 %v2363, %v2364
      %vm2366 = vcmp.lt.s32.totalorder %v2347, 1
      %vm2367 = vcmp.lt.s32.totalorder %v2347, 2
      %vm2368 = vcmp.lt.s32.totalorder %v2347, 3
      %vm2369 = vcmp.lt.s32.totalorder %v2347, 4
      %v2370 = vsel %vm2366, %v2350, %v2353
      %v2371 = vsel %vm2369, %v2359, 2102212464
      %v2372 = vsel %vm2368, %v2356, %v2371
      %v2373 = vsel %vm2367, %v2370, %v2372
      %v2374 = vsel %vm2366, %v2353, %v2356
      %v2375 = vsel %vm2369, %v2362, 920167782
      %v2376 = vsel %vm2368, %v2359, %v2375
      %v2377 = vsel %vm2367, %v2374, %v2376
      %v2378 = vsel %vm2366, %v2356, %v2359
      %v2379 = vsel %vm2369, %v2365, 1326507024
      %v2380 = vsel %vm2368, %v2362, %v2379
      %v2381 = vsel %vm2367, %v2378, %v2380
      %v2382 = vshll.u32 %v2342, 8
      %v2383 = vmul.u32.u64.compose %v2382, %v2381
      %v2384 = vextract.low.u32 %v2383
      %v2385 = vextract.high.u32 %v2383
      %v2386 = vmul.u32.u64.compose %v2382, %v2377
      %v2387 = vextract.low.u32 %v2386
      %v2388 = vextract.high.u32 %v2386
      %v2389 = vmul.u32 %v2382, %v2373
      %v2390 = vadd.s32 %v2385, %v2387
      %vm2391 = vc.u32 %v2385, %v2387
      %v2392 = vadd.s32 %v2388, 1
      %v2393 = vsel %vm2391, %v2392, %v2388
      %v2394 = vadd.s32 %v2389, %v2393
      %v2395 = vadd.s32 %v2394, 536870912
      %v2396 = vshrl.u32 %v2395, 30
      %v2397 = vshll.u32 %v2396, 30
      %v2398 = vsub.s32 %v2394, %v2397
      %vm2399 = vcmp.lt.s32.totalorder %v2398, 0
      %v2400 = vsub.s32 0, %v2398
      %v2401 = vsel %vm2399, %v2400, %v2398
      %v2402 = vclz %v2401
      %v2403 = vsub.s32 %v2402, 2
      %vm2404 = vcmp.gt.s32.totalorder 0, %v2403
      %v2405 = vsel %vm2404, 0, %v2403
      %v2406 = vsub.s32 32, %v2405
      %v2407 = vshll.u32 %v2398, %v2405
      %v2408 = vshrl.u32 %v2390, %v2406
      %v2409 = vor.u32 %v2407, %v2408
      %v2410 = vsub.s32 4294967266, %v2405
      %v2411 = vadd.s32 %v2410, 127
      %v2412 = vshll.u32 %v2411, 23
      %v2413 = vor.u32 4788187, %v2412
      %v2414 = vand.u32 2147483647, %v2413
      %v2416 = vcvt.s32.f32 %v2409
      %v2417 = vmul.f32 %v2416, %v2414
      %v2418 = vxor.u32 %v2417, 2147483648
      %v2419 = vsel %vm2336, %v2418, %v2417
      %v2420 = vsub.s32 4, %v2396
      %v2421 = vsel %vm2336, %v2420, %v2396
      %v2422 = vsel %vm2335, %v764, %v2419
      %v2423 = vsel %vm2335, 0, %v2421
      %v2424 = vcosq.f32.pop %v2422
      %v2425 = vsinq.f32.pop %v2422
      %vm2426 = vweird.f32 %v764
      %v2427 = vadd.s32 %v2423, 3
      %v2428 = vand.u32 %v2427, 3
      %vm2429 = vcmp.lt.s32.totalorder %v2428, 2
      %vm2430 = vcmp.eq.s32.totalorder %v2428, 0
      %v2431 = vxor.u32 %v2425, 2147483648
      %v2432 = vsel %vm2430, %v2424, %v2431
      %vm2433 = vcmp.eq.s32.totalorder %v2428, 2
      %v2434 = vxor.u32 %v2424, 2147483648
      %v2435 = vsel %vm2433, %v2434, %v2425
      %v2436 = vsel %vm2429, %v2432, %v2435
      %v2437 = vsel %vm2426, nan, %v2436
      %v2438 = vmul.f32 %v720, %v1709
      %v2439 = vmul.f32 %v722, %v1813
      %v2440 = vmul.f32 %v726, %v1917
      %v2441 = vmul.f32 %v728, %v2021
      %v2442 = vmul.f32 %v732, %v2125
      %v2443 = vmul.f32 %v734, %v2229
      %v2444 = vmul.f32 %v738, %v2333
      %v2445 = vmul.f32 %v740, %v2437
      %2446 = vst [vmem:[%s313] sm:$0xff] %v2438
      %2447 = vst [vmem:[%s313 + $0x8] sm:$0xff] %v2439
      %2448 = vst [vmem:[%s313 + $0x10] sm:$0xff] %v2440
      %2449 = vst [vmem:[%s313 + $0x18] sm:$0xff] %v2441
      %2450 = vst [vmem:[%s313 + $0x20] sm:$0xff] %v2442
      %2451 = vst [vmem:[%s313 + $0x28] sm:$0xff] %v2443
      %2452 = vst [vmem:[%s313 + $0x30] sm:$0xff] %v2444
      %2453 = vst [vmem:[%s313 + $0x38] sm:$0xff] %v2445
      %s2454 = smul.u32 2, %s23
      %p2455 = scmp.lt.s32.totalorder %s22, 1
      %s2456 = scalar_select %p2455, %s22, 1
      %p2457 = scmp.lt.s32.totalorder %s2454, 1
      %s2458 = scalar_select %p2457, %s2454, 1
      %s2459 = smul.addr %s2456, 8
      %s2460 = sadd.s32 %s2458, %s2459
      %s2461 = smul.addr %s2460, 8
      %s2462 = scalar_lea.vmem %s5, %s2461
      %s2463 = smul.u32 2, %s23
      %p2464 = scmp.lt.s32.totalorder %s22, 1
      %s2465 = scalar_select %p2464, %s22, 1
      %p2466 = scmp.lt.s32.totalorder %s2463, 1
      %s2467 = scalar_select %p2466, %s2463, 1
      %s2468 = smul.addr %s2465, 8
      %s2469 = sadd.s32 %s2467, %s2468
      %s2470 = smul.addr %s2469, 8
      %s2471 = scalar_lea.vmem %s6, %s2470
      // Predicated region
      $region41: #{_lambda_.12} parent=39 // pred_check
        %p2472 = pneg %p162
      $region42: #{_lambda_.12} parent=39 // pred_check_branch
        %2474 = sbr.rel (%p2472) target = $region44
      $region43: #{_lambda_.12} parent=39 // pred_region
        %s2475 = smul.u32 2, %s23
      $region44: #{_lambda_.12} parent=39 // pred_fallthru
        _
      // Predicated region
      $region45: #{_lambda_.12} parent=39 // pred_check
        %p2476 = pneg %p190
      $region46: #{_lambda_.12} parent=39 // pred_check_branch
        %2478 = sbr.rel (%p2476) target = $region48
      $region47: #{_lambda_.12} parent=39 // pred_region
        %s2479 = smul.u32 2, %s23
      $region48: #{_lambda_.12} parent=39 // pred_fallthru
        _
    $region40: #{_lambda_.12} parent=5 // pred_fallthru
      _
    %p2480 = scmp.le.s32.totalorder 2, %s13
    // Predicated region
    $region49: #{_lambda_.12} parent=5 // pred_check
      %p2481 = pneg %p2480
    $region50: #{_lambda_.12} parent=5 // pred_check_branch
      %2483 = sbr.rel (%p2481) target = $region52
    $region51: #{_lambda_.12} parent=5 // pred_region
      %s2484 = ssub.s32 %s13, 2
      // Predicated region
      $region53: #{_lambda_.12} parent=51 // pred_check
        %p2485 = pneg %p168
      $region54: #{_lambda_.12} parent=51 // pred_check_branch
        %2487 = sbr.rel (%p2485) target = $region56
      $region55: #{_lambda_.12} parent=51 // pred_region
        %s2488 = smul.u32 2, %s25
        %p2489 = scmp.lt.s32.totalorder %s24, 1
        %s2490 = scalar_select %p2489, %s24, 1
        %p2491 = scmp.lt.s32.totalorder %s2488, 1
        %s2492 = scalar_select %p2491, %s2488, 1
        %s2493 = smul.addr %s2490, 8
        %s2494 = sadd.s32 %s2492, %s2493
        %s2495 = smul.addr %s2494, 8
        %s2496 = scalar_lea.vmem %s5, %s2495
      $region56: #{_lambda_.12} parent=51 // pred_fallthru
        _
      // Predicated region
      $region57: #{_lambda_.12} parent=51 // pred_check
        %p2497 = pneg %p196
      $region58: #{_lambda_.12} parent=51 // pred_check_branch
        %2499 = sbr.rel (%p2497) target = $region60
      $region59: #{_lambda_.12} parent=51 // pred_region
        %s2500 = smul.u32 2, %s25
        %p2501 = scmp.lt.s32.totalorder %s24, 1
        %s2502 = scalar_select %p2501, %s24, 1
        %p2503 = scmp.lt.s32.totalorder %s2500, 1
        %s2504 = scalar_select %p2503, %s2500, 1
        %s2505 = smul.addr %s2502, 8
        %s2506 = sadd.s32 %s2504, %s2505
        %s2507 = smul.addr %s2506, 8
        %s2508 = scalar_lea.vmem %s6, %s2507
      $region60: #{_lambda_.12} parent=51 // pred_fallthru
        _
    $region52: #{_lambda_.12} parent=5 // pred_fallthru
      _
  $region6: #{_lambda_.12} parent=0 // loop_footer
    %s17 = sadd.s32 1, %s13
  $region7: #{_lambda_.12} parent=0 // loop_footer_branch
    %12 = sbr.rel target = $region3
  $region8: #{_lambda_.12} parent=0 // loop_exit
    _

// kernel: _lambda_.13
$region0: #{_lambda_.13}
  #allocation0 [shape = 'u32[]', space=smem, size = 0x4, offset = 0x4, fixed_abs, tag = 'smem constant byte address 0x4 - core index']
  #allocation1 [shape = 'u32[144,128]{1,0:T(1,128)}', space=vmem, size = 0x12000, scoped, tag = 'internal scratch']
  %s0 = inlined_call_operand.vmem [shape: f32[2,32,1024], index: 0, kind: input, shape index: {}]
  %s1 = inlined_call_operand.vmem [shape: f32[2,16,1024], index: 1, kind: input, shape index: {}]
  %s2 = inlined_call_operand.vmem [shape: f32[16,16], index: 2, kind: input, shape index: {}]
  %s3 = inlined_call_operand.vmem [shape: f32[16,32], index: 3, kind: input, shape index: {}]
  %s4 = inlined_call_operand.vmem [shape: f32[16,1], index: 4, kind: input, shape index: {}]
  %s5 = inlined_call_operand.vmem [shape: f32[2,16,1024], index: 5, kind: output, shape index: {}]
  %s6 = sld [smem:[#allocation0]]
  $region53: #{_lambda_.13} parent=0
    _
  %s8 = ssub.s32 1, %s6
  %s9 = scalar_select 0, %s8, %s6
  loop: start=0, step=1, limit=4
  $region2: #{_lambda_.13} parent=0 // loop_pre_header
    _
  $region3: #{_lambda_.13} parent=0 // loop_header
    %s11 = sphi 0, %s15
    %p12 = scmp.ge.s32.totalorder %s11, 4
    %s18 = sphi 0, %s30
    %s19 = sphi 0, %s26
    %s20 = sphi 0, %s18
    %s21 = sphi 0, %s19
    %s22 = sphi 0, %s20
    %s23 = sphi 0, %s21
    %s35 = sphi 0, %s37
    %s38 = sphi 0, %s35
    %s39 = sphi 0, %s38
    %s55 = sphi 0, %s39
    %s63 = sphi 0, %s65
    %s66 = sphi 0, %s63
    %s67 = sphi 0, %s66
    %s83 = sphi 0, %s67
    %s87 = sphi 0, %s87
    %s89 = sphi 0, %s87
    %s90 = sphi 0, %s89
    %s104 = sphi 0, %s90
    %s108 = sphi 0, %s108
    %s110 = sphi 0, %s108
    %s111 = sphi 0, %s110
    %s125 = sphi 0, %s111
    %s129 = sphi 0, %s129
    %s131 = sphi 0, %s129
    %s132 = sphi 0, %s131
    %s146 = sphi 0, %s132
    %s154 = sphi 0, %s156
    %s157 = sphi 0, %s154
    %s158 = sphi 0, %s157
    %s174 = sphi 0, %s158
  $region4: #{_lambda_.13} parent=0 // loop_header_branch
    %14 = sbr.rel (%p12) target = $region8
  $region5: #{_lambda_.13} parent=0 // loop_body
    %s16 = ssub.s32 %s11, 1
    %s17 = ssub.s32 %s11, 2
    %s24 = sadd.s32 1, %s19
    %p25 = scmp.ge.s32.totalorder %s24, 1
    %s26 = scalar_select %p25, 0, %s24
    %s27 = sadd.s32 1, %s18
    %s28 = scalar_select %p25, %s27, %s18
    %p29 = scmp.ge.s32.totalorder %s28, 2
    %s30 = scalar_select %p29, 0, %s28
    %s31 = ssub.s32 %s18, %s30
    %s32 = ssub.s32 %s19, %s26
    %s33 = sor.u32 %s31, %s32
    %p34 = scmp.eq.s32.totalorder %s33, 0
    %s36 = sadd.s32 %s35, 1
    %s37 = scalar_select %p34, %s35, %s36
    %p40 = pneg %p34
    %p41 = scmp.eq.s32.totalorder %s11, 1
    %p42 = por %p40, %p41
    %p43 = scmp.ne.s32.totalorder %s35, %s38
    %p44 = scmp.eq.s32.totalorder %s11, 0
    %p45 = por %p43, %p44
    %p46 = scmp.ne.s32.totalorder %s35, %s38
    %p47 = scmp.eq.s32.totalorder %s16, 1
    %p48 = por %p46, %p47
    %p49 = scmp.ne.s32.totalorder %s38, %s39
    %p50 = scmp.eq.s32.totalorder %s16, 0
    %p51 = por %p49, %p50
    %p52 = scmp.ne.s32.totalorder %s38, %s39
    %p53 = scmp.eq.s32.totalorder %s17, 1
    %p54 = por %p52, %p53
    %p56 = scmp.ne.s32.totalorder %s39, %s55
    %p57 = scmp.eq.s32.totalorder %s17, 0
    %p58 = por %p56, %p57
    %s59 = ssub.s32 %s18, %s30
    %s60 = ssub.s32 %s19, %s26
    %s61 = sor.u32 %s59, %s60
    %p62 = scmp.eq.s32.totalorder %s61, 0
    %s64 = sadd.s32 %s63, 1
    %s65 = scalar_select %p62, %s63, %s64
    %p68 = pneg %p62
    %p69 = scmp.eq.s32.totalorder %s11, 1
    %p70 = por %p68, %p69
    %p71 = scmp.ne.s32.totalorder %s63, %s66
    %p72 = scmp.eq.s32.totalorder %s11, 0
    %p73 = por %p71, %p72
    %p74 = scmp.ne.s32.totalorder %s63, %s66
    %p75 = scmp.eq.s32.totalorder %s16, 1
    %p76 = por %p74, %p75
    %p77 = scmp.ne.s32.totalorder %s66, %s67
    %p78 = scmp.eq.s32.totalorder %s16, 0
    %p79 = por %p77, %p78
    %p80 = scmp.ne.s32.totalorder %s66, %s67
    %p81 = scmp.eq.s32.totalorder %s17, 1
    %p82 = por %p80, %p81
    %p84 = scmp.ne.s32.totalorder %s67, %s83
    %p85 = scmp.eq.s32.totalorder %s17, 0
    %p86 = por %p84, %p85
    %s88 = sadd.s32 %s87, 1
    %p91 = scmp.eq.s32.totalorder %s11, 1
    %p92 = scmp.ne.s32.totalorder %s87, %s89
    %p93 = scmp.eq.s32.totalorder %s11, 0
    %p94 = por %p92, %p93
    %p95 = scmp.ne.s32.totalorder %s87, %s89
    %p96 = scmp.eq.s32.totalorder %s16, 1
    %p97 = por %p95, %p96
    %p98 = scmp.ne.s32.totalorder %s89, %s90
    %p99 = scmp.eq.s32.totalorder %s16, 0
    %p100 = por %p98, %p99
    %p101 = scmp.ne.s32.totalorder %s89, %s90
    %p102 = scmp.eq.s32.totalorder %s17, 1
    %p103 = por %p101, %p102
    %p105 = scmp.ne.s32.totalorder %s90, %s104
    %p106 = scmp.eq.s32.totalorder %s17, 0
    %p107 = por %p105, %p106
    %s109 = sadd.s32 %s108, 1
    %p112 = scmp.eq.s32.totalorder %s11, 1
    %p113 = scmp.ne.s32.totalorder %s108, %s110
    %p114 = scmp.eq.s32.totalorder %s11, 0
    %p115 = por %p113, %p114
    %p116 = scmp.ne.s32.totalorder %s108, %s110
    %p117 = scmp.eq.s32.totalorder %s16, 1
    %p118 = por %p116, %p117
    %p119 = scmp.ne.s32.totalorder %s110, %s111
    %p120 = scmp.eq.s32.totalorder %s16, 0
    %p121 = por %p119, %p120
    %p122 = scmp.ne.s32.totalorder %s110, %s111
    %p123 = scmp.eq.s32.totalorder %s17, 1
    %p124 = por %p122, %p123
    %p126 = scmp.ne.s32.totalorder %s111, %s125
    %p127 = scmp.eq.s32.totalorder %s17, 0
    %p128 = por %p126, %p127
    %s130 = sadd.s32 %s129, 1
    %p133 = scmp.eq.s32.totalorder %s11, 1
    %p134 = scmp.ne.s32.totalorder %s129, %s131
    %p135 = scmp.eq.s32.totalorder %s11, 0
    %p136 = por %p134, %p135
    %p137 = scmp.ne.s32.totalorder %s129, %s131
    %p138 = scmp.eq.s32.totalorder %s16, 1
    %p139 = por %p137, %p138
    %p140 = scmp.ne.s32.totalorder %s131, %s132
    %p141 = scmp.eq.s32.totalorder %s16, 0
    %p142 = por %p140, %p141
    %p143 = scmp.ne.s32.totalorder %s131, %s132
    %p144 = scmp.eq.s32.totalorder %s17, 1
    %p145 = por %p143, %p144
    %p147 = scmp.ne.s32.totalorder %s132, %s146
    %p148 = scmp.eq.s32.totalorder %s17, 0
    %p149 = por %p147, %p148
    %s150 = ssub.s32 %s18, %s30
    %s151 = ssub.s32 %s19, %s26
    %s152 = sor.u32 %s150, %s151
    %p153 = scmp.eq.s32.totalorder %s152, 0
    %s155 = sadd.s32 %s154, 1
    %s156 = scalar_select %p153, %s154, %s155
    %p159 = pneg %p153
    %p160 = scmp.eq.s32.totalorder %s11, 1
    %p161 = por %p159, %p160
    %p162 = scmp.ne.s32.totalorder %s154, %s157
    %p163 = scmp.eq.s32.totalorder %s11, 0
    %p164 = por %p162, %p163
    %p165 = scmp.ne.s32.totalorder %s154, %s157
    %p166 = scmp.eq.s32.totalorder %s16, 1
    %p167 = por %p165, %p166
    %p168 = scmp.ne.s32.totalorder %s157, %s158
    %p169 = scmp.eq.s32.totalorder %s16, 0
    %p170 = por %p168, %p169
    %p171 = scmp.ne.s32.totalorder %s157, %s158
    %p172 = scmp.eq.s32.totalorder %s17, 1
    %p173 = por %p171, %p172
    %p175 = scmp.ne.s32.totalorder %s158, %s174
    %p176 = scmp.eq.s32.totalorder %s17, 0
    %p177 = por %p175, %p176
    %p178 = scmp.le.s32.totalorder 1, %s11
    %p179 = scmp.lt.s32.totalorder %s11, 3
    %p180 = pnand %p178, %p179
    %p181 = pneg %p180
    // Predicated region
    $region9: #{_lambda_.13} parent=5 // pred_check
      _
    $region10: #{_lambda_.13} parent=5 // pred_check_branch
      %183 = sbr.rel (%p180) target = $region12
    $region11: #{_lambda_.13} parent=5 // pred_region
      %s184 = ssub.s32 %s11, 1
      // Predicated region
      $region13: #{_lambda_.13} parent=11 // pred_check
        %p185 = pneg %p100
      $region14: #{_lambda_.13} parent=11 // pred_check_branch
        %187 = sbr.rel (%p185) target = $region16
      $region15: #{_lambda_.13} parent=11 // pred_region
        _
      $region16: #{_lambda_.13} parent=11 // pred_fallthru
        _
      // Predicated region
      $region17: #{_lambda_.13} parent=11 // pred_check
        %p188 = pneg %p121
      $region18: #{_lambda_.13} parent=11 // pred_check_branch
        %190 = sbr.rel (%p188) target = $region20
      $region19: #{_lambda_.13} parent=11 // pred_region
        _
      $region20: #{_lambda_.13} parent=11 // pred_fallthru
        _
      // Predicated region
      $region21: #{_lambda_.13} parent=11 // pred_check
        %p191 = pneg %p142
      $region22: #{_lambda_.13} parent=11 // pred_check_branch
        %193 = sbr.rel (%p191) target = $region24
      $region23: #{_lambda_.13} parent=11 // pred_region
        _
      $region24: #{_lambda_.13} parent=11 // pred_fallthru
        _
    $region12: #{_lambda_.13} parent=5 // pred_fallthru
      _
    %p194 = scmp.lt.s32.totalorder %s11, 2
    // Predicated region
    $region25: #{_lambda_.13} parent=5 // pred_check
      %p195 = pneg %p194
    $region26: #{_lambda_.13} parent=5 // pred_check_branch
      %197 = sbr.rel (%p195) target = $region28
    $region27: #{_lambda_.13} parent=5 // pred_region
      // Predicated region
      $region29: #{_lambda_.13} parent=27 // pred_check
        %p198 = pneg %p45
      $region30: #{_lambda_.13} parent=27 // pred_check_branch
        %200 = sbr.rel (%p198) target = $region32
      $region31: #{_lambda_.13} parent=27 // pred_region
        %s201 = smul.u32 8, %s19
        %p202 = scmp.lt.s32.totalorder %s18, 1
        %s203 = scalar_select %p202, %s18, 1
        %p204 = scmp.lt.s32.totalorder %s201, 7
        %s205 = scalar_select %p204, %s201, 7
        %s206 = smul.addr %s203, 32
        %s207 = sadd.s32 %s205, %s206
        %s208 = smul.addr %s207, 8
        %s209 = scalar_lea.vmem %s0, %s208
        %s210 = smul.u32 8, %s19
      $region32: #{_lambda_.13} parent=27 // pred_fallthru
        _
      // Predicated region
      $region33: #{_lambda_.13} parent=27 // pred_check
        %p211 = pneg %p73
      $region34: #{_lambda_.13} parent=27 // pred_check_branch
        %213 = sbr.rel (%p211) target = $region36
      $region35: #{_lambda_.13} parent=27 // pred_region
        %s214 = smul.u32 8, %s19
        %p215 = scmp.lt.s32.totalorder %s18, 1
        %s216 = scalar_select %p215, %s18, 1
        %p217 = scmp.lt.s32.totalorder %s214, 7
        %s218 = scalar_select %p217, %s214, 7
        %s219 = smul.addr %s216, 16
        %s220 = sadd.s32 %s218, %s219
        %s221 = smul.addr %s220, 8
        %s222 = scalar_lea.vmem %s1, %s221
        %s223 = smul.u32 8, %s19
      $region36: #{_lambda_.13} parent=27 // pred_fallthru
        _
    $region28: #{_lambda_.13} parent=5 // pred_fallthru
      _
    %p224 = scmp.le.s32.totalorder 1, %s11
    %p225 = scmp.lt.s32.totalorder %s11, 3
    %p226 = pnand %p224, %p225
    %p227 = pneg %p226
    // Predicated region
    $region37: #{_lambda_.13} parent=5 // pred_check
      _
    $region38: #{_lambda_.13} parent=5 // pred_check_branch
      %229 = sbr.rel (%p226) target = $region40
    $region39: #{_lambda_.13} parent=5 // pred_region
      %s230 = ssub.s32 %s11, 1
      %s231 = smul.u32 8, %s21
      %p232 = scmp.lt.s32.totalorder %s20, 1
      %s233 = scalar_select %p232, %s20, 1
      %p234 = scmp.lt.s32.totalorder %s231, 7
      %s235 = scalar_select %p234, %s231, 7
      %s236 = smul.addr %s233, 32
      %s237 = sadd.s32 %s235, %s236
      %s238 = smul.addr %s237, 8
      %s239 = scalar_lea.vmem %s0, %s238
      %p240 = pneg %p51
      %p241 = pneg %p48
      %s242 = smul.u32 8, %s21
      %p243 = scmp.lt.s32.totalorder %s20, 1
      %s244 = scalar_select %p243, %s20, 1
      %p245 = scmp.lt.s32.totalorder %s242, 7
      %s246 = scalar_select %p245, %s242, 7
      %s247 = smul.addr %s244, 16
      %s248 = sadd.s32 %s246, %s247
      %s249 = smul.addr %s248, 8
      %s250 = scalar_lea.vmem %s1, %s249
      %p251 = pneg %p79
      %p252 = pneg %p76
      %p253 = pneg %p100
      %p254 = pneg %p97
      %p255 = pneg %p121
      %p256 = pneg %p118
      %p257 = pneg %p142
      %p258 = pneg %p139
      %p259 = pneg %p170
      %p260 = pneg %p167
      %s261 = smul.u32 8, %s21
      %p262 = scmp.lt.s32.totalorder %s20, 1
      %s263 = scalar_select %p262, %s20, 1
      %p264 = scmp.lt.s32.totalorder %s261, 7
      %s265 = scalar_select %p264, %s261, 7
      %s266 = smul.addr %s263, 16
      %s267 = sadd.s32 %s265, %s266
      %s268 = smul.addr %s267, 8
      %s269 = scalar_lea.vmem %s5, %s268
      %s270 = smul.u32 8, %s21
      %p271 = scmp.lt.s32.totalorder %s20, 1
      %s272 = scalar_select %p271, %s20, 1
      %p273 = scmp.lt.s32.totalorder %s270, 7
      %s274 = scalar_select %p273, %s270, 7
      %s275 = smul.addr %s272, 32
      %s276 = sadd.s32 %s274, %s275
      %s277 = smul.addr %s276, 8
      %s278 = scalar_lea.vmem %s0, %s277
      %s279 = smul.u32 8, %s21
      %s280 = smul.u32 8, %s21
      %p281 = scmp.lt.s32.totalorder %s20, 1
      %s282 = scalar_select %p281, %s20, 1
      %p283 = scmp.lt.s32.totalorder %s280, 7
      %s284 = scalar_select %p283, %s280, 7
      %s285 = smul.addr %s282, 16
      %s286 = sadd.s32 %s284, %s285
      %s287 = smul.addr %s286, 8
      %s288 = scalar_lea.vmem %s1, %s287
      %s289 = smul.u32 8, %s21
      %s290 = smul.u32 8, %s21
      %p291 = scmp.lt.s32.totalorder %s20, 1
      %s292 = scalar_select %p291, %s20, 1
      %p293 = scmp.lt.s32.totalorder %s290, 7
      %s294 = scalar_select %p293, %s290, 7
      %s295 = smul.addr %s292, 16
      %s296 = sadd.s32 %s294, %s295
      %s297 = smul.addr %s296, 8
      %s298 = scalar_lea.vmem %s5, %s297
      %s299 = smul.u32 8, %s21
      %v300 = vld [vmem:[%s2] sm:$0xff]
      %v301 = vld [vmem:[%s2 + $0x8] sm:$0xff]
      %v302 = vld [vmem:[%s288] sm:$0xff]
      %v303 = vld [vmem:[%s288 + $0x8] sm:$0xff]
      %v304 = vld [vmem:[%s288 + $0x10] sm:$0xff]
      %v305 = vld [vmem:[%s288 + $0x18] sm:$0xff]
      %v306 = vld [vmem:[%s288 + $0x20] sm:$0xff]
      %v307 = vld [vmem:[%s288 + $0x28] sm:$0xff]
      %v308 = vld [vmem:[%s288 + $0x30] sm:$0xff]
      %v309 = vld [vmem:[%s288 + $0x38] sm:$0xff]
      %v310 = vld [vmem:[%s288 + $0x40] sm:$0xff]
      %v311 = vld [vmem:[%s288 + $0x48] sm:$0xff]
      %v312 = vld [vmem:[%s288 + $0x50] sm:$0xff]
      %v313 = vld [vmem:[%s288 + $0x58] sm:$0xff]
      %v314 = vld [vmem:[%s288 + $0x60] sm:$0xff]
      %v315 = vld [vmem:[%s288 + $0x68] sm:$0xff]
      %v316 = vld [vmem:[%s288 + $0x70] sm:$0xff]
      %v317 = vld [vmem:[%s288 + $0x78] sm:$0xff]
      %v318 = vld [vmem:[%s3] sm:$0xff]
      %v319 = vld [vmem:[%s3 + $0x8] sm:$0xff]
      %v320 = vld [vmem:[%s278] sm:$0xff]
      %v321 = vld [vmem:[%s278 + $0x8] sm:$0xff]
      %v322 = vld [vmem:[%s278 + $0x10] sm:$0xff]
      %v323 = vld [vmem:[%s278 + $0x18] sm:$0xff]
      %v324 = vld [vmem:[%s278 + $0x20] sm:$0xff]
      %v325 = vld [vmem:[%s278 + $0x28] sm:$0xff]
      %v326 = vld [vmem:[%s278 + $0x30] sm:$0xff]
      %v327 = vld [vmem:[%s278 + $0x38] sm:$0xff]
      %v328 = vld [vmem:[%s278 + $0x40] sm:$0xff]
      %v329 = vld [vmem:[%s278 + $0x48] sm:$0xff]
      %v330 = vld [vmem:[%s278 + $0x50] sm:$0xff]
      %v331 = vld [vmem:[%s278 + $0x58] sm:$0xff]
      %v332 = vld [vmem:[%s278 + $0x60] sm:$0xff]
      %v333 = vld [vmem:[%s278 + $0x68] sm:$0xff]
      %v334 = vld [vmem:[%s278 + $0x70] sm:$0xff]
      %v335 = vld [vmem:[%s278 + $0x78] sm:$0xff]
      %v336 = vld [vmem:[%s278 + $0x80] sm:$0xff]
      %v337 = vld [vmem:[%s278 + $0x88] sm:$0xff]
      %v338 = vld [vmem:[%s278 + $0x90] sm:$0xff]
      %v339 = vld [vmem:[%s278 + $0x98] sm:$0xff]
      %v340 = vld [vmem:[%s278 + $0xa0] sm:$0xff]
      %v341 = vld [vmem:[%s278 + $0xa8] sm:$0xff]
      %v342 = vld [vmem:[%s278 + $0xb0] sm:$0xff]
      %v343 = vld [vmem:[%s278 + $0xb8] sm:$0xff]
      %v344 = vld [vmem:[%s278 + $0xc0] sm:$0xff]
      %v345 = vld [vmem:[%s278 + $0xc8] sm:$0xff]
      %v346 = vld [vmem:[%s278 + $0xd0] sm:$0xff]
      %v347 = vld [vmem:[%s278 + $0xd8] sm:$0xff]
      %v348 = vld [vmem:[%s278 + $0xe0] sm:$0xff]
      %v349 = vld [vmem:[%s278 + $0xe8] sm:$0xff]
      %v350 = vld [vmem:[%s278 + $0xf0] sm:$0xff]
      %v351 = vld [vmem:[%s278 + $0xf8] sm:$0xff]
      %vm352 = vcmask 261120
      %v354 = vsel %vm352, %v318, 0
      %v357 = vsel %vm352, %v319, 0
      %359 = vmatprep.subr.mxu0 %v321
      %360 = vmatpush1.msra.mxu0 %v320
      %361 = vmatprep.subr.mxu0 %v329
      %362 = vmatpush1.msra.mxu0 %v328
      %363 = vmatprep.subr.mxu0 %v337
      %364 = vmatpush1.msra.mxu0 %v336
      %365 = vmatprep.subr.mxu0 %v345
      %366 = vmatpush1.msra.mxu0 %v344
      %367 = vmatprep.subr.mxu0 0.0
      %368 = vmatpush1.msra.mxu0 0.0
      %369 = vmatprep.subr.mxu0 0.0
      %370 = vmatpush1.msra.mxu0 0.0
      %371 = vmatprep.subr.mxu0 0.0
      %372 = vmatpush1.msra.mxu0 0.0
      %373 = vmatprep.subr.mxu0 0.0
      %374 = vmatpush1.msra.mxu0 0.0
      %375 = vmatprep.subr.mxu0 0.0
      %376 = vmatpush1.msra.mxu0 0.0
      %377 = vmatprep.subr.mxu0 0.0
      %378 = vmatpush1.msra.mxu0 0.0
      %379 = vmatprep.subr.mxu0 0.0
      %380 = vmatpush1.msra.mxu0 0.0
      %381 = vmatprep.subr.mxu0 0.0
      %382 = vmatpush1.msra.mxu0 0.0
      %383 = vmatprep.subr.mxu0 0.0
      %384 = vmatpush1.msra.mxu0 0.0
      %385 = vmatprep.subr.mxu0 0.0
      %386 = vmatpush1.msra.mxu0 0.0
      %387 = vmatprep.subr.mxu0 0.0
      %388 = vmatpush1.msra.mxu0 0.0
      %389 = vmatprep.subr.mxu0 0.0
      %390 = vmatpush1.msra.mxu0 0.0
      %391 = vmatprep.subr.mxu0 0.0
      %392 = vmatpush1.msra.mxu0 0.0
      %393 = vmatprep.subr.mxu0 0.0
      %394 = vmatpush1.msra.mxu0 0.0
      %395 = vmatprep.subr.mxu0 0.0
      %396 = vmatpush1.msra.mxu0 0.0
      %397 = vmatprep.subr.mxu0 0.0
      %398 = vmatpush1.msra.mxu0 0.0
      %399 = vmatprep.subr.mxu0 0.0
      %400 = vmatpush1.msra.mxu0 0.0
      %401 = vmatprep.subr.mxu0 0.0
      %402 = vmatpush1.msra.mxu0 0.0
      %403 = vmatprep.subr.mxu0 0.0
      %404 = vmatpush1.msra.mxu0 0.0
      %405 = vmatprep.subr.mxu0 0.0
      %406 = vmatpush1.msra.mxu0 0.0
      %407 = vmatprep.subr.mxu0 0.0
      %408 = vmatpush1.msra.mxu0 0.0
      %409 = vmatprep.subr.mxu0 0.0
      %410 = vmatpush1.msra.mxu0 0.0
      %411 = vmatprep.subr.mxu0 0.0
      %412 = vmatpush1.msra.mxu0 0.0
      %413 = vmatprep.subr.mxu0 0.0
      %414 = vmatpush1.msra.mxu0 0.0
      %415 = vmatprep.subr.mxu0 0.0
      %416 = vmatpush1.msra.mxu0 0.0
      %417 = vmatprep.subr.mxu0 0.0
      %418 = vmatpush1.msra.mxu0 0.0
      %419 = vmatprep.subr.mxu0 0.0
      %420 = vmatpush1.msra.mxu0 0.0
      %421 = vmatprep.subr.mxu0 0.0
      %422 = vmatpush1.msra.mxu0 0.0
      %423 = vmatprep.mubr.f32.mxu0 0.0
      %424 = vmatmul.mubr.f32.gmra.mrb[0].mxu0 %v354
      %v425 = vpop.f32.mrb[0].mxu0
      %v426 = vadd.f32 0.0, %v425
      %v427 = vpop.f32.mrb[0].mxu0
      %v428 = vadd.f32 0.0, %v427
      %429 = vmatprep.mubr.f32.mxu0 0.0
      %430 = vmatmul.mubr.f32.gmra.mrb[0].mxu0 %v357
      %v431 = vpop.f32.mrb[0].mxu0
      %v432 = vadd.f32 0.0, %v431
      %v433 = vpop.f32.mrb[0].mxu0
      %v434 = vadd.f32 0.0, %v433
      %435 = vdwg.mxu0
      %436 = vmatprep.subr.mxu0 %v323
      %437 = vmatpush1.msra.mxu0 %v322
      %438 = vmatprep.subr.mxu0 %v331
      %439 = vmatpush1.msra.mxu0 %v330
      %440 = vmatprep.subr.mxu0 %v339
      %441 = vmatpush1.msra.mxu0 %v338
      %442 = vmatprep.subr.mxu0 %v347
      %443 = vmatpush1.msra.mxu0 %v346
      %444 = vmatprep.subr.mxu0 0.0
      %445 = vmatpush1.msra.mxu0 0.0
      %446 = vmatprep.subr.mxu0 0.0
      %447 = vmatpush1.msra.mxu0 0.0
      %448 = vmatprep.subr.mxu0 0.0
      %449 = vmatpush1.msra.mxu0 0.0
      %450 = vmatprep.subr.mxu0 0.0
      %451 = vmatpush1.msra.mxu0 0.0
      %452 = vmatprep.subr.mxu0 0.0
      %453 = vmatpush1.msra.mxu0 0.0
      %454 = vmatprep.subr.mxu0 0.0
      %455 = vmatpush1.msra.mxu0 0.0
      %456 = vmatprep.subr.mxu0 0.0
      %457 = vmatpush1.msra.mxu0 0.0
      %458 = vmatprep.subr.mxu0 0.0
      %459 = vmatpush1.msra.mxu0 0.0
      %460 = vmatprep.subr.mxu0 0.0
      %461 = vmatpush1.msra.mxu0 0.0
      %462 = vmatprep.subr.mxu0 0.0
      %463 = vmatpush1.msra.mxu0 0.0
      %464 = vmatprep.subr.mxu0 0.0
      %465 = vmatpush1.msra.mxu0 0.0
      %466 = vmatprep.subr.mxu0 0.0
      %467 = vmatpush1.msra.mxu0 0.0
      %468 = vmatprep.subr.mxu0 0.0
      %469 = vmatpush1.msra.mxu0 0.0
      %470 = vmatprep.subr.mxu0 0.0
      %471 = vmatpush1.msra.mxu0 0.0
      %472 = vmatprep.subr.mxu0 0.0
      %473 = vmatpush1.msra.mxu0 0.0
      %474 = vmatprep.subr.mxu0 0.0
      %475 = vmatpush1.msra.mxu0 0.0
      %476 = vmatprep.subr.mxu0 0.0
      %477 = vmatpush1.msra.mxu0 0.0
      %478 = vmatprep.subr.mxu0 0.0
      %479 = vmatpush1.msra.mxu0 0.0
      %480 = vmatprep.subr.mxu0 0.0
      %481 = vmatpush1.msra.mxu0 0.0
      %482 = vmatprep.subr.mxu0 0.0
      %483 = vmatpush1.msra.mxu0 0.0
      %484 = vmatprep.subr.mxu0 0.0
      %485 = vmatpush1.msra.mxu0 0.0
      %486 = vmatprep.subr.mxu0 0.0
      %487 = vmatpush1.msra.mxu0 0.0
      %488 = vmatprep.subr.mxu0 0.0
      %489 = vmatpush1.msra.mxu0 0.0
      %490 = vmatprep.subr.mxu0 0.0
      %491 = vmatpush1.msra.mxu0 0.0
      %492 = vmatprep.subr.mxu0 0.0
      %493 = vmatpush1.msra.mxu0 0.0
      %494 = vmatprep.subr.mxu0 0.0
      %495 = vmatpush1.msra.mxu0 0.0
      %496 = vmatprep.subr.mxu0 0.0
      %497 = vmatpush1.msra.mxu0 0.0
      %498 = vmatprep.subr.mxu0 0.0
      %499 = vmatpush1.msra.mxu0 0.0
      %500 = vmatprep.mubr.f32.mxu0 0.0
      %501 = vmatmul.mubr.f32.gmra.mrb[0].mxu0 %v354
      %v502 = vpop.f32.mrb[0].mxu0
      %v503 = vadd.f32 0.0, %v502
      %v504 = vpop.f32.mrb[0].mxu0
      %v505 = vadd.f32 0.0, %v504
      %506 = vmatprep.mubr.f32.mxu0 0.0
      %507 = vmatmul.mubr.f32.gmra.mrb[0].mxu0 %v357
      %v508 = vpop.f32.mrb[0].mxu0
      %v509 = vadd.f32 0.0, %v508
      %v510 = vpop.f32.mrb[0].mxu0
      %v511 = vadd.f32 0.0, %v510
      %512 = vdwg.mxu0
      %513 = vmatprep.subr.mxu0 %v325
      %514 = vmatpush1.msra.mxu0 %v324
      %515 = vmatprep.subr.mxu0 %v333
      %516 = vmatpush1.msra.mxu0 %v332
      %517 = vmatprep.subr.mxu0 %v341
      %518 = vmatpush1.msra.mxu0 %v340
      %519 = vmatprep.subr.mxu0 %v349
      %520 = vmatpush1.msra.mxu0 %v348
      %521 = vmatprep.subr.mxu0 0.0
      %522 = vmatpush1.msra.mxu0 0.0
      %523 = vmatprep.subr.mxu0 0.0
      %524 = vmatpush1.msra.mxu0 0.0
      %525 = vmatprep.subr.mxu0 0.0
      %526 = vmatpush1.msra.mxu0 0.0
      %527 = vmatprep.subr.mxu0 0.0
      %528 = vmatpush1.msra.mxu0 0.0
      %529 = vmatprep.subr.mxu0 0.0
      %530 = vmatpush1.msra.mxu0 0.0
      %531 = vmatprep.subr.mxu0 0.0
      %532 = vmatpush1.msra.mxu0 0.0
      %533 = vmatprep.subr.mxu0 0.0
      %534 = vmatpush1.msra.mxu0 0.0
      %535 = vmatprep.subr.mxu0 0.0
      %536 = vmatpush1.msra.mxu0 0.0
      %537 = vmatprep.subr.mxu0 0.0
      %538 = vmatpush1.msra.mxu0 0.0
      %539 = vmatprep.subr.mxu0 0.0
      %540 = vmatpush1.msra.mxu0 0.0
      %541 = vmatprep.subr.mxu0 0.0
      %542 = vmatpush1.msra.mxu0 0.0
      %543 = vmatprep.subr.mxu0 0.0
      %544 = vmatpush1.msra.mxu0 0.0
      %545 = vmatprep.subr.mxu0 0.0
      %546 = vmatpush1.msra.mxu0 0.0
      %547 = vmatprep.subr.mxu0 0.0
      %548 = vmatpush1.msra.mxu0 0.0
      %549 = vmatprep.subr.mxu0 0.0
      %550 = vmatpush1.msra.mxu0 0.0
      %551 = vmatprep.subr.mxu0 0.0
      %552 = vmatpush1.msra.mxu0 0.0
      %553 = vmatprep.subr.mxu0 0.0
      %554 = vmatpush1.msra.mxu0 0.0
      %555 = vmatprep.subr.mxu0 0.0
      %556 = vmatpush1.msra.mxu0 0.0
      %557 = vmatprep.subr.mxu0 0.0
      %558 = vmatpush1.msra.mxu0 0.0
      %559 = vmatprep.subr.mxu0 0.0
      %560 = vmatpush1.msra.mxu0 0.0
      %561 = vmatprep.subr.mxu0 0.0
      %562 = vmatpush1.msra.mxu0 0.0
      %563 = vmatprep.subr.mxu0 0.0
      %564 = vmatpush1.msra.mxu0 0.0
      %565 = vmatprep.subr.mxu0 0.0
      %566 = vmatpush1.msra.mxu0 0.0
      %567 = vmatprep.subr.mxu0 0.0
      %568 = vmatpush1.msra.mxu0 0.0
      %569 = vmatprep.subr.mxu0 0.0
      %570 = vmatpush1.msra.mxu0 0.0
      %571 = vmatprep.subr.mxu0 0.0
      %572 = vmatpush1.msra.mxu0 0.0
      %573 = vmatprep.subr.mxu0 0.0
      %574 = vmatpush1.msra.mxu0 0.0
      %575 = vmatprep.subr.mxu0 0.0
      %576 = vmatpush1.msra.mxu0 0.0
      %577 = vmatprep.mubr.f32.mxu0 0.0
      %578 = vmatmul.mubr.f32.gmra.mrb[0].mxu0 %v354
      %v579 = vpop.f32.mrb[0].mxu0
      %v580 = vadd.f32 0.0, %v579
      %v581 = vpop.f32.mrb[0].mxu0
      %v582 = vadd.f32 0.0, %v581
      %583 = vmatprep.mubr.f32.mxu0 0.0
      %584 = vmatmul.mubr.f32.gmra.mrb[0].mxu0 %v357
      %v585 = vpop.f32.mrb[0].mxu0
      %v586 = vadd.f32 0.0, %v585
      %v587 = vpop.f32.mrb[0].mxu0
      %v588 = vadd.f32 0.0, %v587
      %589 = vdwg.mxu0
      %590 = vmatprep.subr.mxu0 %v327
      %591 = vmatpush1.msra.mxu0 %v326
      %592 = vmatprep.subr.mxu0 %v335
      %593 = vmatpush1.msra.mxu0 %v334
      %594 = vmatprep.subr.mxu0 %v343
      %595 = vmatpush1.msra.mxu0 %v342
      %596 = vmatprep.subr.mxu0 %v351
      %597 = vmatpush1.msra.mxu0 %v350
      %598 = vmatprep.subr.mxu0 0.0
      %599 = vmatpush1.msra.mxu0 0.0
      %600 = vmatprep.subr.mxu0 0.0
      %601 = vmatpush1.msra.mxu0 0.0
      %602 = vmatprep.subr.mxu0 0.0
      %603 = vmatpush1.msra.mxu0 0.0
      %604 = vmatprep.subr.mxu0 0.0
      %605 = vmatpush1.msra.mxu0 0.0
      %606 = vmatprep.subr.mxu0 0.0
      %607 = vmatpush1.msra.mxu0 0.0
      %608 = vmatprep.subr.mxu0 0.0
      %609 = vmatpush1.msra.mxu0 0.0
      %610 = vmatprep.subr.mxu0 0.0
      %611 = vmatpush1.msra.mxu0 0.0
      %612 = vmatprep.subr.mxu0 0.0
      %613 = vmatpush1.msra.mxu0 0.0
      %614 = vmatprep.subr.mxu0 0.0
      %615 = vmatpush1.msra.mxu0 0.0
      %616 = vmatprep.subr.mxu0 0.0
      %617 = vmatpush1.msra.mxu0 0.0
      %618 = vmatprep.subr.mxu0 0.0
      %619 = vmatpush1.msra.mxu0 0.0
      %620 = vmatprep.subr.mxu0 0.0
      %621 = vmatpush1.msra.mxu0 0.0
      %622 = vmatprep.subr.mxu0 0.0
      %623 = vmatpush1.msra.mxu0 0.0
      %624 = vmatprep.subr.mxu0 0.0
      %625 = vmatpush1.msra.mxu0 0.0
      %626 = vmatprep.subr.mxu0 0.0
      %627 = vmatpush1.msra.mxu0 0.0
      %628 = vmatprep.subr.mxu0 0.0
      %629 = vmatpush1.msra.mxu0 0.0
      %630 = vmatprep.subr.mxu0 0.0
      %631 = vmatpush1.msra.mxu0 0.0
      %632 = vmatprep.subr.mxu0 0.0
      %633 = vmatpush1.msra.mxu0 0.0
      %634 = vmatprep.subr.mxu0 0.0
      %635 = vmatpush1.msra.mxu0 0.0
      %636 = vmatprep.subr.mxu0 0.0
      %637 = vmatpush1.msra.mxu0 0.0
      %638 = vmatprep.subr.mxu0 0.0
      %639 = vmatpush1.msra.mxu0 0.0
      %640 = vmatprep.subr.mxu0 0.0
      %641 = vmatpush1.msra.mxu0 0.0
      %642 = vmatprep.subr.mxu0 0.0
      %643 = vmatpush1.msra.mxu0 0.0
      %644 = vmatprep.subr.mxu0 0.0
      %645 = vmatpush1.msra.mxu0 0.0
      %646 = vmatprep.subr.mxu0 0.0
      %647 = vmatpush1.msra.mxu0 0.0
      %648 = vmatprep.subr.mxu0 0.0
      %649 = vmatpush1.msra.mxu0 0.0
      %650 = vmatprep.subr.mxu0 0.0
      %651 = vmatpush1.msra.mxu0 0.0
      %652 = vmatprep.subr.mxu0 0.0
      %653 = vmatpush1.msra.mxu0 0.0
      %654 = vmatprep.mubr.f32.mxu0 0.0
      %655 = vmatmul.mubr.f32.gmra.mrb[0].mxu0 %v354
      %v656 = vpop.f32.mrb[0].mxu0
      %v657 = vadd.f32 0.0, %v656
      %v658 = vpop.f32.mrb[0].mxu0
      %v659 = vadd.f32 0.0, %v658
      %660 = vmatprep.mubr.f32.mxu0 0.0
      %661 = vmatmul.mubr.f32.gmra.mrb[0].mxu0 %v357
      %v662 = vpop.f32.mrb[0].mxu0
      %v663 = vadd.f32 0.0, %v662
      %v664 = vpop.f32.mrb[0].mxu0
      %v665 = vadd.f32 0.0, %v664
      %666 = vdwg.mxu0
      %vm667 = vcmask 130048
      %v669 = vsel %vm667, %v300, 0
      %v672 = vsel %vm667, %v301, 0
      %674 = vmatprep.subr.mxu0 %v303
      %675 = vmatpush1.msra.mxu0 %v302
      %676 = vmatprep.subr.mxu0 %v311
      %677 = vmatpush1.msra.mxu0 %v310
      %678 = vmatprep.subr.mxu0 0.0
      %679 = vmatpush1.msra.mxu0 0.0
      %680 = vmatprep.subr.mxu0 0.0
      %681 = vmatpush1.msra.mxu0 0.0
      %682 = vmatprep.subr.mxu0 0.0
      %683 = vmatpush1.msra.mxu0 0.0
      %684 = vmatprep.subr.mxu0 0.0
      %685 = vmatpush1.msra.mxu0 0.0
      %686 = vmatprep.subr.mxu0 0.0
      %687 = vmatpush1.msra.mxu0 0.0
      %688 = vmatprep.subr.mxu0 0.0
      %689 = vmatpush1.msra.mxu0 0.0
      %690 = vmatprep.subr.mxu0 0.0
      %691 = vmatpush1.msra.mxu0 0.0
      %692 = vmatprep.subr.mxu0 0.0
      %693 = vmatpush1.msra.mxu0 0.0
      %694 = vmatprep.subr.mxu0 0.0
      %695 = vmatpush1.msra.mxu0 0.0
      %696 = vmatprep.subr.mxu0 0.0
      %697 = vmatpush1.msra.mxu0 0.0
      %698 = vmatprep.subr.mxu0 0.0
      %699 = vmatpush1.msra.mxu0 0.0
      %700 = vmatprep.subr.mxu0 0.0
      %701 = vmatpush1.msra.mxu0 0.0
      %702 = vmatprep.subr.mxu0 0.0
      %703 = vmatpush1.msra.mxu0 0.0
      %704 = vmatprep.subr.mxu0 0.0
      %705 = vmatpush1.msra.mxu0 0.0
      %706 = vmatprep.subr.mxu0 0.0
      %707 = vmatpush1.msra.mxu0 0.0
      %708 = vmatprep.subr.mxu0 0.0
      %709 = vmatpush1.msra.mxu0 0.0
      %710 = vmatprep.subr.mxu0 0.0
      %711 = vmatpush1.msra.mxu0 0.0
      %712 = vmatprep.subr.mxu0 0.0
      %713 = vmatpush1.msra.mxu0 0.0
      %714 = vmatprep.subr.mxu0 0.0
      %715 = vmatpush1.msra.mxu0 0.0
      %716 = vmatprep.subr.mxu0 0.0
      %717 = vmatpush1.msra.mxu0 0.0
      %718 = vmatprep.subr.mxu0 0.0
      %719 = vmatpush1.msra.mxu0 0.0
      %720 = vmatprep.subr.mxu0 0.0
      %721 = vmatpush1.msra.mxu0 0.0
      %722 = vmatprep.subr.mxu0 0.0
      %723 = vmatpush1.msra.mxu0 0.0
      %724 = vmatprep.subr.mxu0 0.0
      %725 = vmatpush1.msra.mxu0 0.0
      %726 = vmatprep.subr.mxu0 0.0
      %727 = vmatpush1.msra.mxu0 0.0
      %728 = vmatprep.subr.mxu0 0.0
      %729 = vmatpush1.msra.mxu0 0.0
      %730 = vmatprep.subr.mxu0 0.0
      %731 = vmatpush1.msra.mxu0 0.0
      %732 = vmatprep.subr.mxu0 0.0
      %733 = vmatpush1.msra.mxu0 0.0
      %734 = vmatprep.subr.mxu0 0.0
      %735 = vmatpush1.msra.mxu0 0.0
      %736 = vmatprep.subr.mxu0 0.0
      %737 = vmatpush1.msra.mxu0 0.0
      %738 = vmatprep.mubr.f32.mxu0 0.0
      %739 = vmatmul.mubr.f32.gmra.mrb[0].mxu0 %v669
      %v740 = vpop.f32.mrb[0].mxu0
      %v741 = vadd.f32 %v426, %v740
      %v742 = vpop.f32.mrb[0].mxu0
      %v743 = vadd.f32 %v428, %v742
      %744 = vmatprep.mubr.f32.mxu0 0.0
      %745 = vmatmul.mubr.f32.gmra.mrb[0].mxu0 %v672
      %v746 = vpop.f32.mrb[0].mxu0
      %v747 = vadd.f32 %v432, %v746
      %v748 = vpop.f32.mrb[0].mxu0
      %v749 = vadd.f32 %v434, %v748
      %750 = vdwg.mxu0
      %751 = vmatprep.subr.mxu0 %v305
      %752 = vmatpush1.msra.mxu0 %v304
      %753 = vmatprep.subr.mxu0 %v313
      %754 = vmatpush1.msra.mxu0 %v312
      %755 = vmatprep.subr.mxu0 0.0
      %756 = vmatpush1.msra.mxu0 0.0
      %757 = vmatprep.subr.mxu0 0.0
      %758 = vmatpush1.msra.mxu0 0.0
      %759 = vmatprep.subr.mxu0 0.0
      %760 = vmatpush1.msra.mxu0 0.0
      %761 = vmatprep.subr.mxu0 0.0
      %762 = vmatpush1.msra.mxu0 0.0
      %763 = vmatprep.subr.mxu0 0.0
      %764 = vmatpush1.msra.mxu0 0.0
      %765 = vmatprep.subr.mxu0 0.0
      %766 = vmatpush1.msra.mxu0 0.0
      %767 = vmatprep.subr.mxu0 0.0
      %768 = vmatpush1.msra.mxu0 0.0
      %769 = vmatprep.subr.mxu0 0.0
      %770 = vmatpush1.msra.mxu0 0.0
      %771 = vmatprep.subr.mxu0 0.0
      %772 = vmatpush1.msra.mxu0 0.0
      %773 = vmatprep.subr.mxu0 0.0
      %774 = vmatpush1.msra.mxu0 0.0
      %775 = vmatprep.subr.mxu0 0.0
      %776 = vmatpush1.msra.mxu0 0.0
      %777 = vmatprep.subr.mxu0 0.0
      %778 = vmatpush1.msra.mxu0 0.0
      %779 = vmatprep.subr.mxu0 0.0
      %780 = vmatpush1.msra.mxu0 0.0
      %781 = vmatprep.subr.mxu0 0.0
      %782 = vmatpush1.msra.mxu0 0.0
      %783 = vmatprep.subr.mxu0 0.0
      %784 = vmatpush1.msra.mxu0 0.0
      %785 = vmatprep.subr.mxu0 0.0
      %786 = vmatpush1.msra.mxu0 0.0
      %787 = vmatprep.subr.mxu0 0.0
      %788 = vmatpush1.msra.mxu0 0.0
      %789 = vmatprep.subr.mxu0 0.0
      %790 = vmatpush1.msra.mxu0 0.0
      %791 = vmatprep.subr.mxu0 0.0
      %792 = vmatpush1.msra.mxu0 0.0
      %793 = vmatprep.subr.mxu0 0.0
      %794 = vmatpush1.msra.mxu0 0.0
      %795 = vmatprep.subr.mxu0 0.0
      %796 = vmatpush1.msra.mxu0 0.0
      %797 = vmatprep.subr.mxu0 0.0
      %798 = vmatpush1.msra.mxu0 0.0
      %799 = vmatprep.subr.mxu0 0.0
      %800 = vmatpush1.msra.mxu0 0.0
      %801 = vmatprep.subr.mxu0 0.0
      %802 = vmatpush1.msra.mxu0 0.0
      %803 = vmatprep.subr.mxu0 0.0
      %804 = vmatpush1.msra.mxu0 0.0
      %805 = vmatprep.subr.mxu0 0.0
      %806 = vmatpush1.msra.mxu0 0.0
      %807 = vmatprep.subr.mxu0 0.0
      %808 = vmatpush1.msra.mxu0 0.0
      %809 = vmatprep.subr.mxu0 0.0
      %810 = vmatpush1.msra.mxu0 0.0
      %811 = vmatprep.subr.mxu0 0.0
      %812 = vmatpush1.msra.mxu0 0.0
      %813 = vmatprep.subr.mxu0 0.0
      %814 = vmatpush1.msra.mxu0 0.0
      %815 = vmatprep.mubr.f32.mxu0 0.0
      %816 = vmatmul.mubr.f32.gmra.mrb[0].mxu0 %v669
      %v817 = vpop.f32.mrb[0].mxu0
      %v818 = vadd.f32 %v503, %v817
      %v819 = vpop.f32.mrb[0].mxu0
      %v820 = vadd.f32 %v505, %v819
      %821 = vmatprep.mubr.f32.mxu0 0.0
      %822 = vmatmul.mubr.f32.gmra.mrb[0].mxu0 %v672
      %v823 = vpop.f32.mrb[0].mxu0
      %v824 = vadd.f32 %v509, %v823
      %v825 = vpop.f32.mrb[0].mxu0
      %v826 = vadd.f32 %v511, %v825
      %827 = vdwg.mxu0
      %828 = vmatprep.subr.mxu0 %v307
      %829 = vmatpush1.msra.mxu0 %v306
      %830 = vmatprep.subr.mxu0 %v315
      %831 = vmatpush1.msra.mxu0 %v314
      %832 = vmatprep.subr.mxu0 0.0
      %833 = vmatpush1.msra.mxu0 0.0
      %834 = vmatprep.subr.mxu0 0.0
      %835 = vmatpush1.msra.mxu0 0.0
      %836 = vmatprep.subr.mxu0 0.0
      %837 = vmatpush1.msra.mxu0 0.0
      %838 = vmatprep.subr.mxu0 0.0
      %839 = vmatpush1.msra.mxu0 0.0
      %840 = vmatprep.subr.mxu0 0.0
      %841 = vmatpush1.msra.mxu0 0.0
      %842 = vmatprep.subr.mxu0 0.0
      %843 = vmatpush1.msra.mxu0 0.0
      %844 = vmatprep.subr.mxu0 0.0
      %845 = vmatpush1.msra.mxu0 0.0
      %846 = vmatprep.subr.mxu0 0.0
      %847 = vmatpush1.msra.mxu0 0.0
      %848 = vmatprep.subr.mxu0 0.0
      %849 = vmatpush1.msra.mxu0 0.0
      %850 = vmatprep.subr.mxu0 0.0
      %851 = vmatpush1.msra.mxu0 0.0
      %852 = vmatprep.subr.mxu0 0.0
      %853 = vmatpush1.msra.mxu0 0.0
      %854 = vmatprep.subr.mxu0 0.0
      %855 = vmatpush1.msra.mxu0 0.0
      %856 = vmatprep.subr.mxu0 0.0
      %857 = vmatpush1.msra.mxu0 0.0
      %858 = vmatprep.subr.mxu0 0.0
      %859 = vmatpush1.msra.mxu0 0.0
      %860 = vmatprep.subr.mxu0 0.0
      %861 = vmatpush1.msra.mxu0 0.0
      %862 = vmatprep.subr.mxu0 0.0
      %863 = vmatpush1.msra.mxu0 0.0
      %864 = vmatprep.subr.mxu0 0.0
      %865 = vmatpush1.msra.mxu0 0.0
      %866 = vmatprep.subr.mxu0 0.0
      %867 = vmatpush1.msra.mxu0 0.0
      %868 = vmatprep.subr.mxu0 0.0
      %869 = vmatpush1.msra.mxu0 0.0
      %870 = vmatprep.subr.mxu0 0.0
      %871 = vmatpush1.msra.mxu0 0.0
      %872 = vmatprep.subr.mxu0 0.0
      %873 = vmatpush1.msra.mxu0 0.0
      %874 = vmatprep.subr.mxu0 0.0
      %875 = vmatpush1.msra.mxu0 0.0
      %876 = vmatprep.subr.mxu0 0.0
      %877 = vmatpush1.msra.mxu0 0.0
      %878 = vmatprep.subr.mxu0 0.0
      %879 = vmatpush1.msra.mxu0 0.0
      %880 = vmatprep.subr.mxu0 0.0
      %881 = vmatpush1.msra.mxu0 0.0
      %882 = vmatprep.subr.mxu0 0.0
      %883 = vmatpush1.msra.mxu0 0.0
      %884 = vmatprep.subr.mxu0 0.0
      %885 = vmatpush1.msra.mxu0 0.0
      %886 = vmatprep.subr.mxu0 0.0
      %887 = vmatpush1.msra.mxu0 0.0
      %888 = vmatprep.subr.mxu0 0.0
      %889 = vmatpush1.msra.mxu0 0.0
      %890 = vmatprep.subr.mxu0 0.0
      %891 = vmatpush1.msra.mxu0 0.0
      %892 = vmatprep.mubr.f32.mxu0 0.0
      %893 = vmatmul.mubr.f32.gmra.mrb[0].mxu0 %v669
      %v894 = vpop.f32.mrb[0].mxu0
      %v895 = vadd.f32 %v580, %v894
      %v896 = vpop.f32.mrb[0].mxu0
      %v897 = vadd.f32 %v582, %v896
      %898 = vmatprep.mubr.f32.mxu0 0.0
      %899 = vmatmul.mubr.f32.gmra.mrb[0].mxu0 %v672
      %v900 = vpop.f32.mrb[0].mxu0
      %v901 = vadd.f32 %v586, %v900
      %v902 = vpop.f32.mrb[0].mxu0
      %v903 = vadd.f32 %v588, %v902
      %904 = vdwg.mxu0
      %905 = vmatprep.subr.mxu0 %v309
      %906 = vmatpush1.msra.mxu0 %v308
      %907 = vmatprep.subr.mxu0 %v317
      %908 = vmatpush1.msra.mxu0 %v316
      %909 = vmatprep.subr.mxu0 0.0
      %910 = vmatpush1.msra.mxu0 0.0
      %911 = vmatprep.subr.mxu0 0.0
      %912 = vmatpush1.msra.mxu0 0.0
      %913 = vmatprep.subr.mxu0 0.0
      %914 = vmatpush1.msra.mxu0 0.0
      %915 = vmatprep.subr.mxu0 0.0
      %916 = vmatpush1.msra.mxu0 0.0
      %917 = vmatprep.subr.mxu0 0.0
      %918 = vmatpush1.msra.mxu0 0.0
      %919 = vmatprep.subr.mxu0 0.0
      %920 = vmatpush1.msra.mxu0 0.0
      %921 = vmatprep.subr.mxu0 0.0
      %922 = vmatpush1.msra.mxu0 0.0
      %923 = vmatprep.subr.mxu0 0.0
      %924 = vmatpush1.msra.mxu0 0.0
      %925 = vmatprep.subr.mxu0 0.0
      %926 = vmatpush1.msra.mxu0 0.0
      %927 = vmatprep.subr.mxu0 0.0
      %928 = vmatpush1.msra.mxu0 0.0
      %929 = vmatprep.subr.mxu0 0.0
      %930 = vmatpush1.msra.mxu0 0.0
      %931 = vmatprep.subr.mxu0 0.0
      %932 = vmatpush1.msra.mxu0 0.0
      %933 = vmatprep.subr.mxu0 0.0
      %934 = vmatpush1.msra.mxu0 0.0
      %935 = vmatprep.subr.mxu0 0.0
      %936 = vmatpush1.msra.mxu0 0.0
      %937 = vmatprep.subr.mxu0 0.0
      %938 = vmatpush1.msra.mxu0 0.0
      %939 = vmatprep.subr.mxu0 0.0
      %940 = vmatpush1.msra.mxu0 0.0
      %941 = vmatprep.subr.mxu0 0.0
      %942 = vmatpush1.msra.mxu0 0.0
      %943 = vmatprep.subr.mxu0 0.0
      %944 = vmatpush1.msra.mxu0 0.0
      %945 = vmatprep.subr.mxu0 0.0
      %946 = vmatpush1.msra.mxu0 0.0
      %947 = vmatprep.subr.mxu0 0.0
      %948 = vmatpush1.msra.mxu0 0.0
      %949 = vmatprep.subr.mxu0 0.0
      %950 = vmatpush1.msra.mxu0 0.0
      %951 = vmatprep.subr.mxu0 0.0
      %952 = vmatpush1.msra.mxu0 0.0
      %953 = vmatprep.subr.mxu0 0.0
      %954 = vmatpush1.msra.mxu0 0.0
      %955 = vmatprep.subr.mxu0 0.0
      %956 = vmatpush1.msra.mxu0 0.0
      %957 = vmatprep.subr.mxu0 0.0
      %958 = vmatpush1.msra.mxu0 0.0
      %959 = vmatprep.subr.mxu0 0.0
      %960 = vmatpush1.msra.mxu0 0.0
      %961 = vmatprep.subr.mxu0 0.0
      %962 = vmatpush1.msra.mxu0 0.0
      %963 = vmatprep.subr.mxu0 0.0
      %964 = vmatpush1.msra.mxu0 0.0
      %965 = vmatprep.subr.mxu0 0.0
      %966 = vmatpush1.msra.mxu0 0.0
      %967 = vmatprep.subr.mxu0 0.0
      %968 = vmatpush1.msra.mxu0 0.0
      %969 = vmatprep.mubr.f32.mxu0 0.0
      %970 = vmatmul.mubr.f32.gmra.mrb[0].mxu0 %v669
      %v971 = vpop.f32.mrb[0].mxu0
      %v972 = vadd.f32 %v657, %v971
      %v973 = vpop.f32.mrb[0].mxu0
      %v974 = vadd.f32 %v659, %v973
      %975 = vmatprep.mubr.f32.mxu0 0.0
      %976 = vmatmul.mubr.f32.gmra.mrb[0].mxu0 %v672
      %v977 = vpop.f32.mrb[0].mxu0
      %v978 = vadd.f32 %v663, %v977
      %v979 = vpop.f32.mrb[0].mxu0
      %v980 = vadd.f32 %v665, %v979
      %981 = vdwg.mxu0
      %v982 = vld [vmem:[%s4] sm:$0xff]
      %v983 = vld [vmem:[%s4 + $0x8] sm:$0xff]
      %985 = vset.pattern.permute.xlu0 0
      %986 = vperm.xlu0 %985, %v982
      %v987 = vpop.permute.xlu0 %986
      %990 = vset.pattern.permute.xlu0 0
      %991 = vperm.xlu0 %990, %v983
      %v992 = vpop.permute.xlu0 %991
      %v994 = vadd.f32 %v741, %v987
      %v995 = vadd.f32 %v743, %v987
      %v996 = vadd.f32 %v818, %v987
      %v997 = vadd.f32 %v820, %v987
      %v998 = vadd.f32 %v895, %v987
      %v999 = vadd.f32 %v897, %v987
      %v1000 = vadd.f32 %v972, %v987
      %v1001 = vadd.f32 %v974, %v987
      %v1002 = vadd.f32 %v747, %v992
      %v1003 = vadd.f32 %v749, %v992
      %v1004 = vadd.f32 %v824, %v992
      %v1005 = vadd.f32 %v826, %v992
      %v1006 = vadd.f32 %v901, %v992
      %v1007 = vadd.f32 %v903, %v992
      %v1008 = vadd.f32 %v978, %v992
      %v1009 = vadd.f32 %v980, %v992
      %1010 = vst [vmem:[%s298] sm:$0xff] %v994
      %1011 = vst [vmem:[%s298 + $0x8] sm:$0xff] %v995
      %1012 = vst [vmem:[%s298 + $0x10] sm:$0xff] %v996
      %1013 = vst [vmem:[%s298 + $0x18] sm:$0xff] %v997
      %1014 = vst [vmem:[%s298 + $0x20] sm:$0xff] %v998
      %1015 = vst [vmem:[%s298 + $0x28] sm:$0xff] %v999
      %1016 = vst [vmem:[%s298 + $0x30] sm:$0xff] %v1000
      %1017 = vst [vmem:[%s298 + $0x38] sm:$0xff] %v1001
      %1018 = vst [vmem:[%s298 + $0x40] sm:$0xff] %v1002
      %1019 = vst [vmem:[%s298 + $0x48] sm:$0xff] %v1003
      %1020 = vst [vmem:[%s298 + $0x50] sm:$0xff] %v1004
      %1021 = vst [vmem:[%s298 + $0x58] sm:$0xff] %v1005
      %1022 = vst [vmem:[%s298 + $0x60] sm:$0xff] %v1006
      %1023 = vst [vmem:[%s298 + $0x68] sm:$0xff] %v1007
      %1024 = vst [vmem:[%s298 + $0x70] sm:$0xff] %v1008
      %1025 = vst [vmem:[%s298 + $0x78] sm:$0xff] %v1009
      %s1026 = smul.u32 8, %s21
      %p1027 = scmp.lt.s32.totalorder %s20, 1
      %s1028 = scalar_select %p1027, %s20, 1
      %p1029 = scmp.lt.s32.totalorder %s1026, 7
      %s1030 = scalar_select %p1029, %s1026, 7
      %s1031 = smul.addr %s1028, 16
      %s1032 = sadd.s32 %s1030, %s1031
      %s1033 = smul.addr %s1032, 8
      %s1034 = scalar_lea.vmem %s5, %s1033
      // Predicated region
      $region41: #{_lambda_.13} parent=39 // pred_check
        %p1035 = pneg %p167
      $region42: #{_lambda_.13} parent=39 // pred_check_branch
        %1037 = sbr.rel (%p1035) target = $region44
      $region43: #{_lambda_.13} parent=39 // pred_region
        %s1038 = smul.u32 8, %s21
      $region44: #{_lambda_.13} parent=39 // pred_fallthru
        _
    $region40: #{_lambda_.13} parent=5 // pred_fallthru
      _
    %p1039 = scmp.le.s32.totalorder 2, %s11
    // Predicated region
    $region45: #{_lambda_.13} parent=5 // pred_check
      %p1040 = pneg %p1039
    $region46: #{_lambda_.13} parent=5 // pred_check_branch
      %1042 = sbr.rel (%p1040) target = $region48
    $region47: #{_lambda_.13} parent=5 // pred_region
      %s1043 = ssub.s32 %s11, 2
      // Predicated region
      $region49: #{_lambda_.13} parent=47 // pred_check
        %p1044 = pneg %p173
      $region50: #{_lambda_.13} parent=47 // pred_check_branch
        %1046 = sbr.rel (%p1044) target = $region52
      $region51: #{_lambda_.13} parent=47 // pred_region
        %s1047 = smul.u32 8, %s23
        %p1048 = scmp.lt.s32.totalorder %s22, 1
        %s1049 = scalar_select %p1048, %s22, 1
        %p1050 = scmp.lt.s32.totalorder %s1047, 7
        %s1051 = scalar_select %p1050, %s1047, 7
        %s1052 = smul.addr %s1049, 16
        %s1053 = sadd.s32 %s1051, %s1052
        %s1054 = smul.addr %s1053, 8
        %s1055 = scalar_lea.vmem %s5, %s1054
      $region52: #{_lambda_.13} parent=47 // pred_fallthru
        _
    $region48: #{_lambda_.13} parent=5 // pred_fallthru
      _
  $region6: #{_lambda_.13} parent=0 // loop_footer
    %s15 = sadd.s32 1, %s11
  $region7: #{_lambda_.13} parent=0 // loop_footer_branch
    %10 = sbr.rel target = $region3
  $region8: #{_lambda_.13} parent=0 // loop_exit
    _

</llo_original>
